<compile_context>
chip_gen: v5e
topology: v5e:2x2
jax: 0.10.0
libtpu: 0.0.40
codegen_flags: <defaults>
</compile_context>

<pallas_src>
import jax
import jax.numpy as jnp
from jax.experimental import pallas as pl
from jax.experimental.pallas import tpu as pltpu

FORGET_BIAS = 1.0


# ----------------------------------------------------------------------------
# Host-side reference convolutions.  Used ONLY once, at weight-preparation
# time, to turn conv weights into dense operators over flattened (h, w, c)
# state vectors.  They never run in the per-timestep data path.
# ----------------------------------------------------------------------------
def conv2d_nhwc_ref(x, w_hwio, bias, stride, pad):
    B, H, W, Cin = x.shape
    kh, kw, _, Cout = w_hwio.shape
    xp = jnp.pad(x, ((0, 0), (pad, pad), (pad, pad), (0, 0)))
    Ho = (H + 2 * pad - kh) // stride + 1
    Wo = (W + 2 * pad - kw) // stride + 1
    cols = []
    for di in range(kh):
        for dj in range(kw):
            cols.append(xp[:, di:di + stride * Ho:stride,
                           dj:dj + stride * Wo:stride, :])
    patches = jnp.concatenate(cols, axis=-1).reshape(B * Ho * Wo, kh * kw * Cin)
    out = patches @ w_hwio.reshape(kh * kw * Cin, Cout)
    if bias is not None:
        out = out + bias
    return out.reshape(B, Ho, Wo, Cout)


def conv_transpose2d_nhwc_ref(x, w_hwio, bias, stride, pad):
    # TODO(synk): w is a forward-conv-equivalent HWIO weight (self-consistent
    # with init_params); importing real PyTorch ConvTranspose2d weights would
    # require a spatial flip + (Cin, Cout) transpose first.
    B, H, W, C = x.shape
    k = w_hwio.shape[0]
    xd = jnp.zeros((B, (H - 1) * stride + 1, (W - 1) * stride + 1, C), x.dtype)
    xd = xd.at[:, ::stride, ::stride, :].set(x)
    return conv2d_nhwc_ref(xd, w_hwio, bias, 1, k - 1 - pad)


# ----------------------------------------------------------------------------
# Weight pre-lowering: convs -> dense operators on flattened (h, w, c) rows
# ----------------------------------------------------------------------------
def build_conv_operator(w_hwio, stride, pad, Hp, Wp):
    """Dense M such that flat_out = flat_in @ M (flat = (h, w, c) order)."""
    Cin = w_hwio.shape[2]
    D = Hp * Wp * Cin
    basis = jnp.eye(D, dtype=jnp.float32).reshape(D, Hp, Wp, Cin)
    out = conv2d_nhwc_ref(basis, w_hwio, None, stride, pad)
    return out.reshape(D, -1)


def build_cell_operators(cp, Cin, N, Hp, Wp, f):
    """Fuse wx/wh/wm into one gate-major GEMM operator + wo / wlast operators."""
    pad = f // 2
    HW = Hp * Wp
    Dx, Dh = HW * Cin, HW * N
    Din = Dx + 2 * Dh
    eye = jnp.eye(Din, dtype=jnp.float32)
    xb = eye[:, :Dx].reshape(Din, Hp, Wp, Cin)
    hb = eye[:, Dx:Dx + Dh].reshape(Din, Hp, Wp, N)
    mb = eye[:, Dx + Dh:].reshape(Din, Hp, Wp, N)
    xc = conv2d_nhwc_ref(xb, cp["wx"], None, 1, pad).reshape(Din, HW, 7, N)
    hc = conv2d_nhwc_ref(hb, cp["wh"], None, 1, pad).reshape(Din, HW, 4, N)
    mc = conv2d_nhwc_ref(mb, cp["wm"], None, 1, pad).reshape(Din, HW, 3, N)
    # Pre-summed gate pre-activations (i, f, g, i', f', g', o), gate-major so
    # every gate is a contiguous 128-lane block inside the kernel.
    gates = [
        xc[:, :, 0] + hc[:, :, 0],     # i
        xc[:, :, 1] + hc[:, :, 1],     # f
        xc[:, :, 2] + hc[:, :, 2],     # g
        xc[:, :, 3] + mc[:, :, 0],     # i'
        xc[:, :, 4] + mc[:, :, 1],     # f'
        xc[:, :, 5] + mc[:, :, 2],     # g'
        xc[:, :, 6] + hc[:, :, 3],     # o
    ]
    A_gate = jnp.stack(gates, axis=1).reshape(Din, 7 * Dh)

    # output-gate conv / 1x1 "last" conv over concat([c_new, m_new])
    eye2 = jnp.eye(2 * Dh, dtype=jnp.float32)
    cb = eye2[:, :Dh].reshape(2 * Dh, Hp, Wp, N)
    mb2 = eye2[:, Dh:].reshape(2 * Dh, Hp, Wp, N)
    cm = jnp.concatenate([cb, mb2], axis=-1)
    A_o = conv2d_nhwc_ref(cm, cp["wo"], None, 1, pad).reshape(2 * Dh, Dh)
    A_wl = conv2d_nhwc_ref(cm, cp["wlast"], None, 1, 0).reshape(2 * Dh, Dh)
    return A_gate, A_o, A_wl


def build_encdec_gate_operators(enc_w, enc_b, dec_w, dec_b, gate_w, gate_b,
                                N, Hp, Wp, f):
    """Compose enc(conv s2) -> dec(convT k4 s2) -> gate(conv) into 2 affine maps."""
    HW = Hp * Wp
    Dh = HW * N
    # encoder Conv2d(N -> N//4, k=f, stride=2, pad=f//2)
    A_enc = build_conv_operator(enc_w, 2, f // 2, Hp, Wp)          # (Dh, De)
    He, We = Hp // 2, Wp // 2
    b_enc = jnp.tile(enc_b, He * We)                               # flat (h, w, c)
    # decoder ConvTranspose2d(N//4 -> N, k=4, stride=2, pad=1)
    De = A_enc.shape[1]
    basis_e = jnp.eye(De, dtype=jnp.float32).reshape(De, He, We, N // 4)
    A_dec = conv_transpose2d_nhwc_ref(basis_e, dec_w, None, 2, 1).reshape(De, Dh)
    b_dec = jnp.tile(dec_b, HW)
    # exact affine composition enc -> dec
    A_ed = A_enc @ A_dec                                           # (Dh, Dh)
    b_ed = b_enc @ A_dec + b_dec
    # gate conv on concat([h_tmp, h], channel axis)
    eye2 = jnp.eye(2 * Dh, dtype=jnp.float32)
    tmp_b = eye2[:, :Dh].reshape(2 * Dh, Hp, Wp, N)
    h_b = eye2[:, Dh:].reshape(2 * Dh, Hp, Wp, N)
    gin = jnp.concatenate([tmp_b, h_b], axis=-1)
    A_gfull = conv2d_nhwc_ref(gin, gate_w, None, 1, f // 2).reshape(2 * Dh, Dh)
    b_g = jnp.tile(gate_b, HW)
    A_g_tmp, A_g_h = A_gfull[:Dh], A_gfull[Dh:]
    # substitute h_tmp = h @ A_ed + b_ed into the gate conv (exact)
    A_go = A_ed @ A_g_tmp + A_g_h
    b_go = b_ed @ A_g_tmp + b_g
    return A_ed, b_ed, A_go, b_go


# ----------------------------------------------------------------------------
# Config / parameters
# ----------------------------------------------------------------------------
class Configs:
    img_height = 16
    img_width = 16
    patch_size = 4
    img_channel = 1
    filter_size = 3
    stride = 1
    layer_norm = False
    total_length = 4
    input_length = 2


def init_params(key, num_layers, num_hidden, cfg):
    patch_ch = cfg.img_channel * cfg.patch_size ** 2
    f = cfg.filter_size
    keys = iter(jax.random.split(key, 64))

    def w(shape, scale=0.1):
        return scale * jax.random.normal(next(keys), shape, jnp.float32)

    cells = []
    for i in range(num_layers):
        in_ch = patch_ch if i == 0 else num_hidden[i - 1]
        N = num_hidden[i]
        cells.append(dict(
            wx=w((f, f, in_ch, 7 * N)),
            wh=w((f, f, N, 4 * N)),
            wm=w((f, f, N, 3 * N)),
            wo=w((f, f, 2 * N, N)),
            wlast=w((1, 1, 2 * N, N)),
        ))
    enc_w, enc_b, dec_w, dec_b, gate_w, gate_b = [], [], [], [], [], []
    for i in range(num_layers - 1):
        N = num_hidden[i]
        enc_w.append(w((f, f, N, N // 4)))
        enc_b.append(w((N // 4,)))
        dec_w.append(w((4, 4, N // 4, N)))   # forward-conv-equivalent HWIO weight
        dec_b.append(w((N,)))
        gate_w.append(w((f, f, 2 * N, N)))
        gate_b.append(w((N,)))
    return dict(cells=cells, enc_w=enc_w, enc_b=enc_b, dec_w=dec_w, dec_b=dec_b,
                gate_w=gate_w, gate_b=gate_b,
                w_last=w((1, 1, num_hidden[-1], patch_ch)),
                w_first_v=w((1, 1, patch_ch, num_hidden[0])))


def prepare_operators(params, cfg, num_layers, num_hidden):
    L = num_layers
    Hp = cfg.img_height // cfg.patch_size
    Wp = cfg.img_width // cfg.patch_size
    patch_ch = cfg.img_channel * cfg.patch_size ** 2
    f = cfg.filter_size
    N = num_hidden[0]
    # The reference threads mem / motion_highway / cloud shifts with
    # num_hidden[0] channels across all layers -> homogeneous hidden only.
    assert all(n == N for n in num_hidden), "requires equal num_hidden"

    ops = dict(A_gate=[], A_o=[], A_wl=[], A_ed=[], A_go=[], b_ed=[], b_go=[])
    for i in range(L):
        Cin = patch_ch if i == 0 else num_hidden[i - 1]
        A_g, A_o, A_wl = build_cell_operators(params["cells"][i], Cin, N, Hp, Wp, f)
        ops["A_gate"].append(A_g.astype(jnp.bfloat16))
        ops["A_o"].append(A_o.astype(jnp.bfloat16))
        ops["A_wl"].append(A_wl.astype(jnp.bfloat16))
    for i in range(L - 1):
        A_ed, b_ed, A_go, b_go = build_encdec_gate_operators(
            params["enc_w"][i], params["enc_b"][i], params["dec_w"][i],
            params["dec_b"][i], params["gate_w"][i], params["gate_b"][i],
            N, Hp, Wp, f)
        ops["A_ed"].append(A_ed.astype(jnp.bfloat16))
        ops["A_go"].append(A_go.astype(jnp.bfloat16))
        ops["b_ed"].append(b_ed.reshape(1, -1).astype(jnp.float32))
        ops["b_go"].append(b_go.reshape(1, -1).astype(jnp.float32))
    ops["A_fv"] = build_conv_operator(
        params["w_first_v"], 1, 0, Hp, Wp).astype(jnp.bfloat16)
    ops["A_last"] = build_conv_operator(
        params["w_last"], 1, 0, Hp, Wp).astype(jnp.bfloat16)
    return ops


# ----------------------------------------------------------------------------
# The fused network kernel
# ----------------------------------------------------------------------------
def make_network_kernel(L, input_length, HD):
    n_data = 9

    def kernel(*refs):
        (frames_ref, mask_ref, cs_ref, cls_ref,
         h_init_ref, c_init_ref, mem_init_ref,
         csa_init_ref, clsa_init_ref) = refs[:n_data]
        p = n_data
        A_fv_ref, A_last_ref = refs[p], refs[p + 1]
        p += 2
        A_gate_refs = refs[p:p + L]; p += L
        A_o_refs = refs[p:p + L]; p += L
        A_wl_refs = refs[p:p + L]; p += L
        A_ed_refs = refs[p:p + L - 1]; p += L - 1
        A_go_refs = refs[p:p + L - 1]; p += L - 1
        b_ed_refs = refs[p:p + L - 1]; p += L - 1
        b_go_refs = refs[p:p + L - 1]; p += L - 1
        out_ref = refs[p]; p += 1
        (h_scr, c_scr, mem_scr, csa_scr, clsa_scr, dis_scr, xg_scr) = refs[p:]

        t = pl.program_id(0)

        @pl.when(t == 0)
        def _init():
            h_scr[...] = h_init_ref[...]
            c_scr[...] = c_init_ref[...]
            mem_scr[...] = mem_init_ref[...]
            csa_scr[...] = csa_init_ref[...]
            clsa_scr[...] = clsa_init_ref[...]
            dis_scr[...] = jnp.zeros_like(dis_scr)
            xg_scr[...] = jnp.zeros_like(xg_scr)

        def mm(x, w_ref):
            # bf16 operands on the MXU, f32 accumulation.
            return jnp.dot(x.astype(jnp.bfloat16), w_ref[...],
                           preferred_element_type=jnp.float32)

        # scheduled sampling
        frame = frames_ref[0]                       # (B, F)
        m_t = mask_ref[0]                           # (B, F)
        net = jnp.where(t >= input_length,
                        m_t * frame + (1.0 - m_t) * xg_scr[...],
                        frame)

        mh = mm(net, A_fv_ref)                      # motion highway (B, HD)
        mem = mem_scr[...]
        csa = csa_scr[...]
        clsa = clsa_scr[...]

        def st_lstm_cell(i, x, h, c, m, highway):
            pre = mm(jnp.concatenate([x, h, m], axis=-1), A_gate_refs[i])
            i_t = jax.nn.sigmoid(pre[:, 0 * HD:1 * HD])
            f_t = jax.nn.sigmoid(pre[:, 1 * HD:2 * HD] + FORGET_BIAS)
            g_t = jnp.tanh(pre[:, 2 * HD:3 * HD])
            c_new = f_t * c + i_t * g_t
            i_tp = jax.nn.sigmoid(pre[:, 3 * HD:4 * HD])
            f_tp = jax.nn.sigmoid(pre[:, 4 * HD:5 * HD] + FORGET_BIAS)
            g_tp = jnp.tanh(pre[:, 5 * HD:6 * HD])
            m_new = f_tp * m + i_tp * g_tp
            o_base = pre[:, 6 * HD:7 * HD]
            cm = jnp.concatenate([c_new, m_new], axis=-1)
            o_t = jax.nn.sigmoid(o_base + mm(cm, A_o_refs[i]))
            cell_v = mm(cm, A_wl_refs[i])
            h_new = o_t * jnp.tanh(cell_v) + (1.0 - o_t) * highway
            return h_new, c_new, m_new, h_new

        def enc_dec_gate(i, h):
            h_tmp = mm(h, A_ed_refs[i]) + b_ed_refs[i][...]
            o_t = jax.nn.sigmoid(mm(h, A_go_refs[i]) + b_go_refs[i][...])
            return o_t * h_tmp + (1.0 - o_t) * h

        x_prev = net
        for i in range(L):
            h_i = h_scr[i]
            c_i = c_scr[i]
            if i < L - 1:
                h_i = h_i + clsa + csa              # cloud / cloudless shift add
            h_i, c_i, mem, mh = st_lstm_cell(i, x_prev, h_i, c_i, mem, mh)
            if i < L - 1:
                h_i = enc_dec_gate(i, h_i)
            h_scr[i] = h_i
            c_scr[i] = c_i
            x_prev = h_i

        h_last = x_prev

        @pl.when(t >= 1)
        def _cloud_shift_update():
            trend = h_last - dis_scr[...]
            gen = jnp.maximum(trend, 0.0)           # generate_cloud (clamp min=0)
            dis = jnp.minimum(trend, 0.0)           # disapper_cloud (clamp max=0)
            # TODO(synk): CloudShift module source not provided; gated-scale stand-in.
            csa_scr[...] = jnp.tanh(gen) * cs_ref[...]
            clsa_scr[...] = jnp.tanh(dis) * cls_ref[...]

        dis_scr[...] = h_last
        mem_scr[...] = mem

        x_gen = mm(h_last, A_last_ref)              # (B, F)
        xg_scr[...] = x_gen
        out_ref[0] = x_gen

    return kernel


# ----------------------------------------------------------------------------
# Network forward
# ----------------------------------------------------------------------------
def network_forward(ops, all_frames, mask_true, batch_size, cloud_shift,
                    cloudless_shift, cfg, num_layers, num_hidden, state_key):
    B = batch_size
    L = num_layers
    Hp = cfg.img_height // cfg.patch_size
    Wp = cfg.img_width // cfg.patch_size
    patch_ch = cfg.img_channel * cfg.patch_size ** 2
    F = Hp * Wp * patch_ch
    HD = Hp * Wp * num_hidden[0]
    T = cfg.total_length
    IL = cfg.input_length

    # NCHW -> flattened (h, w, c)-order rows, time-major for per-step DMA.
    frames = jnp.transpose(all_frames, (0, 1, 3, 4, 2)).astype(jnp.float32)
    frames = frames.reshape(B, T, F).transpose(1, 0, 2)            # (T, B, F)
    mask = jnp.transpose(mask_true, (0, 1, 3, 4, 2)).astype(jnp.float32)
    mask = mask.reshape(B, -1, F).transpose(1, 0, 2)               # (maskT, B, F)
    if mask.shape[0] == 0:
        mask = jnp.zeros((1, B, F), jnp.float32)
    mask_T = mask.shape[0]

    def flat_nchw(x):
        return jnp.transpose(x, (0, 2, 3, 1)).astype(jnp.float32).reshape(B, -1)

    cs_w = flat_nchw(cloud_shift)                                  # (B, HD)
    cls_w = flat_nchw(cloudless_shift)

    def xavier_like(k, shape_nchw):
        # deterministic stand-in for nn.init.xavier_normal_ on the state tensor
        b, c, h, wd = shape_nchw
        std = (2.0 / (c * h * wd + b * h * wd)) ** 0.5
        x = std * jax.random.normal(k, shape_nchw, jnp.float32)
        return jnp.transpose(x, (0, 2, 3, 1)).reshape(b, -1)

    skeys = jax.random.split(state_key, L + 4)
    h_init = jnp.stack(
        [xavier_like(skeys[i], (B, num_hidden[i], Hp, Wp)) for i in range(L)])
    c_init = h_init                      # PyTorch reuses the same init tensor
    mem_init = xavier_like(skeys[L], (B, num_hidden[0], Hp, Wp))
    csa_init = xavier_like(skeys[L + 1], (B, num_hidden[0], Hp, Wp))
    clsa_init = xavier_like(skeys[L + 2], (B, num_hidden[0], Hp, Wp))
    # motion_highway / h_t_conv / h_t_conv_offset / mean inits are never read.

    inputs = [frames, mask, cs_w, cls_w, h_init, c_init, mem_init,
              csa_init, clsa_init, ops["A_fv"], ops["A_last"],
              *ops["A_gate"], *ops["A_o"], *ops["A_wl"],
              *ops["A_ed"], *ops["A_go"], *ops["b_ed"], *ops["b_go"]]

    def const_spec(shape):
        nd = len(shape)
        return pl.BlockSpec(shape, lambda t, _nd=nd: (0,) * _nd)

    def mask_index_map(t, _il=IL, _mt=mask_T):
        return (jnp.minimum(jnp.maximum(t - _il, 0), _mt - 1), 0, 0)

    in_specs = []
    for k, x in enumerate(inputs):
        if k == 0:      # frames: sliced per timestep
            in_specs.append(pl.BlockSpec((1, B, F), lambda t: (t, 0, 0)))
        elif k == 1:    # mask: sliced per timestep (clamped index)
            in_specs.append(pl.BlockSpec((1, B, F), mask_index_map))
        else:           # weights / initial states: resident, constant block
            in_specs.append(const_spec(x.shape))

    kernel = make_network_kernel(L, IL, HD)

    out = pl.pallas_call(
        kernel,
        out_shape=jax.ShapeDtypeStruct((T - 1, B, F), jnp.float32),
        grid_spec=pltpu.PrefetchScalarGridSpec(
            num_scalar_prefetch=0,
            grid=(T - 1,),
            in_specs=in_specs,
            out_specs=pl.BlockSpec((1, B, F), lambda t: (t, 0, 0)),
            scratch_shapes=[
                pltpu.VMEM((L, B, HD), jnp.float32),   # h_t
                pltpu.VMEM((L, B, HD), jnp.float32),   # c_t
                pltpu.VMEM((B, HD), jnp.float32),      # mem
                pltpu.VMEM((B, HD), jnp.float32),      # CloudShift (state)
                pltpu.VMEM((B, HD), jnp.float32),      # CloudlessShift (state)
                pltpu.VMEM((B, HD), jnp.float32),      # dis_frames[t-1]
                pltpu.VMEM((B, F), jnp.float32),       # x_gen (scheduled sampling)
            ]),
        compiler_params=pltpu.CompilerParams(
            dimension_semantics=("arbitrary",)),       # sequential over time
    )(*inputs)

    nf = out.reshape(T - 1, B, Hp, Wp, patch_ch)
    nf = jnp.transpose(nf, (1, 0, 4, 2, 3))            # [B, T-1, C, H, W]
    return [nf]


# ----------------------------------------------------------------------------
if __name__ == "__main__":
    key = jax.random.PRNGKey(0)
    cfg = Configs()
    num_layers = 3
    num_hidden = (8, 8, 8)
    B = 2
    patch_ch = cfg.img_channel * cfg.patch_size ** 2      # 16
    Hp = cfg.img_height // cfg.patch_size                 # 4
    Wp = cfg.img_width // cfg.patch_size                  # 4

    k_params, k_states, k_frames, k_mask, k_cs, k_cls = jax.random.split(key, 6)
    params = init_params(k_params, num_layers, num_hidden, cfg)
    ops = prepare_operators(params, cfg, num_layers, num_hidden)

    all_frames = jax.random.normal(
        k_frames, (B, cfg.total_length, patch_ch, Hp, Wp), jnp.float32)
    mask_true = (jax.random.uniform(
        k_mask, (B, cfg.total_length - cfg.input_length - 1, patch_ch, Hp, Wp))
        > 0.5).astype(jnp.float32)
    cloud_shift = jax.random.normal(k_cs, (B, num_hidden[0], Hp, Wp), jnp.float32)
    cloudless_shift = jax.random.normal(k_cls, (B, num_hidden[0], Hp, Wp),
                                        jnp.float32)

    final_frames = network_forward(ops, all_frames, mask_true, B, cloud_shift,
                                   cloudless_shift, cfg, num_layers, num_hidden,
                                   k_states)
    out = jax.block_until_ready(final_frames[0])
    assert out.shape == (B, cfg.total_length - 1, patch_ch, Hp, Wp), out.shape
    assert jnp.all(jnp.isfinite(out))
    print("KERNEL_OK")
</pallas_src>

<mosaic_0001>
module attributes {stable_mosaic.version = 11 : i64} {
  func.func @kernel(%arg0: i32, %arg1: memref<1x2x256xf32, #tpu.memory_space<vmem>>, %arg2: memref<1x2x256xf32, #tpu.memory_space<vmem>>, %arg3: memref<2x128xf32, #tpu.memory_space<vmem>>, %arg4: memref<2x128xf32, #tpu.memory_space<vmem>>, %arg5: memref<3x2x128xf32, #tpu.memory_space<vmem>>, %arg6: memref<3x2x128xf32, #tpu.memory_space<vmem>>, %arg7: memref<2x128xf32, #tpu.memory_space<vmem>>, %arg8: memref<2x128xf32, #tpu.memory_space<vmem>>, %arg9: memref<2x128xf32, #tpu.memory_space<vmem>>, %arg10: memref<256x128xbf16, #tpu.memory_space<vmem>>, %arg11: memref<128x256xbf16, #tpu.memory_space<vmem>>, %arg12: memref<512x896xbf16, #tpu.memory_space<vmem>>, %arg13: memref<384x896xbf16, #tpu.memory_space<vmem>>, %arg14: memref<384x896xbf16, #tpu.memory_space<vmem>>, %arg15: memref<256x128xbf16, #tpu.memory_space<vmem>>, %arg16: memref<256x128xbf16, #tpu.memory_space<vmem>>, %arg17: memref<256x128xbf16, #tpu.memory_space<vmem>>, %arg18: memref<256x128xbf16, #tpu.memory_space<vmem>>, %arg19: memref<256x128xbf16, #tpu.memory_space<vmem>>, %arg20: memref<256x128xbf16, #tpu.memory_space<vmem>>, %arg21: memref<128x128xbf16, #tpu.memory_space<vmem>>, %arg22: memref<128x128xbf16, #tpu.memory_space<vmem>>, %arg23: memref<128x128xbf16, #tpu.memory_space<vmem>>, %arg24: memref<128x128xbf16, #tpu.memory_space<vmem>>, %arg25: memref<1x128xf32, #tpu.memory_space<vmem>>, %arg26: memref<1x128xf32, #tpu.memory_space<vmem>>, %arg27: memref<1x128xf32, #tpu.memory_space<vmem>>, %arg28: memref<1x128xf32, #tpu.memory_space<vmem>>, %arg29: memref<1x2x256xf32, #tpu.memory_space<vmem>>, %arg30: memref<3x2x128xf32, #tpu.memory_space<vmem>>, %arg31: memref<3x2x128xf32, #tpu.memory_space<vmem>>, %arg32: memref<2x128xf32, #tpu.memory_space<vmem>>, %arg33: memref<2x128xf32, #tpu.memory_space<vmem>>, %arg34: memref<2x128xf32, #tpu.memory_space<vmem>>, %arg35: memref<2x128xf32, #tpu.memory_space<vmem>>, %arg36: memref<2x256xf32, #tpu.memory_space<vmem>>) attributes {dimension_semantics = [#tpu.dimension_semantics<arbitrary>], iteration_bounds = array<i64: 3>, scalar_prefetch = 0 : i64, scratch_operands = 7 : i64, tpu.core_type = #tpu.core_type<tc>, window_params = [{transform_indices = @transform_0, window_bounds = array<i64: 1, 2, 256>}, {transform_indices = @transform_1, window_bounds = array<i64: 1, 2, 256>}, {pipeline_mode = #tpu.pipeline_mode<synchronous>, transform_indices = @transform_2, window_bounds = array<i64: 2, 128>}, {pipeline_mode = #tpu.pipeline_mode<synchronous>, transform_indices = @transform_3, window_bounds = array<i64: 2, 128>}, {pipeline_mode = #tpu.pipeline_mode<synchronous>, transform_indices = @transform_4, window_bounds = array<i64: 3, 2, 128>}, {pipeline_mode = #tpu.pipeline_mode<synchronous>, transform_indices = @transform_5, window_bounds = array<i64: 3, 2, 128>}, {pipeline_mode = #tpu.pipeline_mode<synchronous>, transform_indices = @transform_6, window_bounds = array<i64: 2, 128>}, {pipeline_mode = #tpu.pipeline_mode<synchronous>, transform_indices = @transform_7, window_bounds = array<i64: 2, 128>}, {pipeline_mode = #tpu.pipeline_mode<synchronous>, transform_indices = @transform_8, window_bounds = array<i64: 2, 128>}, {pipeline_mode = #tpu.pipeline_mode<synchronous>, transform_indices = @transform_9, window_bounds = array<i64: 256, 128>}, {pipeline_mode = #tpu.pipeline_mode<synchronous>, transform_indices = @transform_10, window_bounds = array<i64: 128, 256>}, {pipeline_mode = #tpu.pipeline_mode<synchronous>, transform_indices = @transform_11, window_bounds = array<i64: 512, 896>}, {pipeline_mode = #tpu.pipeline_mode<synchronous>, transform_indices = @transform_12, window_bounds = array<i64: 384, 896>}, {pipeline_mode = #tpu.pipeline_mode<synchronous>, transform_indices = @transform_13, window_bounds = array<i64: 384, 896>}, {pipeline_mode = #tpu.pipeline_mode<synchronous>, transform_indices = @transform_14, window_bounds = array<i64: 256, 128>}, {pipeline_mode = #tpu.pipeline_mode<synchronous>, transform_indices = @transform_15, window_bounds = array<i64: 256, 128>}, {pipeline_mode = #tpu.pipeline_mode<synchronous>, transform_indices = @transform_16, window_bounds = array<i64: 256, 128>}, {pipeline_mode = #tpu.pipeline_mode<synchronous>, transform_indices = @transform_17, window_bounds = array<i64: 256, 128>}, {pipeline_mode = #tpu.pipeline_mode<synchronous>, transform_indices = @transform_18, window_bounds = array<i64: 256, 128>}, {pipeline_mode = #tpu.pipeline_mode<synchronous>, transform_indices = @transform_19, window_bounds = array<i64: 256, 128>}, {pipeline_mode = #tpu.pipeline_mode<synchronous>, transform_indices = @transform_20, window_bounds = array<i64: 128, 128>}, {pipeline_mode = #tpu.pipeline_mode<synchronous>, transform_indices = @transform_21, window_bounds = array<i64: 128, 128>}, {pipeline_mode = #tpu.pipeline_mode<synchronous>, transform_indices = @transform_22, window_bounds = array<i64: 128, 128>}, {pipeline_mode = #tpu.pipeline_mode<synchronous>, transform_indices = @transform_23, window_bounds = array<i64: 128, 128>}, {pipeline_mode = #tpu.pipeline_mode<synchronous>, transform_indices = @transform_24, window_bounds = array<i64: 1, 128>}, {pipeline_mode = #tpu.pipeline_mode<synchronous>, transform_indices = @transform_25, window_bounds = array<i64: 1, 128>}, {pipeline_mode = #tpu.pipeline_mode<synchronous>, transform_indices = @transform_26, window_bounds = array<i64: 1, 128>}, {pipeline_mode = #tpu.pipeline_mode<synchronous>, transform_indices = @transform_27, window_bounds = array<i64: 1, 128>}, {transform_indices = @transform_28, window_bounds = array<i64: 1, 2, 256>}]} {
    %c0_i32 = arith.constant 0 : i32
    %0 = arith.cmpi eq, %arg0, %c0_i32 : i32
    %1 = arith.extui %0 : i1 to i32
    %c0_i32_0 = arith.constant 0 : i32
    %2 = arith.cmpi ne, %1, %c0_i32_0 : i32
    scf.if %2 {
      %c0_139 = arith.constant 0 : index
      %c0_140 = arith.constant 0 : index
      %c0_141 = arith.constant 0 : index
      %297 = vector.load %arg5[%c0_139, %c0_140, %c0_141] : memref<3x2x128xf32, #tpu.memory_space<vmem>>, vector<3x2x128xf32>
      %c0_142 = arith.constant 0 : index
      %c0_143 = arith.constant 0 : index
      %c0_144 = arith.constant 0 : index
      %298 = vector.load %arg30[%c0_142, %c0_143, %c0_144] : memref<3x2x128xf32, #tpu.memory_space<vmem>>, vector<3x2x128xf32>
      tpu.vector_store %arg30[%c0_142, %c0_143, %c0_144], %297 {strides = array<i32>} : memref<3x2x128xf32, #tpu.memory_space<vmem>>, vector<3x2x128xf32>,
      %c0_145 = arith.constant 0 : index
      %c0_146 = arith.constant 0 : index
      %c0_147 = arith.constant 0 : index
      %299 = vector.load %arg6[%c0_145, %c0_146, %c0_147] : memref<3x2x128xf32, #tpu.memory_space<vmem>>, vector<3x2x128xf32>
      %c0_148 = arith.constant 0 : index
      %c0_149 = arith.constant 0 : index
      %c0_150 = arith.constant 0 : index
      %300 = vector.load %arg31[%c0_148, %c0_149, %c0_150] : memref<3x2x128xf32, #tpu.memory_space<vmem>>, vector<3x2x128xf32>
      tpu.vector_store %arg31[%c0_148, %c0_149, %c0_150], %299 {strides = array<i32>} : memref<3x2x128xf32, #tpu.memory_space<vmem>>, vector<3x2x128xf32>,
      %c0_151 = arith.constant 0 : index
      %c0_152 = arith.constant 0 : index
      %301 = vector.load %arg7[%c0_151, %c0_152] : memref<2x128xf32, #tpu.memory_space<vmem>>, vector<2x128xf32>
      %c0_153 = arith.constant 0 : index
      %c0_154 = arith.constant 0 : index
      %302 = vector.load %arg32[%c0_153, %c0_154] : memref<2x128xf32, #tpu.memory_space<vmem>>, vector<2x128xf32>
      tpu.vector_store %arg32[%c0_153, %c0_154], %301 {strides = array<i32>} : memref<2x128xf32, #tpu.memory_space<vmem>>, vector<2x128xf32>,
      %c0_155 = arith.constant 0 : index
      %c0_156 = arith.constant 0 : index
      %303 = vector.load %arg8[%c0_155, %c0_156] : memref<2x128xf32, #tpu.memory_space<vmem>>, vector<2x128xf32>
      %c0_157 = arith.constant 0 : index
      %c0_158 = arith.constant 0 : index
      %304 = vector.load %arg33[%c0_157, %c0_158] : memref<2x128xf32, #tpu.memory_space<vmem>>, vector<2x128xf32>
      tpu.vector_store %arg33[%c0_157, %c0_158], %303 {strides = array<i32>} : memref<2x128xf32, #tpu.memory_space<vmem>>, vector<2x128xf32>,
      %c0_159 = arith.constant 0 : index
      %c0_160 = arith.constant 0 : index
      %305 = vector.load %arg9[%c0_159, %c0_160] : memref<2x128xf32, #tpu.memory_space<vmem>>, vector<2x128xf32>
      %c0_161 = arith.constant 0 : index
      %c0_162 = arith.constant 0 : index
      %306 = vector.load %arg34[%c0_161, %c0_162] : memref<2x128xf32, #tpu.memory_space<vmem>>, vector<2x128xf32>
      tpu.vector_store %arg34[%c0_161, %c0_162], %305 {strides = array<i32>} : memref<2x128xf32, #tpu.memory_space<vmem>>, vector<2x128xf32>,
      %cst_163 = arith.constant 0.000000e+00 : f32
      %307 = vector.broadcast %cst_163 : f32 to vector<2x128xf32>
      %c0_164 = arith.constant 0 : index
      %c0_165 = arith.constant 0 : index
      %308 = vector.load %arg35[%c0_164, %c0_165] : memref<2x128xf32, #tpu.memory_space<vmem>>, vector<2x128xf32>
      tpu.vector_store %arg35[%c0_164, %c0_165], %307 {strides = array<i32>} : memref<2x128xf32, #tpu.memory_space<vmem>>, vector<2x128xf32>,
      %cst_166 = arith.constant 0.000000e+00 : f32
      %309 = vector.broadcast %cst_166 : f32 to vector<2x256xf32>
      %c0_167 = arith.constant 0 : index
      %c0_168 = arith.constant 0 : index
      %310 = vector.load %arg36[%c0_167, %c0_168] : memref<2x256xf32, #tpu.memory_space<vmem>>, vector<2x256xf32>
      tpu.vector_store %arg36[%c0_167, %c0_168], %309 {strides = array<i32>} : memref<2x256xf32, #tpu.memory_space<vmem>>, vector<2x256xf32>,
    } else {
    }
    %c0 = arith.constant 0 : index
    %c0_1 = arith.constant 0 : index
    %c0_2 = arith.constant 0 : index
    %3 = vector.load %arg1[%c0, %c0_1, %c0_2] : memref<1x2x256xf32, #tpu.memory_space<vmem>>, vector<1x2x256xf32>
    %4 = vector.shape_cast %3 : vector<1x2x256xf32> to vector<2x256xf32>
    %c0_3 = arith.constant 0 : index
    %c0_4 = arith.constant 0 : index
    %c0_5 = arith.constant 0 : index
    %5 = vector.load %arg2[%c0_3, %c0_4, %c0_5] : memref<1x2x256xf32, #tpu.memory_space<vmem>>, vector<1x2x256xf32>
    %6 = vector.shape_cast %5 : vector<1x2x256xf32> to vector<2x256xf32>
    %c2_i32 = arith.constant 2 : i32
    %7 = arith.cmpi sge, %arg0, %c2_i32 : i32
    %8 = arith.mulf %6, %4 : vector<2x256xf32>
    %cst = arith.constant 1.000000e+00 : f32
    %9 = vector.broadcast %cst : f32 to vector<2x256xf32>
    %10 = arith.subf %9, %6 : vector<2x256xf32>
    %c0_6 = arith.constant 0 : index
    %c0_7 = arith.constant 0 : index
    %11 = vector.load %arg36[%c0_6, %c0_7] : memref<2x256xf32, #tpu.memory_space<vmem>>, vector<2x256xf32>
    %12 = arith.mulf %10, %11 : vector<2x256xf32>
    %13 = arith.addf %8, %12 : vector<2x256xf32>
    %14 = arith.select %7, %13, %4 : vector<2x256xf32>
    %15 = arith.truncf %14 : vector<2x256xf32> to vector<2x256xbf16>
    %c0_8 = arith.constant 0 : index
    %c0_9 = arith.constant 0 : index
    %16 = vector.load %arg10[%c0_8, %c0_9] : memref<256x128xbf16, #tpu.memory_space<vmem>>, vector<256x128xbf16>
    %cst_10 = arith.constant dense<0.000000e+00> : vector<2x128xf32>
    %17 = tpu.matmul %15, %16, %cst_10 {dimension_numbers = #tpu.dot_dimension_numbers<[1], [0], [0], [1], [0, 0, 1, 1], [], []>} : vector<2x256xbf16>, vector<256x128xbf16>, vector<2x128xf32> -> vector<2x128xf32>
    %c0_11 = arith.constant 0 : index
    %c0_12 = arith.constant 0 : index
    %18 = vector.load %arg32[%c0_11, %c0_12] : memref<2x128xf32, #tpu.memory_space<vmem>>, vector<2x128xf32>
    %c0_13 = arith.constant 0 : index
    %c0_14 = arith.constant 0 : index
    %19 = vector.load %arg33[%c0_13, %c0_14] : memref<2x128xf32, #tpu.memory_space<vmem>>, vector<2x128xf32>
    %c0_15 = arith.constant 0 : index
    %c0_16 = arith.constant 0 : index
    %20 = vector.load %arg34[%c0_15, %c0_16] : memref<2x128xf32, #tpu.memory_space<vmem>>, vector<2x128xf32>
    %c0_17 = arith.constant 0 : index
    %c0_18 = arith.constant 0 : index
    %c0_19 = arith.constant 0 : index
    %21 = vector.load %arg30[%c0_17, %c0_18, %c0_19] : memref<3x2x128xf32, #tpu.memory_space<vmem>>, vector<1x2x128xf32>
    %22 = vector.shape_cast %21 : vector<1x2x128xf32> to vector<2x128xf32>
    %c0_20 = arith.constant 0 : index
    %c0_21 = arith.constant 0 : index
    %c0_22 = arith.constant 0 : index
    %23 = vector.load %arg31[%c0_20, %c0_21, %c0_22] : memref<3x2x128xf32, #tpu.memory_space<vmem>>, vector<1x2x128xf32>
    %24 = vector.shape_cast %23 : vector<1x2x128xf32> to vector<2x128xf32>
    %25 = arith.addf %22, %20 : vector<2x128xf32>
    %26 = arith.addf %25, %19 : vector<2x128xf32>
    %27 = tpu.concatenate %14, %26, %18 in 1 : vector<2x256xf32>, vector<2x128xf32>, vector<2x128xf32> -> vector<2x512xf32>
    %28 = arith.truncf %27 : vector<2x512xf32> to vector<2x512xbf16>
    %c0_23 = arith.constant 0 : index
    %c0_24 = arith.constant 0 : index
    %29 = vector.load %arg12[%c0_23, %c0_24] : memref<512x896xbf16, #tpu.memory_space<vmem>>, vector<512x896xbf16>
    %cst_25 = arith.constant dense<0.000000e+00> : vector<2x896xf32>
    %30 = tpu.matmul %28, %29, %cst_25 {dimension_numbers = #tpu.dot_dimension_numbers<[1], [0], [0], [1], [0, 0, 1, 1], [], []>} : vector<2x512xbf16>, vector<512x896xbf16>, vector<2x896xf32> -> vector<2x896xf32>
    %31 = vector.extract_strided_slice %30 {offsets = [0, 0], sizes = [2, 128], strides = [1, 1]} : vector<2x896xf32> to vector<2x128xf32>
    %32 = arith.negf %31 : vector<2x128xf32>
    %33 = math.exp %32 : vector<2x128xf32>
    %cst_26 = arith.constant 1.000000e+00 : f32
    %34 = vector.broadcast %cst_26 : f32 to vector<2x128xf32>
    %35 = arith.addf %34, %33 : vector<2x128xf32>
    %36 = arith.divf %34, %35 : vector<2x128xf32>
    %37 = vector.extract_strided_slice %30 {offsets = [0, 128], sizes = [2, 128], strides = [1, 1]} : vector<2x896xf32> to vector<2x128xf32>
    %cst_27 = arith.constant 1.000000e+00 : f32
    %38 = vector.broadcast %cst_27 : f32 to vector<2x128xf32>
    %39 = arith.addf %37, %38 : vector<2x128xf32>
    %40 = arith.negf %39 : vector<2x128xf32>
    %41 = math.exp %40 : vector<2x128xf32>
    %cst_28 = arith.constant 1.000000e+00 : f32
    %42 = vector.broadcast %cst_28 : f32 to vector<2x128xf32>
    %43 = arith.addf %42, %41 : vector<2x128xf32>
    %44 = arith.divf %42, %43 : vector<2x128xf32>
    %45 = vector.extract_strided_slice %30 {offsets = [0, 256], sizes = [2, 128], strides = [1, 1]} : vector<2x896xf32> to vector<2x128xf32>
    %46 = math.tanh %45 : vector<2x128xf32>
    %47 = arith.mulf %44, %24 : vector<2x128xf32>
    %48 = arith.mulf %36, %46 : vector<2x128xf32>
    %49 = arith.addf %47, %48 : vector<2x128xf32>
    %50 = vector.extract_strided_slice %30 {offsets = [0, 384], sizes = [2, 128], strides = [1, 1]} : vector<2x896xf32> to vector<2x128xf32>
    %51 = arith.negf %50 : vector<2x128xf32>
    %52 = math.exp %51 : vector<2x128xf32>
    %cst_29 = arith.constant 1.000000e+00 : f32
    %53 = vector.broadcast %cst_29 : f32 to vector<2x128xf32>
    %54 = arith.addf %53, %52 : vector<2x128xf32>
    %55 = arith.divf %53, %54 : vector<2x128xf32>
    %56 = vector.extract_strided_slice %30 {offsets = [0, 512], sizes = [2, 128], strides = [1, 1]} : vector<2x896xf32> to vector<2x128xf32>
    %cst_30 = arith.constant 1.000000e+00 : f32
    %57 = vector.broadcast %cst_30 : f32 to vector<2x128xf32>
    %58 = arith.addf %56, %57 : vector<2x128xf32>
    %59 = arith.negf %58 : vector<2x128xf32>
    %60 = math.exp %59 : vector<2x128xf32>
    %cst_31 = arith.constant 1.000000e+00 : f32
    %61 = vector.broadcast %cst_31 : f32 to vector<2x128xf32>
    %62 = arith.addf %61, %60 : vector<2x128xf32>
    %63 = arith.divf %61, %62 : vector<2x128xf32>
    %64 = vector.extract_strided_slice %30 {offsets = [0, 640], sizes = [2, 128], strides = [1, 1]} : vector<2x896xf32> to vector<2x128xf32>
    %65 = math.tanh %64 : vector<2x128xf32>
    %66 = arith.mulf %63, %18 : vector<2x128xf32>
    %67 = arith.mulf %55, %65 : vector<2x128xf32>
    %68 = arith.addf %66, %67 : vector<2x128xf32>
    %69 = vector.extract_strided_slice %30 {offsets = [0, 768], sizes = [2, 128], strides = [1, 1]} : vector<2x896xf32> to vector<2x128xf32>
    %70 = tpu.concatenate %49, %68 in 1 : vector<2x128xf32>, vector<2x128xf32> -> vector<2x256xf32>
    %71 = arith.truncf %70 : vector<2x256xf32> to vector<2x256xbf16>
    %c0_32 = arith.constant 0 : index
    %c0_33 = arith.constant 0 : index
    %72 = vector.load %arg15[%c0_32, %c0_33] : memref<256x128xbf16, #tpu.memory_space<vmem>>, vector<256x128xbf16>
    %cst_34 = arith.constant dense<0.000000e+00> : vector<2x128xf32>
    %73 = tpu.matmul %71, %72, %cst_34 {dimension_numbers = #tpu.dot_dimension_numbers<[1], [0], [0], [1], [0, 0, 1, 1], [], []>} : vector<2x256xbf16>, vector<256x128xbf16>, vector<2x128xf32> -> vector<2x128xf32>
    %74 = arith.addf %69, %73 : vector<2x128xf32>
    %75 = arith.negf %74 : vector<2x128xf32>
    %76 = math.exp %75 : vector<2x128xf32>
    %cst_35 = arith.constant 1.000000e+00 : f32
    %77 = vector.broadcast %cst_35 : f32 to vector<2x128xf32>
    %78 = arith.addf %77, %76 : vector<2x128xf32>
    %79 = arith.divf %77, %78 : vector<2x128xf32>
    %80 = arith.truncf %70 : vector<2x256xf32> to vector<2x256xbf16>
    %c0_36 = arith.constant 0 : index
    %c0_37 = arith.constant 0 : index
    %81 = vector.load %arg18[%c0_36, %c0_37] : memref<256x128xbf16, #tpu.memory_space<vmem>>, vector<256x128xbf16>
    %cst_38 = arith.constant dense<0.000000e+00> : vector<2x128xf32>
    %82 = tpu.matmul %80, %81, %cst_38 {dimension_numbers = #tpu.dot_dimension_numbers<[1], [0], [0], [1], [0, 0, 1, 1], [], []>} : vector<2x256xbf16>, vector<256x128xbf16>, vector<2x128xf32> -> vector<2x128xf32>
    %83 = math.tanh %82 : vector<2x128xf32>
    %84 = arith.mulf %79, %83 : vector<2x128xf32>
    %cst_39 = arith.constant 1.000000e+00 : f32
    %85 = vector.broadcast %cst_39 : f32 to vector<2x128xf32>
    %86 = arith.subf %85, %79 : vector<2x128xf32>
    %87 = arith.mulf %86, %17 : vector<2x128xf32>
    %88 = arith.addf %84, %87 : vector<2x128xf32>
    %89 = arith.truncf %88 : vector<2x128xf32> to vector<2x128xbf16>
    %c0_40 = arith.constant 0 : index
    %c0_41 = arith.constant 0 : index
    %90 = vector.load %arg21[%c0_40, %c0_41] : memref<128x128xbf16, #tpu.memory_space<vmem>>, vector<128x128xbf16>
    %cst_42 = arith.constant dense<0.000000e+00> : vector<2x128xf32>
    %91 = tpu.matmul %89, %90, %cst_42 {dimension_numbers = #tpu.dot_dimension_numbers<[1], [0], [0], [1], [0, 0, 1, 1], [], []>} : vector<2x128xbf16>, vector<128x128xbf16>, vector<2x128xf32> -> vector<2x128xf32>
    %c0_43 = arith.constant 0 : index
    %c0_44 = arith.constant 0 : index
    %92 = vector.load %arg25[%c0_43, %c0_44] : memref<1x128xf32, #tpu.memory_space<vmem>>, vector<1x128xf32>
    %93 = vector.broadcast %92 : vector<1x128xf32> to vector<2x128xf32>
    %94 = arith.addf %91, %93 : vector<2x128xf32>
    %95 = arith.truncf %88 : vector<2x128xf32> to vector<2x128xbf16>
    %c0_45 = arith.constant 0 : index
    %c0_46 = arith.constant 0 : index
    %96 = vector.load %arg23[%c0_45, %c0_46] : memref<128x128xbf16, #tpu.memory_space<vmem>>, vector<128x128xbf16>
    %cst_47 = arith.constant dense<0.000000e+00> : vector<2x128xf32>
    %97 = tpu.matmul %95, %96, %cst_47 {dimension_numbers = #tpu.dot_dimension_numbers<[1], [0], [0], [1], [0, 0, 1, 1], [], []>} : vector<2x128xbf16>, vector<128x128xbf16>, vector<2x128xf32> -> vector<2x128xf32>
    %c0_48 = arith.constant 0 : index
    %c0_49 = arith.constant 0 : index
    %98 = vector.load %arg27[%c0_48, %c0_49] : memref<1x128xf32, #tpu.memory_space<vmem>>, vector<1x128xf32>
    %99 = vector.broadcast %98 : vector<1x128xf32> to vector<2x128xf32>
    %100 = arith.addf %97, %99 : vector<2x128xf32>
    %101 = arith.negf %100 : vector<2x128xf32>
    %102 = math.exp %101 : vector<2x128xf32>
    %cst_50 = arith.constant 1.000000e+00 : f32
    %103 = vector.broadcast %cst_50 : f32 to vector<2x128xf32>
    %104 = arith.addf %103, %102 : vector<2x128xf32>
    %105 = arith.divf %103, %104 : vector<2x128xf32>
    %106 = arith.mulf %105, %94 : vector<2x128xf32>
    %cst_51 = arith.constant 1.000000e+00 : f32
    %107 = vector.broadcast %cst_51 : f32 to vector<2x128xf32>
    %108 = arith.subf %107, %105 : vector<2x128xf32>
    %109 = arith.mulf %108, %88 : vector<2x128xf32>
    %110 = arith.addf %106, %109 : vector<2x128xf32>
    %c0_52 = arith.constant 0 : index
    %c0_53 = arith.constant 0 : index
    %c0_54 = arith.constant 0 : index
    %111 = vector.load %arg30[%c0_52, %c0_53, %c0_54] : memref<3x2x128xf32, #tpu.memory_space<vmem>>, vector<1x2x128xf32>
    %112 = vector.shape_cast %111 : vector<1x2x128xf32> to vector<2x128xf32>
    %113 = vector.shape_cast %110 : vector<2x128xf32> to vector<1x2x128xf32>
    tpu.vector_store %arg30[%c0_52, %c0_53, %c0_54], %113 {strides = array<i32>} : memref<3x2x128xf32, #tpu.memory_space<vmem>>, vector<1x2x128xf32>,
    %c0_55 = arith.constant 0 : index
    %c0_56 = arith.constant 0 : index
    %c0_57 = arith.constant 0 : index
    %114 = vector.load %arg31[%c0_55, %c0_56, %c0_57] : memref<3x2x128xf32, #tpu.memory_space<vmem>>, vector<1x2x128xf32>
    %115 = vector.shape_cast %114 : vector<1x2x128xf32> to vector<2x128xf32>
    %116 = vector.shape_cast %49 : vector<2x128xf32> to vector<1x2x128xf32>
    tpu.vector_store %arg31[%c0_55, %c0_56, %c0_57], %116 {strides = array<i32>} : memref<3x2x128xf32, #tpu.memory_space<vmem>>, vector<1x2x128xf32>,
    %c1 = arith.constant 1 : index
    %c0_58 = arith.constant 0 : index
    %c0_59 = arith.constant 0 : index
    %117 = vector.load %arg30[%c1, %c0_58, %c0_59] : memref<3x2x128xf32, #tpu.memory_space<vmem>>, vector<1x2x128xf32>
    %118 = vector.shape_cast %117 : vector<1x2x128xf32> to vector<2x128xf32>
    %c1_60 = arith.constant 1 : index
    %c0_61 = arith.constant 0 : index
    %c0_62 = arith.constant 0 : index
    %119 = vector.load %arg31[%c1_60, %c0_61, %c0_62] : memref<3x2x128xf32, #tpu.memory_space<vmem>>, vector<1x2x128xf32>
    %120 = vector.shape_cast %119 : vector<1x2x128xf32> to vector<2x128xf32>
    %121 = arith.addf %118, %20 : vector<2x128xf32>
    %122 = arith.addf %121, %19 : vector<2x128xf32>
    %123 = tpu.concatenate %110, %122, %68 in 1 : vector<2x128xf32>, vector<2x128xf32>, vector<2x128xf32> -> vector<2x384xf32>
    %124 = arith.truncf %123 : vector<2x384xf32> to vector<2x384xbf16>
    %c0_63 = arith.constant 0 : index
    %c0_64 = arith.constant 0 : index
    %125 = vector.load %arg13[%c0_63, %c0_64] : memref<384x896xbf16, #tpu.memory_space<vmem>>, vector<384x896xbf16>
    %cst_65 = arith.constant dense<0.000000e+00> : vector<2x896xf32>
    %126 = tpu.matmul %124, %125, %cst_65 {dimension_numbers = #tpu.dot_dimension_numbers<[1], [0], [0], [1], [0, 0, 1, 1], [], []>} : vector<2x384xbf16>, vector<384x896xbf16>, vector<2x896xf32> -> vector<2x896xf32>
    %127 = vector.extract_strided_slice %126 {offsets = [0, 0], sizes = [2, 128], strides = [1, 1]} : vector<2x896xf32> to vector<2x128xf32>
    %128 = arith.negf %127 : vector<2x128xf32>
    %129 = math.exp %128 : vector<2x128xf32>
    %cst_66 = arith.constant 1.000000e+00 : f32
    %130 = vector.broadcast %cst_66 : f32 to vector<2x128xf32>
    %131 = arith.addf %130, %129 : vector<2x128xf32>
    %132 = arith.divf %130, %131 : vector<2x128xf32>
    %133 = vector.extract_strided_slice %126 {offsets = [0, 128], sizes = [2, 128], strides = [1, 1]} : vector<2x896xf32> to vector<2x128xf32>
    %cst_67 = arith.constant 1.000000e+00 : f32
    %134 = vector.broadcast %cst_67 : f32 to vector<2x128xf32>
    %135 = arith.addf %133, %134 : vector<2x128xf32>
    %136 = arith.negf %135 : vector<2x128xf32>
    %137 = math.exp %136 : vector<2x128xf32>
    %cst_68 = arith.constant 1.000000e+00 : f32
    %138 = vector.broadcast %cst_68 : f32 to vector<2x128xf32>
    %139 = arith.addf %138, %137 : vector<2x128xf32>
    %140 = arith.divf %138, %139 : vector<2x128xf32>
    %141 = vector.extract_strided_slice %126 {offsets = [0, 256], sizes = [2, 128], strides = [1, 1]} : vector<2x896xf32> to vector<2x128xf32>
    %142 = math.tanh %141 : vector<2x128xf32>
    %143 = arith.mulf %140, %120 : vector<2x128xf32>
    %144 = arith.mulf %132, %142 : vector<2x128xf32>
    %145 = arith.addf %143, %144 : vector<2x128xf32>
    %146 = vector.extract_strided_slice %126 {offsets = [0, 384], sizes = [2, 128], strides = [1, 1]} : vector<2x896xf32> to vector<2x128xf32>
    %147 = arith.negf %146 : vector<2x128xf32>
    %148 = math.exp %147 : vector<2x128xf32>
    %cst_69 = arith.constant 1.000000e+00 : f32
    %149 = vector.broadcast %cst_69 : f32 to vector<2x128xf32>
    %150 = arith.addf %149, %148 : vector<2x128xf32>
    %151 = arith.divf %149, %150 : vector<2x128xf32>
    %152 = vector.extract_strided_slice %126 {offsets = [0, 512], sizes = [2, 128], strides = [1, 1]} : vector<2x896xf32> to vector<2x128xf32>
    %cst_70 = arith.constant 1.000000e+00 : f32
    %153 = vector.broadcast %cst_70 : f32 to vector<2x128xf32>
    %154 = arith.addf %152, %153 : vector<2x128xf32>
    %155 = arith.negf %154 : vector<2x128xf32>
    %156 = math.exp %155 : vector<2x128xf32>
    %cst_71 = arith.constant 1.000000e+00 : f32
    %157 = vector.broadcast %cst_71 : f32 to vector<2x128xf32>
    %158 = arith.addf %157, %156 : vector<2x128xf32>
    %159 = arith.divf %157, %158 : vector<2x128xf32>
    %160 = vector.extract_strided_slice %126 {offsets = [0, 640], sizes = [2, 128], strides = [1, 1]} : vector<2x896xf32> to vector<2x128xf32>
    %161 = math.tanh %160 : vector<2x128xf32>
    %162 = arith.mulf %159, %68 : vector<2x128xf32>
    %163 = arith.mulf %151, %161 : vector<2x128xf32>
    %164 = arith.addf %162, %163 : vector<2x128xf32>
    %165 = vector.extract_strided_slice %126 {offsets = [0, 768], sizes = [2, 128], strides = [1, 1]} : vector<2x896xf32> to vector<2x128xf32>
    %166 = tpu.concatenate %145, %164 in 1 : vector<2x128xf32>, vector<2x128xf32> -> vector<2x256xf32>
    %167 = arith.truncf %166 : vector<2x256xf32> to vector<2x256xbf16>
    %c0_72 = arith.constant 0 : index
    %c0_73 = arith.constant 0 : index
    %168 = vector.load %arg16[%c0_72, %c0_73] : memref<256x128xbf16, #tpu.memory_space<vmem>>, vector<256x128xbf16>
    %cst_74 = arith.constant dense<0.000000e+00> : vector<2x128xf32>
    %169 = tpu.matmul %167, %168, %cst_74 {dimension_numbers = #tpu.dot_dimension_numbers<[1], [0], [0], [1], [0, 0, 1, 1], [], []>} : vector<2x256xbf16>, vector<256x128xbf16>, vector<2x128xf32> -> vector<2x128xf32>
    %170 = arith.addf %165, %169 : vector<2x128xf32>
    %171 = arith.negf %170 : vector<2x128xf32>
    %172 = math.exp %171 : vector<2x128xf32>
    %cst_75 = arith.constant 1.000000e+00 : f32
    %173 = vector.broadcast %cst_75 : f32 to vector<2x128xf32>
    %174 = arith.addf %173, %172 : vector<2x128xf32>
    %175 = arith.divf %173, %174 : vector<2x128xf32>
    %176 = arith.truncf %166 : vector<2x256xf32> to vector<2x256xbf16>
    %c0_76 = arith.constant 0 : index
    %c0_77 = arith.constant 0 : index
    %177 = vector.load %arg19[%c0_76, %c0_77] : memref<256x128xbf16, #tpu.memory_space<vmem>>, vector<256x128xbf16>
    %cst_78 = arith.constant dense<0.000000e+00> : vector<2x128xf32>
    %178 = tpu.matmul %176, %177, %cst_78 {dimension_numbers = #tpu.dot_dimension_numbers<[1], [0], [0], [1], [0, 0, 1, 1], [], []>} : vector<2x256xbf16>, vector<256x128xbf16>, vector<2x128xf32> -> vector<2x128xf32>
    %179 = math.tanh %178 : vector<2x128xf32>
    %180 = arith.mulf %175, %179 : vector<2x128xf32>
    %cst_79 = arith.constant 1.000000e+00 : f32
    %181 = vector.broadcast %cst_79 : f32 to vector<2x128xf32>
    %182 = arith.subf %181, %175 : vector<2x128xf32>
    %183 = arith.mulf %182, %88 : vector<2x128xf32>
    %184 = arith.addf %180, %183 : vector<2x128xf32>
    %185 = arith.truncf %184 : vector<2x128xf32> to vector<2x128xbf16>
    %c0_80 = arith.constant 0 : index
    %c0_81 = arith.constant 0 : index
    %186 = vector.load %arg22[%c0_80, %c0_81] : memref<128x128xbf16, #tpu.memory_space<vmem>>, vector<128x128xbf16>
    %cst_82 = arith.constant dense<0.000000e+00> : vector<2x128xf32>
    %187 = tpu.matmul %185, %186, %cst_82 {dimension_numbers = #tpu.dot_dimension_numbers<[1], [0], [0], [1], [0, 0, 1, 1], [], []>} : vector<2x128xbf16>, vector<128x128xbf16>, vector<2x128xf32> -> vector<2x128xf32>
    %c0_83 = arith.constant 0 : index
    %c0_84 = arith.constant 0 : index
    %188 = vector.load %arg26[%c0_83, %c0_84] : memref<1x128xf32, #tpu.memory_space<vmem>>, vector<1x128xf32>
    %189 = vector.broadcast %188 : vector<1x128xf32> to vector<2x128xf32>
    %190 = arith.addf %187, %189 : vector<2x128xf32>
    %191 = arith.truncf %184 : vector<2x128xf32> to vector<2x128xbf16>
    %c0_85 = arith.constant 0 : index
    %c0_86 = arith.constant 0 : index
    %192 = vector.load %arg24[%c0_85, %c0_86] : memref<128x128xbf16, #tpu.memory_space<vmem>>, vector<128x128xbf16>
    %cst_87 = arith.constant dense<0.000000e+00> : vector<2x128xf32>
    %193 = tpu.matmul %191, %192, %cst_87 {dimension_numbers = #tpu.dot_dimension_numbers<[1], [0], [0], [1], [0, 0, 1, 1], [], []>} : vector<2x128xbf16>, vector<128x128xbf16>, vector<2x128xf32> -> vector<2x128xf32>
    %c0_88 = arith.constant 0 : index
    %c0_89 = arith.constant 0 : index
    %194 = vector.load %arg28[%c0_88, %c0_89] : memref<1x128xf32, #tpu.memory_space<vmem>>, vector<1x128xf32>
    %195 = vector.broadcast %194 : vector<1x128xf32> to vector<2x128xf32>
    %196 = arith.addf %193, %195 : vector<2x128xf32>
    %197 = arith.negf %196 : vector<2x128xf32>
    %198 = math.exp %197 : vector<2x128xf32>
    %cst_90 = arith.constant 1.000000e+00 : f32
    %199 = vector.broadcast %cst_90 : f32 to vector<2x128xf32>
    %200 = arith.addf %199, %198 : vector<2x128xf32>
    %201 = arith.divf %199, %200 : vector<2x128xf32>
    %202 = arith.mulf %201, %190 : vector<2x128xf32>
    %cst_91 = arith.constant 1.000000e+00 : f32
    %203 = vector.broadcast %cst_91 : f32 to vector<2x128xf32>
    %204 = arith.subf %203, %201 : vector<2x128xf32>
    %205 = arith.mulf %204, %184 : vector<2x128xf32>
    %206 = arith.addf %202, %205 : vector<2x128xf32>
    %c1_92 = arith.constant 1 : index
    %c0_93 = arith.constant 0 : index
    %c0_94 = arith.constant 0 : index
    %207 = vector.load %arg30[%c1_92, %c0_93, %c0_94] : memref<3x2x128xf32, #tpu.memory_space<vmem>>, vector<1x2x128xf32>
    %208 = vector.shape_cast %207 : vector<1x2x128xf32> to vector<2x128xf32>
    %209 = vector.shape_cast %206 : vector<2x128xf32> to vector<1x2x128xf32>
    tpu.vector_store %arg30[%c1_92, %c0_93, %c0_94], %209 {strides = array<i32>} : memref<3x2x128xf32, #tpu.memory_space<vmem>>, vector<1x2x128xf32>,
    %c1_95 = arith.constant 1 : index
    %c0_96 = arith.constant 0 : index
    %c0_97 = arith.constant 0 : index
    %210 = vector.load %arg31[%c1_95, %c0_96, %c0_97] : memref<3x2x128xf32, #tpu.memory_space<vmem>>, vector<1x2x128xf32>
    %211 = vector.shape_cast %210 : vector<1x2x128xf32> to vector<2x128xf32>
    %212 = vector.shape_cast %145 : vector<2x128xf32> to vector<1x2x128xf32>
    tpu.vector_store %arg31[%c1_95, %c0_96, %c0_97], %212 {strides = array<i32>} : memref<3x2x128xf32, #tpu.memory_space<vmem>>, vector<1x2x128xf32>,
    %c2 = arith.constant 2 : index
    %c0_98 = arith.constant 0 : index
    %c0_99 = arith.constant 0 : index
    %213 = vector.load %arg30[%c2, %c0_98, %c0_99] : memref<3x2x128xf32, #tpu.memory_space<vmem>>, vector<1x2x128xf32>
    %214 = vector.shape_cast %213 : vector<1x2x128xf32> to vector<2x128xf32>
    %c2_100 = arith.constant 2 : index
    %c0_101 = arith.constant 0 : index
    %c0_102 = arith.constant 0 : index
    %215 = vector.load %arg31[%c2_100, %c0_101, %c0_102] : memref<3x2x128xf32, #tpu.memory_space<vmem>>, vector<1x2x128xf32>
    %216 = vector.shape_cast %215 : vector<1x2x128xf32> to vector<2x128xf32>
    %217 = tpu.concatenate %206, %214, %164 in 1 : vector<2x128xf32>, vector<2x128xf32>, vector<2x128xf32> -> vector<2x384xf32>
    %218 = arith.truncf %217 : vector<2x384xf32> to vector<2x384xbf16>
    %c0_103 = arith.constant 0 : index
    %c0_104 = arith.constant 0 : index
    %219 = vector.load %arg14[%c0_103, %c0_104] : memref<384x896xbf16, #tpu.memory_space<vmem>>, vector<384x896xbf16>
    %cst_105 = arith.constant dense<0.000000e+00> : vector<2x896xf32>
    %220 = tpu.matmul %218, %219, %cst_105 {dimension_numbers = #tpu.dot_dimension_numbers<[1], [0], [0], [1], [0, 0, 1, 1], [], []>} : vector<2x384xbf16>, vector<384x896xbf16>, vector<2x896xf32> -> vector<2x896xf32>
    %221 = vector.extract_strided_slice %220 {offsets = [0, 0], sizes = [2, 128], strides = [1, 1]} : vector<2x896xf32> to vector<2x128xf32>
    %222 = arith.negf %221 : vector<2x128xf32>
    %223 = math.exp %222 : vector<2x128xf32>
    %cst_106 = arith.constant 1.000000e+00 : f32
    %224 = vector.broadcast %cst_106 : f32 to vector<2x128xf32>
    %225 = arith.addf %224, %223 : vector<2x128xf32>
    %226 = arith.divf %224, %225 : vector<2x128xf32>
    %227 = vector.extract_strided_slice %220 {offsets = [0, 128], sizes = [2, 128], strides = [1, 1]} : vector<2x896xf32> to vector<2x128xf32>
    %cst_107 = arith.constant 1.000000e+00 : f32
    %228 = vector.broadcast %cst_107 : f32 to vector<2x128xf32>
    %229 = arith.addf %227, %228 : vector<2x128xf32>
    %230 = arith.negf %229 : vector<2x128xf32>
    %231 = math.exp %230 : vector<2x128xf32>
    %cst_108 = arith.constant 1.000000e+00 : f32
    %232 = vector.broadcast %cst_108 : f32 to vector<2x128xf32>
    %233 = arith.addf %232, %231 : vector<2x128xf32>
    %234 = arith.divf %232, %233 : vector<2x128xf32>
    %235 = vector.extract_strided_slice %220 {offsets = [0, 256], sizes = [2, 128], strides = [1, 1]} : vector<2x896xf32> to vector<2x128xf32>
    %236 = math.tanh %235 : vector<2x128xf32>
    %237 = arith.mulf %234, %216 : vector<2x128xf32>
    %238 = arith.mulf %226, %236 : vector<2x128xf32>
    %239 = arith.addf %237, %238 : vector<2x128xf32>
    %240 = vector.extract_strided_slice %220 {offsets = [0, 384], sizes = [2, 128], strides = [1, 1]} : vector<2x896xf32> to vector<2x128xf32>
    %241 = arith.negf %240 : vector<2x128xf32>
    %242 = math.exp %241 : vector<2x128xf32>
    %cst_109 = arith.constant 1.000000e+00 : f32
    %243 = vector.broadcast %cst_109 : f32 to vector<2x128xf32>
    %244 = arith.addf %243, %242 : vector<2x128xf32>
    %245 = arith.divf %243, %244 : vector<2x128xf32>
    %246 = vector.extract_strided_slice %220 {offsets = [0, 512], sizes = [2, 128], strides = [1, 1]} : vector<2x896xf32> to vector<2x128xf32>
    %cst_110 = arith.constant 1.000000e+00 : f32
    %247 = vector.broadcast %cst_110 : f32 to vector<2x128xf32>
    %248 = arith.addf %246, %247 : vector<2x128xf32>
    %249 = arith.negf %248 : vector<2x128xf32>
    %250 = math.exp %249 : vector<2x128xf32>
    %cst_111 = arith.constant 1.000000e+00 : f32
    %251 = vector.broadcast %cst_111 : f32 to vector<2x128xf32>
    %252 = arith.addf %251, %250 : vector<2x128xf32>
    %253 = arith.divf %251, %252 : vector<2x128xf32>
    %254 = vector.extract_strided_slice %220 {offsets = [0, 640], sizes = [2, 128], strides = [1, 1]} : vector<2x896xf32> to vector<2x128xf32>
    %255 = math.tanh %254 : vector<2x128xf32>
    %256 = arith.mulf %253, %164 : vector<2x128xf32>
    %257 = arith.mulf %245, %255 : vector<2x128xf32>
    %258 = arith.addf %256, %257 : vector<2x128xf32>
    %259 = vector.extract_strided_slice %220 {offsets = [0, 768], sizes = [2, 128], strides = [1, 1]} : vector<2x896xf32> to vector<2x128xf32>
    %260 = tpu.concatenate %239, %258 in 1 : vector<2x128xf32>, vector<2x128xf32> -> vector<2x256xf32>
    %261 = arith.truncf %260 : vector<2x256xf32> to vector<2x256xbf16>
    %c0_112 = arith.constant 0 : index
    %c0_113 = arith.constant 0 : index
    %262 = vector.load %arg17[%c0_112, %c0_113] : memref<256x128xbf16, #tpu.memory_space<vmem>>, vector<256x128xbf16>
    %cst_114 = arith.constant dense<0.000000e+00> : vector<2x128xf32>
    %263 = tpu.matmul %261, %262, %cst_114 {dimension_numbers = #tpu.dot_dimension_numbers<[1], [0], [0], [1], [0, 0, 1, 1], [], []>} : vector<2x256xbf16>, vector<256x128xbf16>, vector<2x128xf32> -> vector<2x128xf32>
    %264 = arith.addf %259, %263 : vector<2x128xf32>
    %265 = arith.negf %264 : vector<2x128xf32>
    %266 = math.exp %265 : vector<2x128xf32>
    %cst_115 = arith.constant 1.000000e+00 : f32
    %267 = vector.broadcast %cst_115 : f32 to vector<2x128xf32>
    %268 = arith.addf %267, %266 : vector<2x128xf32>
    %269 = arith.divf %267, %268 : vector<2x128xf32>
    %270 = arith.truncf %260 : vector<2x256xf32> to vector<2x256xbf16>
    %c0_116 = arith.constant 0 : index
    %c0_117 = arith.constant 0 : index
    %271 = vector.load %arg20[%c0_116, %c0_117] : memref<256x128xbf16, #tpu.memory_space<vmem>>, vector<256x128xbf16>
    %cst_118 = arith.constant dense<0.000000e+00> : vector<2x128xf32>
    %272 = tpu.matmul %270, %271, %cst_118 {dimension_numbers = #tpu.dot_dimension_numbers<[1], [0], [0], [1], [0, 0, 1, 1], [], []>} : vector<2x256xbf16>, vector<256x128xbf16>, vector<2x128xf32> -> vector<2x128xf32>
    %273 = math.tanh %272 : vector<2x128xf32>
    %274 = arith.mulf %269, %273 : vector<2x128xf32>
    %cst_119 = arith.constant 1.000000e+00 : f32
    %275 = vector.broadcast %cst_119 : f32 to vector<2x128xf32>
    %276 = arith.subf %275, %269 : vector<2x128xf32>
    %277 = arith.mulf %276, %184 : vector<2x128xf32>
    %278 = arith.addf %274, %277 : vector<2x128xf32>
    %c2_120 = arith.constant 2 : index
    %c0_121 = arith.constant 0 : index
    %c0_122 = arith.constant 0 : index
    %279 = vector.load %arg30[%c2_120, %c0_121, %c0_122] : memref<3x2x128xf32, #tpu.memory_space<vmem>>, vector<1x2x128xf32>
    %280 = vector.shape_cast %279 : vector<1x2x128xf32> to vector<2x128xf32>
    %281 = vector.shape_cast %278 : vector<2x128xf32> to vector<1x2x128xf32>
    tpu.vector_store %arg30[%c2_120, %c0_121, %c0_122], %281 {strides = array<i32>} : memref<3x2x128xf32, #tpu.memory_space<vmem>>, vector<1x2x128xf32>,
    %c2_123 = arith.constant 2 : index
    %c0_124 = arith.constant 0 : index
    %c0_125 = arith.constant 0 : index
    %282 = vector.load %arg31[%c2_123, %c0_124, %c0_125] : memref<3x2x128xf32, #tpu.memory_space<vmem>>, vector<1x2x128xf32>
    %283 = vector.shape_cast %282 : vector<1x2x128xf32> to vector<2x128xf32>
    %284 = vector.shape_cast %239 : vector<2x128xf32> to vector<1x2x128xf32>
    tpu.vector_store %arg31[%c2_123, %c0_124, %c0_125], %284 {strides = array<i32>} : memref<3x2x128xf32, #tpu.memory_space<vmem>>, vector<1x2x128xf32>,
    %c1_i32 = arith.constant 1 : i32
    %285 = arith.cmpi sge, %arg0, %c1_i32 : i32
    %286 = arith.extui %285 : i1 to i32
    %c0_i32_126 = arith.constant 0 : i32
    %287 = arith.cmpi ne, %286, %c0_i32_126 : i32
    scf.if %287 {
      %c0_139 = arith.constant 0 : index
      %c0_140 = arith.constant 0 : index
      %297 = vector.load %arg35[%c0_139, %c0_140] : memref<2x128xf32, #tpu.memory_space<vmem>>, vector<2x128xf32>
      %298 = arith.subf %278, %297 : vector<2x128xf32>
      %cst_141 = arith.constant 0.000000e+00 : f32
      %299 = vector.broadcast %cst_141 : f32 to vector<2x128xf32>
      %300 = arith.maximumf %298, %299 : vector<2x128xf32>
      %cst_142 = arith.constant 0.000000e+00 : f32
      %301 = vector.broadcast %cst_142 : f32 to vector<2x128xf32>
      %302 = arith.minimumf %298, %301 : vector<2x128xf32>
      %303 = math.tanh %300 : vector<2x128xf32>
      %c0_143 = arith.constant 0 : index
      %c0_144 = arith.constant 0 : index
      %304 = vector.load %arg3[%c0_143, %c0_144] : memref<2x128xf32, #tpu.memory_space<vmem>>, vector<2x128xf32>
      %305 = arith.mulf %303, %304 : vector<2x128xf32>
      %c0_145 = arith.constant 0 : index
      %c0_146 = arith.constant 0 : index
      %306 = vector.load %arg33[%c0_145, %c0_146] : memref<2x128xf32, #tpu.memory_space<vmem>>, vector<2x128xf32>
      tpu.vector_store %arg33[%c0_145, %c0_146], %305 {strides = array<i32>} : memref<2x128xf32, #tpu.memory_space<vmem>>, vector<2x128xf32>,
      %307 = math.tanh %302 : vector<2x128xf32>
      %c0_147 = arith.constant 0 : index
      %c0_148 = arith.constant 0 : index
      %308 = vector.load %arg4[%c0_147, %c0_148] : memref<2x128xf32, #tpu.memory_space<vmem>>, vector<2x128xf32>
      %309 = arith.mulf %307, %308 : vector<2x128xf32>
      %c0_149 = arith.constant 0 : index
      %c0_150 = arith.constant 0 : index
      %310 = vector.load %arg34[%c0_149, %c0_150] : memref<2x128xf32, #tpu.memory_space<vmem>>, vector<2x128xf32>
      tpu.vector_store %arg34[%c0_149, %c0_150], %309 {strides = array<i32>} : memref<2x128xf32, #tpu.memory_space<vmem>>, vector<2x128xf32>,
    } else {
    }
    %c0_127 = arith.constant 0 : index
    %c0_128 = arith.constant 0 : index
    %288 = vector.load %arg35[%c0_127, %c0_128] : memref<2x128xf32, #tpu.memory_space<vmem>>, vector<2x128xf32>
    tpu.vector_store %arg35[%c0_127, %c0_128], %278 {strides = array<i32>} : memref<2x128xf32, #tpu.memory_space<vmem>>, vector<2x128xf32>,
    %c0_129 = arith.constant 0 : index
    %c0_130 = arith.constant 0 : index
    %289 = vector.load %arg32[%c0_129, %c0_130] : memref<2x128xf32, #tpu.memory_space<vmem>>, vector<2x128xf32>
    tpu.vector_store %arg32[%c0_129, %c0_130], %258 {strides = array<i32>} : memref<2x128xf32, #tpu.memory_space<vmem>>, vector<2x128xf32>,
    %290 = arith.truncf %278 : vector<2x128xf32> to vector<2x128xbf16>
    %c0_131 = arith.constant 0 : index
    %c0_132 = arith.constant 0 : index
    %291 = vector.load %arg11[%c0_131, %c0_132] : memref<128x256xbf16, #tpu.memory_space<vmem>>, vector<128x256xbf16>
    %cst_133 = arith.constant dense<0.000000e+00> : vector<2x256xf32>
    %292 = tpu.matmul %290, %291, %cst_133 {dimension_numbers = #tpu.dot_dimension_numbers<[1], [0], [0], [1], [0, 0, 1, 1], [], []>} : vector<2x128xbf16>, vector<128x256xbf16>, vector<2x256xf32> -> vector<2x256xf32>
    %c0_134 = arith.constant 0 : index
    %c0_135 = arith.constant 0 : index
    %293 = vector.load %arg36[%c0_134, %c0_135] : memref<2x256xf32, #tpu.memory_space<vmem>>, vector<2x256xf32>
    tpu.vector_store %arg36[%c0_134, %c0_135], %292 {strides = array<i32>} : memref<2x256xf32, #tpu.memory_space<vmem>>, vector<2x256xf32>,
    %c0_136 = arith.constant 0 : index
    %c0_137 = arith.constant 0 : index
    %c0_138 = arith.constant 0 : index
    %294 = vector.load %arg29[%c0_136, %c0_137, %c0_138] : memref<1x2x256xf32, #tpu.memory_space<vmem>>, vector<1x2x256xf32>
    %295 = vector.shape_cast %294 : vector<1x2x256xf32> to vector<2x256xf32>
    %296 = vector.shape_cast %292 : vector<2x256xf32> to vector<1x2x256xf32>
    tpu.vector_store %arg29[%c0_136, %c0_137, %c0_138], %296 {strides = array<i32>} : memref<1x2x256xf32, #tpu.memory_space<vmem>>, vector<1x2x256xf32>,
    return
  }
  func.func @transform_0(%arg0: i32) -> (i32, i32, i32) {
    %c0_i32 = arith.constant 0 : i32
    %c0_i32_0 = arith.constant 0 : i32
    %c0_i32_1 = arith.constant 0 : i32
    return %arg0, %c0_i32, %c0_i32_0 : i32, i32, i32
  }
  func.func @transform_1(%arg0: i32) -> (i32, i32, i32) {
    %c2_i32 = arith.constant 2 : i32
    %0 = arith.subi %arg0, %c2_i32 : i32
    %c0_i32 = arith.constant 0 : i32
    %1 = arith.maxsi %0, %c0_i32 : i32
    %c0_i32_0 = arith.constant 0 : i32
    %2 = arith.minsi %1, %c0_i32_0 : i32
    %c0_i32_1 = arith.constant 0 : i32
    %c0_i32_2 = arith.constant 0 : i32
    %c0_i32_3 = arith.constant 0 : i32
    return %2, %c0_i32_1, %c0_i32_2 : i32, i32, i32
  }
  func.func @transform_2(%arg0: i32) -> (i32, i32) {
    %c0_i32 = arith.constant 0 : i32
    %c0_i32_0 = arith.constant 0 : i32
    %c0_i32_1 = arith.constant 0 : i32
    return %c0_i32, %c0_i32_0 : i32, i32
  }
  func.func @transform_3(%arg0: i32) -> (i32, i32) {
    %c0_i32 = arith.constant 0 : i32
    %c0_i32_0 = arith.constant 0 : i32
    %c0_i32_1 = arith.constant 0 : i32
    return %c0_i32, %c0_i32_0 : i32, i32
  }
  func.func @transform_4(%arg0: i32) -> (i32, i32, i32) {
    %c0_i32 = arith.constant 0 : i32
    %c0_i32_0 = arith.constant 0 : i32
    %c0_i32_1 = arith.constant 0 : i32
    %c0_i32_2 = arith.constant 0 : i32
    return %c0_i32, %c0_i32_0, %c0_i32_1 : i32, i32, i32
  }
  func.func @transform_5(%arg0: i32) -> (i32, i32, i32) {
    %c0_i32 = arith.constant 0 : i32
    %c0_i32_0 = arith.constant 0 : i32
    %c0_i32_1 = arith.constant 0 : i32
    %c0_i32_2 = arith.constant 0 : i32
    return %c0_i32, %c0_i32_0, %c0_i32_1 : i32, i32, i32
  }
  func.func @transform_6(%arg0: i32) -> (i32, i32) {
    %c0_i32 = arith.constant 0 : i32
    %c0_i32_0 = arith.constant 0 : i32
    %c0_i32_1 = arith.constant 0 : i32
    return %c0_i32, %c0_i32_0 : i32, i32
  }
  func.func @transform_7(%arg0: i32) -> (i32, i32) {
    %c0_i32 = arith.constant 0 : i32
    %c0_i32_0 = arith.constant 0 : i32
    %c0_i32_1 = arith.constant 0 : i32
    return %c0_i32, %c0_i32_0 : i32, i32
  }
  func.func @transform_8(%arg0: i32) -> (i32, i32) {
    %c0_i32 = arith.constant 0 : i32
    %c0_i32_0 = arith.constant 0 : i32
    %c0_i32_1 = arith.constant 0 : i32
    return %c0_i32, %c0_i32_0 : i32, i32
  }
  func.func @transform_9(%arg0: i32) -> (i32, i32) {
    %c0_i32 = arith.constant 0 : i32
    %c0_i32_0 = arith.constant 0 : i32
    %c0_i32_1 = arith.constant 0 : i32
    return %c0_i32, %c0_i32_0 : i32, i32
  }
  func.func @transform_10(%arg0: i32) -> (i32, i32) {
    %c0_i32 = arith.constant 0 : i32
    %c0_i32_0 = arith.constant 0 : i32
    %c0_i32_1 = arith.constant 0 : i32
    return %c0_i32, %c0_i32_0 : i32, i32
  }
  func.func @transform_11(%arg0: i32) -> (i32, i32) {
    %c0_i32 = arith.constant 0 : i32
    %c0_i32_0 = arith.constant 0 : i32
    %c0_i32_1 = arith.constant 0 : i32
    return %c0_i32, %c0_i32_0 : i32, i32
  }
  func.func @transform_12(%arg0: i32) -> (i32, i32) {
    %c0_i32 = arith.constant 0 : i32
    %c0_i32_0 = arith.constant 0 : i32
    %c0_i32_1 = arith.constant 0 : i32
    return %c0_i32, %c0_i32_0 : i32, i32
  }
  func.func @transform_13(%arg0: i32) -> (i32, i32) {
    %c0_i32 = arith.constant 0 : i32
    %c0_i32_0 = arith.constant 0 : i32
    %c0_i32_1 = arith.constant 0 : i32
    return %c0_i32, %c0_i32_0 : i32, i32
  }
  func.func @transform_14(%arg0: i32) -> (i32, i32) {
    %c0_i32 = arith.constant 0 : i32
    %c0_i32_0 = arith.constant 0 : i32
    %c0_i32_1 = arith.constant 0 : i32
    return %c0_i32, %c0_i32_0 : i32, i32
  }
  func.func @transform_15(%arg0: i32) -> (i32, i32) {
    %c0_i32 = arith.constant 0 : i32
    %c0_i32_0 = arith.constant 0 : i32
    %c0_i32_1 = arith.constant 0 : i32
    return %c0_i32, %c0_i32_0 : i32, i32
  }
  func.func @transform_16(%arg0: i32) -> (i32, i32) {
    %c0_i32 = arith.constant 0 : i32
    %c0_i32_0 = arith.constant 0 : i32
    %c0_i32_1 = arith.constant 0 : i32
    return %c0_i32, %c0_i32_0 : i32, i32
  }
  func.func @transform_17(%arg0: i32) -> (i32, i32) {
    %c0_i32 = arith.constant 0 : i32
    %c0_i32_0 = arith.constant 0 : i32
    %c0_i32_1 = arith.constant 0 : i32
    return %c0_i32, %c0_i32_0 : i32, i32
  }
  func.func @transform_18(%arg0: i32) -> (i32, i32) {
    %c0_i32 = arith.constant 0 : i32
    %c0_i32_0 = arith.constant 0 : i32
    %c0_i32_1 = arith.constant 0 : i32
    return %c0_i32, %c0_i32_0 : i32, i32
  }
  func.func @transform_19(%arg0: i32) -> (i32, i32) {
    %c0_i32 = arith.constant 0 : i32
    %c0_i32_0 = arith.constant 0 : i32
    %c0_i32_1 = arith.constant 0 : i32
    return %c0_i32, %c0_i32_0 : i32, i32
  }
  func.func @transform_20(%arg0: i32) -> (i32, i32) {
    %c0_i32 = arith.constant 0 : i32
    %c0_i32_0 = arith.constant 0 : i32
    %c0_i32_1 = arith.constant 0 : i32
    return %c0_i32, %c0_i32_0 : i32, i32
  }
  func.func @transform_21(%arg0: i32) -> (i32, i32) {
    %c0_i32 = arith.constant 0 : i32
    %c0_i32_0 = arith.constant 0 : i32
    %c0_i32_1 = arith.constant 0 : i32
    return %c0_i32, %c0_i32_0 : i32, i32
  }
  func.func @transform_22(%arg0: i32) -> (i32, i32) {
    %c0_i32 = arith.constant 0 : i32
    %c0_i32_0 = arith.constant 0 : i32
    %c0_i32_1 = arith.constant 0 : i32
    return %c0_i32, %c0_i32_0 : i32, i32
  }
  func.func @transform_23(%arg0: i32) -> (i32, i32) {
    %c0_i32 = arith.constant 0 : i32
    %c0_i32_0 = arith.constant 0 : i32
    %c0_i32_1 = arith.constant 0 : i32
    return %c0_i32, %c0_i32_0 : i32, i32
  }
  func.func @transform_24(%arg0: i32) -> (i32, i32) {
    %c0_i32 = arith.constant 0 : i32
    %c0_i32_0 = arith.constant 0 : i32
    %c0_i32_1 = arith.constant 0 : i32
    return %c0_i32, %c0_i32_0 : i32, i32
  }
  func.func @transform_25(%arg0: i32) -> (i32, i32) {
    %c0_i32 = arith.constant 0 : i32
    %c0_i32_0 = arith.constant 0 : i32
    %c0_i32_1 = arith.constant 0 : i32
    return %c0_i32, %c0_i32_0 : i32, i32
  }
  func.func @transform_26(%arg0: i32) -> (i32, i32) {
    %c0_i32 = arith.constant 0 : i32
    %c0_i32_0 = arith.constant 0 : i32
    %c0_i32_1 = arith.constant 0 : i32
    return %c0_i32, %c0_i32_0 : i32, i32
  }
  func.func @transform_27(%arg0: i32) -> (i32, i32) {
    %c0_i32 = arith.constant 0 : i32
    %c0_i32_0 = arith.constant 0 : i32
    %c0_i32_1 = arith.constant 0 : i32
    return %c0_i32, %c0_i32_0 : i32, i32
  }
  func.func @transform_28(%arg0: i32) -> (i32, i32, i32) {
    %c0_i32 = arith.constant 0 : i32
    %c0_i32_0 = arith.constant 0 : i32
    %c0_i32_1 = arith.constant 0 : i32
    return %arg0, %c0_i32, %c0_i32_0 : i32, i32, i32
  }
}

</mosaic_0001>

<llo_original>
// kernel: tpu_custom_call.1
$region0: #{tpu_custom_call.1}
  #allocation0 [shape = 'u32[]', space=smem, size = 0x4, offset = 0x4, fixed_abs, tag = 'smem constant byte address 0x4 - core index']
  #allocation1 [shape = 'u32[72,128]{1,0:T(1,128)}', space=vmem, size = 0x9000, scoped, tag = 'internal scratch']
  #allocation2 [shape = 'f32[3,2,128]{2,1,0:T(2,128)}', space=vmem, size = 0xc00, scoped, tag = 'scratch operand']
  #allocation3 [shape = 'f32[3,2,128]{2,1,0:T(2,128)}', space=vmem, size = 0xc00, scoped, tag = 'scratch operand']
  #allocation4 [shape = 'f32[2,128]{1,0:T(2,128)}', space=vmem, size = 0x400, scoped, tag = 'scratch operand']
  #allocation5 [shape = 'f32[2,128]{1,0:T(2,128)}', space=vmem, size = 0x400, scoped, tag = 'scratch operand']
  #allocation6 [shape = 'f32[2,128]{1,0:T(2,128)}', space=vmem, size = 0x400, scoped, tag = 'scratch operand']
  #allocation7 [shape = 'f32[2,128]{1,0:T(2,128)}', space=vmem, size = 0x400, scoped, tag = 'scratch operand']
  #allocation8 [shape = 'f32[2,256]{1,0:T(2,128)}', space=vmem, size = 0x800, scoped, tag = 'scratch operand']
  %s0 = inlined_call_operand.hbm [shape: f32[4,2,256], index: 0, kind: input, shape index: {}]
  %s1 = inlined_call_operand.hbm [shape: f32[1,2,256], index: 1, kind: input, shape index: {}]
  %s2 = inlined_call_operand.hbm [shape: f32[2,128], index: 2, kind: input, shape index: {}]
  %s3 = inlined_call_operand.vmem [shape: f32[2,128], index: 3, kind: input, shape index: {}]
  %s4 = inlined_call_operand.hbm [shape: f32[3,2,128], index: 4, kind: input, shape index: {}]
  %s5 = inlined_call_operand.hbm [shape: f32[3,2,128], index: 5, kind: input, shape index: {}]
  %s6 = inlined_call_operand.vmem [shape: f32[2,128], index: 6, kind: input, shape index: {}]
  %s7 = inlined_call_operand.vmem [shape: f32[2,128], index: 7, kind: input, shape index: {}]
  %s8 = inlined_call_operand.hbm [shape: f32[2,128], index: 8, kind: input, shape index: {}]
  %s9 = inlined_call_operand.hbm [shape: bf16[256,128], index: 9, kind: input, shape index: {}]
  %s10 = inlined_call_operand.hbm [shape: bf16[128,256], index: 10, kind: input, shape index: {}]
  %s11 = inlined_call_operand.hbm [shape: bf16[512,896], index: 11, kind: input, shape index: {}]
  %s12 = inlined_call_operand.hbm [shape: bf16[384,896], index: 12, kind: input, shape index: {}]
  %s13 = inlined_call_operand.hbm [shape: bf16[384,896], index: 13, kind: input, shape index: {}]
  %s14 = inlined_call_operand.hbm [shape: bf16[256,128], index: 14, kind: input, shape index: {}]
  %s15 = inlined_call_operand.hbm [shape: bf16[256,128], index: 15, kind: input, shape index: {}]
  %s16 = inlined_call_operand.hbm [shape: bf16[256,128], index: 16, kind: input, shape index: {}]
  %s17 = inlined_call_operand.hbm [shape: bf16[256,128], index: 17, kind: input, shape index: {}]
  %s18 = inlined_call_operand.hbm [shape: bf16[256,128], index: 18, kind: input, shape index: {}]
  %s19 = inlined_call_operand.hbm [shape: bf16[256,128], index: 19, kind: input, shape index: {}]
  %s20 = inlined_call_operand.hbm [shape: bf16[128,128], index: 20, kind: input, shape index: {}]
  %s21 = inlined_call_operand.hbm [shape: bf16[128,128], index: 21, kind: input, shape index: {}]
  %s22 = inlined_call_operand.hbm [shape: bf16[128,128], index: 22, kind: input, shape index: {}]
  %s23 = inlined_call_operand.hbm [shape: bf16[128,128], index: 23, kind: input, shape index: {}]
  %s24 = inlined_call_operand.vmem [shape: f32[1,128], index: 24, kind: input, shape index: {}]
  %s25 = inlined_call_operand.vmem [shape: f32[1,128], index: 25, kind: input, shape index: {}]
  %s26 = inlined_call_operand.vmem [shape: f32[1,128], index: 26, kind: input, shape index: {}]
  %s27 = inlined_call_operand.vmem [shape: f32[1,128], index: 27, kind: input, shape index: {}]
  %s28 = inlined_call_operand.hbm [shape: f32[3,2,256], index: 28, kind: output, shape index: {}]
  %s29 = sld [smem:[#allocation0]]
  $region237: #{tpu_custom_call.1} parent=0
    _
  %s31 = ssub.s32 1, %s29
  %s32 = scalar_select 0, %s31, %s29
  $region1: #{tpu_custom_call.1} parent=0
    #allocation9 [shape = 'u8[4096]{0}', space=vmem, size = 0x1000, scoped, tag = 'input window, operand 0']
    #allocation10 [shape = 's32[2]{0}', space=sflag, size = 0x8, scoped, tag = 'scoped memory for tpu_custom_call.1']
    #allocation11 [shape = 's32[2]{0}', space=sflag, size = 0x8, scoped, tag = 'scoped memory for tpu_custom_call.1']
    #allocation12 [shape = 'u8[4096]{0}', space=vmem, size = 0x1000, scoped, tag = 'input window, operand 1']
    #allocation13 [shape = 's32[2]{0}', space=sflag, size = 0x8, scoped, tag = 'scoped memory for tpu_custom_call.1']
    #allocation14 [shape = 'u8[1024]{0}', space=vmem, size = 0x400, scoped, tag = 'input window, operand 2, single buffered']
    #allocation15 [shape = 'u8[3072]{0}', space=vmem, size = 0xc00, scoped, tag = 'input window, operand 4, single buffered']
    #allocation16 [shape = 's32[1]{0}', space=sflag, size = 0x4, scoped, tag = 'scoped memory for tpu_custom_call.1']
    #allocation17 [shape = 'u8[3072]{0}', space=vmem, size = 0xc00, scoped, tag = 'input window, operand 5, single buffered']
    #allocation18 [shape = 'u8[1024]{0}', space=vmem, size = 0x400, scoped, tag = 'input window, operand 8, single buffered']
    #allocation19 [shape = 's32[1]{0}', space=sflag, size = 0x4, scoped, tag = 'scoped memory for tpu_custom_call.1']
    #allocation20 [shape = 'u8[65536]{0}', space=vmem, size = 0x10000, scoped, tag = 'input window, operand 9, single buffered']
    #allocation21 [shape = 'u8[65536]{0}', space=vmem, size = 0x10000, scoped, tag = 'input window, operand 10, single buffered']
    #allocation22 [shape = 's32[1]{0}', space=sflag, size = 0x4, scoped, tag = 'scoped memory for tpu_custom_call.1']
    #allocation23 [shape = 'u8[917504]{0}', space=vmem, size = 0xe0000, scoped, tag = 'input window, operand 11, single buffered']
    #allocation24 [shape = 'u8[688128]{0}', space=vmem, size = 0xa8000, scoped, tag = 'input window, operand 12, single buffered']
    #allocation25 [shape = 's32[1]{0}', space=sflag, size = 0x4, scoped, tag = 'scoped memory for tpu_custom_call.1']
    #allocation26 [shape = 'u8[688128]{0}', space=vmem, size = 0xa8000, scoped, tag = 'input window, operand 13, single buffered']
    #allocation27 [shape = 'u8[65536]{0}', space=vmem, size = 0x10000, scoped, tag = 'input window, operand 14, single buffered']
    #allocation28 [shape = 's32[1]{0}', space=sflag, size = 0x4, scoped, tag = 'scoped memory for tpu_custom_call.1']
    #allocation29 [shape = 'u8[65536]{0}', space=vmem, size = 0x10000, scoped, tag = 'input window, operand 15, single buffered']
    #allocation30 [shape = 'u8[65536]{0}', space=vmem, size = 0x10000, scoped, tag = 'input window, operand 16, single buffered']
    #allocation31 [shape = 's32[1]{0}', space=sflag, size = 0x4, scoped, tag = 'scoped memory for tpu_custom_call.1']
    #allocation32 [shape = 'u8[65536]{0}', space=vmem, size = 0x10000, scoped, tag = 'input window, operand 17, single buffered']
    #allocation33 [shape = 'u8[65536]{0}', space=vmem, size = 0x10000, scoped, tag = 'input window, operand 18, single buffered']
    #allocation34 [shape = 's32[1]{0}', space=sflag, size = 0x4, scoped, tag = 'scoped memory for tpu_custom_call.1']
    #allocation35 [shape = 'u8[65536]{0}', space=vmem, size = 0x10000, scoped, tag = 'input window, operand 19, single buffered']
    #allocation36 [shape = 'u8[32768]{0}', space=vmem, size = 0x8000, scoped, tag = 'input window, operand 20, single buffered']
    #allocation37 [shape = 's32[1]{0}', space=sflag, size = 0x4, scoped, tag = 'scoped memory for tpu_custom_call.1']
    #allocation38 [shape = 'u8[32768]{0}', space=vmem, size = 0x8000, scoped, tag = 'input window, operand 21, single buffered']
    #allocation39 [shape = 'u8[32768]{0}', space=vmem, size = 0x8000, scoped, tag = 'input window, operand 22, single buffered']
    #allocation40 [shape = 's32[1]{0}', space=sflag, size = 0x4, scoped, tag = 'scoped memory for tpu_custom_call.1']
    #allocation41 [shape = 'u8[32768]{0}', space=vmem, size = 0x8000, scoped, tag = 'input window, operand 23, single buffered']
    #allocation42 [shape = 'u8[4096]{0}', space=vmem, size = 0x1000, scoped, tag = 'output window, operand 0']
    %33 = vsyncpa [#allocation10], 0
    %s34 = scalar_lea.sflag [#allocation10], 1
    %35 = vsyncpa %s34, 0
    %36 = vsyncpa [#allocation13], 0
    %s37 = scalar_lea.sflag [#allocation13], 1
    %38 = vsyncpa %s37, 0
    %39 = vsyncpa [#allocation16], 0
    %40 = vsyncpa [#allocation19], 0
    %41 = vsyncpa [#allocation22], 0
    %42 = vsyncpa [#allocation25], 0
    %43 = vsyncpa [#allocation28], 0
    %44 = vsyncpa [#allocation31], 0
    %45 = vsyncpa [#allocation34], 0
    %46 = vsyncpa [#allocation37], 0
    %47 = vsyncpa [#allocation40], 0
    %48 = vsyncpa [#allocation11], 0
    %s49 = scalar_lea.sflag [#allocation11], 1
    %50 = vsyncpa %s49, 0
    loop: start=0, step=1, limit=5
    $region2: #{tpu_custom_call.1} parent=1 // loop_pre_header
      _
    $region3: #{tpu_custom_call.1} parent=1 // loop_header
      %s52 = sphi 0, %s56
      %p53 = scmp.ge.s32.totalorder %s52, 5
      %s62 = sphi 0, %s64
      %s65 = sphi 0, %s62
      %s66 = sphi 0, %s65
      %s82 = sphi 0, %s66
      %s98 = sphi 0, %s100
      %s101 = sphi 0, %s98
      %s102 = sphi 0, %s101
      %s118 = sphi 0, %s102
      %s122 = sphi 0, %s122
      %s124 = sphi 0, %s122
      %s125 = sphi 0, %s124
      %s139 = sphi 0, %s125
      %s143 = sphi 0, %s143
      %s145 = sphi 0, %s143
      %s146 = sphi 0, %s145
      %s160 = sphi 0, %s146
      %s164 = sphi 0, %s164
      %s166 = sphi 0, %s164
      %s167 = sphi 0, %s166
      %s181 = sphi 0, %s167
      %s185 = sphi 0, %s185
      %s187 = sphi 0, %s185
      %s188 = sphi 0, %s187
      %s202 = sphi 0, %s188
      %s206 = sphi 0, %s206
      %s208 = sphi 0, %s206
      %s209 = sphi 0, %s208
      %s223 = sphi 0, %s209
      %s227 = sphi 0, %s227
      %s229 = sphi 0, %s227
      %s230 = sphi 0, %s229
      %s244 = sphi 0, %s230
      %s248 = sphi 0, %s248
      %s250 = sphi 0, %s248
      %s251 = sphi 0, %s250
      %s265 = sphi 0, %s251
      %s269 = sphi 0, %s269
      %s271 = sphi 0, %s269
      %s272 = sphi 0, %s271
      %s286 = sphi 0, %s272
      %s290 = sphi 0, %s290
      %s292 = sphi 0, %s290
      %s293 = sphi 0, %s292
      %s307 = sphi 0, %s293
      %s311 = sphi 0, %s311
      %s313 = sphi 0, %s311
      %s314 = sphi 0, %s313
      %s328 = sphi 0, %s314
      %s332 = sphi 0, %s332
      %s334 = sphi 0, %s332
      %s335 = sphi 0, %s334
      %s349 = sphi 0, %s335
      %s353 = sphi 0, %s353
      %s355 = sphi 0, %s353
      %s356 = sphi 0, %s355
      %s370 = sphi 0, %s356
      %s374 = sphi 0, %s374
      %s376 = sphi 0, %s374
      %s377 = sphi 0, %s376
      %s391 = sphi 0, %s377
      %s395 = sphi 0, %s395
      %s397 = sphi 0, %s395
      %s398 = sphi 0, %s397
      %s412 = sphi 0, %s398
      %s416 = sphi 0, %s416
      %s418 = sphi 0, %s416
      %s419 = sphi 0, %s418
      %s433 = sphi 0, %s419
      %s437 = sphi 0, %s437
      %s439 = sphi 0, %s437
      %s440 = sphi 0, %s439
      %s454 = sphi 0, %s440
      %s458 = sphi 0, %s458
      %s460 = sphi 0, %s458
      %s461 = sphi 0, %s460
      %s475 = sphi 0, %s461
      %s479 = sphi 0, %s479
      %s481 = sphi 0, %s479
      %s482 = sphi 0, %s481
      %s496 = sphi 0, %s482
      %s500 = sphi 0, %s500
      %s502 = sphi 0, %s500
      %s503 = sphi 0, %s502
      %s517 = sphi 0, %s503
      %s521 = sphi 0, %s521
      %s523 = sphi 0, %s521
      %s524 = sphi 0, %s523
      %s538 = sphi 0, %s524
      %s542 = sphi 0, %s542
      %s544 = sphi 0, %s542
      %s545 = sphi 0, %s544
      %s559 = sphi 0, %s545
      %s563 = sphi 0, %s563
      %s565 = sphi 0, %s563
      %s566 = sphi 0, %s565
      %s580 = sphi 0, %s566
      %s584 = sphi 0, %s584
      %s586 = sphi 0, %s584
      %s587 = sphi 0, %s586
      %s601 = sphi 0, %s587
      %s605 = sphi 0, %s605
      %s607 = sphi 0, %s605
      %s608 = sphi 0, %s607
      %s622 = sphi 0, %s608
      %s626 = sphi 0, %s626
      %s628 = sphi 0, %s626
      %s629 = sphi 0, %s628
      %s643 = sphi 0, %s629
      %s647 = sphi 0, %s647
      %s649 = sphi 0, %s647
      %s650 = sphi 0, %s649
      %s664 = sphi 0, %s650
      %s670 = sphi 0, %s672
      %s673 = sphi 0, %s670
      %s674 = sphi 0, %s673
      %s690 = sphi 0, %s674
    $region4: #{tpu_custom_call.1} parent=1 // loop_header_branch
      %55 = sbr.rel (%p53) target = $region8
    $region5: #{tpu_custom_call.1} parent=1 // loop_body
      %s57 = ssub.s32 %s52, 1
      %s58 = ssub.s32 %s52, 2
      %s59 = sadd.s32 %s52, 1
      %s60 = ssub.s32 %s52, %s59
      %p61 = scmp.eq.s32.totalorder %s60, 0
      %s63 = sadd.s32 %s62, 1
      %s64 = scalar_select %p61, %s62, %s63
      %p67 = pneg %p61
      %p68 = scmp.eq.s32.totalorder %s52, 2
      %p69 = por %p67, %p68
      %p70 = scmp.ne.s32.totalorder %s62, %s65
      %p71 = scmp.eq.s32.totalorder %s52, 0
      %p72 = por %p70, %p71
      %p73 = scmp.ne.s32.totalorder %s62, %s65
      %p74 = scmp.eq.s32.totalorder %s57, 2
      %p75 = por %p73, %p74
      %p76 = scmp.ne.s32.totalorder %s65, %s66
      %p77 = scmp.eq.s32.totalorder %s57, 0
      %p78 = por %p76, %p77
      %p79 = scmp.ne.s32.totalorder %s65, %s66
      %p80 = scmp.eq.s32.totalorder %s58, 2
      %p81 = por %p79, %p80
      %p83 = scmp.ne.s32.totalorder %s66, %s82
      %p84 = scmp.eq.s32.totalorder %s58, 0
      %p85 = por %p83, %p84
      %s86 = ssub.s32 %s52, 2
      %p87 = scmp.gt.s32.totalorder %s86, 0
      %s88 = scalar_select %p87, %s86, 0
      %p89 = scmp.lt.s32.totalorder %s88, 0
      %s90 = scalar_select %p89, %s88, 0
      %s91 = ssub.s32 %s59, 2
      %p92 = scmp.gt.s32.totalorder %s91, 0
      %s93 = scalar_select %p92, %s91, 0
      %p94 = scmp.lt.s32.totalorder %s93, 0
      %s95 = scalar_select %p94, %s93, 0
      %s96 = ssub.s32 %s90, %s95
      %p97 = scmp.eq.s32.totalorder %s96, 0
      %s99 = sadd.s32 %s98, 1
      %s100 = scalar_select %p97, %s98, %s99
      %p103 = pneg %p97
      %p104 = scmp.eq.s32.totalorder %s52, 2
      %p105 = por %p103, %p104
      %p106 = scmp.ne.s32.totalorder %s98, %s101
      %p107 = scmp.eq.s32.totalorder %s52, 0
      %p108 = por %p106, %p107
      %p109 = scmp.ne.s32.totalorder %s98, %s101
      %p110 = scmp.eq.s32.totalorder %s57, 2
      %p111 = por %p109, %p110
      %p112 = scmp.ne.s32.totalorder %s101, %s102
      %p113 = scmp.eq.s32.totalorder %s57, 0
      %p114 = por %p112, %p113
      %p115 = scmp.ne.s32.totalorder %s101, %s102
      %p116 = scmp.eq.s32.totalorder %s58, 2
      %p117 = por %p115, %p116
      %p119 = scmp.ne.s32.totalorder %s102, %s118
      %p120 = scmp.eq.s32.totalorder %s58, 0
      %p121 = por %p119, %p120
      %s123 = sadd.s32 %s122, 1
      %p126 = scmp.eq.s32.totalorder %s52, 2
      %p127 = scmp.ne.s32.totalorder %s122, %s124
      %p128 = scmp.eq.s32.totalorder %s52, 0
      %p129 = por %p127, %p128
      %p130 = scmp.ne.s32.totalorder %s122, %s124
      %p131 = scmp.eq.s32.totalorder %s57, 2
      %p132 = por %p130, %p131
      %p133 = scmp.ne.s32.totalorder %s124, %s125
      %p134 = scmp.eq.s32.totalorder %s57, 0
      %p135 = por %p133, %p134
      %p136 = scmp.ne.s32.totalorder %s124, %s125
      %p137 = scmp.eq.s32.totalorder %s58, 2
      %p138 = por %p136, %p137
      %p140 = scmp.ne.s32.totalorder %s125, %s139
      %p141 = scmp.eq.s32.totalorder %s58, 0
      %p142 = por %p140, %p141
      %s144 = sadd.s32 %s143, 1
      %p147 = scmp.eq.s32.totalorder %s52, 2
      %p148 = scmp.ne.s32.totalorder %s143, %s145
      %p149 = scmp.eq.s32.totalorder %s52, 0
      %p150 = por %p148, %p149
      %p151 = scmp.ne.s32.totalorder %s143, %s145
      %p152 = scmp.eq.s32.totalorder %s57, 2
      %p153 = por %p151, %p152
      %p154 = scmp.ne.s32.totalorder %s145, %s146
      %p155 = scmp.eq.s32.totalorder %s57, 0
      %p156 = por %p154, %p155
      %p157 = scmp.ne.s32.totalorder %s145, %s146
      %p158 = scmp.eq.s32.totalorder %s58, 2
      %p159 = por %p157, %p158
      %p161 = scmp.ne.s32.totalorder %s146, %s160
      %p162 = scmp.eq.s32.totalorder %s58, 0
      %p163 = por %p161, %p162
      %s165 = sadd.s32 %s164, 1
      %p168 = scmp.eq.s32.totalorder %s52, 2
      %p169 = scmp.ne.s32.totalorder %s164, %s166
      %p170 = scmp.eq.s32.totalorder %s52, 0
      %p171 = por %p169, %p170
      %p172 = scmp.ne.s32.totalorder %s164, %s166
      %p173 = scmp.eq.s32.totalorder %s57, 2
      %p174 = por %p172, %p173
      %p175 = scmp.ne.s32.totalorder %s166, %s167
      %p176 = scmp.eq.s32.totalorder %s57, 0
      %p177 = por %p175, %p176
      %p178 = scmp.ne.s32.totalorder %s166, %s167
      %p179 = scmp.eq.s32.totalorder %s58, 2
      %p180 = por %p178, %p179
      %p182 = scmp.ne.s32.totalorder %s167, %s181
      %p183 = scmp.eq.s32.totalorder %s58, 0
      %p184 = por %p182, %p183
      %s186 = sadd.s32 %s185, 1
      %p189 = scmp.eq.s32.totalorder %s52, 2
      %p190 = scmp.ne.s32.totalorder %s185, %s187
      %p191 = scmp.eq.s32.totalorder %s52, 0
      %p192 = por %p190, %p191
      %p193 = scmp.ne.s32.totalorder %s185, %s187
      %p194 = scmp.eq.s32.totalorder %s57, 2
      %p195 = por %p193, %p194
      %p196 = scmp.ne.s32.totalorder %s187, %s188
      %p197 = scmp.eq.s32.totalorder %s57, 0
      %p198 = por %p196, %p197
      %p199 = scmp.ne.s32.totalorder %s187, %s188
      %p200 = scmp.eq.s32.totalorder %s58, 2
      %p201 = por %p199, %p200
      %p203 = scmp.ne.s32.totalorder %s188, %s202
      %p204 = scmp.eq.s32.totalorder %s58, 0
      %p205 = por %p203, %p204
      %s207 = sadd.s32 %s206, 1
      %p210 = scmp.eq.s32.totalorder %s52, 2
      %p211 = scmp.ne.s32.totalorder %s206, %s208
      %p212 = scmp.eq.s32.totalorder %s52, 0
      %p213 = por %p211, %p212
      %p214 = scmp.ne.s32.totalorder %s206, %s208
      %p215 = scmp.eq.s32.totalorder %s57, 2
      %p216 = por %p214, %p215
      %p217 = scmp.ne.s32.totalorder %s208, %s209
      %p218 = scmp.eq.s32.totalorder %s57, 0
      %p219 = por %p217, %p218
      %p220 = scmp.ne.s32.totalorder %s208, %s209
      %p221 = scmp.eq.s32.totalorder %s58, 2
      %p222 = por %p220, %p221
      %p224 = scmp.ne.s32.totalorder %s209, %s223
      %p225 = scmp.eq.s32.totalorder %s58, 0
      %p226 = por %p224, %p225
      %s228 = sadd.s32 %s227, 1
      %p231 = scmp.eq.s32.totalorder %s52, 2
      %p232 = scmp.ne.s32.totalorder %s227, %s229
      %p233 = scmp.eq.s32.totalorder %s52, 0
      %p234 = por %p232, %p233
      %p235 = scmp.ne.s32.totalorder %s227, %s229
      %p236 = scmp.eq.s32.totalorder %s57, 2
      %p237 = por %p235, %p236
      %p238 = scmp.ne.s32.totalorder %s229, %s230
      %p239 = scmp.eq.s32.totalorder %s57, 0
      %p240 = por %p238, %p239
      %p241 = scmp.ne.s32.totalorder %s229, %s230
      %p242 = scmp.eq.s32.totalorder %s58, 2
      %p243 = por %p241, %p242
      %p245 = scmp.ne.s32.totalorder %s230, %s244
      %p246 = scmp.eq.s32.totalorder %s58, 0
      %p247 = por %p245, %p246
      %s249 = sadd.s32 %s248, 1
      %p252 = scmp.eq.s32.totalorder %s52, 2
      %p253 = scmp.ne.s32.totalorder %s248, %s250
      %p254 = scmp.eq.s32.totalorder %s52, 0
      %p255 = por %p253, %p254
      %p256 = scmp.ne.s32.totalorder %s248, %s250
      %p257 = scmp.eq.s32.totalorder %s57, 2
      %p258 = por %p256, %p257
      %p259 = scmp.ne.s32.totalorder %s250, %s251
      %p260 = scmp.eq.s32.totalorder %s57, 0
      %p261 = por %p259, %p260
      %p262 = scmp.ne.s32.totalorder %s250, %s251
      %p263 = scmp.eq.s32.totalorder %s58, 2
      %p264 = por %p262, %p263
      %p266 = scmp.ne.s32.totalorder %s251, %s265
      %p267 = scmp.eq.s32.totalorder %s58, 0
      %p268 = por %p266, %p267
      %s270 = sadd.s32 %s269, 1
      %p273 = scmp.eq.s32.totalorder %s52, 2
      %p274 = scmp.ne.s32.totalorder %s269, %s271
      %p275 = scmp.eq.s32.totalorder %s52, 0
      %p276 = por %p274, %p275
      %p277 = scmp.ne.s32.totalorder %s269, %s271
      %p278 = scmp.eq.s32.totalorder %s57, 2
      %p279 = por %p277, %p278
      %p280 = scmp.ne.s32.totalorder %s271, %s272
      %p281 = scmp.eq.s32.totalorder %s57, 0
      %p282 = por %p280, %p281
      %p283 = scmp.ne.s32.totalorder %s271, %s272
      %p284 = scmp.eq.s32.totalorder %s58, 2
      %p285 = por %p283, %p284
      %p287 = scmp.ne.s32.totalorder %s272, %s286
      %p288 = scmp.eq.s32.totalorder %s58, 0
      %p289 = por %p287, %p288
      %s291 = sadd.s32 %s290, 1
      %p294 = scmp.eq.s32.totalorder %s52, 2
      %p295 = scmp.ne.s32.totalorder %s290, %s292
      %p296 = scmp.eq.s32.totalorder %s52, 0
      %p297 = por %p295, %p296
      %p298 = scmp.ne.s32.totalorder %s290, %s292
      %p299 = scmp.eq.s32.totalorder %s57, 2
      %p300 = por %p298, %p299
      %p301 = scmp.ne.s32.totalorder %s292, %s293
      %p302 = scmp.eq.s32.totalorder %s57, 0
      %p303 = por %p301, %p302
      %p304 = scmp.ne.s32.totalorder %s292, %s293
      %p305 = scmp.eq.s32.totalorder %s58, 2
      %p306 = por %p304, %p305
      %p308 = scmp.ne.s32.totalorder %s293, %s307
      %p309 = scmp.eq.s32.totalorder %s58, 0
      %p310 = por %p308, %p309
      %s312 = sadd.s32 %s311, 1
      %p315 = scmp.eq.s32.totalorder %s52, 2
      %p316 = scmp.ne.s32.totalorder %s311, %s313
      %p317 = scmp.eq.s32.totalorder %s52, 0
      %p318 = por %p316, %p317
      %p319 = scmp.ne.s32.totalorder %s311, %s313
      %p320 = scmp.eq.s32.totalorder %s57, 2
      %p321 = por %p319, %p320
      %p322 = scmp.ne.s32.totalorder %s313, %s314
      %p323 = scmp.eq.s32.totalorder %s57, 0
      %p324 = por %p322, %p323
      %p325 = scmp.ne.s32.totalorder %s313, %s314
      %p326 = scmp.eq.s32.totalorder %s58, 2
      %p327 = por %p325, %p326
      %p329 = scmp.ne.s32.totalorder %s314, %s328
      %p330 = scmp.eq.s32.totalorder %s58, 0
      %p331 = por %p329, %p330
      %s333 = sadd.s32 %s332, 1
      %p336 = scmp.eq.s32.totalorder %s52, 2
      %p337 = scmp.ne.s32.totalorder %s332, %s334
      %p338 = scmp.eq.s32.totalorder %s52, 0
      %p339 = por %p337, %p338
      %p340 = scmp.ne.s32.totalorder %s332, %s334
      %p341 = scmp.eq.s32.totalorder %s57, 2
      %p342 = por %p340, %p341
      %p343 = scmp.ne.s32.totalorder %s334, %s335
      %p344 = scmp.eq.s32.totalorder %s57, 0
      %p345 = por %p343, %p344
      %p346 = scmp.ne.s32.totalorder %s334, %s335
      %p347 = scmp.eq.s32.totalorder %s58, 2
      %p348 = por %p346, %p347
      %p350 = scmp.ne.s32.totalorder %s335, %s349
      %p351 = scmp.eq.s32.totalorder %s58, 0
      %p352 = por %p350, %p351
      %s354 = sadd.s32 %s353, 1
      %p357 = scmp.eq.s32.totalorder %s52, 2
      %p358 = scmp.ne.s32.totalorder %s353, %s355
      %p359 = scmp.eq.s32.totalorder %s52, 0
      %p360 = por %p358, %p359
      %p361 = scmp.ne.s32.totalorder %s353, %s355
      %p362 = scmp.eq.s32.totalorder %s57, 2
      %p363 = por %p361, %p362
      %p364 = scmp.ne.s32.totalorder %s355, %s356
      %p365 = scmp.eq.s32.totalorder %s57, 0
      %p366 = por %p364, %p365
      %p367 = scmp.ne.s32.totalorder %s355, %s356
      %p368 = scmp.eq.s32.totalorder %s58, 2
      %p369 = por %p367, %p368
      %p371 = scmp.ne.s32.totalorder %s356, %s370
      %p372 = scmp.eq.s32.totalorder %s58, 0
      %p373 = por %p371, %p372
      %s375 = sadd.s32 %s374, 1
      %p378 = scmp.eq.s32.totalorder %s52, 2
      %p379 = scmp.ne.s32.totalorder %s374, %s376
      %p380 = scmp.eq.s32.totalorder %s52, 0
      %p381 = por %p379, %p380
      %p382 = scmp.ne.s32.totalorder %s374, %s376
      %p383 = scmp.eq.s32.totalorder %s57, 2
      %p384 = por %p382, %p383
      %p385 = scmp.ne.s32.totalorder %s376, %s377
      %p386 = scmp.eq.s32.totalorder %s57, 0
      %p387 = por %p385, %p386
      %p388 = scmp.ne.s32.totalorder %s376, %s377
      %p389 = scmp.eq.s32.totalorder %s58, 2
      %p390 = por %p388, %p389
      %p392 = scmp.ne.s32.totalorder %s377, %s391
      %p393 = scmp.eq.s32.totalorder %s58, 0
      %p394 = por %p392, %p393
      %s396 = sadd.s32 %s395, 1
      %p399 = scmp.eq.s32.totalorder %s52, 2
      %p400 = scmp.ne.s32.totalorder %s395, %s397
      %p401 = scmp.eq.s32.totalorder %s52, 0
      %p402 = por %p400, %p401
      %p403 = scmp.ne.s32.totalorder %s395, %s397
      %p404 = scmp.eq.s32.totalorder %s57, 2
      %p405 = por %p403, %p404
      %p406 = scmp.ne.s32.totalorder %s397, %s398
      %p407 = scmp.eq.s32.totalorder %s57, 0
      %p408 = por %p406, %p407
      %p409 = scmp.ne.s32.totalorder %s397, %s398
      %p410 = scmp.eq.s32.totalorder %s58, 2
      %p411 = por %p409, %p410
      %p413 = scmp.ne.s32.totalorder %s398, %s412
      %p414 = scmp.eq.s32.totalorder %s58, 0
      %p415 = por %p413, %p414
      %s417 = sadd.s32 %s416, 1
      %p420 = scmp.eq.s32.totalorder %s52, 2
      %p421 = scmp.ne.s32.totalorder %s416, %s418
      %p422 = scmp.eq.s32.totalorder %s52, 0
      %p423 = por %p421, %p422
      %p424 = scmp.ne.s32.totalorder %s416, %s418
      %p425 = scmp.eq.s32.totalorder %s57, 2
      %p426 = por %p424, %p425
      %p427 = scmp.ne.s32.totalorder %s418, %s419
      %p428 = scmp.eq.s32.totalorder %s57, 0
      %p429 = por %p427, %p428
      %p430 = scmp.ne.s32.totalorder %s418, %s419
      %p431 = scmp.eq.s32.totalorder %s58, 2
      %p432 = por %p430, %p431
      %p434 = scmp.ne.s32.totalorder %s419, %s433
      %p435 = scmp.eq.s32.totalorder %s58, 0
      %p436 = por %p434, %p435
      %s438 = sadd.s32 %s437, 1
      %p441 = scmp.eq.s32.totalorder %s52, 2
      %p442 = scmp.ne.s32.totalorder %s437, %s439
      %p443 = scmp.eq.s32.totalorder %s52, 0
      %p444 = por %p442, %p443
      %p445 = scmp.ne.s32.totalorder %s437, %s439
      %p446 = scmp.eq.s32.totalorder %s57, 2
      %p447 = por %p445, %p446
      %p448 = scmp.ne.s32.totalorder %s439, %s440
      %p449 = scmp.eq.s32.totalorder %s57, 0
      %p450 = por %p448, %p449
      %p451 = scmp.ne.s32.totalorder %s439, %s440
      %p452 = scmp.eq.s32.totalorder %s58, 2
      %p453 = por %p451, %p452
      %p455 = scmp.ne.s32.totalorder %s440, %s454
      %p456 = scmp.eq.s32.totalorder %s58, 0
      %p457 = por %p455, %p456
      %s459 = sadd.s32 %s458, 1
      %p462 = scmp.eq.s32.totalorder %s52, 2
      %p463 = scmp.ne.s32.totalorder %s458, %s460
      %p464 = scmp.eq.s32.totalorder %s52, 0
      %p465 = por %p463, %p464
      %p466 = scmp.ne.s32.totalorder %s458, %s460
      %p467 = scmp.eq.s32.totalorder %s57, 2
      %p468 = por %p466, %p467
      %p469 = scmp.ne.s32.totalorder %s460, %s461
      %p470 = scmp.eq.s32.totalorder %s57, 0
      %p471 = por %p469, %p470
      %p472 = scmp.ne.s32.totalorder %s460, %s461
      %p473 = scmp.eq.s32.totalorder %s58, 2
      %p474 = por %p472, %p473
      %p476 = scmp.ne.s32.totalorder %s461, %s475
      %p477 = scmp.eq.s32.totalorder %s58, 0
      %p478 = por %p476, %p477
      %s480 = sadd.s32 %s479, 1
      %p483 = scmp.eq.s32.totalorder %s52, 2
      %p484 = scmp.ne.s32.totalorder %s479, %s481
      %p485 = scmp.eq.s32.totalorder %s52, 0
      %p486 = por %p484, %p485
      %p487 = scmp.ne.s32.totalorder %s479, %s481
      %p488 = scmp.eq.s32.totalorder %s57, 2
      %p489 = por %p487, %p488
      %p490 = scmp.ne.s32.totalorder %s481, %s482
      %p491 = scmp.eq.s32.totalorder %s57, 0
      %p492 = por %p490, %p491
      %p493 = scmp.ne.s32.totalorder %s481, %s482
      %p494 = scmp.eq.s32.totalorder %s58, 2
      %p495 = por %p493, %p494
      %p497 = scmp.ne.s32.totalorder %s482, %s496
      %p498 = scmp.eq.s32.totalorder %s58, 0
      %p499 = por %p497, %p498
      %s501 = sadd.s32 %s500, 1
      %p504 = scmp.eq.s32.totalorder %s52, 2
      %p505 = scmp.ne.s32.totalorder %s500, %s502
      %p506 = scmp.eq.s32.totalorder %s52, 0
      %p507 = por %p505, %p506
      %p508 = scmp.ne.s32.totalorder %s500, %s502
      %p509 = scmp.eq.s32.totalorder %s57, 2
      %p510 = por %p508, %p509
      %p511 = scmp.ne.s32.totalorder %s502, %s503
      %p512 = scmp.eq.s32.totalorder %s57, 0
      %p513 = por %p511, %p512
      %p514 = scmp.ne.s32.totalorder %s502, %s503
      %p515 = scmp.eq.s32.totalorder %s58, 2
      %p516 = por %p514, %p515
      %p518 = scmp.ne.s32.totalorder %s503, %s517
      %p519 = scmp.eq.s32.totalorder %s58, 0
      %p520 = por %p518, %p519
      %s522 = sadd.s32 %s521, 1
      %p525 = scmp.eq.s32.totalorder %s52, 2
      %p526 = scmp.ne.s32.totalorder %s521, %s523
      %p527 = scmp.eq.s32.totalorder %s52, 0
      %p528 = por %p526, %p527
      %p529 = scmp.ne.s32.totalorder %s521, %s523
      %p530 = scmp.eq.s32.totalorder %s57, 2
      %p531 = por %p529, %p530
      %p532 = scmp.ne.s32.totalorder %s523, %s524
      %p533 = scmp.eq.s32.totalorder %s57, 0
      %p534 = por %p532, %p533
      %p535 = scmp.ne.s32.totalorder %s523, %s524
      %p536 = scmp.eq.s32.totalorder %s58, 2
      %p537 = por %p535, %p536
      %p539 = scmp.ne.s32.totalorder %s524, %s538
      %p540 = scmp.eq.s32.totalorder %s58, 0
      %p541 = por %p539, %p540
      %s543 = sadd.s32 %s542, 1
      %p546 = scmp.eq.s32.totalorder %s52, 2
      %p547 = scmp.ne.s32.totalorder %s542, %s544
      %p548 = scmp.eq.s32.totalorder %s52, 0
      %p549 = por %p547, %p548
      %p550 = scmp.ne.s32.totalorder %s542, %s544
      %p551 = scmp.eq.s32.totalorder %s57, 2
      %p552 = por %p550, %p551
      %p553 = scmp.ne.s32.totalorder %s544, %s545
      %p554 = scmp.eq.s32.totalorder %s57, 0
      %p555 = por %p553, %p554
      %p556 = scmp.ne.s32.totalorder %s544, %s545
      %p557 = scmp.eq.s32.totalorder %s58, 2
      %p558 = por %p556, %p557
      %p560 = scmp.ne.s32.totalorder %s545, %s559
      %p561 = scmp.eq.s32.totalorder %s58, 0
      %p562 = por %p560, %p561
      %s564 = sadd.s32 %s563, 1
      %p567 = scmp.eq.s32.totalorder %s52, 2
      %p568 = scmp.ne.s32.totalorder %s563, %s565
      %p569 = scmp.eq.s32.totalorder %s52, 0
      %p570 = por %p568, %p569
      %p571 = scmp.ne.s32.totalorder %s563, %s565
      %p572 = scmp.eq.s32.totalorder %s57, 2
      %p573 = por %p571, %p572
      %p574 = scmp.ne.s32.totalorder %s565, %s566
      %p575 = scmp.eq.s32.totalorder %s57, 0
      %p576 = por %p574, %p575
      %p577 = scmp.ne.s32.totalorder %s565, %s566
      %p578 = scmp.eq.s32.totalorder %s58, 2
      %p579 = por %p577, %p578
      %p581 = scmp.ne.s32.totalorder %s566, %s580
      %p582 = scmp.eq.s32.totalorder %s58, 0
      %p583 = por %p581, %p582
      %s585 = sadd.s32 %s584, 1
      %p588 = scmp.eq.s32.totalorder %s52, 2
      %p589 = scmp.ne.s32.totalorder %s584, %s586
      %p590 = scmp.eq.s32.totalorder %s52, 0
      %p591 = por %p589, %p590
      %p592 = scmp.ne.s32.totalorder %s584, %s586
      %p593 = scmp.eq.s32.totalorder %s57, 2
      %p594 = por %p592, %p593
      %p595 = scmp.ne.s32.totalorder %s586, %s587
      %p596 = scmp.eq.s32.totalorder %s57, 0
      %p597 = por %p595, %p596
      %p598 = scmp.ne.s32.totalorder %s586, %s587
      %p599 = scmp.eq.s32.totalorder %s58, 2
      %p600 = por %p598, %p599
      %p602 = scmp.ne.s32.totalorder %s587, %s601
      %p603 = scmp.eq.s32.totalorder %s58, 0
      %p604 = por %p602, %p603
      %s606 = sadd.s32 %s605, 1
      %p609 = scmp.eq.s32.totalorder %s52, 2
      %p610 = scmp.ne.s32.totalorder %s605, %s607
      %p611 = scmp.eq.s32.totalorder %s52, 0
      %p612 = por %p610, %p611
      %p613 = scmp.ne.s32.totalorder %s605, %s607
      %p614 = scmp.eq.s32.totalorder %s57, 2
      %p615 = por %p613, %p614
      %p616 = scmp.ne.s32.totalorder %s607, %s608
      %p617 = scmp.eq.s32.totalorder %s57, 0
      %p618 = por %p616, %p617
      %p619 = scmp.ne.s32.totalorder %s607, %s608
      %p620 = scmp.eq.s32.totalorder %s58, 2
      %p621 = por %p619, %p620
      %p623 = scmp.ne.s32.totalorder %s608, %s622
      %p624 = scmp.eq.s32.totalorder %s58, 0
      %p625 = por %p623, %p624
      %s627 = sadd.s32 %s626, 1
      %p630 = scmp.eq.s32.totalorder %s52, 2
      %p631 = scmp.ne.s32.totalorder %s626, %s628
      %p632 = scmp.eq.s32.totalorder %s52, 0
      %p633 = por %p631, %p632
      %p634 = scmp.ne.s32.totalorder %s626, %s628
      %p635 = scmp.eq.s32.totalorder %s57, 2
      %p636 = por %p634, %p635
      %p637 = scmp.ne.s32.totalorder %s628, %s629
      %p638 = scmp.eq.s32.totalorder %s57, 0
      %p639 = por %p637, %p638
      %p640 = scmp.ne.s32.totalorder %s628, %s629
      %p641 = scmp.eq.s32.totalorder %s58, 2
      %p642 = por %p640, %p641
      %p644 = scmp.ne.s32.totalorder %s629, %s643
      %p645 = scmp.eq.s32.totalorder %s58, 0
      %p646 = por %p644, %p645
      %s648 = sadd.s32 %s647, 1
      %p651 = scmp.eq.s32.totalorder %s52, 2
      %p652 = scmp.ne.s32.totalorder %s647, %s649
      %p653 = scmp.eq.s32.totalorder %s52, 0
      %p654 = por %p652, %p653
      %p655 = scmp.ne.s32.totalorder %s647, %s649
      %p656 = scmp.eq.s32.totalorder %s57, 2
      %p657 = por %p655, %p656
      %p658 = scmp.ne.s32.totalorder %s649, %s650
      %p659 = scmp.eq.s32.totalorder %s57, 0
      %p660 = por %p658, %p659
      %p661 = scmp.ne.s32.totalorder %s649, %s650
      %p662 = scmp.eq.s32.totalorder %s58, 2
      %p663 = por %p661, %p662
      %p665 = scmp.ne.s32.totalorder %s650, %s664
      %p666 = scmp.eq.s32.totalorder %s58, 0
      %p667 = por %p665, %p666
      %s668 = ssub.s32 %s52, %s59
      %p669 = scmp.eq.s32.totalorder %s668, 0
      %s671 = sadd.s32 %s670, 1
      %s672 = scalar_select %p669, %s670, %s671
      %p675 = pneg %p669
      %p676 = scmp.eq.s32.totalorder %s52, 2
      %p677 = por %p675, %p676
      %p678 = scmp.ne.s32.totalorder %s670, %s673
      %p679 = scmp.eq.s32.totalorder %s52, 0
      %p680 = por %p678, %p679
      %p681 = scmp.ne.s32.totalorder %s670, %s673
      %p682 = scmp.eq.s32.totalorder %s57, 2
      %p683 = por %p681, %p682
      %p684 = scmp.ne.s32.totalorder %s673, %s674
      %p685 = scmp.eq.s32.totalorder %s57, 0
      %p686 = por %p684, %p685
      %p687 = scmp.ne.s32.totalorder %s673, %s674
      %p688 = scmp.eq.s32.totalorder %s58, 2
      %p689 = por %p687, %p688
      %p691 = scmp.ne.s32.totalorder %s674, %s690
      %p692 = scmp.eq.s32.totalorder %s58, 0
      %p693 = por %p691, %p692
      %p694 = scmp.le.s32.totalorder 1, %s52
      %p695 = scmp.lt.s32.totalorder %s52, 4
      %p696 = pnand %p694, %p695
      %p697 = pneg %p696
      // Predicated region
      $region9: #{tpu_custom_call.1} parent=5 // pred_check
        _
      $region10: #{tpu_custom_call.1} parent=5 // pred_check_branch
        %699 = sbr.rel (%p696) target = $region12
      $region11: #{tpu_custom_call.1} parent=5 // pred_region
        %s700 = ssub.s32 %s52, 1
        // Predicated region
        $region13: #{tpu_custom_call.1} parent=11 // pred_check
          %p701 = pneg %p135
        $region14: #{tpu_custom_call.1} parent=11 // pred_check_branch
          %703 = sbr.rel (%p701) target = $region16
        $region15: #{tpu_custom_call.1} parent=11 // pred_region
          %705 = vsyncadd [#allocation13], 0
          %s707 = sshll.u32 %s2, 4
          %s708 = int_to_ptr.hbm [resolvable:$true] %s707
          %s709 = sshll.u32 [#allocation14], 4
          %s710 = int_to_ptr.vmem [resolvable:$true] %s709
          %712 = dma.hbm_to_vmem [thread:$0]  %s708, 32, %s710, [#allocation13]
        $region16: #{tpu_custom_call.1} parent=11 // pred_fallthru
          _
        // Predicated region
        $region17: #{tpu_custom_call.1} parent=11 // pred_check
          %p713 = pneg %p156
        $region18: #{tpu_custom_call.1} parent=11 // pred_check_branch
          %715 = sbr.rel (%p713) target = $region20
        $region19: #{tpu_custom_call.1} parent=11 // pred_region
          _
        $region20: #{tpu_custom_call.1} parent=11 // pred_fallthru
          _
        // Predicated region
        $region21: #{tpu_custom_call.1} parent=11 // pred_check
          %p716 = pneg %p177
        $region22: #{tpu_custom_call.1} parent=11 // pred_check_branch
          %718 = sbr.rel (%p716) target = $region24
        $region23: #{tpu_custom_call.1} parent=11 // pred_region
          %720 = vsyncadd [#allocation16], 0
          %s721 = sshll.u32 %s4, 4
          %s722 = int_to_ptr.hbm [resolvable:$true] %s721
          %s723 = sshll.u32 [#allocation15], 4
          %s724 = int_to_ptr.vmem [resolvable:$true] %s723
          %729 = dma.hbm_to_vmem [thread:$0]  %s722, 96, %s724, [#allocation16], 32, 32, 2
        $region24: #{tpu_custom_call.1} parent=11 // pred_fallthru
          _
        // Predicated region
        $region25: #{tpu_custom_call.1} parent=11 // pred_check
          %p730 = pneg %p198
        $region26: #{tpu_custom_call.1} parent=11 // pred_check_branch
          %732 = sbr.rel (%p730) target = $region28
        $region27: #{tpu_custom_call.1} parent=11 // pred_region
          %734 = vsyncadd [#allocation16], 0
          %s735 = sshll.u32 %s5, 4
          %s736 = int_to_ptr.hbm [resolvable:$true] %s735
          %s737 = sshll.u32 [#allocation17], 4
          %s738 = int_to_ptr.vmem [resolvable:$true] %s737
          %743 = dma.hbm_to_vmem [thread:$0]  %s736, 96, %s738, [#allocation16], 32, 32, 2
        $region28: #{tpu_custom_call.1} parent=11 // pred_fallthru
          _
        // Predicated region
        $region29: #{tpu_custom_call.1} parent=11 // pred_check
          %p744 = pneg %p219
        $region30: #{tpu_custom_call.1} parent=11 // pred_check_branch
          %746 = sbr.rel (%p744) target = $region32
        $region31: #{tpu_custom_call.1} parent=11 // pred_region
          _
        $region32: #{tpu_custom_call.1} parent=11 // pred_fallthru
          _
        // Predicated region
        $region33: #{tpu_custom_call.1} parent=11 // pred_check
          %p747 = pneg %p240
        $region34: #{tpu_custom_call.1} parent=11 // pred_check_branch
          %749 = sbr.rel (%p747) target = $region36
        $region35: #{tpu_custom_call.1} parent=11 // pred_region
          _
        $region36: #{tpu_custom_call.1} parent=11 // pred_fallthru
          _
        // Predicated region
        $region37: #{tpu_custom_call.1} parent=11 // pred_check
          %p750 = pneg %p261
        $region38: #{tpu_custom_call.1} parent=11 // pred_check_branch
          %752 = sbr.rel (%p750) target = $region40
        $region39: #{tpu_custom_call.1} parent=11 // pred_region
          %754 = vsyncadd [#allocation19], 0
          %s756 = sshll.u32 %s8, 4
          %s757 = int_to_ptr.hbm [resolvable:$true] %s756
          %s758 = sshll.u32 [#allocation18], 4
          %s759 = int_to_ptr.vmem [resolvable:$true] %s758
          %761 = dma.hbm_to_vmem [thread:$0]  %s757, 32, %s759, [#allocation19]
        $region40: #{tpu_custom_call.1} parent=11 // pred_fallthru
          _
        // Predicated region
        $region41: #{tpu_custom_call.1} parent=11 // pred_check
          %p762 = pneg %p282
        $region42: #{tpu_custom_call.1} parent=11 // pred_check_branch
          %764 = sbr.rel (%p762) target = $region44
        $region43: #{tpu_custom_call.1} parent=11 // pred_region
          %766 = vsyncadd [#allocation19], 0
          %s767 = sshll.u32 %s9, 4
          %s768 = int_to_ptr.hbm [resolvable:$true] %s767
          %s769 = sshll.u32 [#allocation20], 4
          %s770 = int_to_ptr.vmem [resolvable:$true] %s769
          %775 = dma.hbm_to_vmem [thread:$0]  %s768, 2048, %s770, [#allocation19], 64, 64, 4
        $region44: #{tpu_custom_call.1} parent=11 // pred_fallthru
          _
        // Predicated region
        $region45: #{tpu_custom_call.1} parent=11 // pred_check
          %p776 = pneg %p303
        $region46: #{tpu_custom_call.1} parent=11 // pred_check_branch
          %778 = sbr.rel (%p776) target = $region48
        $region47: #{tpu_custom_call.1} parent=11 // pred_region
          %780 = vsyncadd [#allocation22], 0
          %s781 = sshll.u32 %s10, 4
          %s782 = int_to_ptr.hbm [resolvable:$true] %s781
          %s783 = sshll.u32 [#allocation21], 4
          %s784 = int_to_ptr.vmem [resolvable:$true] %s783
          %789 = dma.hbm_to_vmem [thread:$0]  %s782, 2048, %s784, [#allocation22], 128, 128, 8
        $region48: #{tpu_custom_call.1} parent=11 // pred_fallthru
          _
        // Predicated region
        $region49: #{tpu_custom_call.1} parent=11 // pred_check
          %p790 = pneg %p324
        $region50: #{tpu_custom_call.1} parent=11 // pred_check_branch
          %792 = sbr.rel (%p790) target = $region52
        $region51: #{tpu_custom_call.1} parent=11 // pred_region
          %794 = vsyncadd [#allocation22], 0
          %s795 = sshll.u32 %s11, 4
          %s796 = int_to_ptr.hbm [resolvable:$true] %s795
          %s797 = sshll.u32 [#allocation23], 4
          %s798 = int_to_ptr.vmem [resolvable:$true] %s797
          %803 = dma.hbm_to_vmem [thread:$0]  %s796, 28672, %s798, [#allocation22], 448, 448, 28
        $region52: #{tpu_custom_call.1} parent=11 // pred_fallthru
          _
        // Predicated region
        $region53: #{tpu_custom_call.1} parent=11 // pred_check
          %p804 = pneg %p345
        $region54: #{tpu_custom_call.1} parent=11 // pred_check_branch
          %806 = sbr.rel (%p804) target = $region56
        $region55: #{tpu_custom_call.1} parent=11 // pred_region
          %808 = vsyncadd [#allocation25], 0
          %s809 = sshll.u32 %s12, 4
          %s810 = int_to_ptr.hbm [resolvable:$true] %s809
          %s811 = sshll.u32 [#allocation24], 4
          %s812 = int_to_ptr.vmem [resolvable:$true] %s811
          %817 = dma.hbm_to_vmem [thread:$0]  %s810, 21504, %s812, [#allocation25], 448, 448, 28
        $region56: #{tpu_custom_call.1} parent=11 // pred_fallthru
          _
        // Predicated region
        $region57: #{tpu_custom_call.1} parent=11 // pred_check
          %p818 = pneg %p366
        $region58: #{tpu_custom_call.1} parent=11 // pred_check_branch
          %820 = sbr.rel (%p818) target = $region60
        $region59: #{tpu_custom_call.1} parent=11 // pred_region
          %822 = vsyncadd [#allocation25], 0
          %s823 = sshll.u32 %s13, 4
          %s824 = int_to_ptr.hbm [resolvable:$true] %s823
          %s825 = sshll.u32 [#allocation26], 4
          %s826 = int_to_ptr.vmem [resolvable:$true] %s825
          %831 = dma.hbm_to_vmem [thread:$0]  %s824, 21504, %s826, [#allocation25], 448, 448, 28
        $region60: #{tpu_custom_call.1} parent=11 // pred_fallthru
          _
        // Predicated region
        $region61: #{tpu_custom_call.1} parent=11 // pred_check
          %p832 = pneg %p387
        $region62: #{tpu_custom_call.1} parent=11 // pred_check_branch
          %834 = sbr.rel (%p832) target = $region64
        $region63: #{tpu_custom_call.1} parent=11 // pred_region
          %836 = vsyncadd [#allocation28], 0
          %s837 = sshll.u32 %s14, 4
          %s838 = int_to_ptr.hbm [resolvable:$true] %s837
          %s839 = sshll.u32 [#allocation27], 4
          %s840 = int_to_ptr.vmem [resolvable:$true] %s839
          %845 = dma.hbm_to_vmem [thread:$0]  %s838, 2048, %s840, [#allocation28], 64, 64, 4
        $region64: #{tpu_custom_call.1} parent=11 // pred_fallthru
          _
        // Predicated region
        $region65: #{tpu_custom_call.1} parent=11 // pred_check
          %p846 = pneg %p408
        $region66: #{tpu_custom_call.1} parent=11 // pred_check_branch
          %848 = sbr.rel (%p846) target = $region68
        $region67: #{tpu_custom_call.1} parent=11 // pred_region
          %850 = vsyncadd [#allocation28], 0
          %s851 = sshll.u32 %s15, 4
          %s852 = int_to_ptr.hbm [resolvable:$true] %s851
          %s853 = sshll.u32 [#allocation29], 4
          %s854 = int_to_ptr.vmem [resolvable:$true] %s853
          %859 = dma.hbm_to_vmem [thread:$0]  %s852, 2048, %s854, [#allocation28], 64, 64, 4
        $region68: #{tpu_custom_call.1} parent=11 // pred_fallthru
          _
        // Predicated region
        $region69: #{tpu_custom_call.1} parent=11 // pred_check
          %p860 = pneg %p429
        $region70: #{tpu_custom_call.1} parent=11 // pred_check_branch
          %862 = sbr.rel (%p860) target = $region72
        $region71: #{tpu_custom_call.1} parent=11 // pred_region
          %864 = vsyncadd [#allocation31], 0
          %s865 = sshll.u32 %s16, 4
          %s866 = int_to_ptr.hbm [resolvable:$true] %s865
          %s867 = sshll.u32 [#allocation30], 4
          %s868 = int_to_ptr.vmem [resolvable:$true] %s867
          %873 = dma.hbm_to_vmem [thread:$0]  %s866, 2048, %s868, [#allocation31], 64, 64, 4
        $region72: #{tpu_custom_call.1} parent=11 // pred_fallthru
          _
        // Predicated region
        $region73: #{tpu_custom_call.1} parent=11 // pred_check
          %p874 = pneg %p450
        $region74: #{tpu_custom_call.1} parent=11 // pred_check_branch
          %876 = sbr.rel (%p874) target = $region76
        $region75: #{tpu_custom_call.1} parent=11 // pred_region
          %878 = vsyncadd [#allocation31], 0
          %s879 = sshll.u32 %s17, 4
          %s880 = int_to_ptr.hbm [resolvable:$true] %s879
          %s881 = sshll.u32 [#allocation32], 4
          %s882 = int_to_ptr.vmem [resolvable:$true] %s881
          %887 = dma.hbm_to_vmem [thread:$0]  %s880, 2048, %s882, [#allocation31], 64, 64, 4
        $region76: #{tpu_custom_call.1} parent=11 // pred_fallthru
          _
        // Predicated region
        $region77: #{tpu_custom_call.1} parent=11 // pred_check
          %p888 = pneg %p471
        $region78: #{tpu_custom_call.1} parent=11 // pred_check_branch
          %890 = sbr.rel (%p888) target = $region80
        $region79: #{tpu_custom_call.1} parent=11 // pred_region
          %892 = vsyncadd [#allocation34], 0
          %s893 = sshll.u32 %s18, 4
          %s894 = int_to_ptr.hbm [resolvable:$true] %s893
          %s895 = sshll.u32 [#allocation33], 4
          %s896 = int_to_ptr.vmem [resolvable:$true] %s895
          %901 = dma.hbm_to_vmem [thread:$0]  %s894, 2048, %s896, [#allocation34], 64, 64, 4
        $region80: #{tpu_custom_call.1} parent=11 // pred_fallthru
          _
        // Predicated region
        $region81: #{tpu_custom_call.1} parent=11 // pred_check
          %p902 = pneg %p492
        $region82: #{tpu_custom_call.1} parent=11 // pred_check_branch
          %904 = sbr.rel (%p902) target = $region84
        $region83: #{tpu_custom_call.1} parent=11 // pred_region
          %906 = vsyncadd [#allocation34], 0
          %s907 = sshll.u32 %s19, 4
          %s908 = int_to_ptr.hbm [resolvable:$true] %s907
          %s909 = sshll.u32 [#allocation35], 4
          %s910 = int_to_ptr.vmem [resolvable:$true] %s909
          %915 = dma.hbm_to_vmem [thread:$0]  %s908, 2048, %s910, [#allocation34], 64, 64, 4
        $region84: #{tpu_custom_call.1} parent=11 // pred_fallthru
          _
        // Predicated region
        $region85: #{tpu_custom_call.1} parent=11 // pred_check
          %p916 = pneg %p513
        $region86: #{tpu_custom_call.1} parent=11 // pred_check_branch
          %918 = sbr.rel (%p916) target = $region88
        $region87: #{tpu_custom_call.1} parent=11 // pred_region
          %920 = vsyncadd [#allocation37], 0
          %s921 = sshll.u32 %s20, 4
          %s922 = int_to_ptr.hbm [resolvable:$true] %s921
          %s923 = sshll.u32 [#allocation36], 4
          %s924 = int_to_ptr.vmem [resolvable:$true] %s923
          %929 = dma.hbm_to_vmem [thread:$0]  %s922, 1024, %s924, [#allocation37], 64, 64, 4
        $region88: #{tpu_custom_call.1} parent=11 // pred_fallthru
          _
        // Predicated region
        $region89: #{tpu_custom_call.1} parent=11 // pred_check
          %p930 = pneg %p534
        $region90: #{tpu_custom_call.1} parent=11 // pred_check_branch
          %932 = sbr.rel (%p930) target = $region92
        $region91: #{tpu_custom_call.1} parent=11 // pred_region
          %934 = vsyncadd [#allocation37], 0
          %s935 = sshll.u32 %s21, 4
          %s936 = int_to_ptr.hbm [resolvable:$true] %s935
          %s937 = sshll.u32 [#allocation38], 4
          %s938 = int_to_ptr.vmem [resolvable:$true] %s937
          %943 = dma.hbm_to_vmem [thread:$0]  %s936, 1024, %s938, [#allocation37], 64, 64, 4
        $region92: #{tpu_custom_call.1} parent=11 // pred_fallthru
          _
        // Predicated region
        $region93: #{tpu_custom_call.1} parent=11 // pred_check
          %p944 = pneg %p555
        $region94: #{tpu_custom_call.1} parent=11 // pred_check_branch
          %946 = sbr.rel (%p944) target = $region96
        $region95: #{tpu_custom_call.1} parent=11 // pred_region
          %948 = vsyncadd [#allocation40], 0
          %s949 = sshll.u32 %s22, 4
          %s950 = int_to_ptr.hbm [resolvable:$true] %s949
          %s951 = sshll.u32 [#allocation39], 4
          %s952 = int_to_ptr.vmem [resolvable:$true] %s951
          %957 = dma.hbm_to_vmem [thread:$0]  %s950, 1024, %s952, [#allocation40], 64, 64, 4
        $region96: #{tpu_custom_call.1} parent=11 // pred_fallthru
          _
        // Predicated region
        $region97: #{tpu_custom_call.1} parent=11 // pred_check
          %p958 = pneg %p576
        $region98: #{tpu_custom_call.1} parent=11 // pred_check_branch
          %960 = sbr.rel (%p958) target = $region100
        $region99: #{tpu_custom_call.1} parent=11 // pred_region
          %962 = vsyncadd [#allocation40], 0
          %s963 = sshll.u32 %s23, 4
          %s964 = int_to_ptr.hbm [resolvable:$true] %s963
          %s965 = sshll.u32 [#allocation41], 4
          %s966 = int_to_ptr.vmem [resolvable:$true] %s965
          %971 = dma.hbm_to_vmem [thread:$0]  %s964, 1024, %s966, [#allocation40], 64, 64, 4
        $region100: #{tpu_custom_call.1} parent=11 // pred_fallthru
          _
        // Predicated region
        $region101: #{tpu_custom_call.1} parent=11 // pred_check
          %p972 = pneg %p597
        $region102: #{tpu_custom_call.1} parent=11 // pred_check_branch
          %974 = sbr.rel (%p972) target = $region104
        $region103: #{tpu_custom_call.1} parent=11 // pred_region
          _
        $region104: #{tpu_custom_call.1} parent=11 // pred_fallthru
          _
        // Predicated region
        $region105: #{tpu_custom_call.1} parent=11 // pred_check
          %p975 = pneg %p618
        $region106: #{tpu_custom_call.1} parent=11 // pred_check_branch
          %977 = sbr.rel (%p975) target = $region108
        $region107: #{tpu_custom_call.1} parent=11 // pred_region
          _
        $region108: #{tpu_custom_call.1} parent=11 // pred_fallthru
          _
        // Predicated region
        $region109: #{tpu_custom_call.1} parent=11 // pred_check
          %p978 = pneg %p639
        $region110: #{tpu_custom_call.1} parent=11 // pred_check_branch
          %980 = sbr.rel (%p978) target = $region112
        $region111: #{tpu_custom_call.1} parent=11 // pred_region
          _
        $region112: #{tpu_custom_call.1} parent=11 // pred_fallthru
          _
        // Predicated region
        $region113: #{tpu_custom_call.1} parent=11 // pred_check
          %p981 = pneg %p660
        $region114: #{tpu_custom_call.1} parent=11 // pred_check_branch
          %983 = sbr.rel (%p981) target = $region116
        $region115: #{tpu_custom_call.1} parent=11 // pred_region
          _
        $region116: #{tpu_custom_call.1} parent=11 // pred_fallthru
          _
      $region12: #{tpu_custom_call.1} parent=5 // pred_fallthru
        _
      %p984 = scmp.lt.s32.totalorder %s52, 3
      // Predicated region
      $region117: #{tpu_custom_call.1} parent=5 // pred_check
        %p985 = pneg %p984
      $region118: #{tpu_custom_call.1} parent=5 // pred_check_branch
        %987 = sbr.rel (%p985) target = $region120
      $region119: #{tpu_custom_call.1} parent=5 // pred_region
        // Predicated region
        $region121: #{tpu_custom_call.1} parent=119 // pred_check
          %p988 = pneg %p72
        $region122: #{tpu_custom_call.1} parent=119 // pred_check_branch
          %990 = sbr.rel (%p988) target = $region124
        $region123: #{tpu_custom_call.1} parent=119 // pred_region
          %s991 = sand.u32 %s62, 1
          %s992 = scalar_lea.sflag [#allocation10], %s991
          %s993 = sand.u32 %s62, 1
          %s994 = smul.addr %s993, 4
          %s995 = scalar_lea.vmem [#allocation9], %s994
          %997 = vsyncadd %s992, 0
          %s998 = smul.addr %s52, 2
          %s999 = smul.addr %s998, 2
          %s1000 = scalar_lea.hbm %s0, %s999
          %s1002 = sshll.u32 %s1000, 4
          %s1003 = int_to_ptr.hbm [resolvable:$true] %s1002
          %s1004 = sshll.u32 %s995, 4
          %s1005 = int_to_ptr.vmem [resolvable:$true] %s1004
          %1007 = dma.hbm_to_vmem [thread:$0]  %s1003, 64, %s1005, %s992
        $region124: #{tpu_custom_call.1} parent=119 // pred_fallthru
          _
        // Predicated region
        $region125: #{tpu_custom_call.1} parent=119 // pred_check
          %p1008 = pneg %p108
        $region126: #{tpu_custom_call.1} parent=119 // pred_check_branch
          %1010 = sbr.rel (%p1008) target = $region128
        $region127: #{tpu_custom_call.1} parent=119 // pred_region
          %s1011 = sand.u32 %s52, 1
          %s1012 = scalar_lea.sflag [#allocation13], %s1011
          %s1013 = sand.u32 %s98, 1
          %s1014 = smul.addr %s1013, 4
          %s1015 = scalar_lea.vmem [#allocation12], %s1014
          %s1016 = ssub.s32 %s52, 2
          %p1017 = scmp.gt.s32.totalorder %s1016, 0
          %s1018 = scalar_select %p1017, %s1016, 0
          %p1019 = scmp.lt.s32.totalorder %s1018, 0
          %s1020 = scalar_select %p1019, %s1018, 0
          %1022 = vsyncadd %s1012, 0
          %s1023 = smul.addr %s1020, 2
          %s1024 = smul.addr %s1023, 2
          %s1025 = scalar_lea.hbm %s1, %s1024
          %s1027 = sshll.u32 %s1025, 4
          %s1028 = int_to_ptr.hbm [resolvable:$true] %s1027
          %s1029 = sshll.u32 %s1015, 4
          %s1030 = int_to_ptr.vmem [resolvable:$true] %s1029
          %1032 = dma.hbm_to_vmem [thread:$0]  %s1028, 64, %s1030, %s1012
        $region128: #{tpu_custom_call.1} parent=119 // pred_fallthru
          _
      $region120: #{tpu_custom_call.1} parent=5 // pred_fallthru
        _
      %p1033 = scmp.le.s32.totalorder 1, %s52
      %p1034 = scmp.lt.s32.totalorder %s52, 4
      %p1035 = pnand %p1033, %p1034
      %p1036 = pneg %p1035
      // Predicated region
      $region129: #{tpu_custom_call.1} parent=5 // pred_check
        _
      $region130: #{tpu_custom_call.1} parent=5 // pred_check_branch
        %1038 = sbr.rel (%p1035) target = $region132
      $region131: #{tpu_custom_call.1} parent=5 // pred_region
        %s1039 = ssub.s32 %s52, 1
        %s1040 = sand.u32 %s65, 1
        %s1041 = scalar_lea.sflag [#allocation10], %s1040
        %s1042 = sand.u32 %s65, 1
        %s1043 = smul.addr %s1042, 4
        %s1044 = scalar_lea.vmem [#allocation9], %s1043
        // Predicated region
        $region133: #{tpu_custom_call.1} parent=131 // pred_check
          %p1045 = pneg %p78
        $region134: #{tpu_custom_call.1} parent=131 // pred_check_branch
          %1047 = sbr.rel (%p1045) target = $region136
        $region135: #{tpu_custom_call.1} parent=131 // pred_region
          %1049 = dma.done %s1041, 64
        $region136: #{tpu_custom_call.1} parent=131 // pred_fallthru
          _
        %s1050 = sand.u32 %s57, 1
        %s1051 = scalar_lea.sflag [#allocation13], %s1050
        %s1052 = sand.u32 %s101, 1
        %s1053 = smul.addr %s1052, 4
        %s1054 = scalar_lea.vmem [#allocation12], %s1053
        // Predicated region
        $region137: #{tpu_custom_call.1} parent=131 // pred_check
          %p1055 = pneg %p114
        $region138: #{tpu_custom_call.1} parent=131 // pred_check_branch
          %1057 = sbr.rel (%p1055) target = $region140
        $region139: #{tpu_custom_call.1} parent=131 // pred_region
          %1059 = dma.done %s1051, 64
        $region140: #{tpu_custom_call.1} parent=131 // pred_fallthru
          _
        // Predicated region
        $region141: #{tpu_custom_call.1} parent=131 // pred_check
          %p1060 = pneg %p135
        $region142: #{tpu_custom_call.1} parent=131 // pred_check_branch
          %1062 = sbr.rel (%p1060) target = $region144
        $region143: #{tpu_custom_call.1} parent=131 // pred_region
          %1064 = dma.done [#allocation13], 32
        $region144: #{tpu_custom_call.1} parent=131 // pred_fallthru
          _
        // Predicated region
        $region145: #{tpu_custom_call.1} parent=131 // pred_check
          %p1065 = pneg %p177
        $region146: #{tpu_custom_call.1} parent=131 // pred_check_branch
          %1067 = sbr.rel (%p1065) target = $region148
        $region147: #{tpu_custom_call.1} parent=131 // pred_region
          %1069 = dma.done [#allocation16], 96
        $region148: #{tpu_custom_call.1} parent=131 // pred_fallthru
          _
        // Predicated region
        $region149: #{tpu_custom_call.1} parent=131 // pred_check
          %p1070 = pneg %p198
        $region150: #{tpu_custom_call.1} parent=131 // pred_check_branch
          %1072 = sbr.rel (%p1070) target = $region152
        $region151: #{tpu_custom_call.1} parent=131 // pred_region
          %1074 = dma.done [#allocation16], 96
        $region152: #{tpu_custom_call.1} parent=131 // pred_fallthru
          _
        // Predicated region
        $region153: #{tpu_custom_call.1} parent=131 // pred_check
          %p1075 = pneg %p261
        $region154: #{tpu_custom_call.1} parent=131 // pred_check_branch
          %1077 = sbr.rel (%p1075) target = $region156
        $region155: #{tpu_custom_call.1} parent=131 // pred_region
          %1079 = dma.done [#allocation19], 32
        $region156: #{tpu_custom_call.1} parent=131 // pred_fallthru
          _
        // Predicated region
        $region157: #{tpu_custom_call.1} parent=131 // pred_check
          %p1080 = pneg %p282
        $region158: #{tpu_custom_call.1} parent=131 // pred_check_branch
          %1082 = sbr.rel (%p1080) target = $region160
        $region159: #{tpu_custom_call.1} parent=131 // pred_region
          %1084 = dma.done [#allocation19], 2048
        $region160: #{tpu_custom_call.1} parent=131 // pred_fallthru
          _
        // Predicated region
        $region161: #{tpu_custom_call.1} parent=131 // pred_check
          %p1085 = pneg %p303
        $region162: #{tpu_custom_call.1} parent=131 // pred_check_branch
          %1087 = sbr.rel (%p1085) target = $region164
        $region163: #{tpu_custom_call.1} parent=131 // pred_region
          %1089 = dma.done [#allocation22], 2048
        $region164: #{tpu_custom_call.1} parent=131 // pred_fallthru
          _
        // Predicated region
        $region165: #{tpu_custom_call.1} parent=131 // pred_check
          %p1090 = pneg %p324
        $region166: #{tpu_custom_call.1} parent=131 // pred_check_branch
          %1092 = sbr.rel (%p1090) target = $region168
        $region167: #{tpu_custom_call.1} parent=131 // pred_region
          %1094 = dma.done [#allocation22], 28672
        $region168: #{tpu_custom_call.1} parent=131 // pred_fallthru
          _
        // Predicated region
        $region169: #{tpu_custom_call.1} parent=131 // pred_check
          %p1095 = pneg %p345
        $region170: #{tpu_custom_call.1} parent=131 // pred_check_branch
          %1097 = sbr.rel (%p1095) target = $region172
        $region171: #{tpu_custom_call.1} parent=131 // pred_region
          %1099 = dma.done [#allocation25], 21504
        $region172: #{tpu_custom_call.1} parent=131 // pred_fallthru
          _
        // Predicated region
        $region173: #{tpu_custom_call.1} parent=131 // pred_check
          %p1100 = pneg %p366
        $region174: #{tpu_custom_call.1} parent=131 // pred_check_branch
          %1102 = sbr.rel (%p1100) target = $region176
        $region175: #{tpu_custom_call.1} parent=131 // pred_region
          %1104 = dma.done [#allocation25], 21504
        $region176: #{tpu_custom_call.1} parent=131 // pred_fallthru
          _
        // Predicated region
        $region177: #{tpu_custom_call.1} parent=131 // pred_check
          %p1105 = pneg %p387
        $region178: #{tpu_custom_call.1} parent=131 // pred_check_branch
          %1107 = sbr.rel (%p1105) target = $region180
        $region179: #{tpu_custom_call.1} parent=131 // pred_region
          %1109 = dma.done [#allocation28], 2048
        $region180: #{tpu_custom_call.1} parent=131 // pred_fallthru
          _
        // Predicated region
        $region181: #{tpu_custom_call.1} parent=131 // pred_check
          %p1110 = pneg %p408
        $region182: #{tpu_custom_call.1} parent=131 // pred_check_branch
          %1112 = sbr.rel (%p1110) target = $region184
        $region183: #{tpu_custom_call.1} parent=131 // pred_region
          %1114 = dma.done [#allocation28], 2048
        $region184: #{tpu_custom_call.1} parent=131 // pred_fallthru
          _
        // Predicated region
        $region185: #{tpu_custom_call.1} parent=131 // pred_check
          %p1115 = pneg %p429
        $region186: #{tpu_custom_call.1} parent=131 // pred_check_branch
          %1117 = sbr.rel (%p1115) target = $region188
        $region187: #{tpu_custom_call.1} parent=131 // pred_region
          %1119 = dma.done [#allocation31], 2048
        $region188: #{tpu_custom_call.1} parent=131 // pred_fallthru
          _
        // Predicated region
        $region189: #{tpu_custom_call.1} parent=131 // pred_check
          %p1120 = pneg %p450
        $region190: #{tpu_custom_call.1} parent=131 // pred_check_branch
          %1122 = sbr.rel (%p1120) target = $region192
        $region191: #{tpu_custom_call.1} parent=131 // pred_region
          %1124 = dma.done [#allocation31], 2048
        $region192: #{tpu_custom_call.1} parent=131 // pred_fallthru
          _
        // Predicated region
        $region193: #{tpu_custom_call.1} parent=131 // pred_check
          %p1125 = pneg %p471
        $region194: #{tpu_custom_call.1} parent=131 // pred_check_branch
          %1127 = sbr.rel (%p1125) target = $region196
        $region195: #{tpu_custom_call.1} parent=131 // pred_region
          %1129 = dma.done [#allocation34], 2048
        $region196: #{tpu_custom_call.1} parent=131 // pred_fallthru
          _
        // Predicated region
        $region197: #{tpu_custom_call.1} parent=131 // pred_check
          %p1130 = pneg %p492
        $region198: #{tpu_custom_call.1} parent=131 // pred_check_branch
          %1132 = sbr.rel (%p1130) target = $region200
        $region199: #{tpu_custom_call.1} parent=131 // pred_region
          %1134 = dma.done [#allocation34], 2048
        $region200: #{tpu_custom_call.1} parent=131 // pred_fallthru
          _
        // Predicated region
        $region201: #{tpu_custom_call.1} parent=131 // pred_check
          %p1135 = pneg %p513
        $region202: #{tpu_custom_call.1} parent=131 // pred_check_branch
          %1137 = sbr.rel (%p1135) target = $region204
        $region203: #{tpu_custom_call.1} parent=131 // pred_region
          %1139 = dma.done [#allocation37], 1024
        $region204: #{tpu_custom_call.1} parent=131 // pred_fallthru
          _
        // Predicated region
        $region205: #{tpu_custom_call.1} parent=131 // pred_check
          %p1140 = pneg %p534
        $region206: #{tpu_custom_call.1} parent=131 // pred_check_branch
          %1142 = sbr.rel (%p1140) target = $region208
        $region207: #{tpu_custom_call.1} parent=131 // pred_region
          %1144 = dma.done [#allocation37], 1024
        $region208: #{tpu_custom_call.1} parent=131 // pred_fallthru
          _
        // Predicated region
        $region209: #{tpu_custom_call.1} parent=131 // pred_check
          %p1145 = pneg %p555
        $region210: #{tpu_custom_call.1} parent=131 // pred_check_branch
          %1147 = sbr.rel (%p1145) target = $region212
        $region211: #{tpu_custom_call.1} parent=131 // pred_region
          %1149 = dma.done [#allocation40], 1024
        $region212: #{tpu_custom_call.1} parent=131 // pred_fallthru
          _
        // Predicated region
        $region213: #{tpu_custom_call.1} parent=131 // pred_check
          %p1150 = pneg %p576
        $region214: #{tpu_custom_call.1} parent=131 // pred_check_branch
          %1152 = sbr.rel (%p1150) target = $region216
        $region215: #{tpu_custom_call.1} parent=131 // pred_region
          %1154 = dma.done [#allocation40], 1024
        $region216: #{tpu_custom_call.1} parent=131 // pred_fallthru
          _
        %s1155 = sand.u32 %s65, 1
        %s1156 = scalar_lea.sflag [#allocation10], %s1155
        %s1157 = sand.u32 %s65, 1
        %s1158 = smul.addr %s1157, 4
        %s1159 = scalar_lea.vmem [#allocation9], %s1158
        %p1160 = pneg %p78
        %p1161 = pneg %p75
        %s1162 = sand.u32 %s57, 1
        %s1163 = scalar_lea.sflag [#allocation13], %s1162
        %s1164 = sand.u32 %s101, 1
        %s1165 = smul.addr %s1164, 4
        %s1166 = scalar_lea.vmem [#allocation12], %s1165
        %p1167 = pneg %p114
        %p1168 = pneg %p111
        %p1169 = pneg %p135
        %p1170 = pneg %p132
        %p1171 = pneg %p156
        %p1172 = pneg %p153
        %p1173 = pneg %p177
        %p1174 = pneg %p174
        %p1175 = pneg %p198
        %p1176 = pneg %p195
        %p1177 = pneg %p219
        %p1178 = pneg %p216
        %p1179 = pneg %p240
        %p1180 = pneg %p237
        %p1181 = pneg %p261
        %p1182 = pneg %p258
        %p1183 = pneg %p282
        %p1184 = pneg %p279
        %p1185 = pneg %p303
        %p1186 = pneg %p300
        %p1187 = pneg %p324
        %p1188 = pneg %p321
        %p1189 = pneg %p345
        %p1190 = pneg %p342
        %p1191 = pneg %p366
        %p1192 = pneg %p363
        %p1193 = pneg %p387
        %p1194 = pneg %p384
        %p1195 = pneg %p408
        %p1196 = pneg %p405
        %p1197 = pneg %p429
        %p1198 = pneg %p426
        %p1199 = pneg %p450
        %p1200 = pneg %p447
        %p1201 = pneg %p471
        %p1202 = pneg %p468
        %p1203 = pneg %p492
        %p1204 = pneg %p489
        %p1205 = pneg %p513
        %p1206 = pneg %p510
        %p1207 = pneg %p534
        %p1208 = pneg %p531
        %p1209 = pneg %p555
        %p1210 = pneg %p552
        %p1211 = pneg %p576
        %p1212 = pneg %p573
        %p1213 = pneg %p597
        %p1214 = pneg %p594
        %p1215 = pneg %p618
        %p1216 = pneg %p615
        %p1217 = pneg %p639
        %p1218 = pneg %p636
        %p1219 = pneg %p660
        %p1220 = pneg %p657
        %p1221 = pneg %p686
        %p1222 = pneg %p683
        %s1223 = sand.u32 %s673, 1
        %s1224 = scalar_lea.sflag [#allocation11], %s1223
        %s1225 = sand.u32 %s673, 1
        %s1226 = smul.addr %s1225, 4
        %s1227 = scalar_lea.vmem [#allocation42], %s1226
        %s1228 = ssub.s32 %s57, 2
        %p1229 = scmp.gt.s32.totalorder %s1228, 0
        %s1230 = scalar_select %p1229, %s1228, 0
        %p1231 = scmp.lt.s32.totalorder %s1230, 0
        %s1232 = scalar_select %p1231, %s1230, 0
        %p1233 = scmp.eq.s32.totalorder %s57, 0
        // Predicated region
        $region217: #{tpu_custom_call.1} parent=131 // pred_check
          %p1234 = pneg %p1233
        $region218: #{tpu_custom_call.1} parent=131 // pred_check_branch
          %1236 = sbr.rel (%p1234) target = $region220
        $region219: #{tpu_custom_call.1} parent=131 // pred_region
          %v1237 = vld [vmem:[#allocation15] sm:$0x3]
          %v1238 = vld [vmem:[#allocation15 + $0x2] sm:$0x3]
          %v1239 = vld [vmem:[#allocation15 + $0x4] sm:$0x3]
          %1240 = vst [vmem:[#allocation2] sm:$0x3] %v1237
          %1241 = vst [vmem:[#allocation2 + $0x2] sm:$0x3] %v1238
          %1242 = vst [vmem:[#allocation2 + $0x4] sm:$0x3] %v1239
          %v1243 = vld [vmem:[#allocation17] sm:$0x3]
          %v1244 = vld [vmem:[#allocation17 + $0x2] sm:$0x3]
          %v1245 = vld [vmem:[#allocation17 + $0x4] sm:$0x3]
          %1246 = vst [vmem:[#allocation3] sm:$0x3] %v1243
          %1247 = vst [vmem:[#allocation3 + $0x2] sm:$0x3] %v1244
          %1248 = vst [vmem:[#allocation3 + $0x4] sm:$0x3] %v1245
          %v1249 = vld [vmem:[%s6] sm:$0x3]
          %1250 = vst [vmem:[#allocation4] sm:$0x3] %v1249
          %v1251 = vld [vmem:[%s7] sm:$0x3]
          %1252 = vst [vmem:[#allocation5] sm:$0x3] %v1251
          %v1253 = vld [vmem:[#allocation18] sm:$0x3]
          %1254 = vst [vmem:[#allocation6] sm:$0x3] %v1253
          %1255 = vst [vmem:[#allocation7] sm:$0x3] 0.0
          %1256 = vst [vmem:[#allocation8] sm:$0xf] 0.0
        $region220: #{tpu_custom_call.1} parent=131 // pred_fallthru
          _
        %v1257 = vld [vmem:[%s1044] sm:$0xf]
        %v1258 = vld [vmem:[%s1054] sm:$0xf]
        %p1259 = scmp.ge.s32.totalorder %s57, 2
        %v1260 = vmul.f32 %v1258, %v1257
        %v1261 = vsub.f32 1.0, %v1258
        %v1262 = vld [vmem:[#allocation8] sm:$0xf]
        %v1263 = vmul.f32 %v1261, %v1262
        %v1264 = vadd.f32 %v1260, %v1263
        %s1265 = scalar_select %p1259, 1, 0
        %v1266 = vstv %s1265
        %vm1267 = vcmp.eq.s32.totalorder %v1266, 1
        %v1268 = vsel %vm1267, %v1264, %v1257
        %1270 = vst [vmem:[#allocation1] ss:$4 sm:$0xff] %v1268
        %v1271 = vld.sshfl [vmem:[#allocation1] sm:$0xff pattern:$0x73625140]
        %v1272 = vld.sshfl [vmem:[#allocation1 + $0x8] sm:$0xff pattern:$0x73625140]
        %v1275 = vpack.c.bf16 %v1271, %v1271
        %v1276 = vpack.c.bf16 %v1272, %v1272
        %v1277 = vld [vmem:[#allocation20] sm:$0xf]
        %v1278 = vld [vmem:[#allocation20 + $0x4] sm:$0xf]
        %v1279 = vld [vmem:[#allocation20 + $0x8] sm:$0xf]
        %v1280 = vld [vmem:[#allocation20 + $0xc] sm:$0xf]
        %v1281 = vld [vmem:[#allocation20 + $0x10] sm:$0xf]
        %v1282 = vld [vmem:[#allocation20 + $0x14] sm:$0xf]
        %v1283 = vld [vmem:[#allocation20 + $0x18] sm:$0xf]
        %v1284 = vld [vmem:[#allocation20 + $0x1c] sm:$0xf]
        %v1285 = vld [vmem:[#allocation20 + $0x20] sm:$0xf]
        %v1286 = vld [vmem:[#allocation20 + $0x24] sm:$0xf]
        %v1287 = vld [vmem:[#allocation20 + $0x28] sm:$0xf]
        %v1288 = vld [vmem:[#allocation20 + $0x2c] sm:$0xf]
        %v1289 = vld [vmem:[#allocation20 + $0x30] sm:$0xf]
        %v1290 = vld [vmem:[#allocation20 + $0x34] sm:$0xf]
        %v1291 = vld [vmem:[#allocation20 + $0x38] sm:$0xf]
        %v1292 = vld [vmem:[#allocation20 + $0x3c] sm:$0xf]
        %v1293 = vld [vmem:[#allocation20 + $0x40] sm:$0xf]
        %v1294 = vld [vmem:[#allocation20 + $0x44] sm:$0xf]
        %v1295 = vld [vmem:[#allocation20 + $0x48] sm:$0xf]
        %v1296 = vld [vmem:[#allocation20 + $0x4c] sm:$0xf]
        %v1297 = vld [vmem:[#allocation20 + $0x50] sm:$0xf]
        %v1298 = vld [vmem:[#allocation20 + $0x54] sm:$0xf]
        %v1299 = vld [vmem:[#allocation20 + $0x58] sm:$0xf]
        %v1300 = vld [vmem:[#allocation20 + $0x5c] sm:$0xf]
        %v1301 = vld [vmem:[#allocation20 + $0x60] sm:$0xf]
        %v1302 = vld [vmem:[#allocation20 + $0x64] sm:$0xf]
        %v1303 = vld [vmem:[#allocation20 + $0x68] sm:$0xf]
        %v1304 = vld [vmem:[#allocation20 + $0x6c] sm:$0xf]
        %v1305 = vld [vmem:[#allocation20 + $0x70] sm:$0xf]
        %v1306 = vld [vmem:[#allocation20 + $0x74] sm:$0xf]
        %v1307 = vld [vmem:[#allocation20 + $0x78] sm:$0xf]
        %v1308 = vld [vmem:[#allocation20 + $0x7c] sm:$0xf]
        %v1341 = vunpack.c.l.b16 %v1277
        %v1342 = vunpack.c.l.b16 %v1278
        %v1343 = vunpack.c.l.b16 %v1279
        %v1344 = vunpack.c.l.b16 %v1280
        %v1345 = vunpack.c.l.b16 %v1281
        %v1346 = vunpack.c.l.b16 %v1282
        %v1347 = vunpack.c.l.b16 %v1283
        %v1348 = vunpack.c.l.b16 %v1284
        %v1349 = vunpack.c.l.b16 %v1285
        %v1350 = vunpack.c.l.b16 %v1286
        %v1351 = vunpack.c.l.b16 %v1287
        %v1352 = vunpack.c.l.b16 %v1288
        %v1353 = vunpack.c.l.b16 %v1289
        %v1354 = vunpack.c.l.b16 %v1290
        %v1355 = vunpack.c.l.b16 %v1291
        %v1356 = vunpack.c.l.b16 %v1292
        %v1357 = vunpack.c.l.b16 %v1293
        %v1358 = vunpack.c.l.b16 %v1294
        %v1359 = vunpack.c.l.b16 %v1295
        %v1360 = vunpack.c.l.b16 %v1296
        %v1361 = vunpack.c.l.b16 %v1297
        %v1362 = vunpack.c.l.b16 %v1298
        %v1363 = vunpack.c.l.b16 %v1299
        %v1364 = vunpack.c.l.b16 %v1300
        %v1365 = vunpack.c.l.b16 %v1301
        %v1366 = vunpack.c.l.b16 %v1302
        %v1367 = vunpack.c.l.b16 %v1303
        %v1368 = vunpack.c.l.b16 %v1304
        %v1369 = vunpack.c.l.b16 %v1305
        %v1370 = vunpack.c.l.b16 %v1306
        %v1371 = vunpack.c.l.b16 %v1307
        %v1372 = vunpack.c.l.b16 %v1308
        %v1373 = vpack.c.b16 %v1342, %v1341
        %v1374 = vpack.c.b16 %v1344, %v1343
        %v1375 = vpack.c.b16 %v1346, %v1345
        %v1376 = vpack.c.b16 %v1348, %v1347
        %v1377 = vpack.c.b16 %v1350, %v1349
        %v1378 = vpack.c.b16 %v1352, %v1351
        %v1379 = vpack.c.b16 %v1354, %v1353
        %v1380 = vpack.c.b16 %v1356, %v1355
        %v1381 = vpack.c.b16 %v1358, %v1357
        %v1382 = vpack.c.b16 %v1360, %v1359
        %v1383 = vpack.c.b16 %v1362, %v1361
        %v1384 = vpack.c.b16 %v1364, %v1363
        %v1385 = vpack.c.b16 %v1366, %v1365
        %v1386 = vpack.c.b16 %v1368, %v1367
        %v1387 = vpack.c.b16 %v1370, %v1369
        %v1388 = vpack.c.b16 %v1372, %v1371
        %1405 = vmatpush.bf16.msra.mxu0 %v1380
        %1406 = vmatpush.bf16.msra.mxu0 %v1379
        %1407 = vmatpush.bf16.msra.mxu0 %v1378
        %1408 = vmatpush.bf16.msra.mxu0 %v1377
        %1409 = vmatpush.bf16.msra.mxu0 %v1376
        %1410 = vmatpush.bf16.msra.mxu0 %v1375
        %1411 = vmatpush.bf16.msra.mxu0 %v1374
        %1412 = vmatpush.bf16.msra.mxu0 %v1373
        %1413 = vmatmul.bf16.gmra.mxu0 %v1275
        %v1414 = vpop.f32.mrf.mxu0
        %v1415 = vadd.f32 0.0, %v1414
        %v1416 = vpop.f32.mrf.mxu0
        %1417 = vdwg.mxu0
        %1418 = vmatpush.bf16.msra.mxu0 %v1388
        %1419 = vmatpush.bf16.msra.mxu0 %v1387
        %1420 = vmatpush.bf16.msra.mxu0 %v1386
        %1421 = vmatpush.bf16.msra.mxu0 %v1385
        %1422 = vmatpush.bf16.msra.mxu0 %v1384
        %1423 = vmatpush.bf16.msra.mxu0 %v1383
        %1424 = vmatpush.bf16.msra.mxu0 %v1382
        %1425 = vmatpush.bf16.msra.mxu0 %v1381
        %1426 = vmatmul.bf16.gmra.mxu0 %v1276
        %v1427 = vpop.f32.mrf.mxu0
        %v1428 = vadd.f32 %v1415, %v1427
        %v1429 = vpop.f32.mrf.mxu0
        %1430 = vdwg.mxu0
        %v1431 = vld [vmem:[#allocation4] sm:$0x3]
        %v1432 = vld [vmem:[#allocation5] sm:$0x3]
        %v1433 = vld [vmem:[#allocation6] sm:$0x3]
        %v1434 = vld [vmem:[#allocation2] sm:$0x3]
        %v1435 = vld [vmem:[#allocation3] sm:$0x3]
        %v1436 = vadd.f32 %v1434, %v1433
        %v1437 = vadd.f32 %v1436, %v1432
        %1438 = vst [vmem:[#allocation1] ss:$4 sm:$0xff] %v1268
        %v1439 = vld.sshfl [vmem:[#allocation1] sm:$0xff pattern:$0x73625140]
        %v1440 = vld.sshfl [vmem:[#allocation1 + $0x8] sm:$0xff pattern:$0x73625140]
        %v1443 = vpack.c.bf16 %v1439, %v1439
        %v1444 = vpack.c.bf16 %v1440, %v1440
        %v1445 = vpack.c.bf16 %v1437, %v1437
        %v1446 = vpack.c.bf16 %v1431, %v1431
        %v1447 = vld [vmem:[#allocation23] sm:$0xff]
        %v1448 = vld [vmem:[#allocation23 + $0x8] sm:$0xff]
        %v1449 = vld [vmem:[#allocation23 + $0x10] sm:$0xff]
        %v1450 = vld [vmem:[#allocation23 + $0x18] sm:$0xf]
        %v1451 = vld [vmem:[#allocation23 + $0x1c] sm:$0xff]
        %v1452 = vld [vmem:[#allocation23 + $0x24] sm:$0xff]
        %v1453 = vld [vmem:[#allocation23 + $0x2c] sm:$0xff]
        %v1454 = vld [vmem:[#allocation23 + $0x34] sm:$0xf]
        %v1455 = vld [vmem:[#allocation23 + $0x38] sm:$0xff]
        %v1456 = vld [vmem:[#allocation23 + $0x40] sm:$0xff]
        %v1457 = vld [vmem:[#allocation23 + $0x48] sm:$0xff]
        %v1458 = vld [vmem:[#allocation23 + $0x50] sm:$0xf]
        %v1459 = vld [vmem:[#allocation23 + $0x54] sm:$0xff]
        %v1460 = vld [vmem:[#allocation23 + $0x5c] sm:$0xff]
        %v1461 = vld [vmem:[#allocation23 + $0x64] sm:$0xff]
        %v1462 = vld [vmem:[#allocation23 + $0x6c] sm:$0xf]
        %v1463 = vld [vmem:[#allocation23 + $0x70] sm:$0xff]
        %v1464 = vld [vmem:[#allocation23 + $0x78] sm:$0xff]
        %v1465 = vld [vmem:[#allocation23 + $0x80] sm:$0xff]
        %v1466 = vld [vmem:[#allocation23 + $0x88] sm:$0xf]
        %v1467 = vld [vmem:[#allocation23 + $0x8c] sm:$0xff]
        %v1468 = vld [vmem:[#allocation23 + $0x94] sm:$0xff]
        %v1469 = vld [vmem:[#allocation23 + $0x9c] sm:$0xff]
        %v1470 = vld [vmem:[#allocation23 + $0xa4] sm:$0xf]
        %v1471 = vld [vmem:[#allocation23 + $0xa8] sm:$0xff]
        %v1472 = vld [vmem:[#allocation23 + $0xb0] sm:$0xff]
        %v1473 = vld [vmem:[#allocation23 + $0xb8] sm:$0xff]
        %v1474 = vld [vmem:[#allocation23 + $0xc0] sm:$0xf]
        %v1475 = vld [vmem:[#allocation23 + $0xc4] sm:$0xff]
        %v1476 = vld [vmem:[#allocation23 + $0xcc] sm:$0xff]
        %v1477 = vld [vmem:[#allocation23 + $0xd4] sm:$0xff]
        %v1478 = vld [vmem:[#allocation23 + $0xdc] sm:$0xf]
        %v1479 = vld [vmem:[#allocation23 + $0xe0] sm:$0xff]
        %v1480 = vld [vmem:[#allocation23 + $0xe8] sm:$0xff]
        %v1481 = vld [vmem:[#allocation23 + $0xf0] sm:$0xff]
        %v1482 = vld [vmem:[#allocation23 + $0xf8] sm:$0xf]
        %v1483 = vld [vmem:[#allocation23 + $0xfc] sm:$0xff]
        %v1484 = vld [vmem:[#allocation23 + $0x104] sm:$0xff]
        %v1485 = vld [vmem:[#allocation23 + $0x10c] sm:$0xff]
        %v1486 = vld [vmem:[#allocation23 + $0x114] sm:$0xf]
        %v1487 = vld [vmem:[#allocation23 + $0x118] sm:$0xff]
        %v1488 = vld [vmem:[#allocation23 + $0x120] sm:$0xff]
        %v1489 = vld [vmem:[#allocation23 + $0x128] sm:$0xff]
        %v1490 = vld [vmem:[#allocation23 + $0x130] sm:$0xf]
        %v1491 = vld [vmem:[#allocation23 + $0x134] sm:$0xff]
        %v1492 = vld [vmem:[#allocation23 + $0x13c] sm:$0xff]
        %v1493 = vld [vmem:[#allocation23 + $0x144] sm:$0xff]
        %v1494 = vld [vmem:[#allocation23 + $0x14c] sm:$0xf]
        %v1495 = vld [vmem:[#allocation23 + $0x150] sm:$0xff]
        %v1496 = vld [vmem:[#allocation23 + $0x158] sm:$0xff]
        %v1497 = vld [vmem:[#allocation23 + $0x160] sm:$0xff]
        %v1498 = vld [vmem:[#allocation23 + $0x168] sm:$0xf]
        %v1499 = vld [vmem:[#allocation23 + $0x16c] sm:$0xff]
        %v1500 = vld [vmem:[#allocation23 + $0x174] sm:$0xff]
        %v1501 = vld [vmem:[#allocation23 + $0x17c] sm:$0xff]
        %v1502 = vld [vmem:[#allocation23 + $0x184] sm:$0xf]
        %v1503 = vld [vmem:[#allocation23 + $0x188] sm:$0xff]
        %v1504 = vld [vmem:[#allocation23 + $0x190] sm:$0xff]
        %v1505 = vld [vmem:[#allocation23 + $0x198] sm:$0xff]
        %v1506 = vld [vmem:[#allocation23 + $0x1a0] sm:$0xf]
        %v1507 = vld [vmem:[#allocation23 + $0x1a4] sm:$0xff]
        %v1508 = vld [vmem:[#allocation23 + $0x1ac] sm:$0xff]
        %v1509 = vld [vmem:[#allocation23 + $0x1b4] sm:$0xff]
        %v1510 = vld [vmem:[#allocation23 + $0x1bc] sm:$0xf]
        %v1511 = vld [vmem:[#allocation23 + $0x1c0] sm:$0xff]
        %v1512 = vld [vmem:[#allocation23 + $0x1c8] sm:$0xff]
        %v1513 = vld [vmem:[#allocation23 + $0x1d0] sm:$0xff]
        %v1514 = vld [vmem:[#allocation23 + $0x1d8] sm:$0xf]
        %v1515 = vld [vmem:[#allocation23 + $0x1dc] sm:$0xff]
        %v1516 = vld [vmem:[#allocation23 + $0x1e4] sm:$0xff]
        %v1517 = vld [vmem:[#allocation23 + $0x1ec] sm:$0xff]
        %v1518 = vld [vmem:[#allocation23 + $0x1f4] sm:$0xf]
        %v1519 = vld [vmem:[#allocation23 + $0x1f8] sm:$0xff]
        %v1520 = vld [vmem:[#allocation23 + $0x200] sm:$0xff]
        %v1521 = vld [vmem:[#allocation23 + $0x208] sm:$0xff]
        %v1522 = vld [vmem:[#allocation23 + $0x210] sm:$0xf]
        %v1523 = vld [vmem:[#allocation23 + $0x214] sm:$0xff]
        %v1524 = vld [vmem:[#allocation23 + $0x21c] sm:$0xff]
        %v1525 = vld [vmem:[#allocation23 + $0x224] sm:$0xff]
        %v1526 = vld [vmem:[#allocation23 + $0x22c] sm:$0xf]
        %v1527 = vld [vmem:[#allocation23 + $0x230] sm:$0xff]
        %v1528 = vld [vmem:[#allocation23 + $0x238] sm:$0xff]
        %v1529 = vld [vmem:[#allocation23 + $0x240] sm:$0xff]
        %v1530 = vld [vmem:[#allocation23 + $0x248] sm:$0xf]
        %v1531 = vld [vmem:[#allocation23 + $0x24c] sm:$0xff]
        %v1532 = vld [vmem:[#allocation23 + $0x254] sm:$0xff]
        %v1533 = vld [vmem:[#allocation23 + $0x25c] sm:$0xff]
        %v1534 = vld [vmem:[#allocation23 + $0x264] sm:$0xf]
        %v1535 = vld [vmem:[#allocation23 + $0x268] sm:$0xff]
        %v1536 = vld [vmem:[#allocation23 + $0x270] sm:$0xff]
        %v1537 = vld [vmem:[#allocation23 + $0x278] sm:$0xff]
        %v1538 = vld [vmem:[#allocation23 + $0x280] sm:$0xf]
        %v1539 = vld [vmem:[#allocation23 + $0x284] sm:$0xff]
        %v1540 = vld [vmem:[#allocation23 + $0x28c] sm:$0xff]
        %v1541 = vld [vmem:[#allocation23 + $0x294] sm:$0xff]
        %v1542 = vld [vmem:[#allocation23 + $0x29c] sm:$0xf]
        %v1543 = vld [vmem:[#allocation23 + $0x2a0] sm:$0xff]
        %v1544 = vld [vmem:[#allocation23 + $0x2a8] sm:$0xff]
        %v1545 = vld [vmem:[#allocation23 + $0x2b0] sm:$0xff]
        %v1546 = vld [vmem:[#allocation23 + $0x2b8] sm:$0xf]
        %v1547 = vld [vmem:[#allocation23 + $0x2bc] sm:$0xff]
        %v1548 = vld [vmem:[#allocation23 + $0x2c4] sm:$0xff]
        %v1549 = vld [vmem:[#allocation23 + $0x2cc] sm:$0xff]
        %v1550 = vld [vmem:[#allocation23 + $0x2d4] sm:$0xf]
        %v1551 = vld [vmem:[#allocation23 + $0x2d8] sm:$0xff]
        %v1552 = vld [vmem:[#allocation23 + $0x2e0] sm:$0xff]
        %v1553 = vld [vmem:[#allocation23 + $0x2e8] sm:$0xff]
        %v1554 = vld [vmem:[#allocation23 + $0x2f0] sm:$0xf]
        %v1555 = vld [vmem:[#allocation23 + $0x2f4] sm:$0xff]
        %v1556 = vld [vmem:[#allocation23 + $0x2fc] sm:$0xff]
        %v1557 = vld [vmem:[#allocation23 + $0x304] sm:$0xff]
        %v1558 = vld [vmem:[#allocation23 + $0x30c] sm:$0xf]
        %v1559 = vld [vmem:[#allocation23 + $0x310] sm:$0xff]
        %v1560 = vld [vmem:[#allocation23 + $0x318] sm:$0xff]
        %v1561 = vld [vmem:[#allocation23 + $0x320] sm:$0xff]
        %v1562 = vld [vmem:[#allocation23 + $0x328] sm:$0xf]
        %v1563 = vld [vmem:[#allocation23 + $0x32c] sm:$0xff]
        %v1564 = vld [vmem:[#allocation23 + $0x334] sm:$0xff]
        %v1565 = vld [vmem:[#allocation23 + $0x33c] sm:$0xff]
        %v1566 = vld [vmem:[#allocation23 + $0x344] sm:$0xf]
        %v1567 = vld [vmem:[#allocation23 + $0x348] sm:$0xff]
        %v1568 = vld [vmem:[#allocation23 + $0x350] sm:$0xff]
        %v1569 = vld [vmem:[#allocation23 + $0x358] sm:$0xff]
        %v1570 = vld [vmem:[#allocation23 + $0x360] sm:$0xf]
        %v1571 = vld [vmem:[#allocation23 + $0x364] sm:$0xff]
        %v1572 = vld [vmem:[#allocation23 + $0x36c] sm:$0xff]
        %v1573 = vld [vmem:[#allocation23 + $0x374] sm:$0xff]
        %v1574 = vld [vmem:[#allocation23 + $0x37c] sm:$0xf]
        %v1575 = vld [vmem:[#allocation23 + $0x380] sm:$0xff]
        %v1576 = vld [vmem:[#allocation23 + $0x388] sm:$0xff]
        %v1577 = vld [vmem:[#allocation23 + $0x390] sm:$0xff]
        %v1578 = vld [vmem:[#allocation23 + $0x398] sm:$0xf]
        %v1579 = vld [vmem:[#allocation23 + $0x39c] sm:$0xff]
        %v1580 = vld [vmem:[#allocation23 + $0x3a4] sm:$0xff]
        %v1581 = vld [vmem:[#allocation23 + $0x3ac] sm:$0xff]
        %v1582 = vld [vmem:[#allocation23 + $0x3b4] sm:$0xf]
        %v1583 = vld [vmem:[#allocation23 + $0x3b8] sm:$0xff]
        %v1584 = vld [vmem:[#allocation23 + $0x3c0] sm:$0xff]
        %v1585 = vld [vmem:[#allocation23 + $0x3c8] sm:$0xff]
        %v1586 = vld [vmem:[#allocation23 + $0x3d0] sm:$0xf]
        %v1587 = vld [vmem:[#allocation23 + $0x3d4] sm:$0xff]
        %v1588 = vld [vmem:[#allocation23 + $0x3dc] sm:$0xff]
        %v1589 = vld [vmem:[#allocation23 + $0x3e4] sm:$0xff]
        %v1590 = vld [vmem:[#allocation23 + $0x3ec] sm:$0xf]
        %v1591 = vld [vmem:[#allocation23 + $0x3f0] sm:$0xff]
        %v1592 = vld [vmem:[#allocation23 + $0x3f8] sm:$0xff]
        %v1593 = vld [vmem:[#allocation23 + $0x400] sm:$0xff]
        %v1594 = vld [vmem:[#allocation23 + $0x408] sm:$0xf]
        %v1595 = vld [vmem:[#allocation23 + $0x40c] sm:$0xff]
        %v1596 = vld [vmem:[#allocation23 + $0x414] sm:$0xff]
        %v1597 = vld [vmem:[#allocation23 + $0x41c] sm:$0xff]
        %v1598 = vld [vmem:[#allocation23 + $0x424] sm:$0xf]
        %v1599 = vld [vmem:[#allocation23 + $0x428] sm:$0xff]
        %v1600 = vld [vmem:[#allocation23 + $0x430] sm:$0xff]
        %v1601 = vld [vmem:[#allocation23 + $0x438] sm:$0xff]
        %v1602 = vld [vmem:[#allocation23 + $0x440] sm:$0xf]
        %v1603 = vld [vmem:[#allocation23 + $0x444] sm:$0xff]
        %v1604 = vld [vmem:[#allocation23 + $0x44c] sm:$0xff]
        %v1605 = vld [vmem:[#allocation23 + $0x454] sm:$0xff]
        %v1606 = vld [vmem:[#allocation23 + $0x45c] sm:$0xf]
        %v1607 = vld [vmem:[#allocation23 + $0x460] sm:$0xff]
        %v1608 = vld [vmem:[#allocation23 + $0x468] sm:$0xff]
        %v1609 = vld [vmem:[#allocation23 + $0x470] sm:$0xff]
        %v1610 = vld [vmem:[#allocation23 + $0x478] sm:$0xf]
        %v1611 = vld [vmem:[#allocation23 + $0x47c] sm:$0xff]
        %v1612 = vld [vmem:[#allocation23 + $0x484] sm:$0xff]
        %v1613 = vld [vmem:[#allocation23 + $0x48c] sm:$0xff]
        %v1614 = vld [vmem:[#allocation23 + $0x494] sm:$0xf]
        %v1615 = vld [vmem:[#allocation23 + $0x498] sm:$0xff]
        %v1616 = vld [vmem:[#allocation23 + $0x4a0] sm:$0xff]
        %v1617 = vld [vmem:[#allocation23 + $0x4a8] sm:$0xff]
        %v1618 = vld [vmem:[#allocation23 + $0x4b0] sm:$0xf]
        %v1619 = vld [vmem:[#allocation23 + $0x4b4] sm:$0xff]
        %v1620 = vld [vmem:[#allocation23 + $0x4bc] sm:$0xff]
        %v1621 = vld [vmem:[#allocation23 + $0x4c4] sm:$0xff]
        %v1622 = vld [vmem:[#allocation23 + $0x4cc] sm:$0xf]
        %v1623 = vld [vmem:[#allocation23 + $0x4d0] sm:$0xff]
        %v1624 = vld [vmem:[#allocation23 + $0x4d8] sm:$0xff]
        %v1625 = vld [vmem:[#allocation23 + $0x4e0] sm:$0xff]
        %v1626 = vld [vmem:[#allocation23 + $0x4e8] sm:$0xf]
        %v1627 = vld [vmem:[#allocation23 + $0x4ec] sm:$0xff]
        %v1628 = vld [vmem:[#allocation23 + $0x4f4] sm:$0xff]
        %v1629 = vld [vmem:[#allocation23 + $0x4fc] sm:$0xff]
        %v1630 = vld [vmem:[#allocation23 + $0x504] sm:$0xf]
        %v1631 = vld [vmem:[#allocation23 + $0x508] sm:$0xff]
        %v1632 = vld [vmem:[#allocation23 + $0x510] sm:$0xff]
        %v1633 = vld [vmem:[#allocation23 + $0x518] sm:$0xff]
        %v1634 = vld [vmem:[#allocation23 + $0x520] sm:$0xf]
        %v1635 = vld [vmem:[#allocation23 + $0x524] sm:$0xff]
        %v1636 = vld [vmem:[#allocation23 + $0x52c] sm:$0xff]
        %v1637 = vld [vmem:[#allocation23 + $0x534] sm:$0xff]
        %v1638 = vld [vmem:[#allocation23 + $0x53c] sm:$0xf]
        %v1639 = vld [vmem:[#allocation23 + $0x540] sm:$0xff]
        %v1640 = vld [vmem:[#allocation23 + $0x548] sm:$0xff]
        %v1641 = vld [vmem:[#allocation23 + $0x550] sm:$0xff]
        %v1642 = vld [vmem:[#allocation23 + $0x558] sm:$0xf]
        %v1643 = vld [vmem:[#allocation23 + $0x55c] sm:$0xff]
        %v1644 = vld [vmem:[#allocation23 + $0x564] sm:$0xff]
        %v1645 = vld [vmem:[#allocation23 + $0x56c] sm:$0xff]
        %v1646 = vld [vmem:[#allocation23 + $0x574] sm:$0xf]
        %v1647 = vld [vmem:[#allocation23 + $0x578] sm:$0xff]
        %v1648 = vld [vmem:[#allocation23 + $0x580] sm:$0xff]
        %v1649 = vld [vmem:[#allocation23 + $0x588] sm:$0xff]
        %v1650 = vld [vmem:[#allocation23 + $0x590] sm:$0xf]
        %v1651 = vld [vmem:[#allocation23 + $0x594] sm:$0xff]
        %v1652 = vld [vmem:[#allocation23 + $0x59c] sm:$0xff]
        %v1653 = vld [vmem:[#allocation23 + $0x5a4] sm:$0xff]
        %v1654 = vld [vmem:[#allocation23 + $0x5ac] sm:$0xf]
        %v1655 = vld [vmem:[#allocation23 + $0x5b0] sm:$0xff]
        %v1656 = vld [vmem:[#allocation23 + $0x5b8] sm:$0xff]
        %v1657 = vld [vmem:[#allocation23 + $0x5c0] sm:$0xff]
        %v1658 = vld [vmem:[#allocation23 + $0x5c8] sm:$0xf]
        %v1659 = vld [vmem:[#allocation23 + $0x5cc] sm:$0xff]
        %v1660 = vld [vmem:[#allocation23 + $0x5d4] sm:$0xff]
        %v1661 = vld [vmem:[#allocation23 + $0x5dc] sm:$0xff]
        %v1662 = vld [vmem:[#allocation23 + $0x5e4] sm:$0xf]
        %v1663 = vld [vmem:[#allocation23 + $0x5e8] sm:$0xff]
        %v1664 = vld [vmem:[#allocation23 + $0x5f0] sm:$0xff]
        %v1665 = vld [vmem:[#allocation23 + $0x5f8] sm:$0xff]
        %v1666 = vld [vmem:[#allocation23 + $0x600] sm:$0xf]
        %v1667 = vld [vmem:[#allocation23 + $0x604] sm:$0xff]
        %v1668 = vld [vmem:[#allocation23 + $0x60c] sm:$0xff]
        %v1669 = vld [vmem:[#allocation23 + $0x614] sm:$0xff]
        %v1670 = vld [vmem:[#allocation23 + $0x61c] sm:$0xf]
        %v1671 = vld [vmem:[#allocation23 + $0x620] sm:$0xff]
        %v1672 = vld [vmem:[#allocation23 + $0x628] sm:$0xff]
        %v1673 = vld [vmem:[#allocation23 + $0x630] sm:$0xff]
        %v1674 = vld [vmem:[#allocation23 + $0x638] sm:$0xf]
        %v1675 = vld [vmem:[#allocation23 + $0x63c] sm:$0xff]
        %v1676 = vld [vmem:[#allocation23 + $0x644] sm:$0xff]
        %v1677 = vld [vmem:[#allocation23 + $0x64c] sm:$0xff]
        %v1678 = vld [vmem:[#allocation23 + $0x654] sm:$0xf]
        %v1679 = vld [vmem:[#allocation23 + $0x658] sm:$0xff]
        %v1680 = vld [vmem:[#allocation23 + $0x660] sm:$0xff]
        %v1681 = vld [vmem:[#allocation23 + $0x668] sm:$0xff]
        %v1682 = vld [vmem:[#allocation23 + $0x670] sm:$0xf]
        %v1683 = vld [vmem:[#allocation23 + $0x674] sm:$0xff]
        %v1684 = vld [vmem:[#allocation23 + $0x67c] sm:$0xff]
        %v1685 = vld [vmem:[#allocation23 + $0x684] sm:$0xff]
        %v1686 = vld [vmem:[#allocation23 + $0x68c] sm:$0xf]
        %v1687 = vld [vmem:[#allocation23 + $0x690] sm:$0xff]
        %v1688 = vld [vmem:[#allocation23 + $0x698] sm:$0xff]
        %v1689 = vld [vmem:[#allocation23 + $0x6a0] sm:$0xff]
        %v1690 = vld [vmem:[#allocation23 + $0x6a8] sm:$0xf]
        %v1691 = vld [vmem:[#allocation23 + $0x6ac] sm:$0xff]
        %v1692 = vld [vmem:[#allocation23 + $0x6b4] sm:$0xff]
        %v1693 = vld [vmem:[#allocation23 + $0x6bc] sm:$0xff]
        %v1694 = vld [vmem:[#allocation23 + $0x6c4] sm:$0xf]
        %v1695 = vld [vmem:[#allocation23 + $0x6c8] sm:$0xff]
        %v1696 = vld [vmem:[#allocation23 + $0x6d0] sm:$0xff]
        %v1697 = vld [vmem:[#allocation23 + $0x6d8] sm:$0xff]
        %v1698 = vld [vmem:[#allocation23 + $0x6e0] sm:$0xf]
        %v1699 = vld [vmem:[#allocation23 + $0x6e4] sm:$0xff]
        %v1700 = vld [vmem:[#allocation23 + $0x6ec] sm:$0xff]
        %v1701 = vld [vmem:[#allocation23 + $0x6f4] sm:$0xff]
        %v1702 = vld [vmem:[#allocation23 + $0x6fc] sm:$0xf]
        %v1959 = vunpack.c.l.b16 %v1447
        %v1960 = vunpack.c.h.b16 %v1447
        %v1961 = vunpack.c.l.b16 %v1448
        %v1962 = vunpack.c.h.b16 %v1448
        %v1963 = vunpack.c.l.b16 %v1449
        %v1964 = vunpack.c.h.b16 %v1449
        %v1965 = vunpack.c.l.b16 %v1450
        %v1966 = vunpack.c.l.b16 %v1451
        %v1967 = vunpack.c.h.b16 %v1451
        %v1968 = vunpack.c.l.b16 %v1452
        %v1969 = vunpack.c.h.b16 %v1452
        %v1970 = vunpack.c.l.b16 %v1453
        %v1971 = vunpack.c.h.b16 %v1453
        %v1972 = vunpack.c.l.b16 %v1454
        %v1973 = vunpack.c.l.b16 %v1455
        %v1974 = vunpack.c.h.b16 %v1455
        %v1975 = vunpack.c.l.b16 %v1456
        %v1976 = vunpack.c.h.b16 %v1456
        %v1977 = vunpack.c.l.b16 %v1457
        %v1978 = vunpack.c.h.b16 %v1457
        %v1979 = vunpack.c.l.b16 %v1458
        %v1980 = vunpack.c.l.b16 %v1459
        %v1981 = vunpack.c.h.b16 %v1459
        %v1982 = vunpack.c.l.b16 %v1460
        %v1983 = vunpack.c.h.b16 %v1460
        %v1984 = vunpack.c.l.b16 %v1461
        %v1985 = vunpack.c.h.b16 %v1461
        %v1986 = vunpack.c.l.b16 %v1462
        %v1987 = vunpack.c.l.b16 %v1463
        %v1988 = vunpack.c.h.b16 %v1463
        %v1989 = vunpack.c.l.b16 %v1464
        %v1990 = vunpack.c.h.b16 %v1464
        %v1991 = vunpack.c.l.b16 %v1465
        %v1992 = vunpack.c.h.b16 %v1465
        %v1993 = vunpack.c.l.b16 %v1466
        %v1994 = vunpack.c.l.b16 %v1467
        %v1995 = vunpack.c.h.b16 %v1467
        %v1996 = vunpack.c.l.b16 %v1468
        %v1997 = vunpack.c.h.b16 %v1468
        %v1998 = vunpack.c.l.b16 %v1469
        %v1999 = vunpack.c.h.b16 %v1469
        %v2000 = vunpack.c.l.b16 %v1470
        %v2001 = vunpack.c.l.b16 %v1471
        %v2002 = vunpack.c.h.b16 %v1471
        %v2003 = vunpack.c.l.b16 %v1472
        %v2004 = vunpack.c.h.b16 %v1472
        %v2005 = vunpack.c.l.b16 %v1473
        %v2006 = vunpack.c.h.b16 %v1473
        %v2007 = vunpack.c.l.b16 %v1474
        %v2008 = vunpack.c.l.b16 %v1475
        %v2009 = vunpack.c.h.b16 %v1475
        %v2010 = vunpack.c.l.b16 %v1476
        %v2011 = vunpack.c.h.b16 %v1476
        %v2012 = vunpack.c.l.b16 %v1477
        %v2013 = vunpack.c.h.b16 %v1477
        %v2014 = vunpack.c.l.b16 %v1478
        %v2015 = vunpack.c.l.b16 %v1479
        %v2016 = vunpack.c.h.b16 %v1479
        %v2017 = vunpack.c.l.b16 %v1480
        %v2018 = vunpack.c.h.b16 %v1480
        %v2019 = vunpack.c.l.b16 %v1481
        %v2020 = vunpack.c.h.b16 %v1481
        %v2021 = vunpack.c.l.b16 %v1482
        %v2022 = vunpack.c.l.b16 %v1483
        %v2023 = vunpack.c.h.b16 %v1483
        %v2024 = vunpack.c.l.b16 %v1484
        %v2025 = vunpack.c.h.b16 %v1484
        %v2026 = vunpack.c.l.b16 %v1485
        %v2027 = vunpack.c.h.b16 %v1485
        %v2028 = vunpack.c.l.b16 %v1486
        %v2029 = vunpack.c.l.b16 %v1487
        %v2030 = vunpack.c.h.b16 %v1487
        %v2031 = vunpack.c.l.b16 %v1488
        %v2032 = vunpack.c.h.b16 %v1488
        %v2033 = vunpack.c.l.b16 %v1489
        %v2034 = vunpack.c.h.b16 %v1489
        %v2035 = vunpack.c.l.b16 %v1490
        %v2036 = vunpack.c.l.b16 %v1491
        %v2037 = vunpack.c.h.b16 %v1491
        %v2038 = vunpack.c.l.b16 %v1492
        %v2039 = vunpack.c.h.b16 %v1492
        %v2040 = vunpack.c.l.b16 %v1493
        %v2041 = vunpack.c.h.b16 %v1493
        %v2042 = vunpack.c.l.b16 %v1494
        %v2043 = vunpack.c.l.b16 %v1495
        %v2044 = vunpack.c.h.b16 %v1495
        %v2045 = vunpack.c.l.b16 %v1496
        %v2046 = vunpack.c.h.b16 %v1496
        %v2047 = vunpack.c.l.b16 %v1497
        %v2048 = vunpack.c.h.b16 %v1497
        %v2049 = vunpack.c.l.b16 %v1498
        %v2050 = vunpack.c.l.b16 %v1499
        %v2051 = vunpack.c.h.b16 %v1499
        %v2052 = vunpack.c.l.b16 %v1500
        %v2053 = vunpack.c.h.b16 %v1500
        %v2054 = vunpack.c.l.b16 %v1501
        %v2055 = vunpack.c.h.b16 %v1501
        %v2056 = vunpack.c.l.b16 %v1502
        %v2057 = vunpack.c.l.b16 %v1503
        %v2058 = vunpack.c.h.b16 %v1503
        %v2059 = vunpack.c.l.b16 %v1504
        %v2060 = vunpack.c.h.b16 %v1504
        %v2061 = vunpack.c.l.b16 %v1505
        %v2062 = vunpack.c.h.b16 %v1505
        %v2063 = vunpack.c.l.b16 %v1506
        %v2064 = vunpack.c.l.b16 %v1507
        %v2065 = vunpack.c.h.b16 %v1507
        %v2066 = vunpack.c.l.b16 %v1508
        %v2067 = vunpack.c.h.b16 %v1508
        %v2068 = vunpack.c.l.b16 %v1509
        %v2069 = vunpack.c.h.b16 %v1509
        %v2070 = vunpack.c.l.b16 %v1510
        %v2071 = vunpack.c.l.b16 %v1511
        %v2072 = vunpack.c.h.b16 %v1511
        %v2073 = vunpack.c.l.b16 %v1512
        %v2074 = vunpack.c.h.b16 %v1512
        %v2075 = vunpack.c.l.b16 %v1513
        %v2076 = vunpack.c.h.b16 %v1513
        %v2077 = vunpack.c.l.b16 %v1514
        %v2078 = vunpack.c.l.b16 %v1515
        %v2079 = vunpack.c.h.b16 %v1515
        %v2080 = vunpack.c.l.b16 %v1516
        %v2081 = vunpack.c.h.b16 %v1516
        %v2082 = vunpack.c.l.b16 %v1517
        %v2083 = vunpack.c.h.b16 %v1517
        %v2084 = vunpack.c.l.b16 %v1518
        %v2085 = vunpack.c.l.b16 %v1519
        %v2086 = vunpack.c.h.b16 %v1519
        %v2087 = vunpack.c.l.b16 %v1520
        %v2088 = vunpack.c.h.b16 %v1520
        %v2089 = vunpack.c.l.b16 %v1521
        %v2090 = vunpack.c.h.b16 %v1521
        %v2091 = vunpack.c.l.b16 %v1522
        %v2092 = vunpack.c.l.b16 %v1523
        %v2093 = vunpack.c.h.b16 %v1523
        %v2094 = vunpack.c.l.b16 %v1524
        %v2095 = vunpack.c.h.b16 %v1524
        %v2096 = vunpack.c.l.b16 %v1525
        %v2097 = vunpack.c.h.b16 %v1525
        %v2098 = vunpack.c.l.b16 %v1526
        %v2099 = vunpack.c.l.b16 %v1527
        %v2100 = vunpack.c.h.b16 %v1527
        %v2101 = vunpack.c.l.b16 %v1528
        %v2102 = vunpack.c.h.b16 %v1528
        %v2103 = vunpack.c.l.b16 %v1529
        %v2104 = vunpack.c.h.b16 %v1529
        %v2105 = vunpack.c.l.b16 %v1530
        %v2106 = vunpack.c.l.b16 %v1531
        %v2107 = vunpack.c.h.b16 %v1531
        %v2108 = vunpack.c.l.b16 %v1532
        %v2109 = vunpack.c.h.b16 %v1532
        %v2110 = vunpack.c.l.b16 %v1533
        %v2111 = vunpack.c.h.b16 %v1533
        %v2112 = vunpack.c.l.b16 %v1534
        %v2113 = vunpack.c.l.b16 %v1535
        %v2114 = vunpack.c.h.b16 %v1535
        %v2115 = vunpack.c.l.b16 %v1536
        %v2116 = vunpack.c.h.b16 %v1536
        %v2117 = vunpack.c.l.b16 %v1537
        %v2118 = vunpack.c.h.b16 %v1537
        %v2119 = vunpack.c.l.b16 %v1538
        %v2120 = vunpack.c.l.b16 %v1539
        %v2121 = vunpack.c.h.b16 %v1539
        %v2122 = vunpack.c.l.b16 %v1540
        %v2123 = vunpack.c.h.b16 %v1540
        %v2124 = vunpack.c.l.b16 %v1541
        %v2125 = vunpack.c.h.b16 %v1541
        %v2126 = vunpack.c.l.b16 %v1542
        %v2127 = vunpack.c.l.b16 %v1543
        %v2128 = vunpack.c.h.b16 %v1543
        %v2129 = vunpack.c.l.b16 %v1544
        %v2130 = vunpack.c.h.b16 %v1544
        %v2131 = vunpack.c.l.b16 %v1545
        %v2132 = vunpack.c.h.b16 %v1545
        %v2133 = vunpack.c.l.b16 %v1546
        %v2134 = vunpack.c.l.b16 %v1547
        %v2135 = vunpack.c.h.b16 %v1547
        %v2136 = vunpack.c.l.b16 %v1548
        %v2137 = vunpack.c.h.b16 %v1548
        %v2138 = vunpack.c.l.b16 %v1549
        %v2139 = vunpack.c.h.b16 %v1549
        %v2140 = vunpack.c.l.b16 %v1550
        %v2141 = vunpack.c.l.b16 %v1551
        %v2142 = vunpack.c.h.b16 %v1551
        %v2143 = vunpack.c.l.b16 %v1552
        %v2144 = vunpack.c.h.b16 %v1552
        %v2145 = vunpack.c.l.b16 %v1553
        %v2146 = vunpack.c.h.b16 %v1553
        %v2147 = vunpack.c.l.b16 %v1554
        %v2148 = vunpack.c.l.b16 %v1555
        %v2149 = vunpack.c.h.b16 %v1555
        %v2150 = vunpack.c.l.b16 %v1556
        %v2151 = vunpack.c.h.b16 %v1556
        %v2152 = vunpack.c.l.b16 %v1557
        %v2153 = vunpack.c.h.b16 %v1557
        %v2154 = vunpack.c.l.b16 %v1558
        %v2155 = vunpack.c.l.b16 %v1559
        %v2156 = vunpack.c.h.b16 %v1559
        %v2157 = vunpack.c.l.b16 %v1560
        %v2158 = vunpack.c.h.b16 %v1560
        %v2159 = vunpack.c.l.b16 %v1561
        %v2160 = vunpack.c.h.b16 %v1561
        %v2161 = vunpack.c.l.b16 %v1562
        %v2162 = vunpack.c.l.b16 %v1563
        %v2163 = vunpack.c.h.b16 %v1563
        %v2164 = vunpack.c.l.b16 %v1564
        %v2165 = vunpack.c.h.b16 %v1564
        %v2166 = vunpack.c.l.b16 %v1565
        %v2167 = vunpack.c.h.b16 %v1565
        %v2168 = vunpack.c.l.b16 %v1566
        %v2169 = vunpack.c.l.b16 %v1567
        %v2170 = vunpack.c.h.b16 %v1567
        %v2171 = vunpack.c.l.b16 %v1568
        %v2172 = vunpack.c.h.b16 %v1568
        %v2173 = vunpack.c.l.b16 %v1569
        %v2174 = vunpack.c.h.b16 %v1569
        %v2175 = vunpack.c.l.b16 %v1570
        %v2176 = vunpack.c.l.b16 %v1571
        %v2177 = vunpack.c.h.b16 %v1571
        %v2178 = vunpack.c.l.b16 %v1572
        %v2179 = vunpack.c.h.b16 %v1572
        %v2180 = vunpack.c.l.b16 %v1573
        %v2181 = vunpack.c.h.b16 %v1573
        %v2182 = vunpack.c.l.b16 %v1574
        %v2183 = vunpack.c.l.b16 %v1575
        %v2184 = vunpack.c.h.b16 %v1575
        %v2185 = vunpack.c.l.b16 %v1576
        %v2186 = vunpack.c.h.b16 %v1576
        %v2187 = vunpack.c.l.b16 %v1577
        %v2188 = vunpack.c.h.b16 %v1577
        %v2189 = vunpack.c.l.b16 %v1578
        %v2190 = vunpack.c.l.b16 %v1579
        %v2191 = vunpack.c.h.b16 %v1579
        %v2192 = vunpack.c.l.b16 %v1580
        %v2193 = vunpack.c.h.b16 %v1580
        %v2194 = vunpack.c.l.b16 %v1581
        %v2195 = vunpack.c.h.b16 %v1581
        %v2196 = vunpack.c.l.b16 %v1582
        %v2197 = vunpack.c.l.b16 %v1583
        %v2198 = vunpack.c.h.b16 %v1583
        %v2199 = vunpack.c.l.b16 %v1584
        %v2200 = vunpack.c.h.b16 %v1584
        %v2201 = vunpack.c.l.b16 %v1585
        %v2202 = vunpack.c.h.b16 %v1585
        %v2203 = vunpack.c.l.b16 %v1586
        %v2204 = vunpack.c.l.b16 %v1587
        %v2205 = vunpack.c.h.b16 %v1587
        %v2206 = vunpack.c.l.b16 %v1588
        %v2207 = vunpack.c.h.b16 %v1588
        %v2208 = vunpack.c.l.b16 %v1589
        %v2209 = vunpack.c.h.b16 %v1589
        %v2210 = vunpack.c.l.b16 %v1590
        %v2211 = vunpack.c.l.b16 %v1591
        %v2212 = vunpack.c.h.b16 %v1591
        %v2213 = vunpack.c.l.b16 %v1592
        %v2214 = vunpack.c.h.b16 %v1592
        %v2215 = vunpack.c.l.b16 %v1593
        %v2216 = vunpack.c.h.b16 %v1593
        %v2217 = vunpack.c.l.b16 %v1594
        %v2218 = vunpack.c.l.b16 %v1595
        %v2219 = vunpack.c.h.b16 %v1595
        %v2220 = vunpack.c.l.b16 %v1596
        %v2221 = vunpack.c.h.b16 %v1596
        %v2222 = vunpack.c.l.b16 %v1597
        %v2223 = vunpack.c.h.b16 %v1597
        %v2224 = vunpack.c.l.b16 %v1598
        %v2225 = vunpack.c.l.b16 %v1599
        %v2226 = vunpack.c.h.b16 %v1599
        %v2227 = vunpack.c.l.b16 %v1600
        %v2228 = vunpack.c.h.b16 %v1600
        %v2229 = vunpack.c.l.b16 %v1601
        %v2230 = vunpack.c.h.b16 %v1601
        %v2231 = vunpack.c.l.b16 %v1602
        %v2232 = vunpack.c.l.b16 %v1603
        %v2233 = vunpack.c.h.b16 %v1603
        %v2234 = vunpack.c.l.b16 %v1604
        %v2235 = vunpack.c.h.b16 %v1604
        %v2236 = vunpack.c.l.b16 %v1605
        %v2237 = vunpack.c.h.b16 %v1605
        %v2238 = vunpack.c.l.b16 %v1606
        %v2239 = vunpack.c.l.b16 %v1607
        %v2240 = vunpack.c.h.b16 %v1607
        %v2241 = vunpack.c.l.b16 %v1608
        %v2242 = vunpack.c.h.b16 %v1608
        %v2243 = vunpack.c.l.b16 %v1609
        %v2244 = vunpack.c.h.b16 %v1609
        %v2245 = vunpack.c.l.b16 %v1610
        %v2246 = vunpack.c.l.b16 %v1611
        %v2247 = vunpack.c.h.b16 %v1611
        %v2248 = vunpack.c.l.b16 %v1612
        %v2249 = vunpack.c.h.b16 %v1612
        %v2250 = vunpack.c.l.b16 %v1613
        %v2251 = vunpack.c.h.b16 %v1613
        %v2252 = vunpack.c.l.b16 %v1614
        %v2253 = vunpack.c.l.b16 %v1615
        %v2254 = vunpack.c.h.b16 %v1615
        %v2255 = vunpack.c.l.b16 %v1616
        %v2256 = vunpack.c.h.b16 %v1616
        %v2257 = vunpack.c.l.b16 %v1617
        %v2258 = vunpack.c.h.b16 %v1617
        %v2259 = vunpack.c.l.b16 %v1618
        %v2260 = vunpack.c.l.b16 %v1619
        %v2261 = vunpack.c.h.b16 %v1619
        %v2262 = vunpack.c.l.b16 %v1620
        %v2263 = vunpack.c.h.b16 %v1620
        %v2264 = vunpack.c.l.b16 %v1621
        %v2265 = vunpack.c.h.b16 %v1621
        %v2266 = vunpack.c.l.b16 %v1622
        %v2267 = vunpack.c.l.b16 %v1623
        %v2268 = vunpack.c.h.b16 %v1623
        %v2269 = vunpack.c.l.b16 %v1624
        %v2270 = vunpack.c.h.b16 %v1624
        %v2271 = vunpack.c.l.b16 %v1625
        %v2272 = vunpack.c.h.b16 %v1625
        %v2273 = vunpack.c.l.b16 %v1626
        %v2274 = vunpack.c.l.b16 %v1627
        %v2275 = vunpack.c.h.b16 %v1627
        %v2276 = vunpack.c.l.b16 %v1628
        %v2277 = vunpack.c.h.b16 %v1628
        %v2278 = vunpack.c.l.b16 %v1629
        %v2279 = vunpack.c.h.b16 %v1629
        %v2280 = vunpack.c.l.b16 %v1630
        %v2281 = vunpack.c.l.b16 %v1631
        %v2282 = vunpack.c.h.b16 %v1631
        %v2283 = vunpack.c.l.b16 %v1632
        %v2284 = vunpack.c.h.b16 %v1632
        %v2285 = vunpack.c.l.b16 %v1633
        %v2286 = vunpack.c.h.b16 %v1633
        %v2287 = vunpack.c.l.b16 %v1634
        %v2288 = vunpack.c.l.b16 %v1635
        %v2289 = vunpack.c.h.b16 %v1635
        %v2290 = vunpack.c.l.b16 %v1636
        %v2291 = vunpack.c.h.b16 %v1636
        %v2292 = vunpack.c.l.b16 %v1637
        %v2293 = vunpack.c.h.b16 %v1637
        %v2294 = vunpack.c.l.b16 %v1638
        %v2295 = vunpack.c.l.b16 %v1639
        %v2296 = vunpack.c.h.b16 %v1639
        %v2297 = vunpack.c.l.b16 %v1640
        %v2298 = vunpack.c.h.b16 %v1640
        %v2299 = vunpack.c.l.b16 %v1641
        %v2300 = vunpack.c.h.b16 %v1641
        %v2301 = vunpack.c.l.b16 %v1642
        %v2302 = vunpack.c.l.b16 %v1643
        %v2303 = vunpack.c.h.b16 %v1643
        %v2304 = vunpack.c.l.b16 %v1644
        %v2305 = vunpack.c.h.b16 %v1644
        %v2306 = vunpack.c.l.b16 %v1645
        %v2307 = vunpack.c.h.b16 %v1645
        %v2308 = vunpack.c.l.b16 %v1646
        %v2309 = vunpack.c.l.b16 %v1647
        %v2310 = vunpack.c.h.b16 %v1647
        %v2311 = vunpack.c.l.b16 %v1648
        %v2312 = vunpack.c.h.b16 %v1648
        %v2313 = vunpack.c.l.b16 %v1649
        %v2314 = vunpack.c.h.b16 %v1649
        %v2315 = vunpack.c.l.b16 %v1650
        %v2316 = vunpack.c.l.b16 %v1651
        %v2317 = vunpack.c.h.b16 %v1651
        %v2318 = vunpack.c.l.b16 %v1652
        %v2319 = vunpack.c.h.b16 %v1652
        %v2320 = vunpack.c.l.b16 %v1653
        %v2321 = vunpack.c.h.b16 %v1653
        %v2322 = vunpack.c.l.b16 %v1654
        %v2323 = vunpack.c.l.b16 %v1655
        %v2324 = vunpack.c.h.b16 %v1655
        %v2325 = vunpack.c.l.b16 %v1656
        %v2326 = vunpack.c.h.b16 %v1656
        %v2327 = vunpack.c.l.b16 %v1657
        %v2328 = vunpack.c.h.b16 %v1657
        %v2329 = vunpack.c.l.b16 %v1658
        %v2330 = vunpack.c.l.b16 %v1659
        %v2331 = vunpack.c.h.b16 %v1659
        %v2332 = vunpack.c.l.b16 %v1660
        %v2333 = vunpack.c.h.b16 %v1660
        %v2334 = vunpack.c.l.b16 %v1661
        %v2335 = vunpack.c.h.b16 %v1661
        %v2336 = vunpack.c.l.b16 %v1662
        %v2337 = vunpack.c.l.b16 %v1663
        %v2338 = vunpack.c.h.b16 %v1663
        %v2339 = vunpack.c.l.b16 %v1664
        %v2340 = vunpack.c.h.b16 %v1664
        %v2341 = vunpack.c.l.b16 %v1665
        %v2342 = vunpack.c.h.b16 %v1665
        %v2343 = vunpack.c.l.b16 %v1666
        %v2344 = vunpack.c.l.b16 %v1667
        %v2345 = vunpack.c.h.b16 %v1667
        %v2346 = vunpack.c.l.b16 %v1668
        %v2347 = vunpack.c.h.b16 %v1668
        %v2348 = vunpack.c.l.b16 %v1669
        %v2349 = vunpack.c.h.b16 %v1669
        %v2350 = vunpack.c.l.b16 %v1670
        %v2351 = vunpack.c.l.b16 %v1671
        %v2352 = vunpack.c.h.b16 %v1671
        %v2353 = vunpack.c.l.b16 %v1672
        %v2354 = vunpack.c.h.b16 %v1672
        %v2355 = vunpack.c.l.b16 %v1673
        %v2356 = vunpack.c.h.b16 %v1673
        %v2357 = vunpack.c.l.b16 %v1674
        %v2358 = vunpack.c.l.b16 %v1675
        %v2359 = vunpack.c.h.b16 %v1675
        %v2360 = vunpack.c.l.b16 %v1676
        %v2361 = vunpack.c.h.b16 %v1676
        %v2362 = vunpack.c.l.b16 %v1677
        %v2363 = vunpack.c.h.b16 %v1677
        %v2364 = vunpack.c.l.b16 %v1678
        %v2365 = vunpack.c.l.b16 %v1679
        %v2366 = vunpack.c.h.b16 %v1679
        %v2367 = vunpack.c.l.b16 %v1680
        %v2368 = vunpack.c.h.b16 %v1680
        %v2369 = vunpack.c.l.b16 %v1681
        %v2370 = vunpack.c.h.b16 %v1681
        %v2371 = vunpack.c.l.b16 %v1682
        %v2372 = vunpack.c.l.b16 %v1683
        %v2373 = vunpack.c.h.b16 %v1683
        %v2374 = vunpack.c.l.b16 %v1684
        %v2375 = vunpack.c.h.b16 %v1684
        %v2376 = vunpack.c.l.b16 %v1685
        %v2377 = vunpack.c.h.b16 %v1685
        %v2378 = vunpack.c.l.b16 %v1686
        %v2379 = vunpack.c.l.b16 %v1687
        %v2380 = vunpack.c.h.b16 %v1687
        %v2381 = vunpack.c.l.b16 %v1688
        %v2382 = vunpack.c.h.b16 %v1688
        %v2383 = vunpack.c.l.b16 %v1689
        %v2384 = vunpack.c.h.b16 %v1689
        %v2385 = vunpack.c.l.b16 %v1690
        %v2386 = vunpack.c.l.b16 %v1691
        %v2387 = vunpack.c.h.b16 %v1691
        %v2388 = vunpack.c.l.b16 %v1692
        %v2389 = vunpack.c.h.b16 %v1692
        %v2390 = vunpack.c.l.b16 %v1693
        %v2391 = vunpack.c.h.b16 %v1693
        %v2392 = vunpack.c.l.b16 %v1694
        %v2393 = vunpack.c.l.b16 %v1695
        %v2394 = vunpack.c.h.b16 %v1695
        %v2395 = vunpack.c.l.b16 %v1696
        %v2396 = vunpack.c.h.b16 %v1696
        %v2397 = vunpack.c.l.b16 %v1697
        %v2398 = vunpack.c.h.b16 %v1697
        %v2399 = vunpack.c.l.b16 %v1698
        %v2400 = vunpack.c.l.b16 %v1699
        %v2401 = vunpack.c.h.b16 %v1699
        %v2402 = vunpack.c.l.b16 %v1700
        %v2403 = vunpack.c.h.b16 %v1700
        %v2404 = vunpack.c.l.b16 %v1701
        %v2405 = vunpack.c.h.b16 %v1701
        %v2406 = vunpack.c.l.b16 %v1702
        %v2407 = vpack.c.b16 %v1966, %v1959
        %v2408 = vpack.c.b16 %v1967, %v1960
        %v2409 = vpack.c.b16 %v1968, %v1961
        %v2410 = vpack.c.b16 %v1969, %v1962
        %v2411 = vpack.c.b16 %v1970, %v1963
        %v2412 = vpack.c.b16 %v1971, %v1964
        %v2413 = vpack.c.b16 %v1972, %v1965
        %v2414 = vpack.c.b16 %v1980, %v1973
        %v2415 = vpack.c.b16 %v1981, %v1974
        %v2416 = vpack.c.b16 %v1982, %v1975
        %v2417 = vpack.c.b16 %v1983, %v1976
        %v2418 = vpack.c.b16 %v1984, %v1977
        %v2419 = vpack.c.b16 %v1985, %v1978
        %v2420 = vpack.c.b16 %v1986, %v1979
        %v2421 = vpack.c.b16 %v1994, %v1987
        %v2422 = vpack.c.b16 %v1995, %v1988
        %v2423 = vpack.c.b16 %v1996, %v1989
        %v2424 = vpack.c.b16 %v1997, %v1990
        %v2425 = vpack.c.b16 %v1998, %v1991
        %v2426 = vpack.c.b16 %v1999, %v1992
        %v2427 = vpack.c.b16 %v2000, %v1993
        %v2428 = vpack.c.b16 %v2008, %v2001
        %v2429 = vpack.c.b16 %v2009, %v2002
        %v2430 = vpack.c.b16 %v2010, %v2003
        %v2431 = vpack.c.b16 %v2011, %v2004
        %v2432 = vpack.c.b16 %v2012, %v2005
        %v2433 = vpack.c.b16 %v2013, %v2006
        %v2434 = vpack.c.b16 %v2014, %v2007
        %v2435 = vpack.c.b16 %v2022, %v2015
        %v2436 = vpack.c.b16 %v2023, %v2016
        %v2437 = vpack.c.b16 %v2024, %v2017
        %v2438 = vpack.c.b16 %v2025, %v2018
        %v2439 = vpack.c.b16 %v2026, %v2019
        %v2440 = vpack.c.b16 %v2027, %v2020
        %v2441 = vpack.c.b16 %v2028, %v2021
        %v2442 = vpack.c.b16 %v2036, %v2029
        %v2443 = vpack.c.b16 %v2037, %v2030
        %v2444 = vpack.c.b16 %v2038, %v2031
        %v2445 = vpack.c.b16 %v2039, %v2032
        %v2446 = vpack.c.b16 %v2040, %v2033
        %v2447 = vpack.c.b16 %v2041, %v2034
        %v2448 = vpack.c.b16 %v2042, %v2035
        %v2449 = vpack.c.b16 %v2050, %v2043
        %v2450 = vpack.c.b16 %v2051, %v2044
        %v2451 = vpack.c.b16 %v2052, %v2045
        %v2452 = vpack.c.b16 %v2053, %v2046
        %v2453 = vpack.c.b16 %v2054, %v2047
        %v2454 = vpack.c.b16 %v2055, %v2048
        %v2455 = vpack.c.b16 %v2056, %v2049
        %v2456 = vpack.c.b16 %v2064, %v2057
        %v2457 = vpack.c.b16 %v2065, %v2058
        %v2458 = vpack.c.b16 %v2066, %v2059
        %v2459 = vpack.c.b16 %v2067, %v2060
        %v2460 = vpack.c.b16 %v2068, %v2061
        %v2461 = vpack.c.b16 %v2069, %v2062
        %v2462 = vpack.c.b16 %v2070, %v2063
        %v2463 = vpack.c.b16 %v2078, %v2071
        %v2464 = vpack.c.b16 %v2079, %v2072
        %v2465 = vpack.c.b16 %v2080, %v2073
        %v2466 = vpack.c.b16 %v2081, %v2074
        %v2467 = vpack.c.b16 %v2082, %v2075
        %v2468 = vpack.c.b16 %v2083, %v2076
        %v2469 = vpack.c.b16 %v2084, %v2077
        %v2470 = vpack.c.b16 %v2092, %v2085
        %v2471 = vpack.c.b16 %v2093, %v2086
        %v2472 = vpack.c.b16 %v2094, %v2087
        %v2473 = vpack.c.b16 %v2095, %v2088
        %v2474 = vpack.c.b16 %v2096, %v2089
        %v2475 = vpack.c.b16 %v2097, %v2090
        %v2476 = vpack.c.b16 %v2098, %v2091
        %v2477 = vpack.c.b16 %v2106, %v2099
        %v2478 = vpack.c.b16 %v2107, %v2100
        %v2479 = vpack.c.b16 %v2108, %v2101
        %v2480 = vpack.c.b16 %v2109, %v2102
        %v2481 = vpack.c.b16 %v2110, %v2103
        %v2482 = vpack.c.b16 %v2111, %v2104
        %v2483 = vpack.c.b16 %v2112, %v2105
        %v2484 = vpack.c.b16 %v2120, %v2113
        %v2485 = vpack.c.b16 %v2121, %v2114
        %v2486 = vpack.c.b16 %v2122, %v2115
        %v2487 = vpack.c.b16 %v2123, %v2116
        %v2488 = vpack.c.b16 %v2124, %v2117
        %v2489 = vpack.c.b16 %v2125, %v2118
        %v2490 = vpack.c.b16 %v2126, %v2119
        %v2491 = vpack.c.b16 %v2134, %v2127
        %v2492 = vpack.c.b16 %v2135, %v2128
        %v2493 = vpack.c.b16 %v2136, %v2129
        %v2494 = vpack.c.b16 %v2137, %v2130
        %v2495 = vpack.c.b16 %v2138, %v2131
        %v2496 = vpack.c.b16 %v2139, %v2132
        %v2497 = vpack.c.b16 %v2140, %v2133
        %v2498 = vpack.c.b16 %v2148, %v2141
        %v2499 = vpack.c.b16 %v2149, %v2142
        %v2500 = vpack.c.b16 %v2150, %v2143
        %v2501 = vpack.c.b16 %v2151, %v2144
        %v2502 = vpack.c.b16 %v2152, %v2145
        %v2503 = vpack.c.b16 %v2153, %v2146
        %v2504 = vpack.c.b16 %v2154, %v2147
        %v2505 = vpack.c.b16 %v2162, %v2155
        %v2506 = vpack.c.b16 %v2163, %v2156
        %v2507 = vpack.c.b16 %v2164, %v2157
        %v2508 = vpack.c.b16 %v2165, %v2158
        %v2509 = vpack.c.b16 %v2166, %v2159
        %v2510 = vpack.c.b16 %v2167, %v2160
        %v2511 = vpack.c.b16 %v2168, %v2161
        %v2512 = vpack.c.b16 %v2176, %v2169
        %v2513 = vpack.c.b16 %v2177, %v2170
        %v2514 = vpack.c.b16 %v2178, %v2171
        %v2515 = vpack.c.b16 %v2179, %v2172
        %v2516 = vpack.c.b16 %v2180, %v2173
        %v2517 = vpack.c.b16 %v2181, %v2174
        %v2518 = vpack.c.b16 %v2182, %v2175
        %v2519 = vpack.c.b16 %v2190, %v2183
        %v2520 = vpack.c.b16 %v2191, %v2184
        %v2521 = vpack.c.b16 %v2192, %v2185
        %v2522 = vpack.c.b16 %v2193, %v2186
        %v2523 = vpack.c.b16 %v2194, %v2187
        %v2524 = vpack.c.b16 %v2195, %v2188
        %v2525 = vpack.c.b16 %v2196, %v2189
        %v2526 = vpack.c.b16 %v2204, %v2197
        %v2527 = vpack.c.b16 %v2205, %v2198
        %v2528 = vpack.c.b16 %v2206, %v2199
        %v2529 = vpack.c.b16 %v2207, %v2200
        %v2530 = vpack.c.b16 %v2208, %v2201
        %v2531 = vpack.c.b16 %v2209, %v2202
        %v2532 = vpack.c.b16 %v2210, %v2203
        %v2533 = vpack.c.b16 %v2218, %v2211
        %v2534 = vpack.c.b16 %v2219, %v2212
        %v2535 = vpack.c.b16 %v2220, %v2213
        %v2536 = vpack.c.b16 %v2221, %v2214
        %v2537 = vpack.c.b16 %v2222, %v2215
        %v2538 = vpack.c.b16 %v2223, %v2216
        %v2539 = vpack.c.b16 %v2224, %v2217
        %v2540 = vpack.c.b16 %v2232, %v2225
        %v2541 = vpack.c.b16 %v2233, %v2226
        %v2542 = vpack.c.b16 %v2234, %v2227
        %v2543 = vpack.c.b16 %v2235, %v2228
        %v2544 = vpack.c.b16 %v2236, %v2229
        %v2545 = vpack.c.b16 %v2237, %v2230
        %v2546 = vpack.c.b16 %v2238, %v2231
        %v2547 = vpack.c.b16 %v2246, %v2239
        %v2548 = vpack.c.b16 %v2247, %v2240
        %v2549 = vpack.c.b16 %v2248, %v2241
        %v2550 = vpack.c.b16 %v2249, %v2242
        %v2551 = vpack.c.b16 %v2250, %v2243
        %v2552 = vpack.c.b16 %v2251, %v2244
        %v2553 = vpack.c.b16 %v2252, %v2245
        %v2554 = vpack.c.b16 %v2260, %v2253
        %v2555 = vpack.c.b16 %v2261, %v2254
        %v2556 = vpack.c.b16 %v2262, %v2255
        %v2557 = vpack.c.b16 %v2263, %v2256
        %v2558 = vpack.c.b16 %v2264, %v2257
        %v2559 = vpack.c.b16 %v2265, %v2258
        %v2560 = vpack.c.b16 %v2266, %v2259
        %v2561 = vpack.c.b16 %v2274, %v2267
        %v2562 = vpack.c.b16 %v2275, %v2268
        %v2563 = vpack.c.b16 %v2276, %v2269
        %v2564 = vpack.c.b16 %v2277, %v2270
        %v2565 = vpack.c.b16 %v2278, %v2271
        %v2566 = vpack.c.b16 %v2279, %v2272
        %v2567 = vpack.c.b16 %v2280, %v2273
        %v2568 = vpack.c.b16 %v2288, %v2281
        %v2569 = vpack.c.b16 %v2289, %v2282
        %v2570 = vpack.c.b16 %v2290, %v2283
        %v2571 = vpack.c.b16 %v2291, %v2284
        %v2572 = vpack.c.b16 %v2292, %v2285
        %v2573 = vpack.c.b16 %v2293, %v2286
        %v2574 = vpack.c.b16 %v2294, %v2287
        %v2575 = vpack.c.b16 %v2302, %v2295
        %v2576 = vpack.c.b16 %v2303, %v2296
        %v2577 = vpack.c.b16 %v2304, %v2297
        %v2578 = vpack.c.b16 %v2305, %v2298
        %v2579 = vpack.c.b16 %v2306, %v2299
        %v2580 = vpack.c.b16 %v2307, %v2300
        %v2581 = vpack.c.b16 %v2308, %v2301
        %v2582 = vpack.c.b16 %v2316, %v2309
        %v2583 = vpack.c.b16 %v2317, %v2310
        %v2584 = vpack.c.b16 %v2318, %v2311
        %v2585 = vpack.c.b16 %v2319, %v2312
        %v2586 = vpack.c.b16 %v2320, %v2313
        %v2587 = vpack.c.b16 %v2321, %v2314
        %v2588 = vpack.c.b16 %v2322, %v2315
        %v2589 = vpack.c.b16 %v2330, %v2323
        %v2590 = vpack.c.b16 %v2331, %v2324
        %v2591 = vpack.c.b16 %v2332, %v2325
        %v2592 = vpack.c.b16 %v2333, %v2326
        %v2593 = vpack.c.b16 %v2334, %v2327
        %v2594 = vpack.c.b16 %v2335, %v2328
        %v2595 = vpack.c.b16 %v2336, %v2329
        %v2596 = vpack.c.b16 %v2344, %v2337
        %v2597 = vpack.c.b16 %v2345, %v2338
        %v2598 = vpack.c.b16 %v2346, %v2339
        %v2599 = vpack.c.b16 %v2347, %v2340
        %v2600 = vpack.c.b16 %v2348, %v2341
        %v2601 = vpack.c.b16 %v2349, %v2342
        %v2602 = vpack.c.b16 %v2350, %v2343
        %v2603 = vpack.c.b16 %v2358, %v2351
        %v2604 = vpack.c.b16 %v2359, %v2352
        %v2605 = vpack.c.b16 %v2360, %v2353
        %v2606 = vpack.c.b16 %v2361, %v2354
        %v2607 = vpack.c.b16 %v2362, %v2355
        %v2608 = vpack.c.b16 %v2363, %v2356
        %v2609 = vpack.c.b16 %v2364, %v2357
        %v2610 = vpack.c.b16 %v2372, %v2365
        %v2611 = vpack.c.b16 %v2373, %v2366
        %v2612 = vpack.c.b16 %v2374, %v2367
        %v2613 = vpack.c.b16 %v2375, %v2368
        %v2614 = vpack.c.b16 %v2376, %v2369
        %v2615 = vpack.c.b16 %v2377, %v2370
        %v2616 = vpack.c.b16 %v2378, %v2371
        %v2617 = vpack.c.b16 %v2386, %v2379
        %v2618 = vpack.c.b16 %v2387, %v2380
        %v2619 = vpack.c.b16 %v2388, %v2381
        %v2620 = vpack.c.b16 %v2389, %v2382
        %v2621 = vpack.c.b16 %v2390, %v2383
        %v2622 = vpack.c.b16 %v2391, %v2384
        %v2623 = vpack.c.b16 %v2392, %v2385
        %v2624 = vpack.c.b16 %v2400, %v2393
        %v2625 = vpack.c.b16 %v2401, %v2394
        %v2626 = vpack.c.b16 %v2402, %v2395
        %v2627 = vpack.c.b16 %v2403, %v2396
        %v2628 = vpack.c.b16 %v2404, %v2397
        %v2629 = vpack.c.b16 %v2405, %v2398
        %v2630 = vpack.c.b16 %v2406, %v2399
        %2855 = vmatpush.bf16.msra.mxu0 %v2456
        %2856 = vmatpush.bf16.msra.mxu0 %v2449
        %2857 = vmatpush.bf16.msra.mxu0 %v2442
        %2858 = vmatpush.bf16.msra.mxu0 %v2435
        %2859 = vmatpush.bf16.msra.mxu0 %v2428
        %2860 = vmatpush.bf16.msra.mxu0 %v2421
        %2861 = vmatpush.bf16.msra.mxu0 %v2414
        %2862 = vmatpush.bf16.msra.mxu0 %v2407
        %2863 = vmatmul.bf16.gmra.mxu0 %v1443
        %v2864 = vpop.f32.mrf.mxu0
        %v2865 = vadd.f32 0.0, %v2864
        %v2866 = vpop.f32.mrf.mxu0
        %2867 = vdwg.mxu0
        %2868 = vmatpush.bf16.msra.mxu0 %v2512
        %2869 = vmatpush.bf16.msra.mxu0 %v2505
        %2870 = vmatpush.bf16.msra.mxu0 %v2498
        %2871 = vmatpush.bf16.msra.mxu0 %v2491
        %2872 = vmatpush.bf16.msra.mxu0 %v2484
        %2873 = vmatpush.bf16.msra.mxu0 %v2477
        %2874 = vmatpush.bf16.msra.mxu0 %v2470
        %2875 = vmatpush.bf16.msra.mxu0 %v2463
        %2876 = vmatmul.bf16.gmra.mxu0 %v1444
        %v2877 = vpop.f32.mrf.mxu0
        %v2878 = vadd.f32 %v2865, %v2877
        %v2879 = vpop.f32.mrf.mxu0
        %2880 = vdwg.mxu0
        %2881 = vmatpush.bf16.msra.mxu0 %v2568
        %2882 = vmatpush.bf16.msra.mxu0 %v2561
        %2883 = vmatpush.bf16.msra.mxu0 %v2554
        %2884 = vmatpush.bf16.msra.mxu0 %v2547
        %2885 = vmatpush.bf16.msra.mxu0 %v2540
        %2886 = vmatpush.bf16.msra.mxu0 %v2533
        %2887 = vmatpush.bf16.msra.mxu0 %v2526
        %2888 = vmatpush.bf16.msra.mxu0 %v2519
        %2889 = vmatmul.bf16.gmra.mxu0 %v1445
        %v2890 = vpop.f32.mrf.mxu0
        %v2891 = vadd.f32 %v2878, %v2890
        %v2892 = vpop.f32.mrf.mxu0
        %2893 = vdwg.mxu0
        %2894 = vmatpush.bf16.msra.mxu0 %v2624
        %2895 = vmatpush.bf16.msra.mxu0 %v2617
        %2896 = vmatpush.bf16.msra.mxu0 %v2610
        %2897 = vmatpush.bf16.msra.mxu0 %v2603
        %2898 = vmatpush.bf16.msra.mxu0 %v2596
        %2899 = vmatpush.bf16.msra.mxu0 %v2589
        %2900 = vmatpush.bf16.msra.mxu0 %v2582
        %2901 = vmatpush.bf16.msra.mxu0 %v2575
        %2902 = vmatmul.bf16.gmra.mxu0 %v1446
        %v2903 = vpop.f32.mrf.mxu0
        %v2904 = vadd.f32 %v2891, %v2903
        %v2905 = vpop.f32.mrf.mxu0
        %2906 = vdwg.mxu0
        %2907 = vmatpush.bf16.msra.mxu0 %v2457
        %2908 = vmatpush.bf16.msra.mxu0 %v2450
        %2909 = vmatpush.bf16.msra.mxu0 %v2443
        %2910 = vmatpush.bf16.msra.mxu0 %v2436
        %2911 = vmatpush.bf16.msra.mxu0 %v2429
        %2912 = vmatpush.bf16.msra.mxu0 %v2422
        %2913 = vmatpush.bf16.msra.mxu0 %v2415
        %2914 = vmatpush.bf16.msra.mxu0 %v2408
        %2915 = vmatmul.bf16.gmra.mxu0 %v1443
        %v2916 = vpop.f32.mrf.mxu0
        %v2917 = vadd.f32 0.0, %v2916
        %v2918 = vpop.f32.mrf.mxu0
        %2919 = vdwg.mxu0
        %2920 = vmatpush.bf16.msra.mxu0 %v2513
        %2921 = vmatpush.bf16.msra.mxu0 %v2506
        %2922 = vmatpush.bf16.msra.mxu0 %v2499
        %2923 = vmatpush.bf16.msra.mxu0 %v2492
        %2924 = vmatpush.bf16.msra.mxu0 %v2485
        %2925 = vmatpush.bf16.msra.mxu0 %v2478
        %2926 = vmatpush.bf16.msra.mxu0 %v2471
        %2927 = vmatpush.bf16.msra.mxu0 %v2464
        %2928 = vmatmul.bf16.gmra.mxu0 %v1444
        %v2929 = vpop.f32.mrf.mxu0
        %v2930 = vadd.f32 %v2917, %v2929
        %v2931 = vpop.f32.mrf.mxu0
        %2932 = vdwg.mxu0
        %2933 = vmatpush.bf16.msra.mxu0 %v2569
        %2934 = vmatpush.bf16.msra.mxu0 %v2562
        %2935 = vmatpush.bf16.msra.mxu0 %v2555
        %2936 = vmatpush.bf16.msra.mxu0 %v2548
        %2937 = vmatpush.bf16.msra.mxu0 %v2541
        %2938 = vmatpush.bf16.msra.mxu0 %v2534
        %2939 = vmatpush.bf16.msra.mxu0 %v2527
        %2940 = vmatpush.bf16.msra.mxu0 %v2520
        %2941 = vmatmul.bf16.gmra.mxu0 %v1445
        %v2942 = vpop.f32.mrf.mxu0
        %v2943 = vadd.f32 %v2930, %v2942
        %v2944 = vpop.f32.mrf.mxu0
        %2945 = vdwg.mxu0
        %2946 = vmatpush.bf16.msra.mxu0 %v2625
        %2947 = vmatpush.bf16.msra.mxu0 %v2618
        %2948 = vmatpush.bf16.msra.mxu0 %v2611
        %2949 = vmatpush.bf16.msra.mxu0 %v2604
        %2950 = vmatpush.bf16.msra.mxu0 %v2597
        %2951 = vmatpush.bf16.msra.mxu0 %v2590
        %2952 = vmatpush.bf16.msra.mxu0 %v2583
        %2953 = vmatpush.bf16.msra.mxu0 %v2576
        %2954 = vmatmul.bf16.gmra.mxu0 %v1446
        %v2955 = vpop.f32.mrf.mxu0
        %v2956 = vadd.f32 %v2943, %v2955
        %v2957 = vpop.f32.mrf.mxu0
        %2958 = vdwg.mxu0
        %2959 = vmatpush.bf16.msra.mxu0 %v2458
        %2960 = vmatpush.bf16.msra.mxu0 %v2451
        %2961 = vmatpush.bf16.msra.mxu0 %v2444
        %2962 = vmatpush.bf16.msra.mxu0 %v2437
        %2963 = vmatpush.bf16.msra.mxu0 %v2430
        %2964 = vmatpush.bf16.msra.mxu0 %v2423
        %2965 = vmatpush.bf16.msra.mxu0 %v2416
        %2966 = vmatpush.bf16.msra.mxu0 %v2409
        %2967 = vmatmul.bf16.gmra.mxu0 %v1443
        %v2968 = vpop.f32.mrf.mxu0
        %v2969 = vadd.f32 0.0, %v2968
        %v2970 = vpop.f32.mrf.mxu0
        %2971 = vdwg.mxu0
        %2972 = vmatpush.bf16.msra.mxu0 %v2514
        %2973 = vmatpush.bf16.msra.mxu0 %v2507
        %2974 = vmatpush.bf16.msra.mxu0 %v2500
        %2975 = vmatpush.bf16.msra.mxu0 %v2493
        %2976 = vmatpush.bf16.msra.mxu0 %v2486
        %2977 = vmatpush.bf16.msra.mxu0 %v2479
        %2978 = vmatpush.bf16.msra.mxu0 %v2472
        %2979 = vmatpush.bf16.msra.mxu0 %v2465
        %2980 = vmatmul.bf16.gmra.mxu0 %v1444
        %v2981 = vpop.f32.mrf.mxu0
        %v2982 = vadd.f32 %v2969, %v2981
        %v2983 = vpop.f32.mrf.mxu0
        %2984 = vdwg.mxu0
        %2985 = vmatpush.bf16.msra.mxu0 %v2570
        %2986 = vmatpush.bf16.msra.mxu0 %v2563
        %2987 = vmatpush.bf16.msra.mxu0 %v2556
        %2988 = vmatpush.bf16.msra.mxu0 %v2549
        %2989 = vmatpush.bf16.msra.mxu0 %v2542
        %2990 = vmatpush.bf16.msra.mxu0 %v2535
        %2991 = vmatpush.bf16.msra.mxu0 %v2528
        %2992 = vmatpush.bf16.msra.mxu0 %v2521
        %2993 = vmatmul.bf16.gmra.mxu0 %v1445
        %v2994 = vpop.f32.mrf.mxu0
        %v2995 = vadd.f32 %v2982, %v2994
        %v2996 = vpop.f32.mrf.mxu0
        %2997 = vdwg.mxu0
        %2998 = vmatpush.bf16.msra.mxu0 %v2626
        %2999 = vmatpush.bf16.msra.mxu0 %v2619
        %3000 = vmatpush.bf16.msra.mxu0 %v2612
        %3001 = vmatpush.bf16.msra.mxu0 %v2605
        %3002 = vmatpush.bf16.msra.mxu0 %v2598
        %3003 = vmatpush.bf16.msra.mxu0 %v2591
        %3004 = vmatpush.bf16.msra.mxu0 %v2584
        %3005 = vmatpush.bf16.msra.mxu0 %v2577
        %3006 = vmatmul.bf16.gmra.mxu0 %v1446
        %v3007 = vpop.f32.mrf.mxu0
        %v3008 = vadd.f32 %v2995, %v3007
        %v3009 = vpop.f32.mrf.mxu0
        %3010 = vdwg.mxu0
        %3011 = vmatpush.bf16.msra.mxu0 %v2459
        %3012 = vmatpush.bf16.msra.mxu0 %v2452
        %3013 = vmatpush.bf16.msra.mxu0 %v2445
        %3014 = vmatpush.bf16.msra.mxu0 %v2438
        %3015 = vmatpush.bf16.msra.mxu0 %v2431
        %3016 = vmatpush.bf16.msra.mxu0 %v2424
        %3017 = vmatpush.bf16.msra.mxu0 %v2417
        %3018 = vmatpush.bf16.msra.mxu0 %v2410
        %3019 = vmatmul.bf16.gmra.mxu0 %v1443
        %v3020 = vpop.f32.mrf.mxu0
        %v3021 = vadd.f32 0.0, %v3020
        %v3022 = vpop.f32.mrf.mxu0
        %3023 = vdwg.mxu0
        %3024 = vmatpush.bf16.msra.mxu0 %v2515
        %3025 = vmatpush.bf16.msra.mxu0 %v2508
        %3026 = vmatpush.bf16.msra.mxu0 %v2501
        %3027 = vmatpush.bf16.msra.mxu0 %v2494
        %3028 = vmatpush.bf16.msra.mxu0 %v2487
        %3029 = vmatpush.bf16.msra.mxu0 %v2480
        %3030 = vmatpush.bf16.msra.mxu0 %v2473
        %3031 = vmatpush.bf16.msra.mxu0 %v2466
        %3032 = vmatmul.bf16.gmra.mxu0 %v1444
        %v3033 = vpop.f32.mrf.mxu0
        %v3034 = vadd.f32 %v3021, %v3033
        %v3035 = vpop.f32.mrf.mxu0
        %3036 = vdwg.mxu0
        %3037 = vmatpush.bf16.msra.mxu0 %v2571
        %3038 = vmatpush.bf16.msra.mxu0 %v2564
        %3039 = vmatpush.bf16.msra.mxu0 %v2557
        %3040 = vmatpush.bf16.msra.mxu0 %v2550
        %3041 = vmatpush.bf16.msra.mxu0 %v2543
        %3042 = vmatpush.bf16.msra.mxu0 %v2536
        %3043 = vmatpush.bf16.msra.mxu0 %v2529
        %3044 = vmatpush.bf16.msra.mxu0 %v2522
        %3045 = vmatmul.bf16.gmra.mxu0 %v1445
        %v3046 = vpop.f32.mrf.mxu0
        %v3047 = vadd.f32 %v3034, %v3046
        %v3048 = vpop.f32.mrf.mxu0
        %3049 = vdwg.mxu0
        %3050 = vmatpush.bf16.msra.mxu0 %v2627
        %3051 = vmatpush.bf16.msra.mxu0 %v2620
        %3052 = vmatpush.bf16.msra.mxu0 %v2613
        %3053 = vmatpush.bf16.msra.mxu0 %v2606
        %3054 = vmatpush.bf16.msra.mxu0 %v2599
        %3055 = vmatpush.bf16.msra.mxu0 %v2592
        %3056 = vmatpush.bf16.msra.mxu0 %v2585
        %3057 = vmatpush.bf16.msra.mxu0 %v2578
        %3058 = vmatmul.bf16.gmra.mxu0 %v1446
        %v3059 = vpop.f32.mrf.mxu0
        %v3060 = vadd.f32 %v3047, %v3059
        %v3061 = vpop.f32.mrf.mxu0
        %3062 = vdwg.mxu0
        %3063 = vmatpush.bf16.msra.mxu0 %v2460
        %3064 = vmatpush.bf16.msra.mxu0 %v2453
        %3065 = vmatpush.bf16.msra.mxu0 %v2446
        %3066 = vmatpush.bf16.msra.mxu0 %v2439
        %3067 = vmatpush.bf16.msra.mxu0 %v2432
        %3068 = vmatpush.bf16.msra.mxu0 %v2425
        %3069 = vmatpush.bf16.msra.mxu0 %v2418
        %3070 = vmatpush.bf16.msra.mxu0 %v2411
        %3071 = vmatmul.bf16.gmra.mxu0 %v1443
        %v3072 = vpop.f32.mrf.mxu0
        %v3073 = vadd.f32 0.0, %v3072
        %v3074 = vpop.f32.mrf.mxu0
        %3075 = vdwg.mxu0
        %3076 = vmatpush.bf16.msra.mxu0 %v2516
        %3077 = vmatpush.bf16.msra.mxu0 %v2509
        %3078 = vmatpush.bf16.msra.mxu0 %v2502
        %3079 = vmatpush.bf16.msra.mxu0 %v2495
        %3080 = vmatpush.bf16.msra.mxu0 %v2488
        %3081 = vmatpush.bf16.msra.mxu0 %v2481
        %3082 = vmatpush.bf16.msra.mxu0 %v2474
        %3083 = vmatpush.bf16.msra.mxu0 %v2467
        %3084 = vmatmul.bf16.gmra.mxu0 %v1444
        %v3085 = vpop.f32.mrf.mxu0
        %v3086 = vadd.f32 %v3073, %v3085
        %v3087 = vpop.f32.mrf.mxu0
        %3088 = vdwg.mxu0
        %3089 = vmatpush.bf16.msra.mxu0 %v2572
        %3090 = vmatpush.bf16.msra.mxu0 %v2565
        %3091 = vmatpush.bf16.msra.mxu0 %v2558
        %3092 = vmatpush.bf16.msra.mxu0 %v2551
        %3093 = vmatpush.bf16.msra.mxu0 %v2544
        %3094 = vmatpush.bf16.msra.mxu0 %v2537
        %3095 = vmatpush.bf16.msra.mxu0 %v2530
        %3096 = vmatpush.bf16.msra.mxu0 %v2523
        %3097 = vmatmul.bf16.gmra.mxu0 %v1445
        %v3098 = vpop.f32.mrf.mxu0
        %v3099 = vadd.f32 %v3086, %v3098
        %v3100 = vpop.f32.mrf.mxu0
        %3101 = vdwg.mxu0
        %3102 = vmatpush.bf16.msra.mxu0 %v2628
        %3103 = vmatpush.bf16.msra.mxu0 %v2621
        %3104 = vmatpush.bf16.msra.mxu0 %v2614
        %3105 = vmatpush.bf16.msra.mxu0 %v2607
        %3106 = vmatpush.bf16.msra.mxu0 %v2600
        %3107 = vmatpush.bf16.msra.mxu0 %v2593
        %3108 = vmatpush.bf16.msra.mxu0 %v2586
        %3109 = vmatpush.bf16.msra.mxu0 %v2579
        %3110 = vmatmul.bf16.gmra.mxu0 %v1446
        %v3111 = vpop.f32.mrf.mxu0
        %v3112 = vadd.f32 %v3099, %v3111
        %v3113 = vpop.f32.mrf.mxu0
        %3114 = vdwg.mxu0
        %3115 = vmatpush.bf16.msra.mxu0 %v2461
        %3116 = vmatpush.bf16.msra.mxu0 %v2454
        %3117 = vmatpush.bf16.msra.mxu0 %v2447
        %3118 = vmatpush.bf16.msra.mxu0 %v2440
        %3119 = vmatpush.bf16.msra.mxu0 %v2433
        %3120 = vmatpush.bf16.msra.mxu0 %v2426
        %3121 = vmatpush.bf16.msra.mxu0 %v2419
        %3122 = vmatpush.bf16.msra.mxu0 %v2412
        %3123 = vmatmul.bf16.gmra.mxu0 %v1443
        %v3124 = vpop.f32.mrf.mxu0
        %v3125 = vadd.f32 0.0, %v3124
        %v3126 = vpop.f32.mrf.mxu0
        %3127 = vdwg.mxu0
        %3128 = vmatpush.bf16.msra.mxu0 %v2517
        %3129 = vmatpush.bf16.msra.mxu0 %v2510
        %3130 = vmatpush.bf16.msra.mxu0 %v2503
        %3131 = vmatpush.bf16.msra.mxu0 %v2496
        %3132 = vmatpush.bf16.msra.mxu0 %v2489
        %3133 = vmatpush.bf16.msra.mxu0 %v2482
        %3134 = vmatpush.bf16.msra.mxu0 %v2475
        %3135 = vmatpush.bf16.msra.mxu0 %v2468
        %3136 = vmatmul.bf16.gmra.mxu0 %v1444
        %v3137 = vpop.f32.mrf.mxu0
        %v3138 = vadd.f32 %v3125, %v3137
        %v3139 = vpop.f32.mrf.mxu0
        %3140 = vdwg.mxu0
        %3141 = vmatpush.bf16.msra.mxu0 %v2573
        %3142 = vmatpush.bf16.msra.mxu0 %v2566
        %3143 = vmatpush.bf16.msra.mxu0 %v2559
        %3144 = vmatpush.bf16.msra.mxu0 %v2552
        %3145 = vmatpush.bf16.msra.mxu0 %v2545
        %3146 = vmatpush.bf16.msra.mxu0 %v2538
        %3147 = vmatpush.bf16.msra.mxu0 %v2531
        %3148 = vmatpush.bf16.msra.mxu0 %v2524
        %3149 = vmatmul.bf16.gmra.mxu0 %v1445
        %v3150 = vpop.f32.mrf.mxu0
        %v3151 = vadd.f32 %v3138, %v3150
        %v3152 = vpop.f32.mrf.mxu0
        %3153 = vdwg.mxu0
        %3154 = vmatpush.bf16.msra.mxu0 %v2629
        %3155 = vmatpush.bf16.msra.mxu0 %v2622
        %3156 = vmatpush.bf16.msra.mxu0 %v2615
        %3157 = vmatpush.bf16.msra.mxu0 %v2608
        %3158 = vmatpush.bf16.msra.mxu0 %v2601
        %3159 = vmatpush.bf16.msra.mxu0 %v2594
        %3160 = vmatpush.bf16.msra.mxu0 %v2587
        %3161 = vmatpush.bf16.msra.mxu0 %v2580
        %3162 = vmatmul.bf16.gmra.mxu0 %v1446
        %v3163 = vpop.f32.mrf.mxu0
        %v3164 = vadd.f32 %v3151, %v3163
        %v3165 = vpop.f32.mrf.mxu0
        %3166 = vdwg.mxu0
        %3167 = vmatpush.bf16.msra.mxu0 %v2462
        %3168 = vmatpush.bf16.msra.mxu0 %v2455
        %3169 = vmatpush.bf16.msra.mxu0 %v2448
        %3170 = vmatpush.bf16.msra.mxu0 %v2441
        %3171 = vmatpush.bf16.msra.mxu0 %v2434
        %3172 = vmatpush.bf16.msra.mxu0 %v2427
        %3173 = vmatpush.bf16.msra.mxu0 %v2420
        %3174 = vmatpush.bf16.msra.mxu0 %v2413
        %3175 = vmatmul.bf16.gmra.mxu0 %v1443
        %v3176 = vpop.f32.mrf.mxu0
        %v3177 = vadd.f32 0.0, %v3176
        %v3178 = vpop.f32.mrf.mxu0
        %3179 = vdwg.mxu0
        %3180 = vmatpush.bf16.msra.mxu0 %v2518
        %3181 = vmatpush.bf16.msra.mxu0 %v2511
        %3182 = vmatpush.bf16.msra.mxu0 %v2504
        %3183 = vmatpush.bf16.msra.mxu0 %v2497
        %3184 = vmatpush.bf16.msra.mxu0 %v2490
        %3185 = vmatpush.bf16.msra.mxu0 %v2483
        %3186 = vmatpush.bf16.msra.mxu0 %v2476
        %3187 = vmatpush.bf16.msra.mxu0 %v2469
        %3188 = vmatmul.bf16.gmra.mxu0 %v1444
        %v3189 = vpop.f32.mrf.mxu0
        %v3190 = vadd.f32 %v3177, %v3189
        %v3191 = vpop.f32.mrf.mxu0
        %3192 = vdwg.mxu0
        %3193 = vmatpush.bf16.msra.mxu0 %v2574
        %3194 = vmatpush.bf16.msra.mxu0 %v2567
        %3195 = vmatpush.bf16.msra.mxu0 %v2560
        %3196 = vmatpush.bf16.msra.mxu0 %v2553
        %3197 = vmatpush.bf16.msra.mxu0 %v2546
        %3198 = vmatpush.bf16.msra.mxu0 %v2539
        %3199 = vmatpush.bf16.msra.mxu0 %v2532
        %3200 = vmatpush.bf16.msra.mxu0 %v2525
        %3201 = vmatmul.bf16.gmra.mxu0 %v1445
        %v3202 = vpop.f32.mrf.mxu0
        %v3203 = vadd.f32 %v3190, %v3202
        %v3204 = vpop.f32.mrf.mxu0
        %3205 = vdwg.mxu0
        %3206 = vmatpush.bf16.msra.mxu0 %v2630
        %3207 = vmatpush.bf16.msra.mxu0 %v2623
        %3208 = vmatpush.bf16.msra.mxu0 %v2616
        %3209 = vmatpush.bf16.msra.mxu0 %v2609
        %3210 = vmatpush.bf16.msra.mxu0 %v2602
        %3211 = vmatpush.bf16.msra.mxu0 %v2595
        %3212 = vmatpush.bf16.msra.mxu0 %v2588
        %3213 = vmatpush.bf16.msra.mxu0 %v2581
        %3214 = vmatmul.bf16.gmra.mxu0 %v1446
        %v3215 = vpop.f32.mrf.mxu0
        %v3216 = vadd.f32 %v3203, %v3215
        %v3217 = vpop.f32.mrf.mxu0
        %3218 = vdwg.mxu0
        %v3219 = vxor.u32 %v2904, 2147483648
        %v3220 = vmul.f32 %v3219, 1.442695
        %v3221 = vpow.pop %v3220
        %v3222 = vadd.f32 %v3221, 1.0
        %v3223 = vrcp.pop %v3222
        %v3224 = vmul.f32 %v3222, %v3223
        %v3225 = vsub.f32 1.0, %v3224
        %v3226 = vmul.f32 %v3223, %v3225
        %v3227 = vadd.f32 %v3223, %v3226
        %vm3228 = vweird.f32 %v3222
        %vm3229 = vweird.f32 %v3223
        %vm3230 = vmor %vm3228, %vm3229
        %v3231 = vsel %vm3230, %v3223, %v3227
        %v3232 = vand.u32 2147483647, %v3222
        %vm3233 = vcmp.eq.f32.partialorder %v3232, 8.507059e+37
        %v3234 = vand.u32 %v3222, 2147483648
        %v3235 = vor.u32 1.1754944e-38, %v3234
        %v3236 = vsel %vm3233, %v3235, %v3231
        %v3237 = vmul.f32 1.0, %v3236
        %v3238 = vadd.f32 %v2956, 1.0
        %v3239 = vxor.u32 %v3238, 2147483648
        %v3240 = vmul.f32 %v3239, 1.442695
        %v3241 = vpow.pop %v3240
        %v3242 = vadd.f32 %v3241, 1.0
        %v3243 = vrcp.pop %v3242
        %v3244 = vmul.f32 %v3242, %v3243
        %v3245 = vsub.f32 1.0, %v3244
        %v3246 = vmul.f32 %v3243, %v3245
        %v3247 = vadd.f32 %v3243, %v3246
        %vm3248 = vweird.f32 %v3242
        %vm3249 = vweird.f32 %v3243
        %vm3250 = vmor %vm3248, %vm3249
        %v3251 = vsel %vm3250, %v3243, %v3247
        %v3252 = vand.u32 2147483647, %v3242
        %vm3253 = vcmp.eq.f32.partialorder %v3252, 8.507059e+37
        %v3254 = vand.u32 %v3242, 2147483648
        %v3255 = vor.u32 1.1754944e-38, %v3254
        %v3256 = vsel %vm3253, %v3255, %v3251
        %v3257 = vmul.f32 1.0, %v3256
        %v3258 = vtanh.pop %v3008
        %v3259 = vmul.f32 %v3257, %v1435
        %v3260 = vmul.f32 %v3237, %v3258
        %v3261 = vadd.f32 %v3259, %v3260
        %v3262 = vxor.u32 %v3060, 2147483648
        %v3263 = vmul.f32 %v3262, 1.442695
        %v3264 = vpow.pop %v3263
        %v3265 = vadd.f32 %v3264, 1.0
        %v3266 = vrcp.pop %v3265
        %v3267 = vmul.f32 %v3265, %v3266
        %v3268 = vsub.f32 1.0, %v3267
        %v3269 = vmul.f32 %v3266, %v3268
        %v3270 = vadd.f32 %v3266, %v3269
        %vm3271 = vweird.f32 %v3265
        %vm3272 = vweird.f32 %v3266
        %vm3273 = vmor %vm3271, %vm3272
        %v3274 = vsel %vm3273, %v3266, %v3270
        %v3275 = vand.u32 2147483647, %v3265
        %vm3276 = vcmp.eq.f32.partialorder %v3275, 8.507059e+37
        %v3277 = vand.u32 %v3265, 2147483648
        %v3278 = vor.u32 1.1754944e-38, %v3277
        %v3279 = vsel %vm3276, %v3278, %v3274
        %v3280 = vmul.f32 1.0, %v3279
        %v3281 = vadd.f32 %v3112, 1.0
        %v3282 = vxor.u32 %v3281, 2147483648
        %v3283 = vmul.f32 %v3282, 1.442695
        %v3284 = vpow.pop %v3283
        %v3285 = vadd.f32 %v3284, 1.0
        %v3286 = vrcp.pop %v3285
        %v3287 = vmul.f32 %v3285, %v3286
        %v3288 = vsub.f32 1.0, %v3287
        %v3289 = vmul.f32 %v3286, %v3288
        %v3290 = vadd.f32 %v3286, %v3289
        %vm3291 = vweird.f32 %v3285
        %vm3292 = vweird.f32 %v3286
        %vm3293 = vmor %vm3291, %vm3292
        %v3294 = vsel %vm3293, %v3286, %v3290
        %v3295 = vand.u32 2147483647, %v3285
        %vm3296 = vcmp.eq.f32.partialorder %v3295, 8.507059e+37
        %v3297 = vand.u32 %v3285, 2147483648
        %v3298 = vor.u32 1.1754944e-38, %v3297
        %v3299 = vsel %vm3296, %v3298, %v3294
        %v3300 = vmul.f32 1.0, %v3299
        %v3301 = vtanh.pop %v3164
        %v3302 = vmul.f32 %v3300, %v1431
        %v3303 = vmul.f32 %v3280, %v3301
        %v3304 = vadd.f32 %v3302, %v3303
        %v3305 = vpack.c.bf16 %v3261, %v3261
        %v3306 = vpack.c.bf16 %v3304, %v3304
        %v3307 = vld [vmem:[#allocation27] sm:$0xf]
        %v3308 = vld [vmem:[#allocation27 + $0x4] sm:$0xf]
        %v3309 = vld [vmem:[#allocation27 + $0x8] sm:$0xf]
        %v3310 = vld [vmem:[#allocation27 + $0xc] sm:$0xf]
        %v3311 = vld [vmem:[#allocation27 + $0x10] sm:$0xf]
        %v3312 = vld [vmem:[#allocation27 + $0x14] sm:$0xf]
        %v3313 = vld [vmem:[#allocation27 + $0x18] sm:$0xf]
        %v3314 = vld [vmem:[#allocation27 + $0x1c] sm:$0xf]
        %v3315 = vld [vmem:[#allocation27 + $0x20] sm:$0xf]
        %v3316 = vld [vmem:[#allocation27 + $0x24] sm:$0xf]
        %v3317 = vld [vmem:[#allocation27 + $0x28] sm:$0xf]
        %v3318 = vld [vmem:[#allocation27 + $0x2c] sm:$0xf]
        %v3319 = vld [vmem:[#allocation27 + $0x30] sm:$0xf]
        %v3320 = vld [vmem:[#allocation27 + $0x34] sm:$0xf]
        %v3321 = vld [vmem:[#allocation27 + $0x38] sm:$0xf]
        %v3322 = vld [vmem:[#allocation27 + $0x3c] sm:$0xf]
        %v3323 = vld [vmem:[#allocation27 + $0x40] sm:$0xf]
        %v3324 = vld [vmem:[#allocation27 + $0x44] sm:$0xf]
        %v3325 = vld [vmem:[#allocation27 + $0x48] sm:$0xf]
        %v3326 = vld [vmem:[#allocation27 + $0x4c] sm:$0xf]
        %v3327 = vld [vmem:[#allocation27 + $0x50] sm:$0xf]
        %v3328 = vld [vmem:[#allocation27 + $0x54] sm:$0xf]
        %v3329 = vld [vmem:[#allocation27 + $0x58] sm:$0xf]
        %v3330 = vld [vmem:[#allocation27 + $0x5c] sm:$0xf]
        %v3331 = vld [vmem:[#allocation27 + $0x60] sm:$0xf]
        %v3332 = vld [vmem:[#allocation27 + $0x64] sm:$0xf]
        %v3333 = vld [vmem:[#allocation27 + $0x68] sm:$0xf]
        %v3334 = vld [vmem:[#allocation27 + $0x6c] sm:$0xf]
        %v3335 = vld [vmem:[#allocation27 + $0x70] sm:$0xf]
        %v3336 = vld [vmem:[#allocation27 + $0x74] sm:$0xf]
        %v3337 = vld [vmem:[#allocation27 + $0x78] sm:$0xf]
        %v3338 = vld [vmem:[#allocation27 + $0x7c] sm:$0xf]
        %v3371 = vunpack.c.l.b16 %v3307
        %v3372 = vunpack.c.l.b16 %v3308
        %v3373 = vunpack.c.l.b16 %v3309
        %v3374 = vunpack.c.l.b16 %v3310
        %v3375 = vunpack.c.l.b16 %v3311
        %v3376 = vunpack.c.l.b16 %v3312
        %v3377 = vunpack.c.l.b16 %v3313
        %v3378 = vunpack.c.l.b16 %v3314
        %v3379 = vunpack.c.l.b16 %v3315
        %v3380 = vunpack.c.l.b16 %v3316
        %v3381 = vunpack.c.l.b16 %v3317
        %v3382 = vunpack.c.l.b16 %v3318
        %v3383 = vunpack.c.l.b16 %v3319
        %v3384 = vunpack.c.l.b16 %v3320
        %v3385 = vunpack.c.l.b16 %v3321
        %v3386 = vunpack.c.l.b16 %v3322
        %v3387 = vunpack.c.l.b16 %v3323
        %v3388 = vunpack.c.l.b16 %v3324
        %v3389 = vunpack.c.l.b16 %v3325
        %v3390 = vunpack.c.l.b16 %v3326
        %v3391 = vunpack.c.l.b16 %v3327
        %v3392 = vunpack.c.l.b16 %v3328
        %v3393 = vunpack.c.l.b16 %v3329
        %v3394 = vunpack.c.l.b16 %v3330
        %v3395 = vunpack.c.l.b16 %v3331
        %v3396 = vunpack.c.l.b16 %v3332
        %v3397 = vunpack.c.l.b16 %v3333
        %v3398 = vunpack.c.l.b16 %v3334
        %v3399 = vunpack.c.l.b16 %v3335
        %v3400 = vunpack.c.l.b16 %v3336
        %v3401 = vunpack.c.l.b16 %v3337
        %v3402 = vunpack.c.l.b16 %v3338
        %v3403 = vpack.c.b16 %v3372, %v3371
        %v3404 = vpack.c.b16 %v3374, %v3373
        %v3405 = vpack.c.b16 %v3376, %v3375
        %v3406 = vpack.c.b16 %v3378, %v3377
        %v3407 = vpack.c.b16 %v3380, %v3379
        %v3408 = vpack.c.b16 %v3382, %v3381
        %v3409 = vpack.c.b16 %v3384, %v3383
        %v3410 = vpack.c.b16 %v3386, %v3385
        %v3411 = vpack.c.b16 %v3388, %v3387
        %v3412 = vpack.c.b16 %v3390, %v3389
        %v3413 = vpack.c.b16 %v3392, %v3391
        %v3414 = vpack.c.b16 %v3394, %v3393
        %v3415 = vpack.c.b16 %v3396, %v3395
        %v3416 = vpack.c.b16 %v3398, %v3397
        %v3417 = vpack.c.b16 %v3400, %v3399
        %v3418 = vpack.c.b16 %v3402, %v3401
        %3435 = vmatpush.bf16.msra.mxu0 %v3410
        %3436 = vmatpush.bf16.msra.mxu0 %v3409
        %3437 = vmatpush.bf16.msra.mxu0 %v3408
        %3438 = vmatpush.bf16.msra.mxu0 %v3407
        %3439 = vmatpush.bf16.msra.mxu0 %v3406
        %3440 = vmatpush.bf16.msra.mxu0 %v3405
        %3441 = vmatpush.bf16.msra.mxu0 %v3404
        %3442 = vmatpush.bf16.msra.mxu0 %v3403
        %3443 = vmatmul.bf16.gmra.mxu0 %v3305
        %v3444 = vpop.f32.mrf.mxu0
        %v3445 = vadd.f32 0.0, %v3444
        %v3446 = vpop.f32.mrf.mxu0
        %3447 = vdwg.mxu0
        %3448 = vmatpush.bf16.msra.mxu0 %v3418
        %3449 = vmatpush.bf16.msra.mxu0 %v3417
        %3450 = vmatpush.bf16.msra.mxu0 %v3416
        %3451 = vmatpush.bf16.msra.mxu0 %v3415
        %3452 = vmatpush.bf16.msra.mxu0 %v3414
        %3453 = vmatpush.bf16.msra.mxu0 %v3413
        %3454 = vmatpush.bf16.msra.mxu0 %v3412
        %3455 = vmatpush.bf16.msra.mxu0 %v3411
        %3456 = vmatmul.bf16.gmra.mxu0 %v3306
        %v3457 = vpop.f32.mrf.mxu0
        %v3458 = vadd.f32 %v3445, %v3457
        %v3459 = vpop.f32.mrf.mxu0
        %3460 = vdwg.mxu0
        %v3461 = vadd.f32 %v3216, %v3458
        %v3462 = vxor.u32 %v3461, 2147483648
        %v3463 = vmul.f32 %v3462, 1.442695
        %v3464 = vpow.pop %v3463
        %v3465 = vadd.f32 %v3464, 1.0
        %v3466 = vrcp.pop %v3465
        %v3467 = vmul.f32 %v3465, %v3466
        %v3468 = vsub.f32 1.0, %v3467
        %v3469 = vmul.f32 %v3466, %v3468
        %v3470 = vadd.f32 %v3466, %v3469
        %vm3471 = vweird.f32 %v3465
        %vm3472 = vweird.f32 %v3466
        %vm3473 = vmor %vm3471, %vm3472
        %v3474 = vsel %vm3473, %v3466, %v3470
        %v3475 = vand.u32 2147483647, %v3465
        %vm3476 = vcmp.eq.f32.partialorder %v3475, 8.507059e+37
        %v3477 = vand.u32 %v3465, 2147483648
        %v3478 = vor.u32 1.1754944e-38, %v3477
        %v3479 = vsel %vm3476, %v3478, %v3474
        %v3480 = vmul.f32 1.0, %v3479
        %v3481 = vld [vmem:[#allocation32] sm:$0xf]
        %v3482 = vld [vmem:[#allocation32 + $0x4] sm:$0xf]
        %v3483 = vld [vmem:[#allocation32 + $0x8] sm:$0xf]
        %v3484 = vld [vmem:[#allocation32 + $0xc] sm:$0xf]
        %v3485 = vld [vmem:[#allocation32 + $0x10] sm:$0xf]
        %v3486 = vld [vmem:[#allocation32 + $0x14] sm:$0xf]
        %v3487 = vld [vmem:[#allocation32 + $0x18] sm:$0xf]
        %v3488 = vld [vmem:[#allocation32 + $0x1c] sm:$0xf]
        %v3489 = vld [vmem:[#allocation32 + $0x20] sm:$0xf]
        %v3490 = vld [vmem:[#allocation32 + $0x24] sm:$0xf]
        %v3491 = vld [vmem:[#allocation32 + $0x28] sm:$0xf]
        %v3492 = vld [vmem:[#allocation32 + $0x2c] sm:$0xf]
        %v3493 = vld [vmem:[#allocation32 + $0x30] sm:$0xf]
        %v3494 = vld [vmem:[#allocation32 + $0x34] sm:$0xf]
        %v3495 = vld [vmem:[#allocation32 + $0x38] sm:$0xf]
        %v3496 = vld [vmem:[#allocation32 + $0x3c] sm:$0xf]
        %v3497 = vld [vmem:[#allocation32 + $0x40] sm:$0xf]
        %v3498 = vld [vmem:[#allocation32 + $0x44] sm:$0xf]
        %v3499 = vld [vmem:[#allocation32 + $0x48] sm:$0xf]
        %v3500 = vld [vmem:[#allocation32 + $0x4c] sm:$0xf]
        %v3501 = vld [vmem:[#allocation32 + $0x50] sm:$0xf]
        %v3502 = vld [vmem:[#allocation32 + $0x54] sm:$0xf]
        %v3503 = vld [vmem:[#allocation32 + $0x58] sm:$0xf]
        %v3504 = vld [vmem:[#allocation32 + $0x5c] sm:$0xf]
        %v3505 = vld [vmem:[#allocation32 + $0x60] sm:$0xf]
        %v3506 = vld [vmem:[#allocation32 + $0x64] sm:$0xf]
        %v3507 = vld [vmem:[#allocation32 + $0x68] sm:$0xf]
        %v3508 = vld [vmem:[#allocation32 + $0x6c] sm:$0xf]
        %v3509 = vld [vmem:[#allocation32 + $0x70] sm:$0xf]
        %v3510 = vld [vmem:[#allocation32 + $0x74] sm:$0xf]
        %v3511 = vld [vmem:[#allocation32 + $0x78] sm:$0xf]
        %v3512 = vld [vmem:[#allocation32 + $0x7c] sm:$0xf]
        %v3545 = vunpack.c.l.b16 %v3481
        %v3546 = vunpack.c.l.b16 %v3482
        %v3547 = vunpack.c.l.b16 %v3483
        %v3548 = vunpack.c.l.b16 %v3484
        %v3549 = vunpack.c.l.b16 %v3485
        %v3550 = vunpack.c.l.b16 %v3486
        %v3551 = vunpack.c.l.b16 %v3487
        %v3552 = vunpack.c.l.b16 %v3488
        %v3553 = vunpack.c.l.b16 %v3489
        %v3554 = vunpack.c.l.b16 %v3490
        %v3555 = vunpack.c.l.b16 %v3491
        %v3556 = vunpack.c.l.b16 %v3492
        %v3557 = vunpack.c.l.b16 %v3493
        %v3558 = vunpack.c.l.b16 %v3494
        %v3559 = vunpack.c.l.b16 %v3495
        %v3560 = vunpack.c.l.b16 %v3496
        %v3561 = vunpack.c.l.b16 %v3497
        %v3562 = vunpack.c.l.b16 %v3498
        %v3563 = vunpack.c.l.b16 %v3499
        %v3564 = vunpack.c.l.b16 %v3500
        %v3565 = vunpack.c.l.b16 %v3501
        %v3566 = vunpack.c.l.b16 %v3502
        %v3567 = vunpack.c.l.b16 %v3503
        %v3568 = vunpack.c.l.b16 %v3504
        %v3569 = vunpack.c.l.b16 %v3505
        %v3570 = vunpack.c.l.b16 %v3506
        %v3571 = vunpack.c.l.b16 %v3507
        %v3572 = vunpack.c.l.b16 %v3508
        %v3573 = vunpack.c.l.b16 %v3509
        %v3574 = vunpack.c.l.b16 %v3510
        %v3575 = vunpack.c.l.b16 %v3511
        %v3576 = vunpack.c.l.b16 %v3512
        %v3577 = vpack.c.b16 %v3546, %v3545
        %v3578 = vpack.c.b16 %v3548, %v3547
        %v3579 = vpack.c.b16 %v3550, %v3549
        %v3580 = vpack.c.b16 %v3552, %v3551
        %v3581 = vpack.c.b16 %v3554, %v3553
        %v3582 = vpack.c.b16 %v3556, %v3555
        %v3583 = vpack.c.b16 %v3558, %v3557
        %v3584 = vpack.c.b16 %v3560, %v3559
        %v3585 = vpack.c.b16 %v3562, %v3561
        %v3586 = vpack.c.b16 %v3564, %v3563
        %v3587 = vpack.c.b16 %v3566, %v3565
        %v3588 = vpack.c.b16 %v3568, %v3567
        %v3589 = vpack.c.b16 %v3570, %v3569
        %v3590 = vpack.c.b16 %v3572, %v3571
        %v3591 = vpack.c.b16 %v3574, %v3573
        %v3592 = vpack.c.b16 %v3576, %v3575
        %3609 = vmatpush.bf16.msra.mxu0 %v3584
        %3610 = vmatpush.bf16.msra.mxu0 %v3583
        %3611 = vmatpush.bf16.msra.mxu0 %v3582
        %3612 = vmatpush.bf16.msra.mxu0 %v3581
        %3613 = vmatpush.bf16.msra.mxu0 %v3580
        %3614 = vmatpush.bf16.msra.mxu0 %v3579
        %3615 = vmatpush.bf16.msra.mxu0 %v3578
        %3616 = vmatpush.bf16.msra.mxu0 %v3577
        %3617 = vmatmul.bf16.gmra.mxu0 %v3305
        %v3618 = vpop.f32.mrf.mxu0
        %v3619 = vadd.f32 0.0, %v3618
        %v3620 = vpop.f32.mrf.mxu0
        %3621 = vdwg.mxu0
        %3622 = vmatpush.bf16.msra.mxu0 %v3592
        %3623 = vmatpush.bf16.msra.mxu0 %v3591
        %3624 = vmatpush.bf16.msra.mxu0 %v3590
        %3625 = vmatpush.bf16.msra.mxu0 %v3589
        %3626 = vmatpush.bf16.msra.mxu0 %v3588
        %3627 = vmatpush.bf16.msra.mxu0 %v3587
        %3628 = vmatpush.bf16.msra.mxu0 %v3586
        %3629 = vmatpush.bf16.msra.mxu0 %v3585
        %3630 = vmatmul.bf16.gmra.mxu0 %v3306
        %v3631 = vpop.f32.mrf.mxu0
        %v3632 = vadd.f32 %v3619, %v3631
        %v3633 = vpop.f32.mrf.mxu0
        %3634 = vdwg.mxu0
        %v3635 = vtanh.pop %v3632
        %v3636 = vmul.f32 %v3480, %v3635
        %v3637 = vsub.f32 1.0, %v3480
        %v3638 = vmul.f32 %v3637, %v1428
        %v3639 = vadd.f32 %v3636, %v3638
        %v3640 = vpack.c.bf16 %v3639, %v3639
        %v3641 = vld [vmem:[#allocation36] sm:$0xf]
        %v3642 = vld [vmem:[#allocation36 + $0x4] sm:$0xf]
        %v3643 = vld [vmem:[#allocation36 + $0x8] sm:$0xf]
        %v3644 = vld [vmem:[#allocation36 + $0xc] sm:$0xf]
        %v3645 = vld [vmem:[#allocation36 + $0x10] sm:$0xf]
        %v3646 = vld [vmem:[#allocation36 + $0x14] sm:$0xf]
        %v3647 = vld [vmem:[#allocation36 + $0x18] sm:$0xf]
        %v3648 = vld [vmem:[#allocation36 + $0x1c] sm:$0xf]
        %v3649 = vld [vmem:[#allocation36 + $0x20] sm:$0xf]
        %v3650 = vld [vmem:[#allocation36 + $0x24] sm:$0xf]
        %v3651 = vld [vmem:[#allocation36 + $0x28] sm:$0xf]
        %v3652 = vld [vmem:[#allocation36 + $0x2c] sm:$0xf]
        %v3653 = vld [vmem:[#allocation36 + $0x30] sm:$0xf]
        %v3654 = vld [vmem:[#allocation36 + $0x34] sm:$0xf]
        %v3655 = vld [vmem:[#allocation36 + $0x38] sm:$0xf]
        %v3656 = vld [vmem:[#allocation36 + $0x3c] sm:$0xf]
        %v3657 = vld [vmem:[%s24] sm:$0x1]
        %v3659 = vperm.slane %v3657, 0
        %v3677 = vunpack.c.l.b16 %v3641
        %v3678 = vunpack.c.l.b16 %v3642
        %v3679 = vunpack.c.l.b16 %v3643
        %v3680 = vunpack.c.l.b16 %v3644
        %v3681 = vunpack.c.l.b16 %v3645
        %v3682 = vunpack.c.l.b16 %v3646
        %v3683 = vunpack.c.l.b16 %v3647
        %v3684 = vunpack.c.l.b16 %v3648
        %v3685 = vunpack.c.l.b16 %v3649
        %v3686 = vunpack.c.l.b16 %v3650
        %v3687 = vunpack.c.l.b16 %v3651
        %v3688 = vunpack.c.l.b16 %v3652
        %v3689 = vunpack.c.l.b16 %v3653
        %v3690 = vunpack.c.l.b16 %v3654
        %v3691 = vunpack.c.l.b16 %v3655
        %v3692 = vunpack.c.l.b16 %v3656
        %v3693 = vpack.c.b16 %v3678, %v3677
        %v3694 = vpack.c.b16 %v3680, %v3679
        %v3695 = vpack.c.b16 %v3682, %v3681
        %v3696 = vpack.c.b16 %v3684, %v3683
        %v3697 = vpack.c.b16 %v3686, %v3685
        %v3698 = vpack.c.b16 %v3688, %v3687
        %v3699 = vpack.c.b16 %v3690, %v3689
        %v3700 = vpack.c.b16 %v3692, %v3691
        %3709 = vmatpush.bf16.msra.mxu0 %v3700
        %3710 = vmatpush.bf16.msra.mxu0 %v3699
        %3711 = vmatpush.bf16.msra.mxu0 %v3698
        %3712 = vmatpush.bf16.msra.mxu0 %v3697
        %3713 = vmatpush.bf16.msra.mxu0 %v3696
        %3714 = vmatpush.bf16.msra.mxu0 %v3695
        %3715 = vmatpush.bf16.msra.mxu0 %v3694
        %3716 = vmatpush.bf16.msra.mxu0 %v3693
        %3717 = vmatmul.bf16.gmra.mxu0 %v3640
        %v3718 = vpop.f32.mrf.mxu0
        %v3719 = vadd.f32 %v3659, %v3718
        %v3720 = vpop.f32.mrf.mxu0
        %3721 = vdwg.mxu0
        %v3722 = vld [vmem:[#allocation39] sm:$0xf]
        %v3723 = vld [vmem:[#allocation39 + $0x4] sm:$0xf]
        %v3724 = vld [vmem:[#allocation39 + $0x8] sm:$0xf]
        %v3725 = vld [vmem:[#allocation39 + $0xc] sm:$0xf]
        %v3726 = vld [vmem:[#allocation39 + $0x10] sm:$0xf]
        %v3727 = vld [vmem:[#allocation39 + $0x14] sm:$0xf]
        %v3728 = vld [vmem:[#allocation39 + $0x18] sm:$0xf]
        %v3729 = vld [vmem:[#allocation39 + $0x1c] sm:$0xf]
        %v3730 = vld [vmem:[#allocation39 + $0x20] sm:$0xf]
        %v3731 = vld [vmem:[#allocation39 + $0x24] sm:$0xf]
        %v3732 = vld [vmem:[#allocation39 + $0x28] sm:$0xf]
        %v3733 = vld [vmem:[#allocation39 + $0x2c] sm:$0xf]
        %v3734 = vld [vmem:[#allocation39 + $0x30] sm:$0xf]
        %v3735 = vld [vmem:[#allocation39 + $0x34] sm:$0xf]
        %v3736 = vld [vmem:[#allocation39 + $0x38] sm:$0xf]
        %v3737 = vld [vmem:[#allocation39 + $0x3c] sm:$0xf]
        %v3738 = vld [vmem:[%s26] sm:$0x1]
        %v3740 = vperm.slane %v3738, 0
        %v3758 = vunpack.c.l.b16 %v3722
        %v3759 = vunpack.c.l.b16 %v3723
        %v3760 = vunpack.c.l.b16 %v3724
        %v3761 = vunpack.c.l.b16 %v3725
        %v3762 = vunpack.c.l.b16 %v3726
        %v3763 = vunpack.c.l.b16 %v3727
        %v3764 = vunpack.c.l.b16 %v3728
        %v3765 = vunpack.c.l.b16 %v3729
        %v3766 = vunpack.c.l.b16 %v3730
        %v3767 = vunpack.c.l.b16 %v3731
        %v3768 = vunpack.c.l.b16 %v3732
        %v3769 = vunpack.c.l.b16 %v3733
        %v3770 = vunpack.c.l.b16 %v3734
        %v3771 = vunpack.c.l.b16 %v3735
        %v3772 = vunpack.c.l.b16 %v3736
        %v3773 = vunpack.c.l.b16 %v3737
        %v3774 = vpack.c.b16 %v3759, %v3758
        %v3775 = vpack.c.b16 %v3761, %v3760
        %v3776 = vpack.c.b16 %v3763, %v3762
        %v3777 = vpack.c.b16 %v3765, %v3764
        %v3778 = vpack.c.b16 %v3767, %v3766
        %v3779 = vpack.c.b16 %v3769, %v3768
        %v3780 = vpack.c.b16 %v3771, %v3770
        %v3781 = vpack.c.b16 %v3773, %v3772
        %3790 = vmatpush.bf16.msra.mxu0 %v3781
        %3791 = vmatpush.bf16.msra.mxu0 %v3780
        %3792 = vmatpush.bf16.msra.mxu0 %v3779
        %3793 = vmatpush.bf16.msra.mxu0 %v3778
        %3794 = vmatpush.bf16.msra.mxu0 %v3777
        %3795 = vmatpush.bf16.msra.mxu0 %v3776
        %3796 = vmatpush.bf16.msra.mxu0 %v3775
        %3797 = vmatpush.bf16.msra.mxu0 %v3774
        %3798 = vmatmul.bf16.gmra.mxu0 %v3640
        %v3799 = vpop.f32.mrf.mxu0
        %v3800 = vadd.f32 %v3740, %v3799
        %v3801 = vpop.f32.mrf.mxu0
        %3802 = vdwg.mxu0
        %v3803 = vxor.u32 %v3800, 2147483648
        %v3804 = vmul.f32 %v3803, 1.442695
        %v3805 = vpow.pop %v3804
        %v3806 = vadd.f32 %v3805, 1.0
        %v3807 = vrcp.pop %v3806
        %v3808 = vmul.f32 %v3806, %v3807
        %v3809 = vsub.f32 1.0, %v3808
        %v3810 = vmul.f32 %v3807, %v3809
        %v3811 = vadd.f32 %v3807, %v3810
        %vm3812 = vweird.f32 %v3806
        %vm3813 = vweird.f32 %v3807
        %vm3814 = vmor %vm3812, %vm3813
        %v3815 = vsel %vm3814, %v3807, %v3811
        %v3816 = vand.u32 2147483647, %v3806
        %vm3817 = vcmp.eq.f32.partialorder %v3816, 8.507059e+37
        %v3818 = vand.u32 %v3806, 2147483648
        %v3819 = vor.u32 1.1754944e-38, %v3818
        %v3820 = vsel %vm3817, %v3819, %v3815
        %v3821 = vmul.f32 1.0, %v3820
        %v3822 = vmul.f32 %v3821, %v3719
        %v3823 = vsub.f32 1.0, %v3821
        %v3824 = vmul.f32 %v3823, %v3639
        %v3825 = vadd.f32 %v3822, %v3824
        %3826 = vst [vmem:[#allocation2] sm:$0x3] %v3825
        %3827 = vst [vmem:[#allocation3] sm:$0x3] %v3261
        %s3828 = scalar_lea.vmem [#allocation2], 2
        %v3829 = vld [vmem:[%s3828] sm:$0x3]
        %s3830 = scalar_lea.vmem [#allocation3], 2
        %v3831 = vld [vmem:[%s3830] sm:$0x3]
        %v3832 = vadd.f32 %v3829, %v1433
        %v3833 = vadd.f32 %v3832, %v1432
        %v3834 = vpack.c.bf16 %v3825, %v3825
        %v3835 = vpack.c.bf16 %v3833, %v3833
        %v3836 = vld [vmem:[#allocation24] sm:$0xff]
        %v3837 = vld [vmem:[#allocation24 + $0x8] sm:$0xff]
        %v3838 = vld [vmem:[#allocation24 + $0x10] sm:$0xff]
        %v3839 = vld [vmem:[#allocation24 + $0x18] sm:$0xf]
        %v3840 = vld [vmem:[#allocation24 + $0x1c] sm:$0xff]
        %v3841 = vld [vmem:[#allocation24 + $0x24] sm:$0xff]
        %v3842 = vld [vmem:[#allocation24 + $0x2c] sm:$0xff]
        %v3843 = vld [vmem:[#allocation24 + $0x34] sm:$0xf]
        %v3844 = vld [vmem:[#allocation24 + $0x38] sm:$0xff]
        %v3845 = vld [vmem:[#allocation24 + $0x40] sm:$0xff]
        %v3846 = vld [vmem:[#allocation24 + $0x48] sm:$0xff]
        %v3847 = vld [vmem:[#allocation24 + $0x50] sm:$0xf]
        %v3848 = vld [vmem:[#allocation24 + $0x54] sm:$0xff]
        %v3849 = vld [vmem:[#allocation24 + $0x5c] sm:$0xff]
        %v3850 = vld [vmem:[#allocation24 + $0x64] sm:$0xff]
        %v3851 = vld [vmem:[#allocation24 + $0x6c] sm:$0xf]
        %v3852 = vld [vmem:[#allocation24 + $0x70] sm:$0xff]
        %v3853 = vld [vmem:[#allocation24 + $0x78] sm:$0xff]
        %v3854 = vld [vmem:[#allocation24 + $0x80] sm:$0xff]
        %v3855 = vld [vmem:[#allocation24 + $0x88] sm:$0xf]
        %v3856 = vld [vmem:[#allocation24 + $0x8c] sm:$0xff]
        %v3857 = vld [vmem:[#allocation24 + $0x94] sm:$0xff]
        %v3858 = vld [vmem:[#allocation24 + $0x9c] sm:$0xff]
        %v3859 = vld [vmem:[#allocation24 + $0xa4] sm:$0xf]
        %v3860 = vld [vmem:[#allocation24 + $0xa8] sm:$0xff]
        %v3861 = vld [vmem:[#allocation24 + $0xb0] sm:$0xff]
        %v3862 = vld [vmem:[#allocation24 + $0xb8] sm:$0xff]
        %v3863 = vld [vmem:[#allocation24 + $0xc0] sm:$0xf]
        %v3864 = vld [vmem:[#allocation24 + $0xc4] sm:$0xff]
        %v3865 = vld [vmem:[#allocation24 + $0xcc] sm:$0xff]
        %v3866 = vld [vmem:[#allocation24 + $0xd4] sm:$0xff]
        %v3867 = vld [vmem:[#allocation24 + $0xdc] sm:$0xf]
        %v3868 = vld [vmem:[#allocation24 + $0xe0] sm:$0xff]
        %v3869 = vld [vmem:[#allocation24 + $0xe8] sm:$0xff]
        %v3870 = vld [vmem:[#allocation24 + $0xf0] sm:$0xff]
        %v3871 = vld [vmem:[#allocation24 + $0xf8] sm:$0xf]
        %v3872 = vld [vmem:[#allocation24 + $0xfc] sm:$0xff]
        %v3873 = vld [vmem:[#allocation24 + $0x104] sm:$0xff]
        %v3874 = vld [vmem:[#allocation24 + $0x10c] sm:$0xff]
        %v3875 = vld [vmem:[#allocation24 + $0x114] sm:$0xf]
        %v3876 = vld [vmem:[#allocation24 + $0x118] sm:$0xff]
        %v3877 = vld [vmem:[#allocation24 + $0x120] sm:$0xff]
        %v3878 = vld [vmem:[#allocation24 + $0x128] sm:$0xff]
        %v3879 = vld [vmem:[#allocation24 + $0x130] sm:$0xf]
        %v3880 = vld [vmem:[#allocation24 + $0x134] sm:$0xff]
        %v3881 = vld [vmem:[#allocation24 + $0x13c] sm:$0xff]
        %v3882 = vld [vmem:[#allocation24 + $0x144] sm:$0xff]
        %v3883 = vld [vmem:[#allocation24 + $0x14c] sm:$0xf]
        %v3884 = vld [vmem:[#allocation24 + $0x150] sm:$0xff]
        %v3885 = vld [vmem:[#allocation24 + $0x158] sm:$0xff]
        %v3886 = vld [vmem:[#allocation24 + $0x160] sm:$0xff]
        %v3887 = vld [vmem:[#allocation24 + $0x168] sm:$0xf]
        %v3888 = vld [vmem:[#allocation24 + $0x16c] sm:$0xff]
        %v3889 = vld [vmem:[#allocation24 + $0x174] sm:$0xff]
        %v3890 = vld [vmem:[#allocation24 + $0x17c] sm:$0xff]
        %v3891 = vld [vmem:[#allocation24 + $0x184] sm:$0xf]
        %v3892 = vld [vmem:[#allocation24 + $0x188] sm:$0xff]
        %v3893 = vld [vmem:[#allocation24 + $0x190] sm:$0xff]
        %v3894 = vld [vmem:[#allocation24 + $0x198] sm:$0xff]
        %v3895 = vld [vmem:[#allocation24 + $0x1a0] sm:$0xf]
        %v3896 = vld [vmem:[#allocation24 + $0x1a4] sm:$0xff]
        %v3897 = vld [vmem:[#allocation24 + $0x1ac] sm:$0xff]
        %v3898 = vld [vmem:[#allocation24 + $0x1b4] sm:$0xff]
        %v3899 = vld [vmem:[#allocation24 + $0x1bc] sm:$0xf]
        %v3900 = vld [vmem:[#allocation24 + $0x1c0] sm:$0xff]
        %v3901 = vld [vmem:[#allocation24 + $0x1c8] sm:$0xff]
        %v3902 = vld [vmem:[#allocation24 + $0x1d0] sm:$0xff]
        %v3903 = vld [vmem:[#allocation24 + $0x1d8] sm:$0xf]
        %v3904 = vld [vmem:[#allocation24 + $0x1dc] sm:$0xff]
        %v3905 = vld [vmem:[#allocation24 + $0x1e4] sm:$0xff]
        %v3906 = vld [vmem:[#allocation24 + $0x1ec] sm:$0xff]
        %v3907 = vld [vmem:[#allocation24 + $0x1f4] sm:$0xf]
        %v3908 = vld [vmem:[#allocation24 + $0x1f8] sm:$0xff]
        %v3909 = vld [vmem:[#allocation24 + $0x200] sm:$0xff]
        %v3910 = vld [vmem:[#allocation24 + $0x208] sm:$0xff]
        %v3911 = vld [vmem:[#allocation24 + $0x210] sm:$0xf]
        %v3912 = vld [vmem:[#allocation24 + $0x214] sm:$0xff]
        %v3913 = vld [vmem:[#allocation24 + $0x21c] sm:$0xff]
        %v3914 = vld [vmem:[#allocation24 + $0x224] sm:$0xff]
        %v3915 = vld [vmem:[#allocation24 + $0x22c] sm:$0xf]
        %v3916 = vld [vmem:[#allocation24 + $0x230] sm:$0xff]
        %v3917 = vld [vmem:[#allocation24 + $0x238] sm:$0xff]
        %v3918 = vld [vmem:[#allocation24 + $0x240] sm:$0xff]
        %v3919 = vld [vmem:[#allocation24 + $0x248] sm:$0xf]
        %v3920 = vld [vmem:[#allocation24 + $0x24c] sm:$0xff]
        %v3921 = vld [vmem:[#allocation24 + $0x254] sm:$0xff]
        %v3922 = vld [vmem:[#allocation24 + $0x25c] sm:$0xff]
        %v3923 = vld [vmem:[#allocation24 + $0x264] sm:$0xf]
        %v3924 = vld [vmem:[#allocation24 + $0x268] sm:$0xff]
        %v3925 = vld [vmem:[#allocation24 + $0x270] sm:$0xff]
        %v3926 = vld [vmem:[#allocation24 + $0x278] sm:$0xff]
        %v3927 = vld [vmem:[#allocation24 + $0x280] sm:$0xf]
        %v3928 = vld [vmem:[#allocation24 + $0x284] sm:$0xff]
        %v3929 = vld [vmem:[#allocation24 + $0x28c] sm:$0xff]
        %v3930 = vld [vmem:[#allocation24 + $0x294] sm:$0xff]
        %v3931 = vld [vmem:[#allocation24 + $0x29c] sm:$0xf]
        %v3932 = vld [vmem:[#allocation24 + $0x2a0] sm:$0xff]
        %v3933 = vld [vmem:[#allocation24 + $0x2a8] sm:$0xff]
        %v3934 = vld [vmem:[#allocation24 + $0x2b0] sm:$0xff]
        %v3935 = vld [vmem:[#allocation24 + $0x2b8] sm:$0xf]
        %v3936 = vld [vmem:[#allocation24 + $0x2bc] sm:$0xff]
        %v3937 = vld [vmem:[#allocation24 + $0x2c4] sm:$0xff]
        %v3938 = vld [vmem:[#allocation24 + $0x2cc] sm:$0xff]
        %v3939 = vld [vmem:[#allocation24 + $0x2d4] sm:$0xf]
        %v3940 = vld [vmem:[#allocation24 + $0x2d8] sm:$0xff]
        %v3941 = vld [vmem:[#allocation24 + $0x2e0] sm:$0xff]
        %v3942 = vld [vmem:[#allocation24 + $0x2e8] sm:$0xff]
        %v3943 = vld [vmem:[#allocation24 + $0x2f0] sm:$0xf]
        %v3944 = vld [vmem:[#allocation24 + $0x2f4] sm:$0xff]
        %v3945 = vld [vmem:[#allocation24 + $0x2fc] sm:$0xff]
        %v3946 = vld [vmem:[#allocation24 + $0x304] sm:$0xff]
        %v3947 = vld [vmem:[#allocation24 + $0x30c] sm:$0xf]
        %v3948 = vld [vmem:[#allocation24 + $0x310] sm:$0xff]
        %v3949 = vld [vmem:[#allocation24 + $0x318] sm:$0xff]
        %v3950 = vld [vmem:[#allocation24 + $0x320] sm:$0xff]
        %v3951 = vld [vmem:[#allocation24 + $0x328] sm:$0xf]
        %v3952 = vld [vmem:[#allocation24 + $0x32c] sm:$0xff]
        %v3953 = vld [vmem:[#allocation24 + $0x334] sm:$0xff]
        %v3954 = vld [vmem:[#allocation24 + $0x33c] sm:$0xff]
        %v3955 = vld [vmem:[#allocation24 + $0x344] sm:$0xf]
        %v3956 = vld [vmem:[#allocation24 + $0x348] sm:$0xff]
        %v3957 = vld [vmem:[#allocation24 + $0x350] sm:$0xff]
        %v3958 = vld [vmem:[#allocation24 + $0x358] sm:$0xff]
        %v3959 = vld [vmem:[#allocation24 + $0x360] sm:$0xf]
        %v3960 = vld [vmem:[#allocation24 + $0x364] sm:$0xff]
        %v3961 = vld [vmem:[#allocation24 + $0x36c] sm:$0xff]
        %v3962 = vld [vmem:[#allocation24 + $0x374] sm:$0xff]
        %v3963 = vld [vmem:[#allocation24 + $0x37c] sm:$0xf]
        %v3964 = vld [vmem:[#allocation24 + $0x380] sm:$0xff]
        %v3965 = vld [vmem:[#allocation24 + $0x388] sm:$0xff]
        %v3966 = vld [vmem:[#allocation24 + $0x390] sm:$0xff]
        %v3967 = vld [vmem:[#allocation24 + $0x398] sm:$0xf]
        %v3968 = vld [vmem:[#allocation24 + $0x39c] sm:$0xff]
        %v3969 = vld [vmem:[#allocation24 + $0x3a4] sm:$0xff]
        %v3970 = vld [vmem:[#allocation24 + $0x3ac] sm:$0xff]
        %v3971 = vld [vmem:[#allocation24 + $0x3b4] sm:$0xf]
        %v3972 = vld [vmem:[#allocation24 + $0x3b8] sm:$0xff]
        %v3973 = vld [vmem:[#allocation24 + $0x3c0] sm:$0xff]
        %v3974 = vld [vmem:[#allocation24 + $0x3c8] sm:$0xff]
        %v3975 = vld [vmem:[#allocation24 + $0x3d0] sm:$0xf]
        %v3976 = vld [vmem:[#allocation24 + $0x3d4] sm:$0xff]
        %v3977 = vld [vmem:[#allocation24 + $0x3dc] sm:$0xff]
        %v3978 = vld [vmem:[#allocation24 + $0x3e4] sm:$0xff]
        %v3979 = vld [vmem:[#allocation24 + $0x3ec] sm:$0xf]
        %v3980 = vld [vmem:[#allocation24 + $0x3f0] sm:$0xff]
        %v3981 = vld [vmem:[#allocation24 + $0x3f8] sm:$0xff]
        %v3982 = vld [vmem:[#allocation24 + $0x400] sm:$0xff]
        %v3983 = vld [vmem:[#allocation24 + $0x408] sm:$0xf]
        %v3984 = vld [vmem:[#allocation24 + $0x40c] sm:$0xff]
        %v3985 = vld [vmem:[#allocation24 + $0x414] sm:$0xff]
        %v3986 = vld [vmem:[#allocation24 + $0x41c] sm:$0xff]
        %v3987 = vld [vmem:[#allocation24 + $0x424] sm:$0xf]
        %v3988 = vld [vmem:[#allocation24 + $0x428] sm:$0xff]
        %v3989 = vld [vmem:[#allocation24 + $0x430] sm:$0xff]
        %v3990 = vld [vmem:[#allocation24 + $0x438] sm:$0xff]
        %v3991 = vld [vmem:[#allocation24 + $0x440] sm:$0xf]
        %v3992 = vld [vmem:[#allocation24 + $0x444] sm:$0xff]
        %v3993 = vld [vmem:[#allocation24 + $0x44c] sm:$0xff]
        %v3994 = vld [vmem:[#allocation24 + $0x454] sm:$0xff]
        %v3995 = vld [vmem:[#allocation24 + $0x45c] sm:$0xf]
        %v3996 = vld [vmem:[#allocation24 + $0x460] sm:$0xff]
        %v3997 = vld [vmem:[#allocation24 + $0x468] sm:$0xff]
        %v3998 = vld [vmem:[#allocation24 + $0x470] sm:$0xff]
        %v3999 = vld [vmem:[#allocation24 + $0x478] sm:$0xf]
        %v4000 = vld [vmem:[#allocation24 + $0x47c] sm:$0xff]
        %v4001 = vld [vmem:[#allocation24 + $0x484] sm:$0xff]
        %v4002 = vld [vmem:[#allocation24 + $0x48c] sm:$0xff]
        %v4003 = vld [vmem:[#allocation24 + $0x494] sm:$0xf]
        %v4004 = vld [vmem:[#allocation24 + $0x498] sm:$0xff]
        %v4005 = vld [vmem:[#allocation24 + $0x4a0] sm:$0xff]
        %v4006 = vld [vmem:[#allocation24 + $0x4a8] sm:$0xff]
        %v4007 = vld [vmem:[#allocation24 + $0x4b0] sm:$0xf]
        %v4008 = vld [vmem:[#allocation24 + $0x4b4] sm:$0xff]
        %v4009 = vld [vmem:[#allocation24 + $0x4bc] sm:$0xff]
        %v4010 = vld [vmem:[#allocation24 + $0x4c4] sm:$0xff]
        %v4011 = vld [vmem:[#allocation24 + $0x4cc] sm:$0xf]
        %v4012 = vld [vmem:[#allocation24 + $0x4d0] sm:$0xff]
        %v4013 = vld [vmem:[#allocation24 + $0x4d8] sm:$0xff]
        %v4014 = vld [vmem:[#allocation24 + $0x4e0] sm:$0xff]
        %v4015 = vld [vmem:[#allocation24 + $0x4e8] sm:$0xf]
        %v4016 = vld [vmem:[#allocation24 + $0x4ec] sm:$0xff]
        %v4017 = vld [vmem:[#allocation24 + $0x4f4] sm:$0xff]
        %v4018 = vld [vmem:[#allocation24 + $0x4fc] sm:$0xff]
        %v4019 = vld [vmem:[#allocation24 + $0x504] sm:$0xf]
        %v4020 = vld [vmem:[#allocation24 + $0x508] sm:$0xff]
        %v4021 = vld [vmem:[#allocation24 + $0x510] sm:$0xff]
        %v4022 = vld [vmem:[#allocation24 + $0x518] sm:$0xff]
        %v4023 = vld [vmem:[#allocation24 + $0x520] sm:$0xf]
        %v4024 = vld [vmem:[#allocation24 + $0x524] sm:$0xff]
        %v4025 = vld [vmem:[#allocation24 + $0x52c] sm:$0xff]
        %v4026 = vld [vmem:[#allocation24 + $0x534] sm:$0xff]
        %v4027 = vld [vmem:[#allocation24 + $0x53c] sm:$0xf]
        %v4220 = vunpack.c.l.b16 %v3836
        %v4221 = vunpack.c.h.b16 %v3836
        %v4222 = vunpack.c.l.b16 %v3837
        %v4223 = vunpack.c.h.b16 %v3837
        %v4224 = vunpack.c.l.b16 %v3838
        %v4225 = vunpack.c.h.b16 %v3838
        %v4226 = vunpack.c.l.b16 %v3839
        %v4227 = vunpack.c.l.b16 %v3840
        %v4228 = vunpack.c.h.b16 %v3840
        %v4229 = vunpack.c.l.b16 %v3841
        %v4230 = vunpack.c.h.b16 %v3841
        %v4231 = vunpack.c.l.b16 %v3842
        %v4232 = vunpack.c.h.b16 %v3842
        %v4233 = vunpack.c.l.b16 %v3843
        %v4234 = vunpack.c.l.b16 %v3844
        %v4235 = vunpack.c.h.b16 %v3844
        %v4236 = vunpack.c.l.b16 %v3845
        %v4237 = vunpack.c.h.b16 %v3845
        %v4238 = vunpack.c.l.b16 %v3846
        %v4239 = vunpack.c.h.b16 %v3846
        %v4240 = vunpack.c.l.b16 %v3847
        %v4241 = vunpack.c.l.b16 %v3848
        %v4242 = vunpack.c.h.b16 %v3848
        %v4243 = vunpack.c.l.b16 %v3849
        %v4244 = vunpack.c.h.b16 %v3849
        %v4245 = vunpack.c.l.b16 %v3850
        %v4246 = vunpack.c.h.b16 %v3850
        %v4247 = vunpack.c.l.b16 %v3851
        %v4248 = vunpack.c.l.b16 %v3852
        %v4249 = vunpack.c.h.b16 %v3852
        %v4250 = vunpack.c.l.b16 %v3853
        %v4251 = vunpack.c.h.b16 %v3853
        %v4252 = vunpack.c.l.b16 %v3854
        %v4253 = vunpack.c.h.b16 %v3854
        %v4254 = vunpack.c.l.b16 %v3855
        %v4255 = vunpack.c.l.b16 %v3856
        %v4256 = vunpack.c.h.b16 %v3856
        %v4257 = vunpack.c.l.b16 %v3857
        %v4258 = vunpack.c.h.b16 %v3857
        %v4259 = vunpack.c.l.b16 %v3858
        %v4260 = vunpack.c.h.b16 %v3858
        %v4261 = vunpack.c.l.b16 %v3859
        %v4262 = vunpack.c.l.b16 %v3860
        %v4263 = vunpack.c.h.b16 %v3860
        %v4264 = vunpack.c.l.b16 %v3861
        %v4265 = vunpack.c.h.b16 %v3861
        %v4266 = vunpack.c.l.b16 %v3862
        %v4267 = vunpack.c.h.b16 %v3862
        %v4268 = vunpack.c.l.b16 %v3863
        %v4269 = vunpack.c.l.b16 %v3864
        %v4270 = vunpack.c.h.b16 %v3864
        %v4271 = vunpack.c.l.b16 %v3865
        %v4272 = vunpack.c.h.b16 %v3865
        %v4273 = vunpack.c.l.b16 %v3866
        %v4274 = vunpack.c.h.b16 %v3866
        %v4275 = vunpack.c.l.b16 %v3867
        %v4276 = vunpack.c.l.b16 %v3868
        %v4277 = vunpack.c.h.b16 %v3868
        %v4278 = vunpack.c.l.b16 %v3869
        %v4279 = vunpack.c.h.b16 %v3869
        %v4280 = vunpack.c.l.b16 %v3870
        %v4281 = vunpack.c.h.b16 %v3870
        %v4282 = vunpack.c.l.b16 %v3871
        %v4283 = vunpack.c.l.b16 %v3872
        %v4284 = vunpack.c.h.b16 %v3872
        %v4285 = vunpack.c.l.b16 %v3873
        %v4286 = vunpack.c.h.b16 %v3873
        %v4287 = vunpack.c.l.b16 %v3874
        %v4288 = vunpack.c.h.b16 %v3874
        %v4289 = vunpack.c.l.b16 %v3875
        %v4290 = vunpack.c.l.b16 %v3876
        %v4291 = vunpack.c.h.b16 %v3876
        %v4292 = vunpack.c.l.b16 %v3877
        %v4293 = vunpack.c.h.b16 %v3877
        %v4294 = vunpack.c.l.b16 %v3878
        %v4295 = vunpack.c.h.b16 %v3878
        %v4296 = vunpack.c.l.b16 %v3879
        %v4297 = vunpack.c.l.b16 %v3880
        %v4298 = vunpack.c.h.b16 %v3880
        %v4299 = vunpack.c.l.b16 %v3881
        %v4300 = vunpack.c.h.b16 %v3881
        %v4301 = vunpack.c.l.b16 %v3882
        %v4302 = vunpack.c.h.b16 %v3882
        %v4303 = vunpack.c.l.b16 %v3883
        %v4304 = vunpack.c.l.b16 %v3884
        %v4305 = vunpack.c.h.b16 %v3884
        %v4306 = vunpack.c.l.b16 %v3885
        %v4307 = vunpack.c.h.b16 %v3885
        %v4308 = vunpack.c.l.b16 %v3886
        %v4309 = vunpack.c.h.b16 %v3886
        %v4310 = vunpack.c.l.b16 %v3887
        %v4311 = vunpack.c.l.b16 %v3888
        %v4312 = vunpack.c.h.b16 %v3888
        %v4313 = vunpack.c.l.b16 %v3889
        %v4314 = vunpack.c.h.b16 %v3889
        %v4315 = vunpack.c.l.b16 %v3890
        %v4316 = vunpack.c.h.b16 %v3890
        %v4317 = vunpack.c.l.b16 %v3891
        %v4318 = vunpack.c.l.b16 %v3892
        %v4319 = vunpack.c.h.b16 %v3892
        %v4320 = vunpack.c.l.b16 %v3893
        %v4321 = vunpack.c.h.b16 %v3893
        %v4322 = vunpack.c.l.b16 %v3894
        %v4323 = vunpack.c.h.b16 %v3894
        %v4324 = vunpack.c.l.b16 %v3895
        %v4325 = vunpack.c.l.b16 %v3896
        %v4326 = vunpack.c.h.b16 %v3896
        %v4327 = vunpack.c.l.b16 %v3897
        %v4328 = vunpack.c.h.b16 %v3897
        %v4329 = vunpack.c.l.b16 %v3898
        %v4330 = vunpack.c.h.b16 %v3898
        %v4331 = vunpack.c.l.b16 %v3899
        %v4332 = vunpack.c.l.b16 %v3900
        %v4333 = vunpack.c.h.b16 %v3900
        %v4334 = vunpack.c.l.b16 %v3901
        %v4335 = vunpack.c.h.b16 %v3901
        %v4336 = vunpack.c.l.b16 %v3902
        %v4337 = vunpack.c.h.b16 %v3902
        %v4338 = vunpack.c.l.b16 %v3903
        %v4339 = vunpack.c.l.b16 %v3904
        %v4340 = vunpack.c.h.b16 %v3904
        %v4341 = vunpack.c.l.b16 %v3905
        %v4342 = vunpack.c.h.b16 %v3905
        %v4343 = vunpack.c.l.b16 %v3906
        %v4344 = vunpack.c.h.b16 %v3906
        %v4345 = vunpack.c.l.b16 %v3907
        %v4346 = vunpack.c.l.b16 %v3908
        %v4347 = vunpack.c.h.b16 %v3908
        %v4348 = vunpack.c.l.b16 %v3909
        %v4349 = vunpack.c.h.b16 %v3909
        %v4350 = vunpack.c.l.b16 %v3910
        %v4351 = vunpack.c.h.b16 %v3910
        %v4352 = vunpack.c.l.b16 %v3911
        %v4353 = vunpack.c.l.b16 %v3912
        %v4354 = vunpack.c.h.b16 %v3912
        %v4355 = vunpack.c.l.b16 %v3913
        %v4356 = vunpack.c.h.b16 %v3913
        %v4357 = vunpack.c.l.b16 %v3914
        %v4358 = vunpack.c.h.b16 %v3914
        %v4359 = vunpack.c.l.b16 %v3915
        %v4360 = vunpack.c.l.b16 %v3916
        %v4361 = vunpack.c.h.b16 %v3916
        %v4362 = vunpack.c.l.b16 %v3917
        %v4363 = vunpack.c.h.b16 %v3917
        %v4364 = vunpack.c.l.b16 %v3918
        %v4365 = vunpack.c.h.b16 %v3918
        %v4366 = vunpack.c.l.b16 %v3919
        %v4367 = vunpack.c.l.b16 %v3920
        %v4368 = vunpack.c.h.b16 %v3920
        %v4369 = vunpack.c.l.b16 %v3921
        %v4370 = vunpack.c.h.b16 %v3921
        %v4371 = vunpack.c.l.b16 %v3922
        %v4372 = vunpack.c.h.b16 %v3922
        %v4373 = vunpack.c.l.b16 %v3923
        %v4374 = vunpack.c.l.b16 %v3924
        %v4375 = vunpack.c.h.b16 %v3924
        %v4376 = vunpack.c.l.b16 %v3925
        %v4377 = vunpack.c.h.b16 %v3925
        %v4378 = vunpack.c.l.b16 %v3926
        %v4379 = vunpack.c.h.b16 %v3926
        %v4380 = vunpack.c.l.b16 %v3927
        %v4381 = vunpack.c.l.b16 %v3928
        %v4382 = vunpack.c.h.b16 %v3928
        %v4383 = vunpack.c.l.b16 %v3929
        %v4384 = vunpack.c.h.b16 %v3929
        %v4385 = vunpack.c.l.b16 %v3930
        %v4386 = vunpack.c.h.b16 %v3930
        %v4387 = vunpack.c.l.b16 %v3931
        %v4388 = vunpack.c.l.b16 %v3932
        %v4389 = vunpack.c.h.b16 %v3932
        %v4390 = vunpack.c.l.b16 %v3933
        %v4391 = vunpack.c.h.b16 %v3933
        %v4392 = vunpack.c.l.b16 %v3934
        %v4393 = vunpack.c.h.b16 %v3934
        %v4394 = vunpack.c.l.b16 %v3935
        %v4395 = vunpack.c.l.b16 %v3936
        %v4396 = vunpack.c.h.b16 %v3936
        %v4397 = vunpack.c.l.b16 %v3937
        %v4398 = vunpack.c.h.b16 %v3937
        %v4399 = vunpack.c.l.b16 %v3938
        %v4400 = vunpack.c.h.b16 %v3938
        %v4401 = vunpack.c.l.b16 %v3939
        %v4402 = vunpack.c.l.b16 %v3940
        %v4403 = vunpack.c.h.b16 %v3940
        %v4404 = vunpack.c.l.b16 %v3941
        %v4405 = vunpack.c.h.b16 %v3941
        %v4406 = vunpack.c.l.b16 %v3942
        %v4407 = vunpack.c.h.b16 %v3942
        %v4408 = vunpack.c.l.b16 %v3943
        %v4409 = vunpack.c.l.b16 %v3944
        %v4410 = vunpack.c.h.b16 %v3944
        %v4411 = vunpack.c.l.b16 %v3945
        %v4412 = vunpack.c.h.b16 %v3945
        %v4413 = vunpack.c.l.b16 %v3946
        %v4414 = vunpack.c.h.b16 %v3946
        %v4415 = vunpack.c.l.b16 %v3947
        %v4416 = vunpack.c.l.b16 %v3948
        %v4417 = vunpack.c.h.b16 %v3948
        %v4418 = vunpack.c.l.b16 %v3949
        %v4419 = vunpack.c.h.b16 %v3949
        %v4420 = vunpack.c.l.b16 %v3950
        %v4421 = vunpack.c.h.b16 %v3950
        %v4422 = vunpack.c.l.b16 %v3951
        %v4423 = vunpack.c.l.b16 %v3952
        %v4424 = vunpack.c.h.b16 %v3952
        %v4425 = vunpack.c.l.b16 %v3953
        %v4426 = vunpack.c.h.b16 %v3953
        %v4427 = vunpack.c.l.b16 %v3954
        %v4428 = vunpack.c.h.b16 %v3954
        %v4429 = vunpack.c.l.b16 %v3955
        %v4430 = vunpack.c.l.b16 %v3956
        %v4431 = vunpack.c.h.b16 %v3956
        %v4432 = vunpack.c.l.b16 %v3957
        %v4433 = vunpack.c.h.b16 %v3957
        %v4434 = vunpack.c.l.b16 %v3958
        %v4435 = vunpack.c.h.b16 %v3958
        %v4436 = vunpack.c.l.b16 %v3959
        %v4437 = vunpack.c.l.b16 %v3960
        %v4438 = vunpack.c.h.b16 %v3960
        %v4439 = vunpack.c.l.b16 %v3961
        %v4440 = vunpack.c.h.b16 %v3961
        %v4441 = vunpack.c.l.b16 %v3962
        %v4442 = vunpack.c.h.b16 %v3962
        %v4443 = vunpack.c.l.b16 %v3963
        %v4444 = vunpack.c.l.b16 %v3964
        %v4445 = vunpack.c.h.b16 %v3964
        %v4446 = vunpack.c.l.b16 %v3965
        %v4447 = vunpack.c.h.b16 %v3965
        %v4448 = vunpack.c.l.b16 %v3966
        %v4449 = vunpack.c.h.b16 %v3966
        %v4450 = vunpack.c.l.b16 %v3967
        %v4451 = vunpack.c.l.b16 %v3968
        %v4452 = vunpack.c.h.b16 %v3968
        %v4453 = vunpack.c.l.b16 %v3969
        %v4454 = vunpack.c.h.b16 %v3969
        %v4455 = vunpack.c.l.b16 %v3970
        %v4456 = vunpack.c.h.b16 %v3970
        %v4457 = vunpack.c.l.b16 %v3971
        %v4458 = vunpack.c.l.b16 %v3972
        %v4459 = vunpack.c.h.b16 %v3972
        %v4460 = vunpack.c.l.b16 %v3973
        %v4461 = vunpack.c.h.b16 %v3973
        %v4462 = vunpack.c.l.b16 %v3974
        %v4463 = vunpack.c.h.b16 %v3974
        %v4464 = vunpack.c.l.b16 %v3975
        %v4465 = vunpack.c.l.b16 %v3976
        %v4466 = vunpack.c.h.b16 %v3976
        %v4467 = vunpack.c.l.b16 %v3977
        %v4468 = vunpack.c.h.b16 %v3977
        %v4469 = vunpack.c.l.b16 %v3978
        %v4470 = vunpack.c.h.b16 %v3978
        %v4471 = vunpack.c.l.b16 %v3979
        %v4472 = vunpack.c.l.b16 %v3980
        %v4473 = vunpack.c.h.b16 %v3980
        %v4474 = vunpack.c.l.b16 %v3981
        %v4475 = vunpack.c.h.b16 %v3981
        %v4476 = vunpack.c.l.b16 %v3982
        %v4477 = vunpack.c.h.b16 %v3982
        %v4478 = vunpack.c.l.b16 %v3983
        %v4479 = vunpack.c.l.b16 %v3984
        %v4480 = vunpack.c.h.b16 %v3984
        %v4481 = vunpack.c.l.b16 %v3985
        %v4482 = vunpack.c.h.b16 %v3985
        %v4483 = vunpack.c.l.b16 %v3986
        %v4484 = vunpack.c.h.b16 %v3986
        %v4485 = vunpack.c.l.b16 %v3987
        %v4486 = vunpack.c.l.b16 %v3988
        %v4487 = vunpack.c.h.b16 %v3988
        %v4488 = vunpack.c.l.b16 %v3989
        %v4489 = vunpack.c.h.b16 %v3989
        %v4490 = vunpack.c.l.b16 %v3990
        %v4491 = vunpack.c.h.b16 %v3990
        %v4492 = vunpack.c.l.b16 %v3991
        %v4493 = vunpack.c.l.b16 %v3992
        %v4494 = vunpack.c.h.b16 %v3992
        %v4495 = vunpack.c.l.b16 %v3993
        %v4496 = vunpack.c.h.b16 %v3993
        %v4497 = vunpack.c.l.b16 %v3994
        %v4498 = vunpack.c.h.b16 %v3994
        %v4499 = vunpack.c.l.b16 %v3995
        %v4500 = vunpack.c.l.b16 %v3996
        %v4501 = vunpack.c.h.b16 %v3996
        %v4502 = vunpack.c.l.b16 %v3997
        %v4503 = vunpack.c.h.b16 %v3997
        %v4504 = vunpack.c.l.b16 %v3998
        %v4505 = vunpack.c.h.b16 %v3998
        %v4506 = vunpack.c.l.b16 %v3999
        %v4507 = vunpack.c.l.b16 %v4000
        %v4508 = vunpack.c.h.b16 %v4000
        %v4509 = vunpack.c.l.b16 %v4001
        %v4510 = vunpack.c.h.b16 %v4001
        %v4511 = vunpack.c.l.b16 %v4002
        %v4512 = vunpack.c.h.b16 %v4002
        %v4513 = vunpack.c.l.b16 %v4003
        %v4514 = vunpack.c.l.b16 %v4004
        %v4515 = vunpack.c.h.b16 %v4004
        %v4516 = vunpack.c.l.b16 %v4005
        %v4517 = vunpack.c.h.b16 %v4005
        %v4518 = vunpack.c.l.b16 %v4006
        %v4519 = vunpack.c.h.b16 %v4006
        %v4520 = vunpack.c.l.b16 %v4007
        %v4521 = vunpack.c.l.b16 %v4008
        %v4522 = vunpack.c.h.b16 %v4008
        %v4523 = vunpack.c.l.b16 %v4009
        %v4524 = vunpack.c.h.b16 %v4009
        %v4525 = vunpack.c.l.b16 %v4010
        %v4526 = vunpack.c.h.b16 %v4010
        %v4527 = vunpack.c.l.b16 %v4011
        %v4528 = vunpack.c.l.b16 %v4012
        %v4529 = vunpack.c.h.b16 %v4012
        %v4530 = vunpack.c.l.b16 %v4013
        %v4531 = vunpack.c.h.b16 %v4013
        %v4532 = vunpack.c.l.b16 %v4014
        %v4533 = vunpack.c.h.b16 %v4014
        %v4534 = vunpack.c.l.b16 %v4015
        %v4535 = vunpack.c.l.b16 %v4016
        %v4536 = vunpack.c.h.b16 %v4016
        %v4537 = vunpack.c.l.b16 %v4017
        %v4538 = vunpack.c.h.b16 %v4017
        %v4539 = vunpack.c.l.b16 %v4018
        %v4540 = vunpack.c.h.b16 %v4018
        %v4541 = vunpack.c.l.b16 %v4019
        %v4542 = vunpack.c.l.b16 %v4020
        %v4543 = vunpack.c.h.b16 %v4020
        %v4544 = vunpack.c.l.b16 %v4021
        %v4545 = vunpack.c.h.b16 %v4021
        %v4546 = vunpack.c.l.b16 %v4022
        %v4547 = vunpack.c.h.b16 %v4022
        %v4548 = vunpack.c.l.b16 %v4023
        %v4549 = vunpack.c.l.b16 %v4024
        %v4550 = vunpack.c.h.b16 %v4024
        %v4551 = vunpack.c.l.b16 %v4025
        %v4552 = vunpack.c.h.b16 %v4025
        %v4553 = vunpack.c.l.b16 %v4026
        %v4554 = vunpack.c.h.b16 %v4026
        %v4555 = vunpack.c.l.b16 %v4027
        %v4556 = vpack.c.b16 %v4227, %v4220
        %v4557 = vpack.c.b16 %v4228, %v4221
        %v4558 = vpack.c.b16 %v4229, %v4222
        %v4559 = vpack.c.b16 %v4230, %v4223
        %v4560 = vpack.c.b16 %v4231, %v4224
        %v4561 = vpack.c.b16 %v4232, %v4225
        %v4562 = vpack.c.b16 %v4233, %v4226
        %v4563 = vpack.c.b16 %v4241, %v4234
        %v4564 = vpack.c.b16 %v4242, %v4235
        %v4565 = vpack.c.b16 %v4243, %v4236
        %v4566 = vpack.c.b16 %v4244, %v4237
        %v4567 = vpack.c.b16 %v4245, %v4238
        %v4568 = vpack.c.b16 %v4246, %v4239
        %v4569 = vpack.c.b16 %v4247, %v4240
        %v4570 = vpack.c.b16 %v4255, %v4248
        %v4571 = vpack.c.b16 %v4256, %v4249
        %v4572 = vpack.c.b16 %v4257, %v4250
        %v4573 = vpack.c.b16 %v4258, %v4251
        %v4574 = vpack.c.b16 %v4259, %v4252
        %v4575 = vpack.c.b16 %v4260, %v4253
        %v4576 = vpack.c.b16 %v4261, %v4254
        %v4577 = vpack.c.b16 %v4269, %v4262
        %v4578 = vpack.c.b16 %v4270, %v4263
        %v4579 = vpack.c.b16 %v4271, %v4264
        %v4580 = vpack.c.b16 %v4272, %v4265
        %v4581 = vpack.c.b16 %v4273, %v4266
        %v4582 = vpack.c.b16 %v4274, %v4267
        %v4583 = vpack.c.b16 %v4275, %v4268
        %v4584 = vpack.c.b16 %v4283, %v4276
        %v4585 = vpack.c.b16 %v4284, %v4277
        %v4586 = vpack.c.b16 %v4285, %v4278
        %v4587 = vpack.c.b16 %v4286, %v4279
        %v4588 = vpack.c.b16 %v4287, %v4280
        %v4589 = vpack.c.b16 %v4288, %v4281
        %v4590 = vpack.c.b16 %v4289, %v4282
        %v4591 = vpack.c.b16 %v4297, %v4290
        %v4592 = vpack.c.b16 %v4298, %v4291
        %v4593 = vpack.c.b16 %v4299, %v4292
        %v4594 = vpack.c.b16 %v4300, %v4293
        %v4595 = vpack.c.b16 %v4301, %v4294
        %v4596 = vpack.c.b16 %v4302, %v4295
        %v4597 = vpack.c.b16 %v4303, %v4296
        %v4598 = vpack.c.b16 %v4311, %v4304
        %v4599 = vpack.c.b16 %v4312, %v4305
        %v4600 = vpack.c.b16 %v4313, %v4306
        %v4601 = vpack.c.b16 %v4314, %v4307
        %v4602 = vpack.c.b16 %v4315, %v4308
        %v4603 = vpack.c.b16 %v4316, %v4309
        %v4604 = vpack.c.b16 %v4317, %v4310
        %v4605 = vpack.c.b16 %v4325, %v4318
        %v4606 = vpack.c.b16 %v4326, %v4319
        %v4607 = vpack.c.b16 %v4327, %v4320
        %v4608 = vpack.c.b16 %v4328, %v4321
        %v4609 = vpack.c.b16 %v4329, %v4322
        %v4610 = vpack.c.b16 %v4330, %v4323
        %v4611 = vpack.c.b16 %v4331, %v4324
        %v4612 = vpack.c.b16 %v4339, %v4332
        %v4613 = vpack.c.b16 %v4340, %v4333
        %v4614 = vpack.c.b16 %v4341, %v4334
        %v4615 = vpack.c.b16 %v4342, %v4335
        %v4616 = vpack.c.b16 %v4343, %v4336
        %v4617 = vpack.c.b16 %v4344, %v4337
        %v4618 = vpack.c.b16 %v4345, %v4338
        %v4619 = vpack.c.b16 %v4353, %v4346
        %v4620 = vpack.c.b16 %v4354, %v4347
        %v4621 = vpack.c.b16 %v4355, %v4348
        %v4622 = vpack.c.b16 %v4356, %v4349
        %v4623 = vpack.c.b16 %v4357, %v4350
        %v4624 = vpack.c.b16 %v4358, %v4351
        %v4625 = vpack.c.b16 %v4359, %v4352
        %v4626 = vpack.c.b16 %v4367, %v4360
        %v4627 = vpack.c.b16 %v4368, %v4361
        %v4628 = vpack.c.b16 %v4369, %v4362
        %v4629 = vpack.c.b16 %v4370, %v4363
        %v4630 = vpack.c.b16 %v4371, %v4364
        %v4631 = vpack.c.b16 %v4372, %v4365
        %v4632 = vpack.c.b16 %v4373, %v4366
        %v4633 = vpack.c.b16 %v4381, %v4374
        %v4634 = vpack.c.b16 %v4382, %v4375
        %v4635 = vpack.c.b16 %v4383, %v4376
        %v4636 = vpack.c.b16 %v4384, %v4377
        %v4637 = vpack.c.b16 %v4385, %v4378
        %v4638 = vpack.c.b16 %v4386, %v4379
        %v4639 = vpack.c.b16 %v4387, %v4380
        %v4640 = vpack.c.b16 %v4395, %v4388
        %v4641 = vpack.c.b16 %v4396, %v4389
        %v4642 = vpack.c.b16 %v4397, %v4390
        %v4643 = vpack.c.b16 %v4398, %v4391
        %v4644 = vpack.c.b16 %v4399, %v4392
        %v4645 = vpack.c.b16 %v4400, %v4393
        %v4646 = vpack.c.b16 %v4401, %v4394
        %v4647 = vpack.c.b16 %v4409, %v4402
        %v4648 = vpack.c.b16 %v4410, %v4403
        %v4649 = vpack.c.b16 %v4411, %v4404
        %v4650 = vpack.c.b16 %v4412, %v4405
        %v4651 = vpack.c.b16 %v4413, %v4406
        %v4652 = vpack.c.b16 %v4414, %v4407
        %v4653 = vpack.c.b16 %v4415, %v4408
        %v4654 = vpack.c.b16 %v4423, %v4416
        %v4655 = vpack.c.b16 %v4424, %v4417
        %v4656 = vpack.c.b16 %v4425, %v4418
        %v4657 = vpack.c.b16 %v4426, %v4419
        %v4658 = vpack.c.b16 %v4427, %v4420
        %v4659 = vpack.c.b16 %v4428, %v4421
        %v4660 = vpack.c.b16 %v4429, %v4422
        %v4661 = vpack.c.b16 %v4437, %v4430
        %v4662 = vpack.c.b16 %v4438, %v4431
        %v4663 = vpack.c.b16 %v4439, %v4432
        %v4664 = vpack.c.b16 %v4440, %v4433
        %v4665 = vpack.c.b16 %v4441, %v4434
        %v4666 = vpack.c.b16 %v4442, %v4435
        %v4667 = vpack.c.b16 %v4443, %v4436
        %v4668 = vpack.c.b16 %v4451, %v4444
        %v4669 = vpack.c.b16 %v4452, %v4445
        %v4670 = vpack.c.b16 %v4453, %v4446
        %v4671 = vpack.c.b16 %v4454, %v4447
        %v4672 = vpack.c.b16 %v4455, %v4448
        %v4673 = vpack.c.b16 %v4456, %v4449
        %v4674 = vpack.c.b16 %v4457, %v4450
        %v4675 = vpack.c.b16 %v4465, %v4458
        %v4676 = vpack.c.b16 %v4466, %v4459
        %v4677 = vpack.c.b16 %v4467, %v4460
        %v4678 = vpack.c.b16 %v4468, %v4461
        %v4679 = vpack.c.b16 %v4469, %v4462
        %v4680 = vpack.c.b16 %v4470, %v4463
        %v4681 = vpack.c.b16 %v4471, %v4464
        %v4682 = vpack.c.b16 %v4479, %v4472
        %v4683 = vpack.c.b16 %v4480, %v4473
        %v4684 = vpack.c.b16 %v4481, %v4474
        %v4685 = vpack.c.b16 %v4482, %v4475
        %v4686 = vpack.c.b16 %v4483, %v4476
        %v4687 = vpack.c.b16 %v4484, %v4477
        %v4688 = vpack.c.b16 %v4485, %v4478
        %v4689 = vpack.c.b16 %v4493, %v4486
        %v4690 = vpack.c.b16 %v4494, %v4487
        %v4691 = vpack.c.b16 %v4495, %v4488
        %v4692 = vpack.c.b16 %v4496, %v4489
        %v4693 = vpack.c.b16 %v4497, %v4490
        %v4694 = vpack.c.b16 %v4498, %v4491
        %v4695 = vpack.c.b16 %v4499, %v4492
        %v4696 = vpack.c.b16 %v4507, %v4500
        %v4697 = vpack.c.b16 %v4508, %v4501
        %v4698 = vpack.c.b16 %v4509, %v4502
        %v4699 = vpack.c.b16 %v4510, %v4503
        %v4700 = vpack.c.b16 %v4511, %v4504
        %v4701 = vpack.c.b16 %v4512, %v4505
        %v4702 = vpack.c.b16 %v4513, %v4506
        %v4703 = vpack.c.b16 %v4521, %v4514
        %v4704 = vpack.c.b16 %v4522, %v4515
        %v4705 = vpack.c.b16 %v4523, %v4516
        %v4706 = vpack.c.b16 %v4524, %v4517
        %v4707 = vpack.c.b16 %v4525, %v4518
        %v4708 = vpack.c.b16 %v4526, %v4519
        %v4709 = vpack.c.b16 %v4527, %v4520
        %v4710 = vpack.c.b16 %v4535, %v4528
        %v4711 = vpack.c.b16 %v4536, %v4529
        %v4712 = vpack.c.b16 %v4537, %v4530
        %v4713 = vpack.c.b16 %v4538, %v4531
        %v4714 = vpack.c.b16 %v4539, %v4532
        %v4715 = vpack.c.b16 %v4540, %v4533
        %v4716 = vpack.c.b16 %v4541, %v4534
        %v4717 = vpack.c.b16 %v4549, %v4542
        %v4718 = vpack.c.b16 %v4550, %v4543
        %v4719 = vpack.c.b16 %v4551, %v4544
        %v4720 = vpack.c.b16 %v4552, %v4545
        %v4721 = vpack.c.b16 %v4553, %v4546
        %v4722 = vpack.c.b16 %v4554, %v4547
        %v4723 = vpack.c.b16 %v4555, %v4548
        %4892 = vmatpush.bf16.msra.mxu0 %v4605
        %4893 = vmatpush.bf16.msra.mxu0 %v4598
        %4894 = vmatpush.bf16.msra.mxu0 %v4591
        %4895 = vmatpush.bf16.msra.mxu0 %v4584
        %4896 = vmatpush.bf16.msra.mxu0 %v4577
        %4897 = vmatpush.bf16.msra.mxu0 %v4570
        %4898 = vmatpush.bf16.msra.mxu0 %v4563
        %4899 = vmatpush.bf16.msra.mxu0 %v4556
        %4900 = vmatmul.bf16.gmra.mxu0 %v3834
        %v4901 = vpop.f32.mrf.mxu0
        %v4902 = vadd.f32 0.0, %v4901
        %v4903 = vpop.f32.mrf.mxu0
        %4904 = vdwg.mxu0
        %4905 = vmatpush.bf16.msra.mxu0 %v4661
        %4906 = vmatpush.bf16.msra.mxu0 %v4654
        %4907 = vmatpush.bf16.msra.mxu0 %v4647
        %4908 = vmatpush.bf16.msra.mxu0 %v4640
        %4909 = vmatpush.bf16.msra.mxu0 %v4633
        %4910 = vmatpush.bf16.msra.mxu0 %v4626
        %4911 = vmatpush.bf16.msra.mxu0 %v4619
        %4912 = vmatpush.bf16.msra.mxu0 %v4612
        %4913 = vmatmul.bf16.gmra.mxu0 %v3835
        %v4914 = vpop.f32.mrf.mxu0
        %v4915 = vadd.f32 %v4902, %v4914
        %v4916 = vpop.f32.mrf.mxu0
        %4917 = vdwg.mxu0
        %4918 = vmatpush.bf16.msra.mxu0 %v4717
        %4919 = vmatpush.bf16.msra.mxu0 %v4710
        %4920 = vmatpush.bf16.msra.mxu0 %v4703
        %4921 = vmatpush.bf16.msra.mxu0 %v4696
        %4922 = vmatpush.bf16.msra.mxu0 %v4689
        %4923 = vmatpush.bf16.msra.mxu0 %v4682
        %4924 = vmatpush.bf16.msra.mxu0 %v4675
        %4925 = vmatpush.bf16.msra.mxu0 %v4668
        %4926 = vmatmul.bf16.gmra.mxu0 %v3306
        %v4927 = vpop.f32.mrf.mxu0
        %v4928 = vadd.f32 %v4915, %v4927
        %v4929 = vpop.f32.mrf.mxu0
        %4930 = vdwg.mxu0
        %4931 = vmatpush.bf16.msra.mxu0 %v4606
        %4932 = vmatpush.bf16.msra.mxu0 %v4599
        %4933 = vmatpush.bf16.msra.mxu0 %v4592
        %4934 = vmatpush.bf16.msra.mxu0 %v4585
        %4935 = vmatpush.bf16.msra.mxu0 %v4578
        %4936 = vmatpush.bf16.msra.mxu0 %v4571
        %4937 = vmatpush.bf16.msra.mxu0 %v4564
        %4938 = vmatpush.bf16.msra.mxu0 %v4557
        %4939 = vmatmul.bf16.gmra.mxu0 %v3834
        %v4940 = vpop.f32.mrf.mxu0
        %v4941 = vadd.f32 0.0, %v4940
        %v4942 = vpop.f32.mrf.mxu0
        %4943 = vdwg.mxu0
        %4944 = vmatpush.bf16.msra.mxu0 %v4662
        %4945 = vmatpush.bf16.msra.mxu0 %v4655
        %4946 = vmatpush.bf16.msra.mxu0 %v4648
        %4947 = vmatpush.bf16.msra.mxu0 %v4641
        %4948 = vmatpush.bf16.msra.mxu0 %v4634
        %4949 = vmatpush.bf16.msra.mxu0 %v4627
        %4950 = vmatpush.bf16.msra.mxu0 %v4620
        %4951 = vmatpush.bf16.msra.mxu0 %v4613
        %4952 = vmatmul.bf16.gmra.mxu0 %v3835
        %v4953 = vpop.f32.mrf.mxu0
        %v4954 = vadd.f32 %v4941, %v4953
        %v4955 = vpop.f32.mrf.mxu0
        %4956 = vdwg.mxu0
        %4957 = vmatpush.bf16.msra.mxu0 %v4718
        %4958 = vmatpush.bf16.msra.mxu0 %v4711
        %4959 = vmatpush.bf16.msra.mxu0 %v4704
        %4960 = vmatpush.bf16.msra.mxu0 %v4697
        %4961 = vmatpush.bf16.msra.mxu0 %v4690
        %4962 = vmatpush.bf16.msra.mxu0 %v4683
        %4963 = vmatpush.bf16.msra.mxu0 %v4676
        %4964 = vmatpush.bf16.msra.mxu0 %v4669
        %4965 = vmatmul.bf16.gmra.mxu0 %v3306
        %v4966 = vpop.f32.mrf.mxu0
        %v4967 = vadd.f32 %v4954, %v4966
        %v4968 = vpop.f32.mrf.mxu0
        %4969 = vdwg.mxu0
        %4970 = vmatpush.bf16.msra.mxu0 %v4607
        %4971 = vmatpush.bf16.msra.mxu0 %v4600
        %4972 = vmatpush.bf16.msra.mxu0 %v4593
        %4973 = vmatpush.bf16.msra.mxu0 %v4586
        %4974 = vmatpush.bf16.msra.mxu0 %v4579
        %4975 = vmatpush.bf16.msra.mxu0 %v4572
        %4976 = vmatpush.bf16.msra.mxu0 %v4565
        %4977 = vmatpush.bf16.msra.mxu0 %v4558
        %4978 = vmatmul.bf16.gmra.mxu0 %v3834
        %v4979 = vpop.f32.mrf.mxu0
        %v4980 = vadd.f32 0.0, %v4979
        %v4981 = vpop.f32.mrf.mxu0
        %4982 = vdwg.mxu0
        %4983 = vmatpush.bf16.msra.mxu0 %v4663
        %4984 = vmatpush.bf16.msra.mxu0 %v4656
        %4985 = vmatpush.bf16.msra.mxu0 %v4649
        %4986 = vmatpush.bf16.msra.mxu0 %v4642
        %4987 = vmatpush.bf16.msra.mxu0 %v4635
        %4988 = vmatpush.bf16.msra.mxu0 %v4628
        %4989 = vmatpush.bf16.msra.mxu0 %v4621
        %4990 = vmatpush.bf16.msra.mxu0 %v4614
        %4991 = vmatmul.bf16.gmra.mxu0 %v3835
        %v4992 = vpop.f32.mrf.mxu0
        %v4993 = vadd.f32 %v4980, %v4992
        %v4994 = vpop.f32.mrf.mxu0
        %4995 = vdwg.mxu0
        %4996 = vmatpush.bf16.msra.mxu0 %v4719
        %4997 = vmatpush.bf16.msra.mxu0 %v4712
        %4998 = vmatpush.bf16.msra.mxu0 %v4705
        %4999 = vmatpush.bf16.msra.mxu0 %v4698
        %5000 = vmatpush.bf16.msra.mxu0 %v4691
        %5001 = vmatpush.bf16.msra.mxu0 %v4684
        %5002 = vmatpush.bf16.msra.mxu0 %v4677
        %5003 = vmatpush.bf16.msra.mxu0 %v4670
        %5004 = vmatmul.bf16.gmra.mxu0 %v3306
        %v5005 = vpop.f32.mrf.mxu0
        %v5006 = vadd.f32 %v4993, %v5005
        %v5007 = vpop.f32.mrf.mxu0
        %5008 = vdwg.mxu0
        %5009 = vmatpush.bf16.msra.mxu0 %v4608
        %5010 = vmatpush.bf16.msra.mxu0 %v4601
        %5011 = vmatpush.bf16.msra.mxu0 %v4594
        %5012 = vmatpush.bf16.msra.mxu0 %v4587
        %5013 = vmatpush.bf16.msra.mxu0 %v4580
        %5014 = vmatpush.bf16.msra.mxu0 %v4573
        %5015 = vmatpush.bf16.msra.mxu0 %v4566
        %5016 = vmatpush.bf16.msra.mxu0 %v4559
        %5017 = vmatmul.bf16.gmra.mxu0 %v3834
        %v5018 = vpop.f32.mrf.mxu0
        %v5019 = vadd.f32 0.0, %v5018
        %v5020 = vpop.f32.mrf.mxu0
        %5021 = vdwg.mxu0
        %5022 = vmatpush.bf16.msra.mxu0 %v4664
        %5023 = vmatpush.bf16.msra.mxu0 %v4657
        %5024 = vmatpush.bf16.msra.mxu0 %v4650
        %5025 = vmatpush.bf16.msra.mxu0 %v4643
        %5026 = vmatpush.bf16.msra.mxu0 %v4636
        %5027 = vmatpush.bf16.msra.mxu0 %v4629
        %5028 = vmatpush.bf16.msra.mxu0 %v4622
        %5029 = vmatpush.bf16.msra.mxu0 %v4615
        %5030 = vmatmul.bf16.gmra.mxu0 %v3835
        %v5031 = vpop.f32.mrf.mxu0
        %v5032 = vadd.f32 %v5019, %v5031
        %v5033 = vpop.f32.mrf.mxu0
        %5034 = vdwg.mxu0
        %5035 = vmatpush.bf16.msra.mxu0 %v4720
        %5036 = vmatpush.bf16.msra.mxu0 %v4713
        %5037 = vmatpush.bf16.msra.mxu0 %v4706
        %5038 = vmatpush.bf16.msra.mxu0 %v4699
        %5039 = vmatpush.bf16.msra.mxu0 %v4692
        %5040 = vmatpush.bf16.msra.mxu0 %v4685
        %5041 = vmatpush.bf16.msra.mxu0 %v4678
        %5042 = vmatpush.bf16.msra.mxu0 %v4671
        %5043 = vmatmul.bf16.gmra.mxu0 %v3306
        %v5044 = vpop.f32.mrf.mxu0
        %v5045 = vadd.f32 %v5032, %v5044
        %v5046 = vpop.f32.mrf.mxu0
        %5047 = vdwg.mxu0
        %5048 = vmatpush.bf16.msra.mxu0 %v4609
        %5049 = vmatpush.bf16.msra.mxu0 %v4602
        %5050 = vmatpush.bf16.msra.mxu0 %v4595
        %5051 = vmatpush.bf16.msra.mxu0 %v4588
        %5052 = vmatpush.bf16.msra.mxu0 %v4581
        %5053 = vmatpush.bf16.msra.mxu0 %v4574
        %5054 = vmatpush.bf16.msra.mxu0 %v4567
        %5055 = vmatpush.bf16.msra.mxu0 %v4560
        %5056 = vmatmul.bf16.gmra.mxu0 %v3834
        %v5057 = vpop.f32.mrf.mxu0
        %v5058 = vadd.f32 0.0, %v5057
        %v5059 = vpop.f32.mrf.mxu0
        %5060 = vdwg.mxu0
        %5061 = vmatpush.bf16.msra.mxu0 %v4665
        %5062 = vmatpush.bf16.msra.mxu0 %v4658
        %5063 = vmatpush.bf16.msra.mxu0 %v4651
        %5064 = vmatpush.bf16.msra.mxu0 %v4644
        %5065 = vmatpush.bf16.msra.mxu0 %v4637
        %5066 = vmatpush.bf16.msra.mxu0 %v4630
        %5067 = vmatpush.bf16.msra.mxu0 %v4623
        %5068 = vmatpush.bf16.msra.mxu0 %v4616
        %5069 = vmatmul.bf16.gmra.mxu0 %v3835
        %v5070 = vpop.f32.mrf.mxu0
        %v5071 = vadd.f32 %v5058, %v5070
        %v5072 = vpop.f32.mrf.mxu0
        %5073 = vdwg.mxu0
        %5074 = vmatpush.bf16.msra.mxu0 %v4721
        %5075 = vmatpush.bf16.msra.mxu0 %v4714
        %5076 = vmatpush.bf16.msra.mxu0 %v4707
        %5077 = vmatpush.bf16.msra.mxu0 %v4700
        %5078 = vmatpush.bf16.msra.mxu0 %v4693
        %5079 = vmatpush.bf16.msra.mxu0 %v4686
        %5080 = vmatpush.bf16.msra.mxu0 %v4679
        %5081 = vmatpush.bf16.msra.mxu0 %v4672
        %5082 = vmatmul.bf16.gmra.mxu0 %v3306
        %v5083 = vpop.f32.mrf.mxu0
        %v5084 = vadd.f32 %v5071, %v5083
        %v5085 = vpop.f32.mrf.mxu0
        %5086 = vdwg.mxu0
        %5087 = vmatpush.bf16.msra.mxu0 %v4610
        %5088 = vmatpush.bf16.msra.mxu0 %v4603
        %5089 = vmatpush.bf16.msra.mxu0 %v4596
        %5090 = vmatpush.bf16.msra.mxu0 %v4589
        %5091 = vmatpush.bf16.msra.mxu0 %v4582
        %5092 = vmatpush.bf16.msra.mxu0 %v4575
        %5093 = vmatpush.bf16.msra.mxu0 %v4568
        %5094 = vmatpush.bf16.msra.mxu0 %v4561
        %5095 = vmatmul.bf16.gmra.mxu0 %v3834
        %v5096 = vpop.f32.mrf.mxu0
        %v5097 = vadd.f32 0.0, %v5096
        %v5098 = vpop.f32.mrf.mxu0
        %5099 = vdwg.mxu0
        %5100 = vmatpush.bf16.msra.mxu0 %v4666
        %5101 = vmatpush.bf16.msra.mxu0 %v4659
        %5102 = vmatpush.bf16.msra.mxu0 %v4652
        %5103 = vmatpush.bf16.msra.mxu0 %v4645
        %5104 = vmatpush.bf16.msra.mxu0 %v4638
        %5105 = vmatpush.bf16.msra.mxu0 %v4631
        %5106 = vmatpush.bf16.msra.mxu0 %v4624
        %5107 = vmatpush.bf16.msra.mxu0 %v4617
        %5108 = vmatmul.bf16.gmra.mxu0 %v3835
        %v5109 = vpop.f32.mrf.mxu0
        %v5110 = vadd.f32 %v5097, %v5109
        %v5111 = vpop.f32.mrf.mxu0
        %5112 = vdwg.mxu0
        %5113 = vmatpush.bf16.msra.mxu0 %v4722
        %5114 = vmatpush.bf16.msra.mxu0 %v4715
        %5115 = vmatpush.bf16.msra.mxu0 %v4708
        %5116 = vmatpush.bf16.msra.mxu0 %v4701
        %5117 = vmatpush.bf16.msra.mxu0 %v4694
        %5118 = vmatpush.bf16.msra.mxu0 %v4687
        %5119 = vmatpush.bf16.msra.mxu0 %v4680
        %5120 = vmatpush.bf16.msra.mxu0 %v4673
        %5121 = vmatmul.bf16.gmra.mxu0 %v3306
        %v5122 = vpop.f32.mrf.mxu0
        %v5123 = vadd.f32 %v5110, %v5122
        %v5124 = vpop.f32.mrf.mxu0
        %5125 = vdwg.mxu0
        %5126 = vmatpush.bf16.msra.mxu0 %v4611
        %5127 = vmatpush.bf16.msra.mxu0 %v4604
        %5128 = vmatpush.bf16.msra.mxu0 %v4597
        %5129 = vmatpush.bf16.msra.mxu0 %v4590
        %5130 = vmatpush.bf16.msra.mxu0 %v4583
        %5131 = vmatpush.bf16.msra.mxu0 %v4576
        %5132 = vmatpush.bf16.msra.mxu0 %v4569
        %5133 = vmatpush.bf16.msra.mxu0 %v4562
        %5134 = vmatmul.bf16.gmra.mxu0 %v3834
        %v5135 = vpop.f32.mrf.mxu0
        %v5136 = vadd.f32 0.0, %v5135
        %v5137 = vpop.f32.mrf.mxu0
        %5138 = vdwg.mxu0
        %5139 = vmatpush.bf16.msra.mxu0 %v4667
        %5140 = vmatpush.bf16.msra.mxu0 %v4660
        %5141 = vmatpush.bf16.msra.mxu0 %v4653
        %5142 = vmatpush.bf16.msra.mxu0 %v4646
        %5143 = vmatpush.bf16.msra.mxu0 %v4639
        %5144 = vmatpush.bf16.msra.mxu0 %v4632
        %5145 = vmatpush.bf16.msra.mxu0 %v4625
        %5146 = vmatpush.bf16.msra.mxu0 %v4618
        %5147 = vmatmul.bf16.gmra.mxu0 %v3835
        %v5148 = vpop.f32.mrf.mxu0
        %v5149 = vadd.f32 %v5136, %v5148
        %v5150 = vpop.f32.mrf.mxu0
        %5151 = vdwg.mxu0
        %5152 = vmatpush.bf16.msra.mxu0 %v4723
        %5153 = vmatpush.bf16.msra.mxu0 %v4716
        %5154 = vmatpush.bf16.msra.mxu0 %v4709
        %5155 = vmatpush.bf16.msra.mxu0 %v4702
        %5156 = vmatpush.bf16.msra.mxu0 %v4695
        %5157 = vmatpush.bf16.msra.mxu0 %v4688
        %5158 = vmatpush.bf16.msra.mxu0 %v4681
        %5159 = vmatpush.bf16.msra.mxu0 %v4674
        %5160 = vmatmul.bf16.gmra.mxu0 %v3306
        %v5161 = vpop.f32.mrf.mxu0
        %v5162 = vadd.f32 %v5149, %v5161
        %v5163 = vpop.f32.mrf.mxu0
        %5164 = vdwg.mxu0
        %v5165 = vxor.u32 %v4928, 2147483648
        %v5166 = vmul.f32 %v5165, 1.442695
        %v5167 = vpow.pop %v5166
        %v5168 = vadd.f32 %v5167, 1.0
        %v5169 = vrcp.pop %v5168
        %v5170 = vmul.f32 %v5168, %v5169
        %v5171 = vsub.f32 1.0, %v5170
        %v5172 = vmul.f32 %v5169, %v5171
        %v5173 = vadd.f32 %v5169, %v5172
        %vm5174 = vweird.f32 %v5168
        %vm5175 = vweird.f32 %v5169
        %vm5176 = vmor %vm5174, %vm5175
        %v5177 = vsel %vm5176, %v5169, %v5173
        %v5178 = vand.u32 2147483647, %v5168
        %vm5179 = vcmp.eq.f32.partialorder %v5178, 8.507059e+37
        %v5180 = vand.u32 %v5168, 2147483648
        %v5181 = vor.u32 1.1754944e-38, %v5180
        %v5182 = vsel %vm5179, %v5181, %v5177
        %v5183 = vmul.f32 1.0, %v5182
        %v5184 = vadd.f32 %v4967, 1.0
        %v5185 = vxor.u32 %v5184, 2147483648
        %v5186 = vmul.f32 %v5185, 1.442695
        %v5187 = vpow.pop %v5186
        %v5188 = vadd.f32 %v5187, 1.0
        %v5189 = vrcp.pop %v5188
        %v5190 = vmul.f32 %v5188, %v5189
        %v5191 = vsub.f32 1.0, %v5190
        %v5192 = vmul.f32 %v5189, %v5191
        %v5193 = vadd.f32 %v5189, %v5192
        %vm5194 = vweird.f32 %v5188
        %vm5195 = vweird.f32 %v5189
        %vm5196 = vmor %vm5194, %vm5195
        %v5197 = vsel %vm5196, %v5189, %v5193
        %v5198 = vand.u32 2147483647, %v5188
        %vm5199 = vcmp.eq.f32.partialorder %v5198, 8.507059e+37
        %v5200 = vand.u32 %v5188, 2147483648
        %v5201 = vor.u32 1.1754944e-38, %v5200
        %v5202 = vsel %vm5199, %v5201, %v5197
        %v5203 = vmul.f32 1.0, %v5202
        %v5204 = vtanh.pop %v5006
        %v5205 = vmul.f32 %v5203, %v3831
        %v5206 = vmul.f32 %v5183, %v5204
        %v5207 = vadd.f32 %v5205, %v5206
        %v5208 = vxor.u32 %v5045, 2147483648
        %v5209 = vmul.f32 %v5208, 1.442695
        %v5210 = vpow.pop %v5209
        %v5211 = vadd.f32 %v5210, 1.0
        %v5212 = vrcp.pop %v5211
        %v5213 = vmul.f32 %v5211, %v5212
        %v5214 = vsub.f32 1.0, %v5213
        %v5215 = vmul.f32 %v5212, %v5214
        %v5216 = vadd.f32 %v5212, %v5215
        %vm5217 = vweird.f32 %v5211
        %vm5218 = vweird.f32 %v5212
        %vm5219 = vmor %vm5217, %vm5218
        %v5220 = vsel %vm5219, %v5212, %v5216
        %v5221 = vand.u32 2147483647, %v5211
        %vm5222 = vcmp.eq.f32.partialorder %v5221, 8.507059e+37
        %v5223 = vand.u32 %v5211, 2147483648
        %v5224 = vor.u32 1.1754944e-38, %v5223
        %v5225 = vsel %vm5222, %v5224, %v5220
        %v5226 = vmul.f32 1.0, %v5225
        %v5227 = vadd.f32 %v5084, 1.0
        %v5228 = vxor.u32 %v5227, 2147483648
        %v5229 = vmul.f32 %v5228, 1.442695
        %v5230 = vpow.pop %v5229
        %v5231 = vadd.f32 %v5230, 1.0
        %v5232 = vrcp.pop %v5231
        %v5233 = vmul.f32 %v5231, %v5232
        %v5234 = vsub.f32 1.0, %v5233
        %v5235 = vmul.f32 %v5232, %v5234
        %v5236 = vadd.f32 %v5232, %v5235
        %vm5237 = vweird.f32 %v5231
        %vm5238 = vweird.f32 %v5232
        %vm5239 = vmor %vm5237, %vm5238
        %v5240 = vsel %vm5239, %v5232, %v5236
        %v5241 = vand.u32 2147483647, %v5231
        %vm5242 = vcmp.eq.f32.partialorder %v5241, 8.507059e+37
        %v5243 = vand.u32 %v5231, 2147483648
        %v5244 = vor.u32 1.1754944e-38, %v5243
        %v5245 = vsel %vm5242, %v5244, %v5240
        %v5246 = vmul.f32 1.0, %v5245
        %v5247 = vtanh.pop %v5123
        %v5248 = vmul.f32 %v5246, %v3304
        %v5249 = vmul.f32 %v5226, %v5247
        %v5250 = vadd.f32 %v5248, %v5249
        %v5251 = vpack.c.bf16 %v5207, %v5207
        %v5252 = vpack.c.bf16 %v5250, %v5250
        %v5253 = vld [vmem:[#allocation29] sm:$0xf]
        %v5254 = vld [vmem:[#allocation29 + $0x4] sm:$0xf]
        %v5255 = vld [vmem:[#allocation29 + $0x8] sm:$0xf]
        %v5256 = vld [vmem:[#allocation29 + $0xc] sm:$0xf]
        %v5257 = vld [vmem:[#allocation29 + $0x10] sm:$0xf]
        %v5258 = vld [vmem:[#allocation29 + $0x14] sm:$0xf]
        %v5259 = vld [vmem:[#allocation29 + $0x18] sm:$0xf]
        %v5260 = vld [vmem:[#allocation29 + $0x1c] sm:$0xf]
        %v5261 = vld [vmem:[#allocation29 + $0x20] sm:$0xf]
        %v5262 = vld [vmem:[#allocation29 + $0x24] sm:$0xf]
        %v5263 = vld [vmem:[#allocation29 + $0x28] sm:$0xf]
        %v5264 = vld [vmem:[#allocation29 + $0x2c] sm:$0xf]
        %v5265 = vld [vmem:[#allocation29 + $0x30] sm:$0xf]
        %v5266 = vld [vmem:[#allocation29 + $0x34] sm:$0xf]
        %v5267 = vld [vmem:[#allocation29 + $0x38] sm:$0xf]
        %v5268 = vld [vmem:[#allocation29 + $0x3c] sm:$0xf]
        %v5269 = vld [vmem:[#allocation29 + $0x40] sm:$0xf]
        %v5270 = vld [vmem:[#allocation29 + $0x44] sm:$0xf]
        %v5271 = vld [vmem:[#allocation29 + $0x48] sm:$0xf]
        %v5272 = vld [vmem:[#allocation29 + $0x4c] sm:$0xf]
        %v5273 = vld [vmem:[#allocation29 + $0x50] sm:$0xf]
        %v5274 = vld [vmem:[#allocation29 + $0x54] sm:$0xf]
        %v5275 = vld [vmem:[#allocation29 + $0x58] sm:$0xf]
        %v5276 = vld [vmem:[#allocation29 + $0x5c] sm:$0xf]
        %v5277 = vld [vmem:[#allocation29 + $0x60] sm:$0xf]
        %v5278 = vld [vmem:[#allocation29 + $0x64] sm:$0xf]
        %v5279 = vld [vmem:[#allocation29 + $0x68] sm:$0xf]
        %v5280 = vld [vmem:[#allocation29 + $0x6c] sm:$0xf]
        %v5281 = vld [vmem:[#allocation29 + $0x70] sm:$0xf]
        %v5282 = vld [vmem:[#allocation29 + $0x74] sm:$0xf]
        %v5283 = vld [vmem:[#allocation29 + $0x78] sm:$0xf]
        %v5284 = vld [vmem:[#allocation29 + $0x7c] sm:$0xf]
        %v5317 = vunpack.c.l.b16 %v5253
        %v5318 = vunpack.c.l.b16 %v5254
        %v5319 = vunpack.c.l.b16 %v5255
        %v5320 = vunpack.c.l.b16 %v5256
        %v5321 = vunpack.c.l.b16 %v5257
        %v5322 = vunpack.c.l.b16 %v5258
        %v5323 = vunpack.c.l.b16 %v5259
        %v5324 = vunpack.c.l.b16 %v5260
        %v5325 = vunpack.c.l.b16 %v5261
        %v5326 = vunpack.c.l.b16 %v5262
        %v5327 = vunpack.c.l.b16 %v5263
        %v5328 = vunpack.c.l.b16 %v5264
        %v5329 = vunpack.c.l.b16 %v5265
        %v5330 = vunpack.c.l.b16 %v5266
        %v5331 = vunpack.c.l.b16 %v5267
        %v5332 = vunpack.c.l.b16 %v5268
        %v5333 = vunpack.c.l.b16 %v5269
        %v5334 = vunpack.c.l.b16 %v5270
        %v5335 = vunpack.c.l.b16 %v5271
        %v5336 = vunpack.c.l.b16 %v5272
        %v5337 = vunpack.c.l.b16 %v5273
        %v5338 = vunpack.c.l.b16 %v5274
        %v5339 = vunpack.c.l.b16 %v5275
        %v5340 = vunpack.c.l.b16 %v5276
        %v5341 = vunpack.c.l.b16 %v5277
        %v5342 = vunpack.c.l.b16 %v5278
        %v5343 = vunpack.c.l.b16 %v5279
        %v5344 = vunpack.c.l.b16 %v5280
        %v5345 = vunpack.c.l.b16 %v5281
        %v5346 = vunpack.c.l.b16 %v5282
        %v5347 = vunpack.c.l.b16 %v5283
        %v5348 = vunpack.c.l.b16 %v5284
        %v5349 = vpack.c.b16 %v5318, %v5317
        %v5350 = vpack.c.b16 %v5320, %v5319
        %v5351 = vpack.c.b16 %v5322, %v5321
        %v5352 = vpack.c.b16 %v5324, %v5323
        %v5353 = vpack.c.b16 %v5326, %v5325
        %v5354 = vpack.c.b16 %v5328, %v5327
        %v5355 = vpack.c.b16 %v5330, %v5329
        %v5356 = vpack.c.b16 %v5332, %v5331
        %v5357 = vpack.c.b16 %v5334, %v5333
        %v5358 = vpack.c.b16 %v5336, %v5335
        %v5359 = vpack.c.b16 %v5338, %v5337
        %v5360 = vpack.c.b16 %v5340, %v5339
        %v5361 = vpack.c.b16 %v5342, %v5341
        %v5362 = vpack.c.b16 %v5344, %v5343
        %v5363 = vpack.c.b16 %v5346, %v5345
        %v5364 = vpack.c.b16 %v5348, %v5347
        %5381 = vmatpush.bf16.msra.mxu0 %v5356
        %5382 = vmatpush.bf16.msra.mxu0 %v5355
        %5383 = vmatpush.bf16.msra.mxu0 %v5354
        %5384 = vmatpush.bf16.msra.mxu0 %v5353
        %5385 = vmatpush.bf16.msra.mxu0 %v5352
        %5386 = vmatpush.bf16.msra.mxu0 %v5351
        %5387 = vmatpush.bf16.msra.mxu0 %v5350
        %5388 = vmatpush.bf16.msra.mxu0 %v5349
        %5389 = vmatmul.bf16.gmra.mxu0 %v5251
        %v5390 = vpop.f32.mrf.mxu0
        %v5391 = vadd.f32 0.0, %v5390
        %v5392 = vpop.f32.mrf.mxu0
        %5393 = vdwg.mxu0
        %5394 = vmatpush.bf16.msra.mxu0 %v5364
        %5395 = vmatpush.bf16.msra.mxu0 %v5363
        %5396 = vmatpush.bf16.msra.mxu0 %v5362
        %5397 = vmatpush.bf16.msra.mxu0 %v5361
        %5398 = vmatpush.bf16.msra.mxu0 %v5360
        %5399 = vmatpush.bf16.msra.mxu0 %v5359
        %5400 = vmatpush.bf16.msra.mxu0 %v5358
        %5401 = vmatpush.bf16.msra.mxu0 %v5357
        %5402 = vmatmul.bf16.gmra.mxu0 %v5252
        %v5403 = vpop.f32.mrf.mxu0
        %v5404 = vadd.f32 %v5391, %v5403
        %v5405 = vpop.f32.mrf.mxu0
        %5406 = vdwg.mxu0
        %v5407 = vadd.f32 %v5162, %v5404
        %v5408 = vxor.u32 %v5407, 2147483648
        %v5409 = vmul.f32 %v5408, 1.442695
        %v5410 = vpow.pop %v5409
        %v5411 = vadd.f32 %v5410, 1.0
        %v5412 = vrcp.pop %v5411
        %v5413 = vmul.f32 %v5411, %v5412
        %v5414 = vsub.f32 1.0, %v5413
        %v5415 = vmul.f32 %v5412, %v5414
        %v5416 = vadd.f32 %v5412, %v5415
        %vm5417 = vweird.f32 %v5411
        %vm5418 = vweird.f32 %v5412
        %vm5419 = vmor %vm5417, %vm5418
        %v5420 = vsel %vm5419, %v5412, %v5416
        %v5421 = vand.u32 2147483647, %v5411
        %vm5422 = vcmp.eq.f32.partialorder %v5421, 8.507059e+37
        %v5423 = vand.u32 %v5411, 2147483648
        %v5424 = vor.u32 1.1754944e-38, %v5423
        %v5425 = vsel %vm5422, %v5424, %v5420
        %v5426 = vmul.f32 1.0, %v5425
        %v5427 = vld [vmem:[#allocation33] sm:$0xf]
        %v5428 = vld [vmem:[#allocation33 + $0x4] sm:$0xf]
        %v5429 = vld [vmem:[#allocation33 + $0x8] sm:$0xf]
        %v5430 = vld [vmem:[#allocation33 + $0xc] sm:$0xf]
        %v5431 = vld [vmem:[#allocation33 + $0x10] sm:$0xf]
        %v5432 = vld [vmem:[#allocation33 + $0x14] sm:$0xf]
        %v5433 = vld [vmem:[#allocation33 + $0x18] sm:$0xf]
        %v5434 = vld [vmem:[#allocation33 + $0x1c] sm:$0xf]
        %v5435 = vld [vmem:[#allocation33 + $0x20] sm:$0xf]
        %v5436 = vld [vmem:[#allocation33 + $0x24] sm:$0xf]
        %v5437 = vld [vmem:[#allocation33 + $0x28] sm:$0xf]
        %v5438 = vld [vmem:[#allocation33 + $0x2c] sm:$0xf]
        %v5439 = vld [vmem:[#allocation33 + $0x30] sm:$0xf]
        %v5440 = vld [vmem:[#allocation33 + $0x34] sm:$0xf]
        %v5441 = vld [vmem:[#allocation33 + $0x38] sm:$0xf]
        %v5442 = vld [vmem:[#allocation33 + $0x3c] sm:$0xf]
        %v5443 = vld [vmem:[#allocation33 + $0x40] sm:$0xf]
        %v5444 = vld [vmem:[#allocation33 + $0x44] sm:$0xf]
        %v5445 = vld [vmem:[#allocation33 + $0x48] sm:$0xf]
        %v5446 = vld [vmem:[#allocation33 + $0x4c] sm:$0xf]
        %v5447 = vld [vmem:[#allocation33 + $0x50] sm:$0xf]
        %v5448 = vld [vmem:[#allocation33 + $0x54] sm:$0xf]
        %v5449 = vld [vmem:[#allocation33 + $0x58] sm:$0xf]
        %v5450 = vld [vmem:[#allocation33 + $0x5c] sm:$0xf]
        %v5451 = vld [vmem:[#allocation33 + $0x60] sm:$0xf]
        %v5452 = vld [vmem:[#allocation33 + $0x64] sm:$0xf]
        %v5453 = vld [vmem:[#allocation33 + $0x68] sm:$0xf]
        %v5454 = vld [vmem:[#allocation33 + $0x6c] sm:$0xf]
        %v5455 = vld [vmem:[#allocation33 + $0x70] sm:$0xf]
        %v5456 = vld [vmem:[#allocation33 + $0x74] sm:$0xf]
        %v5457 = vld [vmem:[#allocation33 + $0x78] sm:$0xf]
        %v5458 = vld [vmem:[#allocation33 + $0x7c] sm:$0xf]
        %v5491 = vunpack.c.l.b16 %v5427
        %v5492 = vunpack.c.l.b16 %v5428
        %v5493 = vunpack.c.l.b16 %v5429
        %v5494 = vunpack.c.l.b16 %v5430
        %v5495 = vunpack.c.l.b16 %v5431
        %v5496 = vunpack.c.l.b16 %v5432
        %v5497 = vunpack.c.l.b16 %v5433
        %v5498 = vunpack.c.l.b16 %v5434
        %v5499 = vunpack.c.l.b16 %v5435
        %v5500 = vunpack.c.l.b16 %v5436
        %v5501 = vunpack.c.l.b16 %v5437
        %v5502 = vunpack.c.l.b16 %v5438
        %v5503 = vunpack.c.l.b16 %v5439
        %v5504 = vunpack.c.l.b16 %v5440
        %v5505 = vunpack.c.l.b16 %v5441
        %v5506 = vunpack.c.l.b16 %v5442
        %v5507 = vunpack.c.l.b16 %v5443
        %v5508 = vunpack.c.l.b16 %v5444
        %v5509 = vunpack.c.l.b16 %v5445
        %v5510 = vunpack.c.l.b16 %v5446
        %v5511 = vunpack.c.l.b16 %v5447
        %v5512 = vunpack.c.l.b16 %v5448
        %v5513 = vunpack.c.l.b16 %v5449
        %v5514 = vunpack.c.l.b16 %v5450
        %v5515 = vunpack.c.l.b16 %v5451
        %v5516 = vunpack.c.l.b16 %v5452
        %v5517 = vunpack.c.l.b16 %v5453
        %v5518 = vunpack.c.l.b16 %v5454
        %v5519 = vunpack.c.l.b16 %v5455
        %v5520 = vunpack.c.l.b16 %v5456
        %v5521 = vunpack.c.l.b16 %v5457
        %v5522 = vunpack.c.l.b16 %v5458
        %v5523 = vpack.c.b16 %v5492, %v5491
        %v5524 = vpack.c.b16 %v5494, %v5493
        %v5525 = vpack.c.b16 %v5496, %v5495
        %v5526 = vpack.c.b16 %v5498, %v5497
        %v5527 = vpack.c.b16 %v5500, %v5499
        %v5528 = vpack.c.b16 %v5502, %v5501
        %v5529 = vpack.c.b16 %v5504, %v5503
        %v5530 = vpack.c.b16 %v5506, %v5505
        %v5531 = vpack.c.b16 %v5508, %v5507
        %v5532 = vpack.c.b16 %v5510, %v5509
        %v5533 = vpack.c.b16 %v5512, %v5511
        %v5534 = vpack.c.b16 %v5514, %v5513
        %v5535 = vpack.c.b16 %v5516, %v5515
        %v5536 = vpack.c.b16 %v5518, %v5517
        %v5537 = vpack.c.b16 %v5520, %v5519
        %v5538 = vpack.c.b16 %v5522, %v5521
        %5555 = vmatpush.bf16.msra.mxu0 %v5530
        %5556 = vmatpush.bf16.msra.mxu0 %v5529
        %5557 = vmatpush.bf16.msra.mxu0 %v5528
        %5558 = vmatpush.bf16.msra.mxu0 %v5527
        %5559 = vmatpush.bf16.msra.mxu0 %v5526
        %5560 = vmatpush.bf16.msra.mxu0 %v5525
        %5561 = vmatpush.bf16.msra.mxu0 %v5524
        %5562 = vmatpush.bf16.msra.mxu0 %v5523
        %5563 = vmatmul.bf16.gmra.mxu0 %v5251
        %v5564 = vpop.f32.mrf.mxu0
        %v5565 = vadd.f32 0.0, %v5564
        %v5566 = vpop.f32.mrf.mxu0
        %5567 = vdwg.mxu0
        %5568 = vmatpush.bf16.msra.mxu0 %v5538
        %5569 = vmatpush.bf16.msra.mxu0 %v5537
        %5570 = vmatpush.bf16.msra.mxu0 %v5536
        %5571 = vmatpush.bf16.msra.mxu0 %v5535
        %5572 = vmatpush.bf16.msra.mxu0 %v5534
        %5573 = vmatpush.bf16.msra.mxu0 %v5533
        %5574 = vmatpush.bf16.msra.mxu0 %v5532
        %5575 = vmatpush.bf16.msra.mxu0 %v5531
        %5576 = vmatmul.bf16.gmra.mxu0 %v5252
        %v5577 = vpop.f32.mrf.mxu0
        %v5578 = vadd.f32 %v5565, %v5577
        %v5579 = vpop.f32.mrf.mxu0
        %5580 = vdwg.mxu0
        %v5581 = vtanh.pop %v5578
        %v5582 = vmul.f32 %v5426, %v5581
        %v5583 = vsub.f32 1.0, %v5426
        %v5584 = vmul.f32 %v5583, %v3639
        %v5585 = vadd.f32 %v5582, %v5584
        %v5586 = vpack.c.bf16 %v5585, %v5585
        %v5587 = vld [vmem:[#allocation38] sm:$0xf]
        %v5588 = vld [vmem:[#allocation38 + $0x4] sm:$0xf]
        %v5589 = vld [vmem:[#allocation38 + $0x8] sm:$0xf]
        %v5590 = vld [vmem:[#allocation38 + $0xc] sm:$0xf]
        %v5591 = vld [vmem:[#allocation38 + $0x10] sm:$0xf]
        %v5592 = vld [vmem:[#allocation38 + $0x14] sm:$0xf]
        %v5593 = vld [vmem:[#allocation38 + $0x18] sm:$0xf]
        %v5594 = vld [vmem:[#allocation38 + $0x1c] sm:$0xf]
        %v5595 = vld [vmem:[#allocation38 + $0x20] sm:$0xf]
        %v5596 = vld [vmem:[#allocation38 + $0x24] sm:$0xf]
        %v5597 = vld [vmem:[#allocation38 + $0x28] sm:$0xf]
        %v5598 = vld [vmem:[#allocation38 + $0x2c] sm:$0xf]
        %v5599 = vld [vmem:[#allocation38 + $0x30] sm:$0xf]
        %v5600 = vld [vmem:[#allocation38 + $0x34] sm:$0xf]
        %v5601 = vld [vmem:[#allocation38 + $0x38] sm:$0xf]
        %v5602 = vld [vmem:[#allocation38 + $0x3c] sm:$0xf]
        %v5603 = vld [vmem:[%s25] sm:$0x1]
        %v5605 = vperm.slane %v5603, 0
        %v5623 = vunpack.c.l.b16 %v5587
        %v5624 = vunpack.c.l.b16 %v5588
        %v5625 = vunpack.c.l.b16 %v5589
        %v5626 = vunpack.c.l.b16 %v5590
        %v5627 = vunpack.c.l.b16 %v5591
        %v5628 = vunpack.c.l.b16 %v5592
        %v5629 = vunpack.c.l.b16 %v5593
        %v5630 = vunpack.c.l.b16 %v5594
        %v5631 = vunpack.c.l.b16 %v5595
        %v5632 = vunpack.c.l.b16 %v5596
        %v5633 = vunpack.c.l.b16 %v5597
        %v5634 = vunpack.c.l.b16 %v5598
        %v5635 = vunpack.c.l.b16 %v5599
        %v5636 = vunpack.c.l.b16 %v5600
        %v5637 = vunpack.c.l.b16 %v5601
        %v5638 = vunpack.c.l.b16 %v5602
        %v5639 = vpack.c.b16 %v5624, %v5623
        %v5640 = vpack.c.b16 %v5626, %v5625
        %v5641 = vpack.c.b16 %v5628, %v5627
        %v5642 = vpack.c.b16 %v5630, %v5629
        %v5643 = vpack.c.b16 %v5632, %v5631
        %v5644 = vpack.c.b16 %v5634, %v5633
        %v5645 = vpack.c.b16 %v5636, %v5635
        %v5646 = vpack.c.b16 %v5638, %v5637
        %5655 = vmatpush.bf16.msra.mxu0 %v5646
        %5656 = vmatpush.bf16.msra.mxu0 %v5645
        %5657 = vmatpush.bf16.msra.mxu0 %v5644
        %5658 = vmatpush.bf16.msra.mxu0 %v5643
        %5659 = vmatpush.bf16.msra.mxu0 %v5642
        %5660 = vmatpush.bf16.msra.mxu0 %v5641
        %5661 = vmatpush.bf16.msra.mxu0 %v5640
        %5662 = vmatpush.bf16.msra.mxu0 %v5639
        %5663 = vmatmul.bf16.gmra.mxu0 %v5586
        %v5664 = vpop.f32.mrf.mxu0
        %v5665 = vadd.f32 %v5605, %v5664
        %v5666 = vpop.f32.mrf.mxu0
        %5667 = vdwg.mxu0
        %v5668 = vld [vmem:[#allocation41] sm:$0xf]
        %v5669 = vld [vmem:[#allocation41 + $0x4] sm:$0xf]
        %v5670 = vld [vmem:[#allocation41 + $0x8] sm:$0xf]
        %v5671 = vld [vmem:[#allocation41 + $0xc] sm:$0xf]
        %v5672 = vld [vmem:[#allocation41 + $0x10] sm:$0xf]
        %v5673 = vld [vmem:[#allocation41 + $0x14] sm:$0xf]
        %v5674 = vld [vmem:[#allocation41 + $0x18] sm:$0xf]
        %v5675 = vld [vmem:[#allocation41 + $0x1c] sm:$0xf]
        %v5676 = vld [vmem:[#allocation41 + $0x20] sm:$0xf]
        %v5677 = vld [vmem:[#allocation41 + $0x24] sm:$0xf]
        %v5678 = vld [vmem:[#allocation41 + $0x28] sm:$0xf]
        %v5679 = vld [vmem:[#allocation41 + $0x2c] sm:$0xf]
        %v5680 = vld [vmem:[#allocation41 + $0x30] sm:$0xf]
        %v5681 = vld [vmem:[#allocation41 + $0x34] sm:$0xf]
        %v5682 = vld [vmem:[#allocation41 + $0x38] sm:$0xf]
        %v5683 = vld [vmem:[#allocation41 + $0x3c] sm:$0xf]
        %v5684 = vld [vmem:[%s27] sm:$0x1]
        %v5686 = vperm.slane %v5684, 0
        %v5704 = vunpack.c.l.b16 %v5668
        %v5705 = vunpack.c.l.b16 %v5669
        %v5706 = vunpack.c.l.b16 %v5670
        %v5707 = vunpack.c.l.b16 %v5671
        %v5708 = vunpack.c.l.b16 %v5672
        %v5709 = vunpack.c.l.b16 %v5673
        %v5710 = vunpack.c.l.b16 %v5674
        %v5711 = vunpack.c.l.b16 %v5675
        %v5712 = vunpack.c.l.b16 %v5676
        %v5713 = vunpack.c.l.b16 %v5677
        %v5714 = vunpack.c.l.b16 %v5678
        %v5715 = vunpack.c.l.b16 %v5679
        %v5716 = vunpack.c.l.b16 %v5680
        %v5717 = vunpack.c.l.b16 %v5681
        %v5718 = vunpack.c.l.b16 %v5682
        %v5719 = vunpack.c.l.b16 %v5683
        %v5720 = vpack.c.b16 %v5705, %v5704
        %v5721 = vpack.c.b16 %v5707, %v5706
        %v5722 = vpack.c.b16 %v5709, %v5708
        %v5723 = vpack.c.b16 %v5711, %v5710
        %v5724 = vpack.c.b16 %v5713, %v5712
        %v5725 = vpack.c.b16 %v5715, %v5714
        %v5726 = vpack.c.b16 %v5717, %v5716
        %v5727 = vpack.c.b16 %v5719, %v5718
        %5736 = vmatpush.bf16.msra.mxu0 %v5727
        %5737 = vmatpush.bf16.msra.mxu0 %v5726
        %5738 = vmatpush.bf16.msra.mxu0 %v5725
        %5739 = vmatpush.bf16.msra.mxu0 %v5724
        %5740 = vmatpush.bf16.msra.mxu0 %v5723
        %5741 = vmatpush.bf16.msra.mxu0 %v5722
        %5742 = vmatpush.bf16.msra.mxu0 %v5721
        %5743 = vmatpush.bf16.msra.mxu0 %v5720
        %5744 = vmatmul.bf16.gmra.mxu0 %v5586
        %v5745 = vpop.f32.mrf.mxu0
        %v5746 = vadd.f32 %v5686, %v5745
        %v5747 = vpop.f32.mrf.mxu0
        %5748 = vdwg.mxu0
        %v5749 = vxor.u32 %v5746, 2147483648
        %v5750 = vmul.f32 %v5749, 1.442695
        %v5751 = vpow.pop %v5750
        %v5752 = vadd.f32 %v5751, 1.0
        %v5753 = vrcp.pop %v5752
        %v5754 = vmul.f32 %v5752, %v5753
        %v5755 = vsub.f32 1.0, %v5754
        %v5756 = vmul.f32 %v5753, %v5755
        %v5757 = vadd.f32 %v5753, %v5756
        %vm5758 = vweird.f32 %v5752
        %vm5759 = vweird.f32 %v5753
        %vm5760 = vmor %vm5758, %vm5759
        %v5761 = vsel %vm5760, %v5753, %v5757
        %v5762 = vand.u32 2147483647, %v5752
        %vm5763 = vcmp.eq.f32.partialorder %v5762, 8.507059e+37
        %v5764 = vand.u32 %v5752, 2147483648
        %v5765 = vor.u32 1.1754944e-38, %v5764
        %v5766 = vsel %vm5763, %v5765, %v5761
        %v5767 = vmul.f32 1.0, %v5766
        %v5768 = vmul.f32 %v5767, %v5665
        %v5769 = vsub.f32 1.0, %v5767
        %v5770 = vmul.f32 %v5769, %v5585
        %v5771 = vadd.f32 %v5768, %v5770
        %5772 = vst [vmem:[%s3828] sm:$0x3] %v5771
        %5773 = vst [vmem:[%s3830] sm:$0x3] %v5207
        %s5774 = scalar_lea.vmem [#allocation2], 4
        %v5775 = vld [vmem:[%s5774] sm:$0x3]
        %s5776 = scalar_lea.vmem [#allocation3], 4
        %v5777 = vld [vmem:[%s5776] sm:$0x3]
        %v5778 = vpack.c.bf16 %v5771, %v5771
        %v5779 = vpack.c.bf16 %v5775, %v5775
        %v5780 = vld [vmem:[#allocation26] sm:$0xff]
        %v5781 = vld [vmem:[#allocation26 + $0x8] sm:$0xff]
        %v5782 = vld [vmem:[#allocation26 + $0x10] sm:$0xff]
        %v5783 = vld [vmem:[#allocation26 + $0x18] sm:$0xf]
        %v5784 = vld [vmem:[#allocation26 + $0x1c] sm:$0xff]
        %v5785 = vld [vmem:[#allocation26 + $0x24] sm:$0xff]
        %v5786 = vld [vmem:[#allocation26 + $0x2c] sm:$0xff]
        %v5787 = vld [vmem:[#allocation26 + $0x34] sm:$0xf]
        %v5788 = vld [vmem:[#allocation26 + $0x38] sm:$0xff]
        %v5789 = vld [vmem:[#allocation26 + $0x40] sm:$0xff]
        %v5790 = vld [vmem:[#allocation26 + $0x48] sm:$0xff]
        %v5791 = vld [vmem:[#allocation26 + $0x50] sm:$0xf]
        %v5792 = vld [vmem:[#allocation26 + $0x54] sm:$0xff]
        %v5793 = vld [vmem:[#allocation26 + $0x5c] sm:$0xff]
        %v5794 = vld [vmem:[#allocation26 + $0x64] sm:$0xff]
        %v5795 = vld [vmem:[#allocation26 + $0x6c] sm:$0xf]
        %v5796 = vld [vmem:[#allocation26 + $0x70] sm:$0xff]
        %v5797 = vld [vmem:[#allocation26 + $0x78] sm:$0xff]
        %v5798 = vld [vmem:[#allocation26 + $0x80] sm:$0xff]
        %v5799 = vld [vmem:[#allocation26 + $0x88] sm:$0xf]
        %v5800 = vld [vmem:[#allocation26 + $0x8c] sm:$0xff]
        %v5801 = vld [vmem:[#allocation26 + $0x94] sm:$0xff]
        %v5802 = vld [vmem:[#allocation26 + $0x9c] sm:$0xff]
        %v5803 = vld [vmem:[#allocation26 + $0xa4] sm:$0xf]
        %v5804 = vld [vmem:[#allocation26 + $0xa8] sm:$0xff]
        %v5805 = vld [vmem:[#allocation26 + $0xb0] sm:$0xff]
        %v5806 = vld [vmem:[#allocation26 + $0xb8] sm:$0xff]
        %v5807 = vld [vmem:[#allocation26 + $0xc0] sm:$0xf]
        %v5808 = vld [vmem:[#allocation26 + $0xc4] sm:$0xff]
        %v5809 = vld [vmem:[#allocation26 + $0xcc] sm:$0xff]
        %v5810 = vld [vmem:[#allocation26 + $0xd4] sm:$0xff]
        %v5811 = vld [vmem:[#allocation26 + $0xdc] sm:$0xf]
        %v5812 = vld [vmem:[#allocation26 + $0xe0] sm:$0xff]
        %v5813 = vld [vmem:[#allocation26 + $0xe8] sm:$0xff]
        %v5814 = vld [vmem:[#allocation26 + $0xf0] sm:$0xff]
        %v5815 = vld [vmem:[#allocation26 + $0xf8] sm:$0xf]
        %v5816 = vld [vmem:[#allocation26 + $0xfc] sm:$0xff]
        %v5817 = vld [vmem:[#allocation26 + $0x104] sm:$0xff]
        %v5818 = vld [vmem:[#allocation26 + $0x10c] sm:$0xff]
        %v5819 = vld [vmem:[#allocation26 + $0x114] sm:$0xf]
        %v5820 = vld [vmem:[#allocation26 + $0x118] sm:$0xff]
        %v5821 = vld [vmem:[#allocation26 + $0x120] sm:$0xff]
        %v5822 = vld [vmem:[#allocation26 + $0x128] sm:$0xff]
        %v5823 = vld [vmem:[#allocation26 + $0x130] sm:$0xf]
        %v5824 = vld [vmem:[#allocation26 + $0x134] sm:$0xff]
        %v5825 = vld [vmem:[#allocation26 + $0x13c] sm:$0xff]
        %v5826 = vld [vmem:[#allocation26 + $0x144] sm:$0xff]
        %v5827 = vld [vmem:[#allocation26 + $0x14c] sm:$0xf]
        %v5828 = vld [vmem:[#allocation26 + $0x150] sm:$0xff]
        %v5829 = vld [vmem:[#allocation26 + $0x158] sm:$0xff]
        %v5830 = vld [vmem:[#allocation26 + $0x160] sm:$0xff]
        %v5831 = vld [vmem:[#allocation26 + $0x168] sm:$0xf]
        %v5832 = vld [vmem:[#allocation26 + $0x16c] sm:$0xff]
        %v5833 = vld [vmem:[#allocation26 + $0x174] sm:$0xff]
        %v5834 = vld [vmem:[#allocation26 + $0x17c] sm:$0xff]
        %v5835 = vld [vmem:[#allocation26 + $0x184] sm:$0xf]
        %v5836 = vld [vmem:[#allocation26 + $0x188] sm:$0xff]
        %v5837 = vld [vmem:[#allocation26 + $0x190] sm:$0xff]
        %v5838 = vld [vmem:[#allocation26 + $0x198] sm:$0xff]
        %v5839 = vld [vmem:[#allocation26 + $0x1a0] sm:$0xf]
        %v5840 = vld [vmem:[#allocation26 + $0x1a4] sm:$0xff]
        %v5841 = vld [vmem:[#allocation26 + $0x1ac] sm:$0xff]
        %v5842 = vld [vmem:[#allocation26 + $0x1b4] sm:$0xff]
        %v5843 = vld [vmem:[#allocation26 + $0x1bc] sm:$0xf]
        %v5844 = vld [vmem:[#allocation26 + $0x1c0] sm:$0xff]
        %v5845 = vld [vmem:[#allocation26 + $0x1c8] sm:$0xff]
        %v5846 = vld [vmem:[#allocation26 + $0x1d0] sm:$0xff]
        %v5847 = vld [vmem:[#allocation26 + $0x1d8] sm:$0xf]
        %v5848 = vld [vmem:[#allocation26 + $0x1dc] sm:$0xff]
        %v5849 = vld [vmem:[#allocation26 + $0x1e4] sm:$0xff]
        %v5850 = vld [vmem:[#allocation26 + $0x1ec] sm:$0xff]
        %v5851 = vld [vmem:[#allocation26 + $0x1f4] sm:$0xf]
        %v5852 = vld [vmem:[#allocation26 + $0x1f8] sm:$0xff]
        %v5853 = vld [vmem:[#allocation26 + $0x200] sm:$0xff]
        %v5854 = vld [vmem:[#allocation26 + $0x208] sm:$0xff]
        %v5855 = vld [vmem:[#allocation26 + $0x210] sm:$0xf]
        %v5856 = vld [vmem:[#allocation26 + $0x214] sm:$0xff]
        %v5857 = vld [vmem:[#allocation26 + $0x21c] sm:$0xff]
        %v5858 = vld [vmem:[#allocation26 + $0x224] sm:$0xff]
        %v5859 = vld [vmem:[#allocation26 + $0x22c] sm:$0xf]
        %v5860 = vld [vmem:[#allocation26 + $0x230] sm:$0xff]
        %v5861 = vld [vmem:[#allocation26 + $0x238] sm:$0xff]
        %v5862 = vld [vmem:[#allocation26 + $0x240] sm:$0xff]
        %v5863 = vld [vmem:[#allocation26 + $0x248] sm:$0xf]
        %v5864 = vld [vmem:[#allocation26 + $0x24c] sm:$0xff]
        %v5865 = vld [vmem:[#allocation26 + $0x254] sm:$0xff]
        %v5866 = vld [vmem:[#allocation26 + $0x25c] sm:$0xff]
        %v5867 = vld [vmem:[#allocation26 + $0x264] sm:$0xf]
        %v5868 = vld [vmem:[#allocation26 + $0x268] sm:$0xff]
        %v5869 = vld [vmem:[#allocation26 + $0x270] sm:$0xff]
        %v5870 = vld [vmem:[#allocation26 + $0x278] sm:$0xff]
        %v5871 = vld [vmem:[#allocation26 + $0x280] sm:$0xf]
        %v5872 = vld [vmem:[#allocation26 + $0x284] sm:$0xff]
        %v5873 = vld [vmem:[#allocation26 + $0x28c] sm:$0xff]
        %v5874 = vld [vmem:[#allocation26 + $0x294] sm:$0xff]
        %v5875 = vld [vmem:[#allocation26 + $0x29c] sm:$0xf]
        %v5876 = vld [vmem:[#allocation26 + $0x2a0] sm:$0xff]
        %v5877 = vld [vmem:[#allocation26 + $0x2a8] sm:$0xff]
        %v5878 = vld [vmem:[#allocation26 + $0x2b0] sm:$0xff]
        %v5879 = vld [vmem:[#allocation26 + $0x2b8] sm:$0xf]
        %v5880 = vld [vmem:[#allocation26 + $0x2bc] sm:$0xff]
        %v5881 = vld [vmem:[#allocation26 + $0x2c4] sm:$0xff]
        %v5882 = vld [vmem:[#allocation26 + $0x2cc] sm:$0xff]
        %v5883 = vld [vmem:[#allocation26 + $0x2d4] sm:$0xf]
        %v5884 = vld [vmem:[#allocation26 + $0x2d8] sm:$0xff]
        %v5885 = vld [vmem:[#allocation26 + $0x2e0] sm:$0xff]
        %v5886 = vld [vmem:[#allocation26 + $0x2e8] sm:$0xff]
        %v5887 = vld [vmem:[#allocation26 + $0x2f0] sm:$0xf]
        %v5888 = vld [vmem:[#allocation26 + $0x2f4] sm:$0xff]
        %v5889 = vld [vmem:[#allocation26 + $0x2fc] sm:$0xff]
        %v5890 = vld [vmem:[#allocation26 + $0x304] sm:$0xff]
        %v5891 = vld [vmem:[#allocation26 + $0x30c] sm:$0xf]
        %v5892 = vld [vmem:[#allocation26 + $0x310] sm:$0xff]
        %v5893 = vld [vmem:[#allocation26 + $0x318] sm:$0xff]
        %v5894 = vld [vmem:[#allocation26 + $0x320] sm:$0xff]
        %v5895 = vld [vmem:[#allocation26 + $0x328] sm:$0xf]
        %v5896 = vld [vmem:[#allocation26 + $0x32c] sm:$0xff]
        %v5897 = vld [vmem:[#allocation26 + $0x334] sm:$0xff]
        %v5898 = vld [vmem:[#allocation26 + $0x33c] sm:$0xff]
        %v5899 = vld [vmem:[#allocation26 + $0x344] sm:$0xf]
        %v5900 = vld [vmem:[#allocation26 + $0x348] sm:$0xff]
        %v5901 = vld [vmem:[#allocation26 + $0x350] sm:$0xff]
        %v5902 = vld [vmem:[#allocation26 + $0x358] sm:$0xff]
        %v5903 = vld [vmem:[#allocation26 + $0x360] sm:$0xf]
        %v5904 = vld [vmem:[#allocation26 + $0x364] sm:$0xff]
        %v5905 = vld [vmem:[#allocation26 + $0x36c] sm:$0xff]
        %v5906 = vld [vmem:[#allocation26 + $0x374] sm:$0xff]
        %v5907 = vld [vmem:[#allocation26 + $0x37c] sm:$0xf]
        %v5908 = vld [vmem:[#allocation26 + $0x380] sm:$0xff]
        %v5909 = vld [vmem:[#allocation26 + $0x388] sm:$0xff]
        %v5910 = vld [vmem:[#allocation26 + $0x390] sm:$0xff]
        %v5911 = vld [vmem:[#allocation26 + $0x398] sm:$0xf]
        %v5912 = vld [vmem:[#allocation26 + $0x39c] sm:$0xff]
        %v5913 = vld [vmem:[#allocation26 + $0x3a4] sm:$0xff]
        %v5914 = vld [vmem:[#allocation26 + $0x3ac] sm:$0xff]
        %v5915 = vld [vmem:[#allocation26 + $0x3b4] sm:$0xf]
        %v5916 = vld [vmem:[#allocation26 + $0x3b8] sm:$0xff]
        %v5917 = vld [vmem:[#allocation26 + $0x3c0] sm:$0xff]
        %v5918 = vld [vmem:[#allocation26 + $0x3c8] sm:$0xff]
        %v5919 = vld [vmem:[#allocation26 + $0x3d0] sm:$0xf]
        %v5920 = vld [vmem:[#allocation26 + $0x3d4] sm:$0xff]
        %v5921 = vld [vmem:[#allocation26 + $0x3dc] sm:$0xff]
        %v5922 = vld [vmem:[#allocation26 + $0x3e4] sm:$0xff]
        %v5923 = vld [vmem:[#allocation26 + $0x3ec] sm:$0xf]
        %v5924 = vld [vmem:[#allocation26 + $0x3f0] sm:$0xff]
        %v5925 = vld [vmem:[#allocation26 + $0x3f8] sm:$0xff]
        %v5926 = vld [vmem:[#allocation26 + $0x400] sm:$0xff]
        %v5927 = vld [vmem:[#allocation26 + $0x408] sm:$0xf]
        %v5928 = vld [vmem:[#allocation26 + $0x40c] sm:$0xff]
        %v5929 = vld [vmem:[#allocation26 + $0x414] sm:$0xff]
        %v5930 = vld [vmem:[#allocation26 + $0x41c] sm:$0xff]
        %v5931 = vld [vmem:[#allocation26 + $0x424] sm:$0xf]
        %v5932 = vld [vmem:[#allocation26 + $0x428] sm:$0xff]
        %v5933 = vld [vmem:[#allocation26 + $0x430] sm:$0xff]
        %v5934 = vld [vmem:[#allocation26 + $0x438] sm:$0xff]
        %v5935 = vld [vmem:[#allocation26 + $0x440] sm:$0xf]
        %v5936 = vld [vmem:[#allocation26 + $0x444] sm:$0xff]
        %v5937 = vld [vmem:[#allocation26 + $0x44c] sm:$0xff]
        %v5938 = vld [vmem:[#allocation26 + $0x454] sm:$0xff]
        %v5939 = vld [vmem:[#allocation26 + $0x45c] sm:$0xf]
        %v5940 = vld [vmem:[#allocation26 + $0x460] sm:$0xff]
        %v5941 = vld [vmem:[#allocation26 + $0x468] sm:$0xff]
        %v5942 = vld [vmem:[#allocation26 + $0x470] sm:$0xff]
        %v5943 = vld [vmem:[#allocation26 + $0x478] sm:$0xf]
        %v5944 = vld [vmem:[#allocation26 + $0x47c] sm:$0xff]
        %v5945 = vld [vmem:[#allocation26 + $0x484] sm:$0xff]
        %v5946 = vld [vmem:[#allocation26 + $0x48c] sm:$0xff]
        %v5947 = vld [vmem:[#allocation26 + $0x494] sm:$0xf]
        %v5948 = vld [vmem:[#allocation26 + $0x498] sm:$0xff]
        %v5949 = vld [vmem:[#allocation26 + $0x4a0] sm:$0xff]
        %v5950 = vld [vmem:[#allocation26 + $0x4a8] sm:$0xff]
        %v5951 = vld [vmem:[#allocation26 + $0x4b0] sm:$0xf]
        %v5952 = vld [vmem:[#allocation26 + $0x4b4] sm:$0xff]
        %v5953 = vld [vmem:[#allocation26 + $0x4bc] sm:$0xff]
        %v5954 = vld [vmem:[#allocation26 + $0x4c4] sm:$0xff]
        %v5955 = vld [vmem:[#allocation26 + $0x4cc] sm:$0xf]
        %v5956 = vld [vmem:[#allocation26 + $0x4d0] sm:$0xff]
        %v5957 = vld [vmem:[#allocation26 + $0x4d8] sm:$0xff]
        %v5958 = vld [vmem:[#allocation26 + $0x4e0] sm:$0xff]
        %v5959 = vld [vmem:[#allocation26 + $0x4e8] sm:$0xf]
        %v5960 = vld [vmem:[#allocation26 + $0x4ec] sm:$0xff]
        %v5961 = vld [vmem:[#allocation26 + $0x4f4] sm:$0xff]
        %v5962 = vld [vmem:[#allocation26 + $0x4fc] sm:$0xff]
        %v5963 = vld [vmem:[#allocation26 + $0x504] sm:$0xf]
        %v5964 = vld [vmem:[#allocation26 + $0x508] sm:$0xff]
        %v5965 = vld [vmem:[#allocation26 + $0x510] sm:$0xff]
        %v5966 = vld [vmem:[#allocation26 + $0x518] sm:$0xff]
        %v5967 = vld [vmem:[#allocation26 + $0x520] sm:$0xf]
        %v5968 = vld [vmem:[#allocation26 + $0x524] sm:$0xff]
        %v5969 = vld [vmem:[#allocation26 + $0x52c] sm:$0xff]
        %v5970 = vld [vmem:[#allocation26 + $0x534] sm:$0xff]
        %v5971 = vld [vmem:[#allocation26 + $0x53c] sm:$0xf]
        %v6164 = vunpack.c.l.b16 %v5780
        %v6165 = vunpack.c.h.b16 %v5780
        %v6166 = vunpack.c.l.b16 %v5781
        %v6167 = vunpack.c.h.b16 %v5781
        %v6168 = vunpack.c.l.b16 %v5782
        %v6169 = vunpack.c.h.b16 %v5782
        %v6170 = vunpack.c.l.b16 %v5783
        %v6171 = vunpack.c.l.b16 %v5784
        %v6172 = vunpack.c.h.b16 %v5784
        %v6173 = vunpack.c.l.b16 %v5785
        %v6174 = vunpack.c.h.b16 %v5785
        %v6175 = vunpack.c.l.b16 %v5786
        %v6176 = vunpack.c.h.b16 %v5786
        %v6177 = vunpack.c.l.b16 %v5787
        %v6178 = vunpack.c.l.b16 %v5788
        %v6179 = vunpack.c.h.b16 %v5788
        %v6180 = vunpack.c.l.b16 %v5789
        %v6181 = vunpack.c.h.b16 %v5789
        %v6182 = vunpack.c.l.b16 %v5790
        %v6183 = vunpack.c.h.b16 %v5790
        %v6184 = vunpack.c.l.b16 %v5791
        %v6185 = vunpack.c.l.b16 %v5792
        %v6186 = vunpack.c.h.b16 %v5792
        %v6187 = vunpack.c.l.b16 %v5793
        %v6188 = vunpack.c.h.b16 %v5793
        %v6189 = vunpack.c.l.b16 %v5794
        %v6190 = vunpack.c.h.b16 %v5794
        %v6191 = vunpack.c.l.b16 %v5795
        %v6192 = vunpack.c.l.b16 %v5796
        %v6193 = vunpack.c.h.b16 %v5796
        %v6194 = vunpack.c.l.b16 %v5797
        %v6195 = vunpack.c.h.b16 %v5797
        %v6196 = vunpack.c.l.b16 %v5798
        %v6197 = vunpack.c.h.b16 %v5798
        %v6198 = vunpack.c.l.b16 %v5799
        %v6199 = vunpack.c.l.b16 %v5800
        %v6200 = vunpack.c.h.b16 %v5800
        %v6201 = vunpack.c.l.b16 %v5801
        %v6202 = vunpack.c.h.b16 %v5801
        %v6203 = vunpack.c.l.b16 %v5802
        %v6204 = vunpack.c.h.b16 %v5802
        %v6205 = vunpack.c.l.b16 %v5803
        %v6206 = vunpack.c.l.b16 %v5804
        %v6207 = vunpack.c.h.b16 %v5804
        %v6208 = vunpack.c.l.b16 %v5805
        %v6209 = vunpack.c.h.b16 %v5805
        %v6210 = vunpack.c.l.b16 %v5806
        %v6211 = vunpack.c.h.b16 %v5806
        %v6212 = vunpack.c.l.b16 %v5807
        %v6213 = vunpack.c.l.b16 %v5808
        %v6214 = vunpack.c.h.b16 %v5808
        %v6215 = vunpack.c.l.b16 %v5809
        %v6216 = vunpack.c.h.b16 %v5809
        %v6217 = vunpack.c.l.b16 %v5810
        %v6218 = vunpack.c.h.b16 %v5810
        %v6219 = vunpack.c.l.b16 %v5811
        %v6220 = vunpack.c.l.b16 %v5812
        %v6221 = vunpack.c.h.b16 %v5812
        %v6222 = vunpack.c.l.b16 %v5813
        %v6223 = vunpack.c.h.b16 %v5813
        %v6224 = vunpack.c.l.b16 %v5814
        %v6225 = vunpack.c.h.b16 %v5814
        %v6226 = vunpack.c.l.b16 %v5815
        %v6227 = vunpack.c.l.b16 %v5816
        %v6228 = vunpack.c.h.b16 %v5816
        %v6229 = vunpack.c.l.b16 %v5817
        %v6230 = vunpack.c.h.b16 %v5817
        %v6231 = vunpack.c.l.b16 %v5818
        %v6232 = vunpack.c.h.b16 %v5818
        %v6233 = vunpack.c.l.b16 %v5819
        %v6234 = vunpack.c.l.b16 %v5820
        %v6235 = vunpack.c.h.b16 %v5820
        %v6236 = vunpack.c.l.b16 %v5821
        %v6237 = vunpack.c.h.b16 %v5821
        %v6238 = vunpack.c.l.b16 %v5822
        %v6239 = vunpack.c.h.b16 %v5822
        %v6240 = vunpack.c.l.b16 %v5823
        %v6241 = vunpack.c.l.b16 %v5824
        %v6242 = vunpack.c.h.b16 %v5824
        %v6243 = vunpack.c.l.b16 %v5825
        %v6244 = vunpack.c.h.b16 %v5825
        %v6245 = vunpack.c.l.b16 %v5826
        %v6246 = vunpack.c.h.b16 %v5826
        %v6247 = vunpack.c.l.b16 %v5827
        %v6248 = vunpack.c.l.b16 %v5828
        %v6249 = vunpack.c.h.b16 %v5828
        %v6250 = vunpack.c.l.b16 %v5829
        %v6251 = vunpack.c.h.b16 %v5829
        %v6252 = vunpack.c.l.b16 %v5830
        %v6253 = vunpack.c.h.b16 %v5830
        %v6254 = vunpack.c.l.b16 %v5831
        %v6255 = vunpack.c.l.b16 %v5832
        %v6256 = vunpack.c.h.b16 %v5832
        %v6257 = vunpack.c.l.b16 %v5833
        %v6258 = vunpack.c.h.b16 %v5833
        %v6259 = vunpack.c.l.b16 %v5834
        %v6260 = vunpack.c.h.b16 %v5834
        %v6261 = vunpack.c.l.b16 %v5835
        %v6262 = vunpack.c.l.b16 %v5836
        %v6263 = vunpack.c.h.b16 %v5836
        %v6264 = vunpack.c.l.b16 %v5837
        %v6265 = vunpack.c.h.b16 %v5837
        %v6266 = vunpack.c.l.b16 %v5838
        %v6267 = vunpack.c.h.b16 %v5838
        %v6268 = vunpack.c.l.b16 %v5839
        %v6269 = vunpack.c.l.b16 %v5840
        %v6270 = vunpack.c.h.b16 %v5840
        %v6271 = vunpack.c.l.b16 %v5841
        %v6272 = vunpack.c.h.b16 %v5841
        %v6273 = vunpack.c.l.b16 %v5842
        %v6274 = vunpack.c.h.b16 %v5842
        %v6275 = vunpack.c.l.b16 %v5843
        %v6276 = vunpack.c.l.b16 %v5844
        %v6277 = vunpack.c.h.b16 %v5844
        %v6278 = vunpack.c.l.b16 %v5845
        %v6279 = vunpack.c.h.b16 %v5845
        %v6280 = vunpack.c.l.b16 %v5846
        %v6281 = vunpack.c.h.b16 %v5846
        %v6282 = vunpack.c.l.b16 %v5847
        %v6283 = vunpack.c.l.b16 %v5848
        %v6284 = vunpack.c.h.b16 %v5848
        %v6285 = vunpack.c.l.b16 %v5849
        %v6286 = vunpack.c.h.b16 %v5849
        %v6287 = vunpack.c.l.b16 %v5850
        %v6288 = vunpack.c.h.b16 %v5850
        %v6289 = vunpack.c.l.b16 %v5851
        %v6290 = vunpack.c.l.b16 %v5852
        %v6291 = vunpack.c.h.b16 %v5852
        %v6292 = vunpack.c.l.b16 %v5853
        %v6293 = vunpack.c.h.b16 %v5853
        %v6294 = vunpack.c.l.b16 %v5854
        %v6295 = vunpack.c.h.b16 %v5854
        %v6296 = vunpack.c.l.b16 %v5855
        %v6297 = vunpack.c.l.b16 %v5856
        %v6298 = vunpack.c.h.b16 %v5856
        %v6299 = vunpack.c.l.b16 %v5857
        %v6300 = vunpack.c.h.b16 %v5857
        %v6301 = vunpack.c.l.b16 %v5858
        %v6302 = vunpack.c.h.b16 %v5858
        %v6303 = vunpack.c.l.b16 %v5859
        %v6304 = vunpack.c.l.b16 %v5860
        %v6305 = vunpack.c.h.b16 %v5860
        %v6306 = vunpack.c.l.b16 %v5861
        %v6307 = vunpack.c.h.b16 %v5861
        %v6308 = vunpack.c.l.b16 %v5862
        %v6309 = vunpack.c.h.b16 %v5862
        %v6310 = vunpack.c.l.b16 %v5863
        %v6311 = vunpack.c.l.b16 %v5864
        %v6312 = vunpack.c.h.b16 %v5864
        %v6313 = vunpack.c.l.b16 %v5865
        %v6314 = vunpack.c.h.b16 %v5865
        %v6315 = vunpack.c.l.b16 %v5866
        %v6316 = vunpack.c.h.b16 %v5866
        %v6317 = vunpack.c.l.b16 %v5867
        %v6318 = vunpack.c.l.b16 %v5868
        %v6319 = vunpack.c.h.b16 %v5868
        %v6320 = vunpack.c.l.b16 %v5869
        %v6321 = vunpack.c.h.b16 %v5869
        %v6322 = vunpack.c.l.b16 %v5870
        %v6323 = vunpack.c.h.b16 %v5870
        %v6324 = vunpack.c.l.b16 %v5871
        %v6325 = vunpack.c.l.b16 %v5872
        %v6326 = vunpack.c.h.b16 %v5872
        %v6327 = vunpack.c.l.b16 %v5873
        %v6328 = vunpack.c.h.b16 %v5873
        %v6329 = vunpack.c.l.b16 %v5874
        %v6330 = vunpack.c.h.b16 %v5874
        %v6331 = vunpack.c.l.b16 %v5875
        %v6332 = vunpack.c.l.b16 %v5876
        %v6333 = vunpack.c.h.b16 %v5876
        %v6334 = vunpack.c.l.b16 %v5877
        %v6335 = vunpack.c.h.b16 %v5877
        %v6336 = vunpack.c.l.b16 %v5878
        %v6337 = vunpack.c.h.b16 %v5878
        %v6338 = vunpack.c.l.b16 %v5879
        %v6339 = vunpack.c.l.b16 %v5880
        %v6340 = vunpack.c.h.b16 %v5880
        %v6341 = vunpack.c.l.b16 %v5881
        %v6342 = vunpack.c.h.b16 %v5881
        %v6343 = vunpack.c.l.b16 %v5882
        %v6344 = vunpack.c.h.b16 %v5882
        %v6345 = vunpack.c.l.b16 %v5883
        %v6346 = vunpack.c.l.b16 %v5884
        %v6347 = vunpack.c.h.b16 %v5884
        %v6348 = vunpack.c.l.b16 %v5885
        %v6349 = vunpack.c.h.b16 %v5885
        %v6350 = vunpack.c.l.b16 %v5886
        %v6351 = vunpack.c.h.b16 %v5886
        %v6352 = vunpack.c.l.b16 %v5887
        %v6353 = vunpack.c.l.b16 %v5888
        %v6354 = vunpack.c.h.b16 %v5888
        %v6355 = vunpack.c.l.b16 %v5889
        %v6356 = vunpack.c.h.b16 %v5889
        %v6357 = vunpack.c.l.b16 %v5890
        %v6358 = vunpack.c.h.b16 %v5890
        %v6359 = vunpack.c.l.b16 %v5891
        %v6360 = vunpack.c.l.b16 %v5892
        %v6361 = vunpack.c.h.b16 %v5892
        %v6362 = vunpack.c.l.b16 %v5893
        %v6363 = vunpack.c.h.b16 %v5893
        %v6364 = vunpack.c.l.b16 %v5894
        %v6365 = vunpack.c.h.b16 %v5894
        %v6366 = vunpack.c.l.b16 %v5895
        %v6367 = vunpack.c.l.b16 %v5896
        %v6368 = vunpack.c.h.b16 %v5896
        %v6369 = vunpack.c.l.b16 %v5897
        %v6370 = vunpack.c.h.b16 %v5897
        %v6371 = vunpack.c.l.b16 %v5898
        %v6372 = vunpack.c.h.b16 %v5898
        %v6373 = vunpack.c.l.b16 %v5899
        %v6374 = vunpack.c.l.b16 %v5900
        %v6375 = vunpack.c.h.b16 %v5900
        %v6376 = vunpack.c.l.b16 %v5901
        %v6377 = vunpack.c.h.b16 %v5901
        %v6378 = vunpack.c.l.b16 %v5902
        %v6379 = vunpack.c.h.b16 %v5902
        %v6380 = vunpack.c.l.b16 %v5903
        %v6381 = vunpack.c.l.b16 %v5904
        %v6382 = vunpack.c.h.b16 %v5904
        %v6383 = vunpack.c.l.b16 %v5905
        %v6384 = vunpack.c.h.b16 %v5905
        %v6385 = vunpack.c.l.b16 %v5906
        %v6386 = vunpack.c.h.b16 %v5906
        %v6387 = vunpack.c.l.b16 %v5907
        %v6388 = vunpack.c.l.b16 %v5908
        %v6389 = vunpack.c.h.b16 %v5908
        %v6390 = vunpack.c.l.b16 %v5909
        %v6391 = vunpack.c.h.b16 %v5909
        %v6392 = vunpack.c.l.b16 %v5910
        %v6393 = vunpack.c.h.b16 %v5910
        %v6394 = vunpack.c.l.b16 %v5911
        %v6395 = vunpack.c.l.b16 %v5912
        %v6396 = vunpack.c.h.b16 %v5912
        %v6397 = vunpack.c.l.b16 %v5913
        %v6398 = vunpack.c.h.b16 %v5913
        %v6399 = vunpack.c.l.b16 %v5914
        %v6400 = vunpack.c.h.b16 %v5914
        %v6401 = vunpack.c.l.b16 %v5915
        %v6402 = vunpack.c.l.b16 %v5916
        %v6403 = vunpack.c.h.b16 %v5916
        %v6404 = vunpack.c.l.b16 %v5917
        %v6405 = vunpack.c.h.b16 %v5917
        %v6406 = vunpack.c.l.b16 %v5918
        %v6407 = vunpack.c.h.b16 %v5918
        %v6408 = vunpack.c.l.b16 %v5919
        %v6409 = vunpack.c.l.b16 %v5920
        %v6410 = vunpack.c.h.b16 %v5920
        %v6411 = vunpack.c.l.b16 %v5921
        %v6412 = vunpack.c.h.b16 %v5921
        %v6413 = vunpack.c.l.b16 %v5922
        %v6414 = vunpack.c.h.b16 %v5922
        %v6415 = vunpack.c.l.b16 %v5923
        %v6416 = vunpack.c.l.b16 %v5924
        %v6417 = vunpack.c.h.b16 %v5924
        %v6418 = vunpack.c.l.b16 %v5925
        %v6419 = vunpack.c.h.b16 %v5925
        %v6420 = vunpack.c.l.b16 %v5926
        %v6421 = vunpack.c.h.b16 %v5926
        %v6422 = vunpack.c.l.b16 %v5927
        %v6423 = vunpack.c.l.b16 %v5928
        %v6424 = vunpack.c.h.b16 %v5928
        %v6425 = vunpack.c.l.b16 %v5929
        %v6426 = vunpack.c.h.b16 %v5929
        %v6427 = vunpack.c.l.b16 %v5930
        %v6428 = vunpack.c.h.b16 %v5930
        %v6429 = vunpack.c.l.b16 %v5931
        %v6430 = vunpack.c.l.b16 %v5932
        %v6431 = vunpack.c.h.b16 %v5932
        %v6432 = vunpack.c.l.b16 %v5933
        %v6433 = vunpack.c.h.b16 %v5933
        %v6434 = vunpack.c.l.b16 %v5934
        %v6435 = vunpack.c.h.b16 %v5934
        %v6436 = vunpack.c.l.b16 %v5935
        %v6437 = vunpack.c.l.b16 %v5936
        %v6438 = vunpack.c.h.b16 %v5936
        %v6439 = vunpack.c.l.b16 %v5937
        %v6440 = vunpack.c.h.b16 %v5937
        %v6441 = vunpack.c.l.b16 %v5938
        %v6442 = vunpack.c.h.b16 %v5938
        %v6443 = vunpack.c.l.b16 %v5939
        %v6444 = vunpack.c.l.b16 %v5940
        %v6445 = vunpack.c.h.b16 %v5940
        %v6446 = vunpack.c.l.b16 %v5941
        %v6447 = vunpack.c.h.b16 %v5941
        %v6448 = vunpack.c.l.b16 %v5942
        %v6449 = vunpack.c.h.b16 %v5942
        %v6450 = vunpack.c.l.b16 %v5943
        %v6451 = vunpack.c.l.b16 %v5944
        %v6452 = vunpack.c.h.b16 %v5944
        %v6453 = vunpack.c.l.b16 %v5945
        %v6454 = vunpack.c.h.b16 %v5945
        %v6455 = vunpack.c.l.b16 %v5946
        %v6456 = vunpack.c.h.b16 %v5946
        %v6457 = vunpack.c.l.b16 %v5947
        %v6458 = vunpack.c.l.b16 %v5948
        %v6459 = vunpack.c.h.b16 %v5948
        %v6460 = vunpack.c.l.b16 %v5949
        %v6461 = vunpack.c.h.b16 %v5949
        %v6462 = vunpack.c.l.b16 %v5950
        %v6463 = vunpack.c.h.b16 %v5950
        %v6464 = vunpack.c.l.b16 %v5951
        %v6465 = vunpack.c.l.b16 %v5952
        %v6466 = vunpack.c.h.b16 %v5952
        %v6467 = vunpack.c.l.b16 %v5953
        %v6468 = vunpack.c.h.b16 %v5953
        %v6469 = vunpack.c.l.b16 %v5954
        %v6470 = vunpack.c.h.b16 %v5954
        %v6471 = vunpack.c.l.b16 %v5955
        %v6472 = vunpack.c.l.b16 %v5956
        %v6473 = vunpack.c.h.b16 %v5956
        %v6474 = vunpack.c.l.b16 %v5957
        %v6475 = vunpack.c.h.b16 %v5957
        %v6476 = vunpack.c.l.b16 %v5958
        %v6477 = vunpack.c.h.b16 %v5958
        %v6478 = vunpack.c.l.b16 %v5959
        %v6479 = vunpack.c.l.b16 %v5960
        %v6480 = vunpack.c.h.b16 %v5960
        %v6481 = vunpack.c.l.b16 %v5961
        %v6482 = vunpack.c.h.b16 %v5961
        %v6483 = vunpack.c.l.b16 %v5962
        %v6484 = vunpack.c.h.b16 %v5962
        %v6485 = vunpack.c.l.b16 %v5963
        %v6486 = vunpack.c.l.b16 %v5964
        %v6487 = vunpack.c.h.b16 %v5964
        %v6488 = vunpack.c.l.b16 %v5965
        %v6489 = vunpack.c.h.b16 %v5965
        %v6490 = vunpack.c.l.b16 %v5966
        %v6491 = vunpack.c.h.b16 %v5966
        %v6492 = vunpack.c.l.b16 %v5967
        %v6493 = vunpack.c.l.b16 %v5968
        %v6494 = vunpack.c.h.b16 %v5968
        %v6495 = vunpack.c.l.b16 %v5969
        %v6496 = vunpack.c.h.b16 %v5969
        %v6497 = vunpack.c.l.b16 %v5970
        %v6498 = vunpack.c.h.b16 %v5970
        %v6499 = vunpack.c.l.b16 %v5971
        %v6500 = vpack.c.b16 %v6171, %v6164
        %v6501 = vpack.c.b16 %v6172, %v6165
        %v6502 = vpack.c.b16 %v6173, %v6166
        %v6503 = vpack.c.b16 %v6174, %v6167
        %v6504 = vpack.c.b16 %v6175, %v6168
        %v6505 = vpack.c.b16 %v6176, %v6169
        %v6506 = vpack.c.b16 %v6177, %v6170
        %v6507 = vpack.c.b16 %v6185, %v6178
        %v6508 = vpack.c.b16 %v6186, %v6179
        %v6509 = vpack.c.b16 %v6187, %v6180
        %v6510 = vpack.c.b16 %v6188, %v6181
        %v6511 = vpack.c.b16 %v6189, %v6182
        %v6512 = vpack.c.b16 %v6190, %v6183
        %v6513 = vpack.c.b16 %v6191, %v6184
        %v6514 = vpack.c.b16 %v6199, %v6192
        %v6515 = vpack.c.b16 %v6200, %v6193
        %v6516 = vpack.c.b16 %v6201, %v6194
        %v6517 = vpack.c.b16 %v6202, %v6195
        %v6518 = vpack.c.b16 %v6203, %v6196
        %v6519 = vpack.c.b16 %v6204, %v6197
        %v6520 = vpack.c.b16 %v6205, %v6198
        %v6521 = vpack.c.b16 %v6213, %v6206
        %v6522 = vpack.c.b16 %v6214, %v6207
        %v6523 = vpack.c.b16 %v6215, %v6208
        %v6524 = vpack.c.b16 %v6216, %v6209
        %v6525 = vpack.c.b16 %v6217, %v6210
        %v6526 = vpack.c.b16 %v6218, %v6211
        %v6527 = vpack.c.b16 %v6219, %v6212
        %v6528 = vpack.c.b16 %v6227, %v6220
        %v6529 = vpack.c.b16 %v6228, %v6221
        %v6530 = vpack.c.b16 %v6229, %v6222
        %v6531 = vpack.c.b16 %v6230, %v6223
        %v6532 = vpack.c.b16 %v6231, %v6224
        %v6533 = vpack.c.b16 %v6232, %v6225
        %v6534 = vpack.c.b16 %v6233, %v6226
        %v6535 = vpack.c.b16 %v6241, %v6234
        %v6536 = vpack.c.b16 %v6242, %v6235
        %v6537 = vpack.c.b16 %v6243, %v6236
        %v6538 = vpack.c.b16 %v6244, %v6237
        %v6539 = vpack.c.b16 %v6245, %v6238
        %v6540 = vpack.c.b16 %v6246, %v6239
        %v6541 = vpack.c.b16 %v6247, %v6240
        %v6542 = vpack.c.b16 %v6255, %v6248
        %v6543 = vpack.c.b16 %v6256, %v6249
        %v6544 = vpack.c.b16 %v6257, %v6250
        %v6545 = vpack.c.b16 %v6258, %v6251
        %v6546 = vpack.c.b16 %v6259, %v6252
        %v6547 = vpack.c.b16 %v6260, %v6253
        %v6548 = vpack.c.b16 %v6261, %v6254
        %v6549 = vpack.c.b16 %v6269, %v6262
        %v6550 = vpack.c.b16 %v6270, %v6263
        %v6551 = vpack.c.b16 %v6271, %v6264
        %v6552 = vpack.c.b16 %v6272, %v6265
        %v6553 = vpack.c.b16 %v6273, %v6266
        %v6554 = vpack.c.b16 %v6274, %v6267
        %v6555 = vpack.c.b16 %v6275, %v6268
        %v6556 = vpack.c.b16 %v6283, %v6276
        %v6557 = vpack.c.b16 %v6284, %v6277
        %v6558 = vpack.c.b16 %v6285, %v6278
        %v6559 = vpack.c.b16 %v6286, %v6279
        %v6560 = vpack.c.b16 %v6287, %v6280
        %v6561 = vpack.c.b16 %v6288, %v6281
        %v6562 = vpack.c.b16 %v6289, %v6282
        %v6563 = vpack.c.b16 %v6297, %v6290
        %v6564 = vpack.c.b16 %v6298, %v6291
        %v6565 = vpack.c.b16 %v6299, %v6292
        %v6566 = vpack.c.b16 %v6300, %v6293
        %v6567 = vpack.c.b16 %v6301, %v6294
        %v6568 = vpack.c.b16 %v6302, %v6295
        %v6569 = vpack.c.b16 %v6303, %v6296
        %v6570 = vpack.c.b16 %v6311, %v6304
        %v6571 = vpack.c.b16 %v6312, %v6305
        %v6572 = vpack.c.b16 %v6313, %v6306
        %v6573 = vpack.c.b16 %v6314, %v6307
        %v6574 = vpack.c.b16 %v6315, %v6308
        %v6575 = vpack.c.b16 %v6316, %v6309
        %v6576 = vpack.c.b16 %v6317, %v6310
        %v6577 = vpack.c.b16 %v6325, %v6318
        %v6578 = vpack.c.b16 %v6326, %v6319
        %v6579 = vpack.c.b16 %v6327, %v6320
        %v6580 = vpack.c.b16 %v6328, %v6321
        %v6581 = vpack.c.b16 %v6329, %v6322
        %v6582 = vpack.c.b16 %v6330, %v6323
        %v6583 = vpack.c.b16 %v6331, %v6324
        %v6584 = vpack.c.b16 %v6339, %v6332
        %v6585 = vpack.c.b16 %v6340, %v6333
        %v6586 = vpack.c.b16 %v6341, %v6334
        %v6587 = vpack.c.b16 %v6342, %v6335
        %v6588 = vpack.c.b16 %v6343, %v6336
        %v6589 = vpack.c.b16 %v6344, %v6337
        %v6590 = vpack.c.b16 %v6345, %v6338
        %v6591 = vpack.c.b16 %v6353, %v6346
        %v6592 = vpack.c.b16 %v6354, %v6347
        %v6593 = vpack.c.b16 %v6355, %v6348
        %v6594 = vpack.c.b16 %v6356, %v6349
        %v6595 = vpack.c.b16 %v6357, %v6350
        %v6596 = vpack.c.b16 %v6358, %v6351
        %v6597 = vpack.c.b16 %v6359, %v6352
        %v6598 = vpack.c.b16 %v6367, %v6360
        %v6599 = vpack.c.b16 %v6368, %v6361
        %v6600 = vpack.c.b16 %v6369, %v6362
        %v6601 = vpack.c.b16 %v6370, %v6363
        %v6602 = vpack.c.b16 %v6371, %v6364
        %v6603 = vpack.c.b16 %v6372, %v6365
        %v6604 = vpack.c.b16 %v6373, %v6366
        %v6605 = vpack.c.b16 %v6381, %v6374
        %v6606 = vpack.c.b16 %v6382, %v6375
        %v6607 = vpack.c.b16 %v6383, %v6376
        %v6608 = vpack.c.b16 %v6384, %v6377
        %v6609 = vpack.c.b16 %v6385, %v6378
        %v6610 = vpack.c.b16 %v6386, %v6379
        %v6611 = vpack.c.b16 %v6387, %v6380
        %v6612 = vpack.c.b16 %v6395, %v6388
        %v6613 = vpack.c.b16 %v6396, %v6389
        %v6614 = vpack.c.b16 %v6397, %v6390
        %v6615 = vpack.c.b16 %v6398, %v6391
        %v6616 = vpack.c.b16 %v6399, %v6392
        %v6617 = vpack.c.b16 %v6400, %v6393
        %v6618 = vpack.c.b16 %v6401, %v6394
        %v6619 = vpack.c.b16 %v6409, %v6402
        %v6620 = vpack.c.b16 %v6410, %v6403
        %v6621 = vpack.c.b16 %v6411, %v6404
        %v6622 = vpack.c.b16 %v6412, %v6405
        %v6623 = vpack.c.b16 %v6413, %v6406
        %v6624 = vpack.c.b16 %v6414, %v6407
        %v6625 = vpack.c.b16 %v6415, %v6408
        %v6626 = vpack.c.b16 %v6423, %v6416
        %v6627 = vpack.c.b16 %v6424, %v6417
        %v6628 = vpack.c.b16 %v6425, %v6418
        %v6629 = vpack.c.b16 %v6426, %v6419
        %v6630 = vpack.c.b16 %v6427, %v6420
        %v6631 = vpack.c.b16 %v6428, %v6421
        %v6632 = vpack.c.b16 %v6429, %v6422
        %v6633 = vpack.c.b16 %v6437, %v6430
        %v6634 = vpack.c.b16 %v6438, %v6431
        %v6635 = vpack.c.b16 %v6439, %v6432
        %v6636 = vpack.c.b16 %v6440, %v6433
        %v6637 = vpack.c.b16 %v6441, %v6434
        %v6638 = vpack.c.b16 %v6442, %v6435
        %v6639 = vpack.c.b16 %v6443, %v6436
        %v6640 = vpack.c.b16 %v6451, %v6444
        %v6641 = vpack.c.b16 %v6452, %v6445
        %v6642 = vpack.c.b16 %v6453, %v6446
        %v6643 = vpack.c.b16 %v6454, %v6447
        %v6644 = vpack.c.b16 %v6455, %v6448
        %v6645 = vpack.c.b16 %v6456, %v6449
        %v6646 = vpack.c.b16 %v6457, %v6450
        %v6647 = vpack.c.b16 %v6465, %v6458
        %v6648 = vpack.c.b16 %v6466, %v6459
        %v6649 = vpack.c.b16 %v6467, %v6460
        %v6650 = vpack.c.b16 %v6468, %v6461
        %v6651 = vpack.c.b16 %v6469, %v6462
        %v6652 = vpack.c.b16 %v6470, %v6463
        %v6653 = vpack.c.b16 %v6471, %v6464
        %v6654 = vpack.c.b16 %v6479, %v6472
        %v6655 = vpack.c.b16 %v6480, %v6473
        %v6656 = vpack.c.b16 %v6481, %v6474
        %v6657 = vpack.c.b16 %v6482, %v6475
        %v6658 = vpack.c.b16 %v6483, %v6476
        %v6659 = vpack.c.b16 %v6484, %v6477
        %v6660 = vpack.c.b16 %v6485, %v6478
        %v6661 = vpack.c.b16 %v6493, %v6486
        %v6662 = vpack.c.b16 %v6494, %v6487
        %v6663 = vpack.c.b16 %v6495, %v6488
        %v6664 = vpack.c.b16 %v6496, %v6489
        %v6665 = vpack.c.b16 %v6497, %v6490
        %v6666 = vpack.c.b16 %v6498, %v6491
        %v6667 = vpack.c.b16 %v6499, %v6492
        %6836 = vmatpush.bf16.msra.mxu0 %v6549
        %6837 = vmatpush.bf16.msra.mxu0 %v6542
        %6838 = vmatpush.bf16.msra.mxu0 %v6535
        %6839 = vmatpush.bf16.msra.mxu0 %v6528
        %6840 = vmatpush.bf16.msra.mxu0 %v6521
        %6841 = vmatpush.bf16.msra.mxu0 %v6514
        %6842 = vmatpush.bf16.msra.mxu0 %v6507
        %6843 = vmatpush.bf16.msra.mxu0 %v6500
        %6844 = vmatmul.bf16.gmra.mxu0 %v5778
        %v6845 = vpop.f32.mrf.mxu0
        %v6846 = vadd.f32 0.0, %v6845
        %v6847 = vpop.f32.mrf.mxu0
        %6848 = vdwg.mxu0
        %6849 = vmatpush.bf16.msra.mxu0 %v6605
        %6850 = vmatpush.bf16.msra.mxu0 %v6598
        %6851 = vmatpush.bf16.msra.mxu0 %v6591
        %6852 = vmatpush.bf16.msra.mxu0 %v6584
        %6853 = vmatpush.bf16.msra.mxu0 %v6577
        %6854 = vmatpush.bf16.msra.mxu0 %v6570
        %6855 = vmatpush.bf16.msra.mxu0 %v6563
        %6856 = vmatpush.bf16.msra.mxu0 %v6556
        %6857 = vmatmul.bf16.gmra.mxu0 %v5779
        %v6858 = vpop.f32.mrf.mxu0
        %v6859 = vadd.f32 %v6846, %v6858
        %v6860 = vpop.f32.mrf.mxu0
        %6861 = vdwg.mxu0
        %6862 = vmatpush.bf16.msra.mxu0 %v6661
        %6863 = vmatpush.bf16.msra.mxu0 %v6654
        %6864 = vmatpush.bf16.msra.mxu0 %v6647
        %6865 = vmatpush.bf16.msra.mxu0 %v6640
        %6866 = vmatpush.bf16.msra.mxu0 %v6633
        %6867 = vmatpush.bf16.msra.mxu0 %v6626
        %6868 = vmatpush.bf16.msra.mxu0 %v6619
        %6869 = vmatpush.bf16.msra.mxu0 %v6612
        %6870 = vmatmul.bf16.gmra.mxu0 %v5252
        %v6871 = vpop.f32.mrf.mxu0
        %v6872 = vadd.f32 %v6859, %v6871
        %v6873 = vpop.f32.mrf.mxu0
        %6874 = vdwg.mxu0
        %6875 = vmatpush.bf16.msra.mxu0 %v6550
        %6876 = vmatpush.bf16.msra.mxu0 %v6543
        %6877 = vmatpush.bf16.msra.mxu0 %v6536
        %6878 = vmatpush.bf16.msra.mxu0 %v6529
        %6879 = vmatpush.bf16.msra.mxu0 %v6522
        %6880 = vmatpush.bf16.msra.mxu0 %v6515
        %6881 = vmatpush.bf16.msra.mxu0 %v6508
        %6882 = vmatpush.bf16.msra.mxu0 %v6501
        %6883 = vmatmul.bf16.gmra.mxu0 %v5778
        %v6884 = vpop.f32.mrf.mxu0
        %v6885 = vadd.f32 0.0, %v6884
        %v6886 = vpop.f32.mrf.mxu0
        %6887 = vdwg.mxu0
        %6888 = vmatpush.bf16.msra.mxu0 %v6606
        %6889 = vmatpush.bf16.msra.mxu0 %v6599
        %6890 = vmatpush.bf16.msra.mxu0 %v6592
        %6891 = vmatpush.bf16.msra.mxu0 %v6585
        %6892 = vmatpush.bf16.msra.mxu0 %v6578
        %6893 = vmatpush.bf16.msra.mxu0 %v6571
        %6894 = vmatpush.bf16.msra.mxu0 %v6564
        %6895 = vmatpush.bf16.msra.mxu0 %v6557
        %6896 = vmatmul.bf16.gmra.mxu0 %v5779
        %v6897 = vpop.f32.mrf.mxu0
        %v6898 = vadd.f32 %v6885, %v6897
        %v6899 = vpop.f32.mrf.mxu0
        %6900 = vdwg.mxu0
        %6901 = vmatpush.bf16.msra.mxu0 %v6662
        %6902 = vmatpush.bf16.msra.mxu0 %v6655
        %6903 = vmatpush.bf16.msra.mxu0 %v6648
        %6904 = vmatpush.bf16.msra.mxu0 %v6641
        %6905 = vmatpush.bf16.msra.mxu0 %v6634
        %6906 = vmatpush.bf16.msra.mxu0 %v6627
        %6907 = vmatpush.bf16.msra.mxu0 %v6620
        %6908 = vmatpush.bf16.msra.mxu0 %v6613
        %6909 = vmatmul.bf16.gmra.mxu0 %v5252
        %v6910 = vpop.f32.mrf.mxu0
        %v6911 = vadd.f32 %v6898, %v6910
        %v6912 = vpop.f32.mrf.mxu0
        %6913 = vdwg.mxu0
        %6914 = vmatpush.bf16.msra.mxu0 %v6551
        %6915 = vmatpush.bf16.msra.mxu0 %v6544
        %6916 = vmatpush.bf16.msra.mxu0 %v6537
        %6917 = vmatpush.bf16.msra.mxu0 %v6530
        %6918 = vmatpush.bf16.msra.mxu0 %v6523
        %6919 = vmatpush.bf16.msra.mxu0 %v6516
        %6920 = vmatpush.bf16.msra.mxu0 %v6509
        %6921 = vmatpush.bf16.msra.mxu0 %v6502
        %6922 = vmatmul.bf16.gmra.mxu0 %v5778
        %v6923 = vpop.f32.mrf.mxu0
        %v6924 = vadd.f32 0.0, %v6923
        %v6925 = vpop.f32.mrf.mxu0
        %6926 = vdwg.mxu0
        %6927 = vmatpush.bf16.msra.mxu0 %v6607
        %6928 = vmatpush.bf16.msra.mxu0 %v6600
        %6929 = vmatpush.bf16.msra.mxu0 %v6593
        %6930 = vmatpush.bf16.msra.mxu0 %v6586
        %6931 = vmatpush.bf16.msra.mxu0 %v6579
        %6932 = vmatpush.bf16.msra.mxu0 %v6572
        %6933 = vmatpush.bf16.msra.mxu0 %v6565
        %6934 = vmatpush.bf16.msra.mxu0 %v6558
        %6935 = vmatmul.bf16.gmra.mxu0 %v5779
        %v6936 = vpop.f32.mrf.mxu0
        %v6937 = vadd.f32 %v6924, %v6936
        %v6938 = vpop.f32.mrf.mxu0
        %6939 = vdwg.mxu0
        %6940 = vmatpush.bf16.msra.mxu0 %v6663
        %6941 = vmatpush.bf16.msra.mxu0 %v6656
        %6942 = vmatpush.bf16.msra.mxu0 %v6649
        %6943 = vmatpush.bf16.msra.mxu0 %v6642
        %6944 = vmatpush.bf16.msra.mxu0 %v6635
        %6945 = vmatpush.bf16.msra.mxu0 %v6628
        %6946 = vmatpush.bf16.msra.mxu0 %v6621
        %6947 = vmatpush.bf16.msra.mxu0 %v6614
        %6948 = vmatmul.bf16.gmra.mxu0 %v5252
        %v6949 = vpop.f32.mrf.mxu0
        %v6950 = vadd.f32 %v6937, %v6949
        %v6951 = vpop.f32.mrf.mxu0
        %6952 = vdwg.mxu0
        %6953 = vmatpush.bf16.msra.mxu0 %v6552
        %6954 = vmatpush.bf16.msra.mxu0 %v6545
        %6955 = vmatpush.bf16.msra.mxu0 %v6538
        %6956 = vmatpush.bf16.msra.mxu0 %v6531
        %6957 = vmatpush.bf16.msra.mxu0 %v6524
        %6958 = vmatpush.bf16.msra.mxu0 %v6517
        %6959 = vmatpush.bf16.msra.mxu0 %v6510
        %6960 = vmatpush.bf16.msra.mxu0 %v6503
        %6961 = vmatmul.bf16.gmra.mxu0 %v5778
        %v6962 = vpop.f32.mrf.mxu0
        %v6963 = vadd.f32 0.0, %v6962
        %v6964 = vpop.f32.mrf.mxu0
        %6965 = vdwg.mxu0
        %6966 = vmatpush.bf16.msra.mxu0 %v6608
        %6967 = vmatpush.bf16.msra.mxu0 %v6601
        %6968 = vmatpush.bf16.msra.mxu0 %v6594
        %6969 = vmatpush.bf16.msra.mxu0 %v6587
        %6970 = vmatpush.bf16.msra.mxu0 %v6580
        %6971 = vmatpush.bf16.msra.mxu0 %v6573
        %6972 = vmatpush.bf16.msra.mxu0 %v6566
        %6973 = vmatpush.bf16.msra.mxu0 %v6559
        %6974 = vmatmul.bf16.gmra.mxu0 %v5779
        %v6975 = vpop.f32.mrf.mxu0
        %v6976 = vadd.f32 %v6963, %v6975
        %v6977 = vpop.f32.mrf.mxu0
        %6978 = vdwg.mxu0
        %6979 = vmatpush.bf16.msra.mxu0 %v6664
        %6980 = vmatpush.bf16.msra.mxu0 %v6657
        %6981 = vmatpush.bf16.msra.mxu0 %v6650
        %6982 = vmatpush.bf16.msra.mxu0 %v6643
        %6983 = vmatpush.bf16.msra.mxu0 %v6636
        %6984 = vmatpush.bf16.msra.mxu0 %v6629
        %6985 = vmatpush.bf16.msra.mxu0 %v6622
        %6986 = vmatpush.bf16.msra.mxu0 %v6615
        %6987 = vmatmul.bf16.gmra.mxu0 %v5252
        %v6988 = vpop.f32.mrf.mxu0
        %v6989 = vadd.f32 %v6976, %v6988
        %v6990 = vpop.f32.mrf.mxu0
        %6991 = vdwg.mxu0
        %6992 = vmatpush.bf16.msra.mxu0 %v6553
        %6993 = vmatpush.bf16.msra.mxu0 %v6546
        %6994 = vmatpush.bf16.msra.mxu0 %v6539
        %6995 = vmatpush.bf16.msra.mxu0 %v6532
        %6996 = vmatpush.bf16.msra.mxu0 %v6525
        %6997 = vmatpush.bf16.msra.mxu0 %v6518
        %6998 = vmatpush.bf16.msra.mxu0 %v6511
        %6999 = vmatpush.bf16.msra.mxu0 %v6504
        %7000 = vmatmul.bf16.gmra.mxu0 %v5778
        %v7001 = vpop.f32.mrf.mxu0
        %v7002 = vadd.f32 0.0, %v7001
        %v7003 = vpop.f32.mrf.mxu0
        %7004 = vdwg.mxu0
        %7005 = vmatpush.bf16.msra.mxu0 %v6609
        %7006 = vmatpush.bf16.msra.mxu0 %v6602
        %7007 = vmatpush.bf16.msra.mxu0 %v6595
        %7008 = vmatpush.bf16.msra.mxu0 %v6588
        %7009 = vmatpush.bf16.msra.mxu0 %v6581
        %7010 = vmatpush.bf16.msra.mxu0 %v6574
        %7011 = vmatpush.bf16.msra.mxu0 %v6567
        %7012 = vmatpush.bf16.msra.mxu0 %v6560
        %7013 = vmatmul.bf16.gmra.mxu0 %v5779
        %v7014 = vpop.f32.mrf.mxu0
        %v7015 = vadd.f32 %v7002, %v7014
        %v7016 = vpop.f32.mrf.mxu0
        %7017 = vdwg.mxu0
        %7018 = vmatpush.bf16.msra.mxu0 %v6665
        %7019 = vmatpush.bf16.msra.mxu0 %v6658
        %7020 = vmatpush.bf16.msra.mxu0 %v6651
        %7021 = vmatpush.bf16.msra.mxu0 %v6644
        %7022 = vmatpush.bf16.msra.mxu0 %v6637
        %7023 = vmatpush.bf16.msra.mxu0 %v6630
        %7024 = vmatpush.bf16.msra.mxu0 %v6623
        %7025 = vmatpush.bf16.msra.mxu0 %v6616
        %7026 = vmatmul.bf16.gmra.mxu0 %v5252
        %v7027 = vpop.f32.mrf.mxu0
        %v7028 = vadd.f32 %v7015, %v7027
        %v7029 = vpop.f32.mrf.mxu0
        %7030 = vdwg.mxu0
        %7031 = vmatpush.bf16.msra.mxu0 %v6554
        %7032 = vmatpush.bf16.msra.mxu0 %v6547
        %7033 = vmatpush.bf16.msra.mxu0 %v6540
        %7034 = vmatpush.bf16.msra.mxu0 %v6533
        %7035 = vmatpush.bf16.msra.mxu0 %v6526
        %7036 = vmatpush.bf16.msra.mxu0 %v6519
        %7037 = vmatpush.bf16.msra.mxu0 %v6512
        %7038 = vmatpush.bf16.msra.mxu0 %v6505
        %7039 = vmatmul.bf16.gmra.mxu0 %v5778
        %v7040 = vpop.f32.mrf.mxu0
        %v7041 = vadd.f32 0.0, %v7040
        %v7042 = vpop.f32.mrf.mxu0
        %7043 = vdwg.mxu0
        %7044 = vmatpush.bf16.msra.mxu0 %v6610
        %7045 = vmatpush.bf16.msra.mxu0 %v6603
        %7046 = vmatpush.bf16.msra.mxu0 %v6596
        %7047 = vmatpush.bf16.msra.mxu0 %v6589
        %7048 = vmatpush.bf16.msra.mxu0 %v6582
        %7049 = vmatpush.bf16.msra.mxu0 %v6575
        %7050 = vmatpush.bf16.msra.mxu0 %v6568
        %7051 = vmatpush.bf16.msra.mxu0 %v6561
        %7052 = vmatmul.bf16.gmra.mxu0 %v5779
        %v7053 = vpop.f32.mrf.mxu0
        %v7054 = vadd.f32 %v7041, %v7053
        %v7055 = vpop.f32.mrf.mxu0
        %7056 = vdwg.mxu0
        %7057 = vmatpush.bf16.msra.mxu0 %v6666
        %7058 = vmatpush.bf16.msra.mxu0 %v6659
        %7059 = vmatpush.bf16.msra.mxu0 %v6652
        %7060 = vmatpush.bf16.msra.mxu0 %v6645
        %7061 = vmatpush.bf16.msra.mxu0 %v6638
        %7062 = vmatpush.bf16.msra.mxu0 %v6631
        %7063 = vmatpush.bf16.msra.mxu0 %v6624
        %7064 = vmatpush.bf16.msra.mxu0 %v6617
        %7065 = vmatmul.bf16.gmra.mxu0 %v5252
        %v7066 = vpop.f32.mrf.mxu0
        %v7067 = vadd.f32 %v7054, %v7066
        %v7068 = vpop.f32.mrf.mxu0
        %7069 = vdwg.mxu0
        %7070 = vmatpush.bf16.msra.mxu0 %v6555
        %7071 = vmatpush.bf16.msra.mxu0 %v6548
        %7072 = vmatpush.bf16.msra.mxu0 %v6541
        %7073 = vmatpush.bf16.msra.mxu0 %v6534
        %7074 = vmatpush.bf16.msra.mxu0 %v6527
        %7075 = vmatpush.bf16.msra.mxu0 %v6520
        %7076 = vmatpush.bf16.msra.mxu0 %v6513
        %7077 = vmatpush.bf16.msra.mxu0 %v6506
        %7078 = vmatmul.bf16.gmra.mxu0 %v5778
        %v7079 = vpop.f32.mrf.mxu0
        %v7080 = vadd.f32 0.0, %v7079
        %v7081 = vpop.f32.mrf.mxu0
        %7082 = vdwg.mxu0
        %7083 = vmatpush.bf16.msra.mxu0 %v6611
        %7084 = vmatpush.bf16.msra.mxu0 %v6604
        %7085 = vmatpush.bf16.msra.mxu0 %v6597
        %7086 = vmatpush.bf16.msra.mxu0 %v6590
        %7087 = vmatpush.bf16.msra.mxu0 %v6583
        %7088 = vmatpush.bf16.msra.mxu0 %v6576
        %7089 = vmatpush.bf16.msra.mxu0 %v6569
        %7090 = vmatpush.bf16.msra.mxu0 %v6562
        %7091 = vmatmul.bf16.gmra.mxu0 %v5779
        %v7092 = vpop.f32.mrf.mxu0
        %v7093 = vadd.f32 %v7080, %v7092
        %v7094 = vpop.f32.mrf.mxu0
        %7095 = vdwg.mxu0
        %7096 = vmatpush.bf16.msra.mxu0 %v6667
        %7097 = vmatpush.bf16.msra.mxu0 %v6660
        %7098 = vmatpush.bf16.msra.mxu0 %v6653
        %7099 = vmatpush.bf16.msra.mxu0 %v6646
        %7100 = vmatpush.bf16.msra.mxu0 %v6639
        %7101 = vmatpush.bf16.msra.mxu0 %v6632
        %7102 = vmatpush.bf16.msra.mxu0 %v6625
        %7103 = vmatpush.bf16.msra.mxu0 %v6618
        %7104 = vmatmul.bf16.gmra.mxu0 %v5252
        %v7105 = vpop.f32.mrf.mxu0
        %v7106 = vadd.f32 %v7093, %v7105
        %v7107 = vpop.f32.mrf.mxu0
        %7108 = vdwg.mxu0
        %v7109 = vxor.u32 %v6872, 2147483648
        %v7110 = vmul.f32 %v7109, 1.442695
        %v7111 = vpow.pop %v7110
        %v7112 = vadd.f32 %v7111, 1.0
        %v7113 = vrcp.pop %v7112
        %v7114 = vmul.f32 %v7112, %v7113
        %v7115 = vsub.f32 1.0, %v7114
        %v7116 = vmul.f32 %v7113, %v7115
        %v7117 = vadd.f32 %v7113, %v7116
        %vm7118 = vweird.f32 %v7112
        %vm7119 = vweird.f32 %v7113
        %vm7120 = vmor %vm7118, %vm7119
        %v7121 = vsel %vm7120, %v7113, %v7117
        %v7122 = vand.u32 2147483647, %v7112
        %vm7123 = vcmp.eq.f32.partialorder %v7122, 8.507059e+37
        %v7124 = vand.u32 %v7112, 2147483648
        %v7125 = vor.u32 1.1754944e-38, %v7124
        %v7126 = vsel %vm7123, %v7125, %v7121
        %v7127 = vmul.f32 1.0, %v7126
        %v7128 = vadd.f32 %v6911, 1.0
        %v7129 = vxor.u32 %v7128, 2147483648
        %v7130 = vmul.f32 %v7129, 1.442695
        %v7131 = vpow.pop %v7130
        %v7132 = vadd.f32 %v7131, 1.0
        %v7133 = vrcp.pop %v7132
        %v7134 = vmul.f32 %v7132, %v7133
        %v7135 = vsub.f32 1.0, %v7134
        %v7136 = vmul.f32 %v7133, %v7135
        %v7137 = vadd.f32 %v7133, %v7136
        %vm7138 = vweird.f32 %v7132
        %vm7139 = vweird.f32 %v7133
        %vm7140 = vmor %vm7138, %vm7139
        %v7141 = vsel %vm7140, %v7133, %v7137
        %v7142 = vand.u32 2147483647, %v7132
        %vm7143 = vcmp.eq.f32.partialorder %v7142, 8.507059e+37
        %v7144 = vand.u32 %v7132, 2147483648
        %v7145 = vor.u32 1.1754944e-38, %v7144
        %v7146 = vsel %vm7143, %v7145, %v7141
        %v7147 = vmul.f32 1.0, %v7146
        %v7148 = vtanh.pop %v6950
        %v7149 = vmul.f32 %v7147, %v5777
        %v7150 = vmul.f32 %v7127, %v7148
        %v7151 = vadd.f32 %v7149, %v7150
        %v7152 = vxor.u32 %v6989, 2147483648
        %v7153 = vmul.f32 %v7152, 1.442695
        %v7154 = vpow.pop %v7153
        %v7155 = vadd.f32 %v7154, 1.0
        %v7156 = vrcp.pop %v7155
        %v7157 = vmul.f32 %v7155, %v7156
        %v7158 = vsub.f32 1.0, %v7157
        %v7159 = vmul.f32 %v7156, %v7158
        %v7160 = vadd.f32 %v7156, %v7159
        %vm7161 = vweird.f32 %v7155
        %vm7162 = vweird.f32 %v7156
        %vm7163 = vmor %vm7161, %vm7162
        %v7164 = vsel %vm7163, %v7156, %v7160
        %v7165 = vand.u32 2147483647, %v7155
        %vm7166 = vcmp.eq.f32.partialorder %v7165, 8.507059e+37
        %v7167 = vand.u32 %v7155, 2147483648
        %v7168 = vor.u32 1.1754944e-38, %v7167
        %v7169 = vsel %vm7166, %v7168, %v7164
        %v7170 = vmul.f32 1.0, %v7169
        %v7171 = vadd.f32 %v7028, 1.0
        %v7172 = vxor.u32 %v7171, 2147483648
        %v7173 = vmul.f32 %v7172, 1.442695
        %v7174 = vpow.pop %v7173
        %v7175 = vadd.f32 %v7174, 1.0
        %v7176 = vrcp.pop %v7175
        %v7177 = vmul.f32 %v7175, %v7176
        %v7178 = vsub.f32 1.0, %v7177
        %v7179 = vmul.f32 %v7176, %v7178
        %v7180 = vadd.f32 %v7176, %v7179
        %vm7181 = vweird.f32 %v7175
        %vm7182 = vweird.f32 %v7176
        %vm7183 = vmor %vm7181, %vm7182
        %v7184 = vsel %vm7183, %v7176, %v7180
        %v7185 = vand.u32 2147483647, %v7175
        %vm7186 = vcmp.eq.f32.partialorder %v7185, 8.507059e+37
        %v7187 = vand.u32 %v7175, 2147483648
        %v7188 = vor.u32 1.1754944e-38, %v7187
        %v7189 = vsel %vm7186, %v7188, %v7184
        %v7190 = vmul.f32 1.0, %v7189
        %v7191 = vtanh.pop %v7067
        %v7192 = vmul.f32 %v7190, %v5250
        %v7193 = vmul.f32 %v7170, %v7191
        %v7194 = vadd.f32 %v7192, %v7193
        %v7195 = vpack.c.bf16 %v7151, %v7151
        %v7196 = vpack.c.bf16 %v7194, %v7194
        %v7197 = vld [vmem:[#allocation30] sm:$0xf]
        %v7198 = vld [vmem:[#allocation30 + $0x4] sm:$0xf]
        %v7199 = vld [vmem:[#allocation30 + $0x8] sm:$0xf]
        %v7200 = vld [vmem:[#allocation30 + $0xc] sm:$0xf]
        %v7201 = vld [vmem:[#allocation30 + $0x10] sm:$0xf]
        %v7202 = vld [vmem:[#allocation30 + $0x14] sm:$0xf]
        %v7203 = vld [vmem:[#allocation30 + $0x18] sm:$0xf]
        %v7204 = vld [vmem:[#allocation30 + $0x1c] sm:$0xf]
        %v7205 = vld [vmem:[#allocation30 + $0x20] sm:$0xf]
        %v7206 = vld [vmem:[#allocation30 + $0x24] sm:$0xf]
        %v7207 = vld [vmem:[#allocation30 + $0x28] sm:$0xf]
        %v7208 = vld [vmem:[#allocation30 + $0x2c] sm:$0xf]
        %v7209 = vld [vmem:[#allocation30 + $0x30] sm:$0xf]
        %v7210 = vld [vmem:[#allocation30 + $0x34] sm:$0xf]
        %v7211 = vld [vmem:[#allocation30 + $0x38] sm:$0xf]
        %v7212 = vld [vmem:[#allocation30 + $0x3c] sm:$0xf]
        %v7213 = vld [vmem:[#allocation30 + $0x40] sm:$0xf]
        %v7214 = vld [vmem:[#allocation30 + $0x44] sm:$0xf]
        %v7215 = vld [vmem:[#allocation30 + $0x48] sm:$0xf]
        %v7216 = vld [vmem:[#allocation30 + $0x4c] sm:$0xf]
        %v7217 = vld [vmem:[#allocation30 + $0x50] sm:$0xf]
        %v7218 = vld [vmem:[#allocation30 + $0x54] sm:$0xf]
        %v7219 = vld [vmem:[#allocation30 + $0x58] sm:$0xf]
        %v7220 = vld [vmem:[#allocation30 + $0x5c] sm:$0xf]
        %v7221 = vld [vmem:[#allocation30 + $0x60] sm:$0xf]
        %v7222 = vld [vmem:[#allocation30 + $0x64] sm:$0xf]
        %v7223 = vld [vmem:[#allocation30 + $0x68] sm:$0xf]
        %v7224 = vld [vmem:[#allocation30 + $0x6c] sm:$0xf]
        %v7225 = vld [vmem:[#allocation30 + $0x70] sm:$0xf]
        %v7226 = vld [vmem:[#allocation30 + $0x74] sm:$0xf]
        %v7227 = vld [vmem:[#allocation30 + $0x78] sm:$0xf]
        %v7228 = vld [vmem:[#allocation30 + $0x7c] sm:$0xf]
        %v7261 = vunpack.c.l.b16 %v7197
        %v7262 = vunpack.c.l.b16 %v7198
        %v7263 = vunpack.c.l.b16 %v7199
        %v7264 = vunpack.c.l.b16 %v7200
        %v7265 = vunpack.c.l.b16 %v7201
        %v7266 = vunpack.c.l.b16 %v7202
        %v7267 = vunpack.c.l.b16 %v7203
        %v7268 = vunpack.c.l.b16 %v7204
        %v7269 = vunpack.c.l.b16 %v7205
        %v7270 = vunpack.c.l.b16 %v7206
        %v7271 = vunpack.c.l.b16 %v7207
        %v7272 = vunpack.c.l.b16 %v7208
        %v7273 = vunpack.c.l.b16 %v7209
        %v7274 = vunpack.c.l.b16 %v7210
        %v7275 = vunpack.c.l.b16 %v7211
        %v7276 = vunpack.c.l.b16 %v7212
        %v7277 = vunpack.c.l.b16 %v7213
        %v7278 = vunpack.c.l.b16 %v7214
        %v7279 = vunpack.c.l.b16 %v7215
        %v7280 = vunpack.c.l.b16 %v7216
        %v7281 = vunpack.c.l.b16 %v7217
        %v7282 = vunpack.c.l.b16 %v7218
        %v7283 = vunpack.c.l.b16 %v7219
        %v7284 = vunpack.c.l.b16 %v7220
        %v7285 = vunpack.c.l.b16 %v7221
        %v7286 = vunpack.c.l.b16 %v7222
        %v7287 = vunpack.c.l.b16 %v7223
        %v7288 = vunpack.c.l.b16 %v7224
        %v7289 = vunpack.c.l.b16 %v7225
        %v7290 = vunpack.c.l.b16 %v7226
        %v7291 = vunpack.c.l.b16 %v7227
        %v7292 = vunpack.c.l.b16 %v7228
        %v7293 = vpack.c.b16 %v7262, %v7261
        %v7294 = vpack.c.b16 %v7264, %v7263
        %v7295 = vpack.c.b16 %v7266, %v7265
        %v7296 = vpack.c.b16 %v7268, %v7267
        %v7297 = vpack.c.b16 %v7270, %v7269
        %v7298 = vpack.c.b16 %v7272, %v7271
        %v7299 = vpack.c.b16 %v7274, %v7273
        %v7300 = vpack.c.b16 %v7276, %v7275
        %v7301 = vpack.c.b16 %v7278, %v7277
        %v7302 = vpack.c.b16 %v7280, %v7279
        %v7303 = vpack.c.b16 %v7282, %v7281
        %v7304 = vpack.c.b16 %v7284, %v7283
        %v7305 = vpack.c.b16 %v7286, %v7285
        %v7306 = vpack.c.b16 %v7288, %v7287
        %v7307 = vpack.c.b16 %v7290, %v7289
        %v7308 = vpack.c.b16 %v7292, %v7291
        %7325 = vmatpush.bf16.msra.mxu0 %v7300
        %7326 = vmatpush.bf16.msra.mxu0 %v7299
        %7327 = vmatpush.bf16.msra.mxu0 %v7298
        %7328 = vmatpush.bf16.msra.mxu0 %v7297
        %7329 = vmatpush.bf16.msra.mxu0 %v7296
        %7330 = vmatpush.bf16.msra.mxu0 %v7295
        %7331 = vmatpush.bf16.msra.mxu0 %v7294
        %7332 = vmatpush.bf16.msra.mxu0 %v7293
        %7333 = vmatmul.bf16.gmra.mxu0 %v7195
        %v7334 = vpop.f32.mrf.mxu0
        %v7335 = vadd.f32 0.0, %v7334
        %v7336 = vpop.f32.mrf.mxu0
        %7337 = vdwg.mxu0
        %7338 = vmatpush.bf16.msra.mxu0 %v7308
        %7339 = vmatpush.bf16.msra.mxu0 %v7307
        %7340 = vmatpush.bf16.msra.mxu0 %v7306
        %7341 = vmatpush.bf16.msra.mxu0 %v7305
        %7342 = vmatpush.bf16.msra.mxu0 %v7304
        %7343 = vmatpush.bf16.msra.mxu0 %v7303
        %7344 = vmatpush.bf16.msra.mxu0 %v7302
        %7345 = vmatpush.bf16.msra.mxu0 %v7301
        %7346 = vmatmul.bf16.gmra.mxu0 %v7196
        %v7347 = vpop.f32.mrf.mxu0
        %v7348 = vadd.f32 %v7335, %v7347
        %v7349 = vpop.f32.mrf.mxu0
        %7350 = vdwg.mxu0
        %v7351 = vadd.f32 %v7106, %v7348
        %v7352 = vxor.u32 %v7351, 2147483648
        %v7353 = vmul.f32 %v7352, 1.442695
        %v7354 = vpow.pop %v7353
        %v7355 = vadd.f32 %v7354, 1.0
        %v7356 = vrcp.pop %v7355
        %v7357 = vmul.f32 %v7355, %v7356
        %v7358 = vsub.f32 1.0, %v7357
        %v7359 = vmul.f32 %v7356, %v7358
        %v7360 = vadd.f32 %v7356, %v7359
        %vm7361 = vweird.f32 %v7355
        %vm7362 = vweird.f32 %v7356
        %vm7363 = vmor %vm7361, %vm7362
        %v7364 = vsel %vm7363, %v7356, %v7360
        %v7365 = vand.u32 2147483647, %v7355
        %vm7366 = vcmp.eq.f32.partialorder %v7365, 8.507059e+37
        %v7367 = vand.u32 %v7355, 2147483648
        %v7368 = vor.u32 1.1754944e-38, %v7367
        %v7369 = vsel %vm7366, %v7368, %v7364
        %v7370 = vmul.f32 1.0, %v7369
        %v7371 = vld [vmem:[#allocation35] sm:$0xf]
        %v7372 = vld [vmem:[#allocation35 + $0x4] sm:$0xf]
        %v7373 = vld [vmem:[#allocation35 + $0x8] sm:$0xf]
        %v7374 = vld [vmem:[#allocation35 + $0xc] sm:$0xf]
        %v7375 = vld [vmem:[#allocation35 + $0x10] sm:$0xf]
        %v7376 = vld [vmem:[#allocation35 + $0x14] sm:$0xf]
        %v7377 = vld [vmem:[#allocation35 + $0x18] sm:$0xf]
        %v7378 = vld [vmem:[#allocation35 + $0x1c] sm:$0xf]
        %v7379 = vld [vmem:[#allocation35 + $0x20] sm:$0xf]
        %v7380 = vld [vmem:[#allocation35 + $0x24] sm:$0xf]
        %v7381 = vld [vmem:[#allocation35 + $0x28] sm:$0xf]
        %v7382 = vld [vmem:[#allocation35 + $0x2c] sm:$0xf]
        %v7383 = vld [vmem:[#allocation35 + $0x30] sm:$0xf]
        %v7384 = vld [vmem:[#allocation35 + $0x34] sm:$0xf]
        %v7385 = vld [vmem:[#allocation35 + $0x38] sm:$0xf]
        %v7386 = vld [vmem:[#allocation35 + $0x3c] sm:$0xf]
        %v7387 = vld [vmem:[#allocation35 + $0x40] sm:$0xf]
        %v7388 = vld [vmem:[#allocation35 + $0x44] sm:$0xf]
        %v7389 = vld [vmem:[#allocation35 + $0x48] sm:$0xf]
        %v7390 = vld [vmem:[#allocation35 + $0x4c] sm:$0xf]
        %v7391 = vld [vmem:[#allocation35 + $0x50] sm:$0xf]
        %v7392 = vld [vmem:[#allocation35 + $0x54] sm:$0xf]
        %v7393 = vld [vmem:[#allocation35 + $0x58] sm:$0xf]
        %v7394 = vld [vmem:[#allocation35 + $0x5c] sm:$0xf]
        %v7395 = vld [vmem:[#allocation35 + $0x60] sm:$0xf]
        %v7396 = vld [vmem:[#allocation35 + $0x64] sm:$0xf]
        %v7397 = vld [vmem:[#allocation35 + $0x68] sm:$0xf]
        %v7398 = vld [vmem:[#allocation35 + $0x6c] sm:$0xf]
        %v7399 = vld [vmem:[#allocation35 + $0x70] sm:$0xf]
        %v7400 = vld [vmem:[#allocation35 + $0x74] sm:$0xf]
        %v7401 = vld [vmem:[#allocation35 + $0x78] sm:$0xf]
        %v7402 = vld [vmem:[#allocation35 + $0x7c] sm:$0xf]
        %v7435 = vunpack.c.l.b16 %v7371
        %v7436 = vunpack.c.l.b16 %v7372
        %v7437 = vunpack.c.l.b16 %v7373
        %v7438 = vunpack.c.l.b16 %v7374
        %v7439 = vunpack.c.l.b16 %v7375
        %v7440 = vunpack.c.l.b16 %v7376
        %v7441 = vunpack.c.l.b16 %v7377
        %v7442 = vunpack.c.l.b16 %v7378
        %v7443 = vunpack.c.l.b16 %v7379
        %v7444 = vunpack.c.l.b16 %v7380
        %v7445 = vunpack.c.l.b16 %v7381
        %v7446 = vunpack.c.l.b16 %v7382
        %v7447 = vunpack.c.l.b16 %v7383
        %v7448 = vunpack.c.l.b16 %v7384
        %v7449 = vunpack.c.l.b16 %v7385
        %v7450 = vunpack.c.l.b16 %v7386
        %v7451 = vunpack.c.l.b16 %v7387
        %v7452 = vunpack.c.l.b16 %v7388
        %v7453 = vunpack.c.l.b16 %v7389
        %v7454 = vunpack.c.l.b16 %v7390
        %v7455 = vunpack.c.l.b16 %v7391
        %v7456 = vunpack.c.l.b16 %v7392
        %v7457 = vunpack.c.l.b16 %v7393
        %v7458 = vunpack.c.l.b16 %v7394
        %v7459 = vunpack.c.l.b16 %v7395
        %v7460 = vunpack.c.l.b16 %v7396
        %v7461 = vunpack.c.l.b16 %v7397
        %v7462 = vunpack.c.l.b16 %v7398
        %v7463 = vunpack.c.l.b16 %v7399
        %v7464 = vunpack.c.l.b16 %v7400
        %v7465 = vunpack.c.l.b16 %v7401
        %v7466 = vunpack.c.l.b16 %v7402
        %v7467 = vpack.c.b16 %v7436, %v7435
        %v7468 = vpack.c.b16 %v7438, %v7437
        %v7469 = vpack.c.b16 %v7440, %v7439
        %v7470 = vpack.c.b16 %v7442, %v7441
        %v7471 = vpack.c.b16 %v7444, %v7443
        %v7472 = vpack.c.b16 %v7446, %v7445
        %v7473 = vpack.c.b16 %v7448, %v7447
        %v7474 = vpack.c.b16 %v7450, %v7449
        %v7475 = vpack.c.b16 %v7452, %v7451
        %v7476 = vpack.c.b16 %v7454, %v7453
        %v7477 = vpack.c.b16 %v7456, %v7455
        %v7478 = vpack.c.b16 %v7458, %v7457
        %v7479 = vpack.c.b16 %v7460, %v7459
        %v7480 = vpack.c.b16 %v7462, %v7461
        %v7481 = vpack.c.b16 %v7464, %v7463
        %v7482 = vpack.c.b16 %v7466, %v7465
        %7499 = vmatpush.bf16.msra.mxu0 %v7474
        %7500 = vmatpush.bf16.msra.mxu0 %v7473
        %7501 = vmatpush.bf16.msra.mxu0 %v7472
        %7502 = vmatpush.bf16.msra.mxu0 %v7471
        %7503 = vmatpush.bf16.msra.mxu0 %v7470
        %7504 = vmatpush.bf16.msra.mxu0 %v7469
        %7505 = vmatpush.bf16.msra.mxu0 %v7468
        %7506 = vmatpush.bf16.msra.mxu0 %v7467
        %7507 = vmatmul.bf16.gmra.mxu0 %v7195
        %v7508 = vpop.f32.mrf.mxu0
        %v7509 = vadd.f32 0.0, %v7508
        %v7510 = vpop.f32.mrf.mxu0
        %7511 = vdwg.mxu0
        %7512 = vmatpush.bf16.msra.mxu0 %v7482
        %7513 = vmatpush.bf16.msra.mxu0 %v7481
        %7514 = vmatpush.bf16.msra.mxu0 %v7480
        %7515 = vmatpush.bf16.msra.mxu0 %v7479
        %7516 = vmatpush.bf16.msra.mxu0 %v7478
        %7517 = vmatpush.bf16.msra.mxu0 %v7477
        %7518 = vmatpush.bf16.msra.mxu0 %v7476
        %7519 = vmatpush.bf16.msra.mxu0 %v7475
        %7520 = vmatmul.bf16.gmra.mxu0 %v7196
        %v7521 = vpop.f32.mrf.mxu0
        %v7522 = vadd.f32 %v7509, %v7521
        %v7523 = vpop.f32.mrf.mxu0
        %7524 = vdwg.mxu0
        %v7525 = vtanh.pop %v7522
        %v7526 = vmul.f32 %v7370, %v7525
        %v7527 = vsub.f32 1.0, %v7370
        %v7528 = vmul.f32 %v7527, %v5585
        %v7529 = vadd.f32 %v7526, %v7528
        %7530 = vst [vmem:[%s5774] sm:$0x3] %v7529
        %7531 = vst [vmem:[%s5776] sm:$0x3] %v7151
        %p7532 = scmp.ge.s32.totalorder %s57, 1
        // Predicated region
        $region221: #{tpu_custom_call.1} parent=131 // pred_check
          %p7533 = pneg %p7532
        $region222: #{tpu_custom_call.1} parent=131 // pred_check_branch
          %7535 = sbr.rel (%p7533) target = $region224
        $region223: #{tpu_custom_call.1} parent=131 // pred_region
          %v7536 = vld [vmem:[#allocation7] sm:$0x3]
          %v7537 = vsub.f32 %v7529, %v7536
          %v7538 = vmax.f32 %v7537, 0.0
          %v7539 = vmin.f32 %v7537, 0.0
          %v7540 = vtanh.pop %v7538
          %v7541 = vld [vmem:[#allocation14] sm:$0x3]
          %v7542 = vmul.f32 %v7540, %v7541
          %7543 = vst [vmem:[#allocation5] sm:$0x3] %v7542
          %v7544 = vtanh.pop %v7539
          %v7545 = vld [vmem:[%s3] sm:$0x3]
          %v7546 = vmul.f32 %v7544, %v7545
          %7547 = vst [vmem:[#allocation6] sm:$0x3] %v7546
        $region224: #{tpu_custom_call.1} parent=131 // pred_fallthru
          _
        %7548 = vst [vmem:[#allocation7] sm:$0x3] %v7529
        %7549 = vst [vmem:[#allocation4] sm:$0x3] %v7194
        %v7550 = vpack.c.bf16 %v7529, %v7529
        %v7551 = vld [vmem:[#allocation21] sm:$0xff]
        %v7552 = vld [vmem:[#allocation21 + $0x8] sm:$0xff]
        %v7553 = vld [vmem:[#allocation21 + $0x10] sm:$0xff]
        %v7554 = vld [vmem:[#allocation21 + $0x18] sm:$0xff]
        %v7555 = vld [vmem:[#allocation21 + $0x20] sm:$0xff]
        %v7556 = vld [vmem:[#allocation21 + $0x28] sm:$0xff]
        %v7557 = vld [vmem:[#allocation21 + $0x30] sm:$0xff]
        %v7558 = vld [vmem:[#allocation21 + $0x38] sm:$0xff]
        %v7559 = vld [vmem:[#allocation21 + $0x40] sm:$0xff]
        %v7560 = vld [vmem:[#allocation21 + $0x48] sm:$0xff]
        %v7561 = vld [vmem:[#allocation21 + $0x50] sm:$0xff]
        %v7562 = vld [vmem:[#allocation21 + $0x58] sm:$0xff]
        %v7563 = vld [vmem:[#allocation21 + $0x60] sm:$0xff]
        %v7564 = vld [vmem:[#allocation21 + $0x68] sm:$0xff]
        %v7565 = vld [vmem:[#allocation21 + $0x70] sm:$0xff]
        %v7566 = vld [vmem:[#allocation21 + $0x78] sm:$0xff]
        %v7583 = vunpack.c.l.b16 %v7551
        %v7584 = vunpack.c.h.b16 %v7551
        %v7585 = vunpack.c.l.b16 %v7552
        %v7586 = vunpack.c.h.b16 %v7552
        %v7587 = vunpack.c.l.b16 %v7553
        %v7588 = vunpack.c.h.b16 %v7553
        %v7589 = vunpack.c.l.b16 %v7554
        %v7590 = vunpack.c.h.b16 %v7554
        %v7591 = vunpack.c.l.b16 %v7555
        %v7592 = vunpack.c.h.b16 %v7555
        %v7593 = vunpack.c.l.b16 %v7556
        %v7594 = vunpack.c.h.b16 %v7556
        %v7595 = vunpack.c.l.b16 %v7557
        %v7596 = vunpack.c.h.b16 %v7557
        %v7597 = vunpack.c.l.b16 %v7558
        %v7598 = vunpack.c.h.b16 %v7558
        %v7599 = vunpack.c.l.b16 %v7559
        %v7600 = vunpack.c.h.b16 %v7559
        %v7601 = vunpack.c.l.b16 %v7560
        %v7602 = vunpack.c.h.b16 %v7560
        %v7603 = vunpack.c.l.b16 %v7561
        %v7604 = vunpack.c.h.b16 %v7561
        %v7605 = vunpack.c.l.b16 %v7562
        %v7606 = vunpack.c.h.b16 %v7562
        %v7607 = vunpack.c.l.b16 %v7563
        %v7608 = vunpack.c.h.b16 %v7563
        %v7609 = vunpack.c.l.b16 %v7564
        %v7610 = vunpack.c.h.b16 %v7564
        %v7611 = vunpack.c.l.b16 %v7565
        %v7612 = vunpack.c.h.b16 %v7565
        %v7613 = vunpack.c.l.b16 %v7566
        %v7614 = vunpack.c.h.b16 %v7566
        %v7615 = vpack.c.b16 %v7585, %v7583
        %v7616 = vpack.c.b16 %v7586, %v7584
        %v7617 = vpack.c.b16 %v7589, %v7587
        %v7618 = vpack.c.b16 %v7590, %v7588
        %v7619 = vpack.c.b16 %v7593, %v7591
        %v7620 = vpack.c.b16 %v7594, %v7592
        %v7621 = vpack.c.b16 %v7597, %v7595
        %v7622 = vpack.c.b16 %v7598, %v7596
        %v7623 = vpack.c.b16 %v7601, %v7599
        %v7624 = vpack.c.b16 %v7602, %v7600
        %v7625 = vpack.c.b16 %v7605, %v7603
        %v7626 = vpack.c.b16 %v7606, %v7604
        %v7627 = vpack.c.b16 %v7609, %v7607
        %v7628 = vpack.c.b16 %v7610, %v7608
        %v7629 = vpack.c.b16 %v7613, %v7611
        %v7630 = vpack.c.b16 %v7614, %v7612
        %7647 = vmatpush.bf16.msra.mxu0 %v7629
        %7648 = vmatpush.bf16.msra.mxu0 %v7627
        %7649 = vmatpush.bf16.msra.mxu0 %v7625
        %7650 = vmatpush.bf16.msra.mxu0 %v7623
        %7651 = vmatpush.bf16.msra.mxu0 %v7621
        %7652 = vmatpush.bf16.msra.mxu0 %v7619
        %7653 = vmatpush.bf16.msra.mxu0 %v7617
        %7654 = vmatpush.bf16.msra.mxu0 %v7615
        %7655 = vmatmul.bf16.gmra.mxu0 %v7550
        %v7656 = vpop.f32.mrf.mxu0
        %v7657 = vadd.f32 0.0, %v7656
        %v7658 = vpop.f32.mrf.mxu0
        %7659 = vdwg.mxu0
        %7660 = vmatpush.bf16.msra.mxu0 %v7630
        %7661 = vmatpush.bf16.msra.mxu0 %v7628
        %7662 = vmatpush.bf16.msra.mxu0 %v7626
        %7663 = vmatpush.bf16.msra.mxu0 %v7624
        %7664 = vmatpush.bf16.msra.mxu0 %v7622
        %7665 = vmatpush.bf16.msra.mxu0 %v7620
        %7666 = vmatpush.bf16.msra.mxu0 %v7618
        %7667 = vmatpush.bf16.msra.mxu0 %v7616
        %7668 = vmatmul.bf16.gmra.mxu0 %v7550
        %v7669 = vpop.f32.mrf.mxu0
        %v7670 = vadd.f32 0.0, %v7669
        %v7671 = vpop.f32.mrf.mxu0
        %7672 = vdwg.mxu0
        %v7675 = vrot.slane %v7670, 6
        %vm7676 = vcmask 1041408
        %v7677 = vsel %vm7676, %v7657, %v7675
        %7679 = vst [vmem:[#allocation8] sm:$0xf] %v7677
        %7680 = vst [vmem:[%s1227] sm:$0xf] %v7677
        %s7681 = sand.u32 %s673, 1
        %s7682 = scalar_lea.sflag [#allocation11], %s7681
        %s7683 = sand.u32 %s673, 1
        %s7684 = smul.addr %s7683, 4
        %s7685 = scalar_lea.vmem [#allocation42], %s7684
        // Predicated region
        $region225: #{tpu_custom_call.1} parent=131 // pred_check
          %p7686 = pneg %p683
        $region226: #{tpu_custom_call.1} parent=131 // pred_check_branch
          %7688 = sbr.rel (%p7686) target = $region228
        $region227: #{tpu_custom_call.1} parent=131 // pred_region
          %7690 = vsyncadd %s7682, 0
          %s7691 = smul.addr %s57, 2
          %s7692 = smul.addr %s7691, 2
          %s7693 = scalar_lea.hbm %s28, %s7692
          %s7695 = sshll.u32 %s7685, 4
          %s7696 = int_to_ptr.vmem [resolvable:$true] %s7695
          %s7697 = sshll.u32 %s7693, 4
          %s7698 = int_to_ptr.hbm [resolvable:$true] %s7697
          %7700 = dma.vmem_to_hbm [thread:$0]  %s7696, 64, %s7698, %s7682
        $region228: #{tpu_custom_call.1} parent=131 // pred_fallthru
          _
      $region132: #{tpu_custom_call.1} parent=5 // pred_fallthru
        _
      %p7701 = scmp.le.s32.totalorder 2, %s52
      // Predicated region
      $region229: #{tpu_custom_call.1} parent=5 // pred_check
        %p7702 = pneg %p7701
      $region230: #{tpu_custom_call.1} parent=5 // pred_check_branch
        %7704 = sbr.rel (%p7702) target = $region232
      $region231: #{tpu_custom_call.1} parent=5 // pred_region
        %s7705 = ssub.s32 %s52, 2
        // Predicated region
        $region233: #{tpu_custom_call.1} parent=231 // pred_check
          %p7706 = pneg %p689
        $region234: #{tpu_custom_call.1} parent=231 // pred_check_branch
          %7708 = sbr.rel (%p7706) target = $region236
        $region235: #{tpu_custom_call.1} parent=231 // pred_region
          %s7709 = sand.u32 %s674, 1
          %s7710 = scalar_lea.sflag [#allocation11], %s7709
          %s7711 = sand.u32 %s674, 1
          %s7712 = smul.addr %s7711, 4
          %s7713 = scalar_lea.vmem [#allocation42], %s7712
          %7715 = dma.done %s7710, 64
        $region236: #{tpu_custom_call.1} parent=231 // pred_fallthru
          _
      $region232: #{tpu_custom_call.1} parent=5 // pred_fallthru
        _
    $region6: #{tpu_custom_call.1} parent=1 // loop_footer
      %s56 = sadd.s32 1, %s52
    $region7: #{tpu_custom_call.1} parent=1 // loop_footer_branch
      %51 = sbr.rel target = $region3
    $region8: #{tpu_custom_call.1} parent=1 // loop_exit
      _
    %7716 = vsyncpa [#allocation10], 1
    %s7717 = scalar_lea.sflag [#allocation10], 1
    %7718 = vsyncpa %s7717, 1
    %7719 = vsyncpa [#allocation13], 1
    %s7720 = scalar_lea.sflag [#allocation13], 1
    %7721 = vsyncpa %s7720, 1
    %7722 = vsyncpa [#allocation16], 1
    %7723 = vsyncpa [#allocation19], 1
    %7724 = vsyncpa [#allocation22], 1
    %7725 = vsyncpa [#allocation25], 1
    %7726 = vsyncpa [#allocation28], 1
    %7727 = vsyncpa [#allocation31], 1
    %7728 = vsyncpa [#allocation34], 1
    %7729 = vsyncpa [#allocation37], 1
    %7730 = vsyncpa [#allocation40], 1
    %7731 = vsyncpa [#allocation11], 1
    %s7732 = scalar_lea.sflag [#allocation11], 1
    %7733 = vsyncpa %s7732, 1

</llo_original>
